<compile_context>
chip_gen: v7x
topology: tpu7x:2x2x1
jax: 0.10.0
libtpu: 0.0.40
codegen_flags: <defaults>
</compile_context>

<pallas_src>
import functools

import numpy as np
import jax
import jax.numpy as jnp
from jax.experimental import pallas as pl
from jax.experimental.pallas import tpu as pltpu

# ----------------------------- configuration ------------------------------
CFG = dict(
    B=2, C=4, IMG=16, PATCH=8,            # visual encoder input
    VIT_D=32, VIT_HEADS=4, VIT_MLP=64, VIT_LAYERS=2,
    Q_D=32, Q_HEADS=4, Q_MLP=64, Q_LAYERS=2,
    NUM_QUERY=8, PROJ_D=16,               # query tokens / vision_proj embed dim
)

BF16 = jnp.bfloat16
F32 = jnp.float32


# --------------------------- in-kernel math helpers -------------------------

def _erf_f32(x):
    # Abramowitz & Stegun 7.1.26 rational approximation (|err| ~ 1.5e-7).
    a1, a2, a3, a4, a5 = 0.254829592, -0.284496736, 1.421413741, -1.453152027, 1.061405429
    p = 0.3275911
    ax = jnp.abs(x)
    t = pl.reciprocal(1.0 + p * ax, approx=True)        # EUP, not VALU divide
    poly = ((((a5 * t + a4) * t + a3) * t + a2) * t + a1) * t
    y = 1.0 - poly * jnp.exp(-ax * ax)
    return jnp.where(x >= 0, y, -y)


def _gelu_exact(x):
    # Exact erf-GELU (matches PyTorch nn.GELU / HF Bert default), f32.
    return 0.5 * x * (1.0 + _erf_f32(x * 0.7071067811865476))


def _layernorm(x, g, b, eps):
    mean = jnp.mean(x, axis=-1, keepdims=True)
    xc = x - mean
    var = jnp.mean(xc * xc, axis=-1, keepdims=True)
    return xc * jax.lax.rsqrt(var + eps) * g + b


def _proj_heads(x, w, b):
    """Head-major projection: x (S, Din) f32, w (G, Din, Dh) bf16, b (G,1,Dh) f32
    -> (G, S, Dh) f32.  G = heads (or 2*/3*heads for fused KV / QKV)."""
    xb = jnp.broadcast_to(x.astype(BF16)[None], (w.shape[0],) + x.shape)
    return jnp.einsum("gsd,gdf->gsf", xb, w, preferred_element_type=F32) + b


def _attend(q, k, v, wo, bo):
    """q (H, Sq, Dh), k/v (H, Sk, Dh) f32; wo (H, Dh, Dout) bf16; bo (1, Dout).
    1/sqrt(Dh) is pre-folded into q.  Returns (Sq, Dout) f32."""
    s = jnp.einsum("hqd,hkd->hqk", q.astype(BF16), k.astype(BF16),
                   preferred_element_type=F32)
    s = s - jnp.max(s, axis=-1, keepdims=True)
    p = jnp.exp(s)
    p = p * pl.reciprocal(jnp.sum(p, axis=-1, keepdims=True), approx=True)
    o = jnp.einsum("hqk,hkd->hqd", p.astype(BF16), v.astype(BF16),
                   preferred_element_type=F32)
    ctx = jnp.einsum("hqd,hdf->hqf", o.astype(BF16), wo,
                     preferred_element_type=F32)
    return jnp.sum(ctx, axis=0) + bo


# ------------------------------ ViT kernel ----------------------------------
# grid = (B, L_vit); batch parallel, layer arbitrary.  Residual stream lives in
# a VMEM scratch; per-layer weights are streamed via the layer grid axis.

def _vit_kernel(patches_ref, pos_bias_ref, patch_w_ref, lnv_g_ref, lnv_b_ref,
                ln1_g, ln1_b, wqkv, bqkv, wo, bo, ln2_g, ln2_b,
                fc1w, fc1b, fc2w, fc2b,
                out_ref, x_scr, *, heads, n_layers, eps):
    l = pl.program_id(1)

    @pl.when(l == 0)
    def _():
        # patch embedding (CLS row of patches is zero; cls+pos+conv-bias are
        # folded into pos_bias).
        x0 = jnp.dot(patches_ref[...], patch_w_ref[...],
                     preferred_element_type=F32)
        x_scr[...] = x0 + pos_bias_ref[...]

    x = x_scr[...]

    # ---- pre-LN self-attention ----
    h = _layernorm(x, ln1_g[...], ln1_b[...], eps)
    qkv = _proj_heads(h, wqkv[...], bqkv[...])          # (3H, S, Dh)
    x = x + _attend(qkv[:heads], qkv[heads:2 * heads], qkv[2 * heads:],
                    wo[...], bo[...])

    # ---- pre-LN MLP ----
    h = _layernorm(x, ln2_g[...], ln2_b[...], eps)
    t = _gelu_exact(jnp.dot(h.astype(BF16), fc1w[...],
                            preferred_element_type=F32) + fc1b[...])
    x = x + jnp.dot(t.astype(BF16), fc2w[...],
                    preferred_element_type=F32) + fc2b[...]

    x_scr[...] = x

    @pl.when(l == n_layers - 1)
    def _():
        out_ref[...] = _layernorm(x, lnv_g_ref[...], lnv_b_ref[...], eps
                                  ).astype(out_ref.dtype)


# ---------------------------- Q-Former kernel --------------------------------
# grid = (B, L_q); self-attn -> cross-attn (K/V from ViT embeds) -> FFN,
# post-LN BERT style.  vit_embeds block for batch b stays VMEM-resident across
# the layer axis (block index unchanged -> no re-DMA).

def _qformer_kernel(vit_ref, query_ref, vp_w_ref, vp_b_ref,
                    s_w, s_b, s_ow, s_ob, s_lng, s_lnb,
                    c_qw, c_qb, c_kvw, c_kvb, c_ow, c_ob, c_lng, c_lnb,
                    fc1w, fc1b, fc2w, fc2b, o_lng, o_lnb,
                    pooled_ref, y_scr, *, heads, n_layers, eps):
    l = pl.program_id(1)

    @pl.when(l == 0)
    def _():
        y_scr[...] = query_ref[...]

    y = y_scr[...]
    vit = vit_ref[...]

    # ---- self-attention ----
    qkv = _proj_heads(y, s_w[...], s_b[...])                       # (3H, NQ, Dh)
    att = _attend(qkv[:heads], qkv[heads:2 * heads], qkv[2 * heads:],
                  s_ow[...], s_ob[...])
    y = _layernorm(y + att, s_lng[...], s_lnb[...], eps)

    # ---- cross-attention (K/V from ViT embeddings, image_atts all ones) ----
    qh = _proj_heads(y, c_qw[...], c_qb[...])                      # (H, NQ, Dh)
    kv = _proj_heads(vit, c_kvw[...], c_kvb[...])                  # (2H, S, Dh)
    att = _attend(qh, kv[:heads], kv[heads:], c_ow[...], c_ob[...])
    y = _layernorm(y + att, c_lng[...], c_lnb[...], eps)

    # ---- feed-forward ----
    t = _gelu_exact(jnp.dot(y.astype(BF16), fc1w[...],
                            preferred_element_type=F32) + fc1b[...])
    h = jnp.dot(t.astype(BF16), fc2w[...], preferred_element_type=F32) + fc2b[...]
    y = _layernorm(y + h, o_lng[...], o_lnb[...], eps)

    y_scr[...] = y

    @pl.when(l == n_layers - 1)
    def _():
        pooled_ref[...] = (jnp.dot(y.astype(BF16), vp_w_ref[...],
                                   preferred_element_type=F32)
                           + vp_b_ref[...]).astype(pooled_ref.dtype)


# ---------------------------- parameter packing ------------------------------

def pack_params(params, cfg):
    """Pack weights head-major (heads, Din, Dh) in bf16, fold the attention
    scale into Q, fold CLS/conv-bias/pos-embed into pos_bias, stack per layer."""
    Dv, Dq = cfg["VIT_D"], cfg["Q_D"]
    Hv, Hq = cfg["VIT_HEADS"], cfg["Q_HEADS"]
    Dhv, Dhq = Dv // Hv, Dq // Hq
    sv = 1.0 / float(np.sqrt(Dhv))
    sq = 1.0 / float(np.sqrt(Dhq))

    def heads_w(w, H, Dh):     # (Din, H*Dh) -> (H, Din, Dh)
        return jnp.transpose(w.reshape(w.shape[0], H, Dh), (1, 0, 2))

    def heads_b(b, H, Dh):     # (H*Dh,) -> (H, 1, Dh)
        return b.reshape(H, 1, Dh)

    def fuse_qkv_heads(attn, H, Dh, scale):
        w = jnp.concatenate([heads_w(attn["q"]["w"] * scale, H, Dh),
                             heads_w(attn["k"]["w"], H, Dh),
                             heads_w(attn["v"]["w"], H, Dh)], axis=0)
        b = jnp.concatenate([heads_b(attn["q"]["b"] * scale, H, Dh),
                             heads_b(attn["k"]["b"], H, Dh),
                             heads_b(attn["v"]["b"], H, Dh)], axis=0)
        return w, b

    def out_heads(o, H, Dh):   # (H*Dh, Dout) -> (H, Dh, Dout)
        return o["w"].reshape(H, Dh, o["w"].shape[1])

    # ----- ViT -----
    vit = params["vit"]
    lv = vit["layers"]
    pos = vit["pos"][0]                                       # (S, Dv)
    pos_bias = pos + vit["patch_embed"]["b"][None, :]         # patch rows: pos + conv bias
    pos_bias = pos_bias.at[0].set(pos[0] + vit["cls"][0, 0])  # CLS row: cls + pos

    vqkv = [fuse_qkv_heads(l["attn"], Hv, Dhv, sv) for l in lv]
    vit_stack = [
        jnp.stack([l["ln1"]["g"] for l in lv])[:, None, :],
        jnp.stack([l["ln1"]["b"] for l in lv])[:, None, :],
        jnp.stack([w for w, _ in vqkv]).astype(BF16),                       # (L,3H,Dv,Dh)
        jnp.stack([b for _, b in vqkv]),                                    # (L,3H,1,Dh)
        jnp.stack([out_heads(l["attn"]["o"], Hv, Dhv) for l in lv]).astype(BF16),
        jnp.stack([l["attn"]["o"]["b"] for l in lv])[:, None, :],
        jnp.stack([l["ln2"]["g"] for l in lv])[:, None, :],
        jnp.stack([l["ln2"]["b"] for l in lv])[:, None, :],
        jnp.stack([l["fc1"]["w"] for l in lv]).astype(BF16),
        jnp.stack([l["fc1"]["b"] for l in lv])[:, None, :],
        jnp.stack([l["fc2"]["w"] for l in lv]).astype(BF16),
        jnp.stack([l["fc2"]["b"] for l in lv])[:, None, :],
    ]

    # ----- Q-Former -----
    lq = params["qformer"]["layers"]
    sqkv = [fuse_qkv_heads(l["self"], Hq, Dhq, sq) for l in lq]
    ckv_w = [jnp.concatenate([heads_w(l["cross"]["k"]["w"], Hq, Dhq),
                              heads_w(l["cross"]["v"]["w"], Hq, Dhq)], axis=0)
             for l in lq]
    ckv_b = [jnp.concatenate([heads_b(l["cross"]["k"]["b"], Hq, Dhq),
                              heads_b(l["cross"]["v"]["b"], Hq, Dhq)], axis=0)
             for l in lq]
    q_stack = [
        jnp.stack([w for w, _ in sqkv]).astype(BF16),
        jnp.stack([b for _, b in sqkv]),
        jnp.stack([out_heads(l["self"]["o"], Hq, Dhq) for l in lq]).astype(BF16),
        jnp.stack([l["self"]["o"]["b"] for l in lq])[:, None, :],
        jnp.stack([l["self"]["ln"]["g"] for l in lq])[:, None, :],
        jnp.stack([l["self"]["ln"]["b"] for l in lq])[:, None, :],
        jnp.stack([heads_w(l["cross"]["q"]["w"] * sq, Hq, Dhq) for l in lq]).astype(BF16),
        jnp.stack([heads_b(l["cross"]["q"]["b"] * sq, Hq, Dhq) for l in lq]),
        jnp.stack(ckv_w).astype(BF16),
        jnp.stack(ckv_b),
        jnp.stack([out_heads(l["cross"]["o"], Hq, Dhq) for l in lq]).astype(BF16),
        jnp.stack([l["cross"]["o"]["b"] for l in lq])[:, None, :],
        jnp.stack([l["cross"]["ln"]["g"] for l in lq])[:, None, :],
        jnp.stack([l["cross"]["ln"]["b"] for l in lq])[:, None, :],
        jnp.stack([l["fc1"]["w"] for l in lq]).astype(BF16),
        jnp.stack([l["fc1"]["b"] for l in lq])[:, None, :],
        jnp.stack([l["fc2"]["w"] for l in lq]).astype(BF16),
        jnp.stack([l["fc2"]["b"] for l in lq])[:, None, :],
        jnp.stack([l["ln_out"]["g"] for l in lq])[:, None, :],
        jnp.stack([l["ln_out"]["b"] for l in lq])[:, None, :],
    ]

    return {
        "patch_w": vit["patch_embed"]["w"].astype(BF16),
        "pos_bias": pos_bias,
        "query_tokens": params["query_tokens"][0],
        "lnv_g": params["ln_vision"]["g"][None, :],
        "lnv_b": params["ln_vision"]["b"][None, :],
        "vit_stack": vit_stack,
        "q_stack": q_stack,
        "vp_w": params["vision_proj"]["w"].astype(BF16),
        "vp_b": params["vision_proj"]["b"][None, :],
    }


# ------------------------------ BlockSpec helpers ----------------------------

def _batch_spec(arr):
    nd = arr.ndim
    return pl.BlockSpec((None,) + arr.shape[1:],
                        lambda b, l, nd=nd: (b,) + (0,) * (nd - 1))


def _layer_spec(arr):
    nd = arr.ndim
    return pl.BlockSpec((None,) + arr.shape[1:],
                        lambda b, l, nd=nd: (l,) + (0,) * (nd - 1))


def _const_spec(arr):
    nd = arr.ndim
    return pl.BlockSpec(arr.shape, lambda b, l, nd=nd: (0,) * nd)


# ------------------------------- cost estimates ------------------------------

def _vit_cost(B, S, Kp, D, H, MLP, L):
    Dh = D // H
    per_layer = (2 * S * D * 3 * D           # qkv projection
                 + 2 * 2 * H * S * S * Dh    # scores + p@v
                 + 2 * S * D * D             # output projection
                 + 2 * 2 * S * D * MLP)      # fc1 + fc2
    flops = B * (2 * S * Kp * D + L * per_layer)
    trans = B * L * (H * S * S + 2 * S * MLP)
    return int(flops), int(trans)


def _qformer_cost(B, S, NQ, Dq, Dv, H, MLP, L, PROJ):
    Dh = Dq // H
    per_layer = (2 * NQ * Dq * 3 * Dq
                 + 2 * 2 * H * NQ * NQ * Dh
                 + 2 * NQ * Dq * Dq
                 + 2 * NQ * Dq * Dq
                 + 2 * S * Dv * 2 * Dq
                 + 2 * 2 * H * NQ * S * Dh
                 + 2 * NQ * Dq * Dq
                 + 2 * 2 * NQ * Dq * MLP)
    flops = B * (L * per_layer + 2 * NQ * Dq * PROJ)
    trans = B * L * (H * NQ * (NQ + S) + 2 * NQ * MLP)
    return int(flops), int(trans)


def _io_bytes(inputs, out_shapes_dtypes):
    b = sum(int(a.size) * a.dtype.itemsize for a in inputs)
    b += sum(int(np.prod(s)) * np.dtype(d).itemsize for s, d in out_shapes_dtypes)
    return int(b)


# ------------------------------- forward pass --------------------------------

def blip2_encoder_forward(packed, pixel_values=None, input_ids=None,
                          attention_mask=None, cfg=CFG):
    if pixel_values is None:
        # TODO(synk): text-only branch (input_ids -> Qformer.bert -> text_proj) not implemented.
        raise NotImplementedError("text-only path not implemented")
    # TODO(synk): optional `mapper` head is not modeled (mapper=None case only).

    B, C, Himg, Wimg = pixel_values.shape
    P = cfg["PATCH"]
    nH, nW = Himg // P, Wimg // P
    Dv, Dq = cfg["VIT_D"], cfg["Q_D"]
    NQ, PROJ = cfg["NUM_QUERY"], cfg["PROJ_D"]
    Hv, Hq = cfg["VIT_HEADS"], cfg["Q_HEADS"]
    Lv, Lq = cfg["VIT_LAYERS"], cfg["Q_LAYERS"]
    S = nH * nW + 1
    Kp = C * P * P

    # Conv2d(C, D, kernel=P, stride=P) == patch extraction + matmul (extraction
    # is layout plumbing in XLA; the matmul runs inside the kernel).
    patches = (pixel_values.astype(jnp.float32)
               .reshape(B, C, nH, P, nW, P)
               .transpose(0, 2, 4, 1, 3, 5)
               .reshape(B, nH * nW, Kp))
    patches = jnp.pad(patches, ((0, 0), (1, 0), (0, 0))).astype(BF16)  # zero row = CLS slot

    # ------------------------------ ViT call --------------------------------
    vit_inputs = [patches, packed["pos_bias"], packed["patch_w"],
                  packed["lnv_g"], packed["lnv_b"], *packed["vit_stack"]]
    vit_specs = ([_batch_spec(patches)]
                 + [_const_spec(a) for a in (packed["pos_bias"], packed["patch_w"],
                                             packed["lnv_g"], packed["lnv_b"])]
                 + [_layer_spec(a) for a in packed["vit_stack"]])
    v_flops, v_trans = _vit_cost(B, S, Kp, Dv, Hv, cfg["VIT_MLP"], Lv)
    v_bytes = _io_bytes(vit_inputs, [((B, S, Dv), jnp.float32)])

    vit_embeds = pl.pallas_call(
        functools.partial(_vit_kernel, heads=Hv, n_layers=Lv, eps=1e-5),
        out_shape=jax.ShapeDtypeStruct((B, S, Dv), jnp.float32),
        grid=(B, Lv),
        in_specs=vit_specs,
        out_specs=pl.BlockSpec((None, S, Dv), lambda b, l: (b, 0, 0)),
        scratch_shapes=[pltpu.VMEM((S, Dv), jnp.float32)],
        cost_estimate=pl.CostEstimate(flops=v_flops, transcendentals=v_trans,
                                      bytes_accessed=v_bytes),
        compiler_params=pltpu.CompilerParams(
            dimension_semantics=("parallel", "arbitrary"),
            vmem_limit_bytes=32 * 1024 * 1024),
    )(*vit_inputs)

    # ---------------------------- Q-Former call ------------------------------
    q_inputs = [vit_embeds, packed["query_tokens"], packed["vp_w"], packed["vp_b"],
                *packed["q_stack"]]
    q_specs = ([_batch_spec(vit_embeds)]
               + [_const_spec(a) for a in (packed["query_tokens"],
                                           packed["vp_w"], packed["vp_b"])]
               + [_layer_spec(a) for a in packed["q_stack"]])
    q_flops, q_trans = _qformer_cost(B, S, NQ, Dq, Dv, Hq, cfg["Q_MLP"], Lq, PROJ)
    q_bytes = _io_bytes(q_inputs, [((B, NQ, PROJ), jnp.float32)])

    pooled = pl.pallas_call(
        functools.partial(_qformer_kernel, heads=Hq, n_layers=Lq, eps=1e-12),
        out_shape=jax.ShapeDtypeStruct((B, NQ, PROJ), jnp.float32),
        grid=(B, Lq),
        in_specs=q_specs,
        out_specs=pl.BlockSpec((None, NQ, PROJ), lambda b, l: (b, 0, 0)),
        scratch_shapes=[pltpu.VMEM((NQ, Dq), jnp.float32)],
        cost_estimate=pl.CostEstimate(flops=q_flops, transcendentals=q_trans,
                                      bytes_accessed=q_bytes),
        compiler_params=pltpu.CompilerParams(
            dimension_semantics=("parallel", "arbitrary"),
            vmem_limit_bytes=32 * 1024 * 1024),
    )(*q_inputs)

    return vit_embeds, pooled


# --------------------------- pure-JAX reference ------------------------------

def _ref_linear(x, p, act=None):
    y = jnp.einsum("...k,kn->...n", x, p["w"],
                   precision=jax.lax.Precision.HIGHEST) + p["b"]
    if act == "gelu":
        y = jax.nn.gelu(y, approximate=False)
    return y


def _ref_layernorm(x, p, eps):
    m = jnp.mean(x, axis=-1, keepdims=True)
    v = jnp.mean((x - m) ** 2, axis=-1, keepdims=True)
    return (x - m) * jax.lax.rsqrt(v + eps) * p["g"] + p["b"]


def _ref_mha(q, k, v, H):
    B, Sq, D = q.shape
    Dh = D // H
    qh = q.reshape(B, Sq, H, Dh).transpose(0, 2, 1, 3)
    kh = k.reshape(B, -1, H, Dh).transpose(0, 2, 1, 3)
    vh = v.reshape(B, -1, H, Dh).transpose(0, 2, 1, 3)
    s = jnp.einsum("bhqd,bhkd->bhqk", qh, kh,
                   precision=jax.lax.Precision.HIGHEST) / np.sqrt(Dh)
    p = jax.nn.softmax(s, axis=-1)
    o = jnp.einsum("bhqk,bhkd->bhqd", p, vh, precision=jax.lax.Precision.HIGHEST)
    return o.transpose(0, 2, 1, 3).reshape(B, Sq, D)


def reference_forward(params, pixel_values, cfg):
    B, C, Himg, Wimg = pixel_values.shape
    P = cfg["PATCH"]
    nH, nW = Himg // P, Wimg // P
    vit = params["vit"]
    patches = (pixel_values.reshape(B, C, nH, P, nW, P)
               .transpose(0, 2, 4, 1, 3, 5)
               .reshape(B, nH * nW, C * P * P))
    x = _ref_linear(patches, vit["patch_embed"])
    cls = jnp.broadcast_to(vit["cls"], (B, 1, cfg["VIT_D"]))
    x = jnp.concatenate([cls, x], axis=1) + vit["pos"]
    for lp in vit["layers"]:
        h = _ref_layernorm(x, lp["ln1"], 1e-5)
        q = _ref_linear(h, lp["attn"]["q"])
        k = _ref_linear(h, lp["attn"]["k"])
        v = _ref_linear(h, lp["attn"]["v"])
        x = x + _ref_linear(_ref_mha(q, k, v, cfg["VIT_HEADS"]), lp["attn"]["o"])
        h = _ref_layernorm(x, lp["ln2"], 1e-5)
        x = x + _ref_linear(_ref_linear(h, lp["fc1"], "gelu"), lp["fc2"])
    vit_embeds = _ref_layernorm(x, params["ln_vision"], 1e-5)

    y = jnp.broadcast_to(params["query_tokens"], (B, cfg["NUM_QUERY"], cfg["Q_D"]))
    for lp in params["qformer"]["layers"]:
        sp = lp["self"]
        q = _ref_linear(y, sp["q"]); k = _ref_linear(y, sp["k"]); v = _ref_linear(y, sp["v"])
        att = _ref_linear(_ref_mha(q, k, v, cfg["Q_HEADS"]), sp["o"])
        y = _ref_layernorm(y + att, sp["ln"], 1e-12)
        cp = lp["cross"]
        q = _ref_linear(y, cp["q"])
        k = _ref_linear(vit_embeds, cp["k"]); v = _ref_linear(vit_embeds, cp["v"])
        att = _ref_linear(_ref_mha(q, k, v, cfg["Q_HEADS"]), cp["o"])
        y = _ref_layernorm(y + att, cp["ln"], 1e-12)
        h = _ref_linear(_ref_linear(y, lp["fc1"], "gelu"), lp["fc2"])
        y = _ref_layernorm(y + h, lp["ln_out"], 1e-12)
    pooled = _ref_linear(y, params["vision_proj"])
    return vit_embeds, pooled


# ------------------------------ parameter init -------------------------------

class ParamGen:
    def __init__(self, key):
        self.key = key

    def next(self):
        self.key, sub = jax.random.split(self.key)
        return sub

    def dense(self, k_in, k_out):
        return {"w": jax.random.normal(self.next(), (k_in, k_out), jnp.float32) * 0.02,
                "b": jnp.zeros((k_out,), jnp.float32)}

    def ln(self, d):
        return {"g": jnp.ones((d,), jnp.float32), "b": jnp.zeros((d,), jnp.float32)}


def init_params(key, cfg):
    pg = ParamGen(key)
    S = (cfg["IMG"] // cfg["PATCH"]) ** 2 + 1  # patches + CLS

    vit_layers = []
    for _ in range(cfg["VIT_LAYERS"]):
        vit_layers.append({
            "ln1": pg.ln(cfg["VIT_D"]),
            "attn": {"q": pg.dense(cfg["VIT_D"], cfg["VIT_D"]),
                     "k": pg.dense(cfg["VIT_D"], cfg["VIT_D"]),
                     "v": pg.dense(cfg["VIT_D"], cfg["VIT_D"]),
                     "o": pg.dense(cfg["VIT_D"], cfg["VIT_D"])},
            "ln2": pg.ln(cfg["VIT_D"]),
            "fc1": pg.dense(cfg["VIT_D"], cfg["VIT_MLP"]),
            "fc2": pg.dense(cfg["VIT_MLP"], cfg["VIT_D"]),
        })
    vit = {
        "patch_embed": pg.dense(cfg["C"] * cfg["PATCH"] ** 2, cfg["VIT_D"]),
        "cls": jax.random.normal(pg.next(), (1, 1, cfg["VIT_D"]), jnp.float32) * 0.02,
        "pos": jax.random.normal(pg.next(), (1, S, cfg["VIT_D"]), jnp.float32) * 0.02,
        "layers": vit_layers,
    }

    q_layers = []
    for _ in range(cfg["Q_LAYERS"]):
        q_layers.append({
            "self": {"q": pg.dense(cfg["Q_D"], cfg["Q_D"]),
                     "k": pg.dense(cfg["Q_D"], cfg["Q_D"]),
                     "v": pg.dense(cfg["Q_D"], cfg["Q_D"]),
                     "o": pg.dense(cfg["Q_D"], cfg["Q_D"]),
                     "ln": pg.ln(cfg["Q_D"])},
            "cross": {"q": pg.dense(cfg["Q_D"], cfg["Q_D"]),
                      "k": pg.dense(cfg["VIT_D"], cfg["Q_D"]),
                      "v": pg.dense(cfg["VIT_D"], cfg["Q_D"]),
                      "o": pg.dense(cfg["Q_D"], cfg["Q_D"]),
                      "ln": pg.ln(cfg["Q_D"])},
            "fc1": pg.dense(cfg["Q_D"], cfg["Q_MLP"]),
            "fc2": pg.dense(cfg["Q_MLP"], cfg["Q_D"]),
            "ln_out": pg.ln(cfg["Q_D"]),
        })

    return {
        "vit": vit,
        "ln_vision": pg.ln(cfg["VIT_D"]),
        "query_tokens": jax.random.normal(pg.next(), (1, cfg["NUM_QUERY"], cfg["Q_D"]),
                                          jnp.float32) * 0.02,
        "qformer": {"layers": q_layers},
        "vision_proj": pg.dense(cfg["Q_D"], cfg["PROJ_D"]),
    }


# ---------------------------------- main -------------------------------------

if __name__ == "__main__":
    key = jax.random.PRNGKey(0)
    pkey, xkey = jax.random.split(key)
    params = init_params(pkey, CFG)
    packed = pack_params(params, CFG)
    pixel_values = jax.random.normal(
        xkey, (CFG["B"], CFG["C"], CFG["IMG"], CFG["IMG"]), jnp.float32)

    fwd = jax.jit(lambda pv: blip2_encoder_forward(packed, pixel_values=pv, cfg=CFG))
    vit_embeds, pooled_output = fwd(pixel_values)
    jax.block_until_ready((vit_embeds, pooled_output))

    S = (CFG["IMG"] // CFG["PATCH"]) ** 2 + 1
    assert vit_embeds.shape == (CFG["B"], S, CFG["VIT_D"])
    assert pooled_output.shape == (CFG["B"], CFG["NUM_QUERY"], CFG["PROJ_D"])
    assert bool(jnp.all(jnp.isfinite(vit_embeds))) and bool(jnp.all(jnp.isfinite(pooled_output)))

    # Numerical check against a plain-JAX f32 reference of the same module
    # semantics (kernel uses bf16 MXU operands, hence the loose tolerance).
    ref_vit, ref_pooled = reference_forward(params, pixel_values, CFG)
    np.testing.assert_allclose(np.asarray(vit_embeds), np.asarray(ref_vit),
                               rtol=5e-2, atol=5e-2)
    np.testing.assert_allclose(np.asarray(pooled_output), np.asarray(ref_pooled),
                               rtol=5e-2, atol=5e-2)

    print("KERNEL_OK")
</pallas_src>

<mosaic_0001>
module attributes {stable_mosaic.version = 11 : i64} {
  func.func @_vit_kernel(%arg0: i32, %arg1: i32, %arg2: memref<1x5x256xbf16, #tpu.memory_space<vmem>>, %arg3: memref<5x32xf32, #tpu.memory_space<vmem>>, %arg4: memref<256x32xbf16, #tpu.memory_space<vmem>>, %arg5: memref<1x32xf32, #tpu.memory_space<vmem>>, %arg6: memref<1x32xf32, #tpu.memory_space<vmem>>, %arg7: memref<1x1x32xf32, #tpu.memory_space<vmem>>, %arg8: memref<1x1x32xf32, #tpu.memory_space<vmem>>, %arg9: memref<1x12x32x8xbf16, #tpu.memory_space<vmem>>, %arg10: memref<1x12x1x8xf32, #tpu.memory_space<vmem>>, %arg11: memref<1x4x8x32xbf16, #tpu.memory_space<vmem>>, %arg12: memref<1x1x32xf32, #tpu.memory_space<vmem>>, %arg13: memref<1x1x32xf32, #tpu.memory_space<vmem>>, %arg14: memref<1x1x32xf32, #tpu.memory_space<vmem>>, %arg15: memref<1x32x64xbf16, #tpu.memory_space<vmem>>, %arg16: memref<1x1x64xf32, #tpu.memory_space<vmem>>, %arg17: memref<1x64x32xbf16, #tpu.memory_space<vmem>>, %arg18: memref<1x1x32xf32, #tpu.memory_space<vmem>>, %arg19: memref<1x5x32xf32, #tpu.memory_space<vmem>>, %arg20: memref<5x32xf32, #tpu.memory_space<vmem>>) attributes {dimension_semantics = [#tpu.dimension_semantics<parallel>, #tpu.dimension_semantics<arbitrary>], iteration_bounds = array<i64: 2, 2>, scalar_prefetch = 0 : i64, scratch_operands = 1 : i64, tpu.core_type = #tpu.core_type<tc>, window_params = [{transform_indices = @transform_0, window_bounds = array<i64: 1, 5, 256>}, {pipeline_mode = #tpu.pipeline_mode<synchronous>, transform_indices = @transform_1, window_bounds = array<i64: 5, 32>}, {pipeline_mode = #tpu.pipeline_mode<synchronous>, transform_indices = @transform_2, window_bounds = array<i64: 256, 32>}, {pipeline_mode = #tpu.pipeline_mode<synchronous>, transform_indices = @transform_3, window_bounds = array<i64: 1, 32>}, {pipeline_mode = #tpu.pipeline_mode<synchronous>, transform_indices = @transform_4, window_bounds = array<i64: 1, 32>}, {transform_indices = @transform_5, window_bounds = array<i64: 1, 1, 32>}, {transform_indices = @transform_6, window_bounds = array<i64: 1, 1, 32>}, {transform_indices = @transform_7, window_bounds = array<i64: 1, 12, 32, 8>}, {transform_indices = @transform_8, window_bounds = array<i64: 1, 12, 1, 8>}, {transform_indices = @transform_9, window_bounds = array<i64: 1, 4, 8, 32>}, {transform_indices = @transform_10, window_bounds = array<i64: 1, 1, 32>}, {transform_indices = @transform_11, window_bounds = array<i64: 1, 1, 32>}, {transform_indices = @transform_12, window_bounds = array<i64: 1, 1, 32>}, {transform_indices = @transform_13, window_bounds = array<i64: 1, 32, 64>}, {transform_indices = @transform_14, window_bounds = array<i64: 1, 1, 64>}, {transform_indices = @transform_15, window_bounds = array<i64: 1, 64, 32>}, {transform_indices = @transform_16, window_bounds = array<i64: 1, 1, 32>}, {transform_indices = @transform_17, window_bounds = array<i64: 1, 5, 32>}]} {
    %c0_i32 = arith.constant 0 : i32
    %0 = arith.cmpi eq, %arg1, %c0_i32 : i32
    %1 = arith.extui %0 : i1 to i32
    %c0_i32_0 = arith.constant 0 : i32
    %2 = arith.cmpi ne, %1, %c0_i32_0 : i32
    scf.if %2 {
      %c0_76 = arith.constant 0 : index
      %c0_77 = arith.constant 0 : index
      %c0_78 = arith.constant 0 : index
      %152 = vector.load %arg2[%c0_76, %c0_77, %c0_78] : memref<1x5x256xbf16, #tpu.memory_space<vmem>>, vector<1x5x256xbf16>
      %153 = vector.shape_cast %152 : vector<1x5x256xbf16> to vector<5x256xbf16>
      %c0_79 = arith.constant 0 : index
      %c0_80 = arith.constant 0 : index
      %154 = vector.load %arg4[%c0_79, %c0_80] : memref<256x32xbf16, #tpu.memory_space<vmem>>, vector<256x32xbf16>
      %cst_81 = arith.constant dense<0.000000e+00> : vector<5x32xf32>
      %155 = tpu.matmul %153, %154, %cst_81 {dimension_numbers = #tpu.dot_dimension_numbers<[1], [0], [0], [1], [0, 0, 1, 1], [], []>} : vector<5x256xbf16>, vector<256x32xbf16>, vector<5x32xf32> -> vector<5x32xf32>
      %c0_82 = arith.constant 0 : index
      %c0_83 = arith.constant 0 : index
      %156 = vector.load %arg3[%c0_82, %c0_83] : memref<5x32xf32, #tpu.memory_space<vmem>>, vector<5x32xf32>
      %157 = arith.addf %155, %156 : vector<5x32xf32>
      %c0_84 = arith.constant 0 : index
      %c0_85 = arith.constant 0 : index
      %158 = vector.load %arg20[%c0_84, %c0_85] : memref<5x32xf32, #tpu.memory_space<vmem>>, vector<5x32xf32>
      tpu.vector_store %arg20[%c0_84, %c0_85], %157 {strides = array<i32>} : memref<5x32xf32, #tpu.memory_space<vmem>>, vector<5x32xf32>,
    } else {
    }
    %c0 = arith.constant 0 : index
    %c0_1 = arith.constant 0 : index
    %3 = vector.load %arg20[%c0, %c0_1] : memref<5x32xf32, #tpu.memory_space<vmem>>, vector<5x32xf32>
    %c0_2 = arith.constant 0 : index
    %c0_3 = arith.constant 0 : index
    %c0_4 = arith.constant 0 : index
    %4 = vector.load %arg7[%c0_2, %c0_3, %c0_4] : memref<1x1x32xf32, #tpu.memory_space<vmem>>, vector<1x1x32xf32>
    %5 = vector.shape_cast %4 : vector<1x1x32xf32> to vector<1x32xf32>
    %c0_5 = arith.constant 0 : index
    %c0_6 = arith.constant 0 : index
    %c0_7 = arith.constant 0 : index
    %6 = vector.load %arg8[%c0_5, %c0_6, %c0_7] : memref<1x1x32xf32, #tpu.memory_space<vmem>>, vector<1x1x32xf32>
    %7 = vector.shape_cast %6 : vector<1x1x32xf32> to vector<1x32xf32>
    %cst = arith.constant dense<0.000000e+00> : vector<5xf32>
    %8 = vector.multi_reduction <add>, %3, %cst [1] : vector<5x32xf32> to vector<5xf32>
    %9 = vector.shape_cast %8 : vector<5xf32> to vector<5x1xf32>
    %cst_8 = arith.constant 3.200000e+01 : f32
    %10 = vector.broadcast %cst_8 : f32 to vector<5x1xf32>
    %11 = arith.divf %9, %10 : vector<5x1xf32>
    %12 = vector.broadcast %11 : vector<5x1xf32> to vector<5x32xf32>
    %13 = arith.subf %3, %12 : vector<5x32xf32>
    %14 = arith.mulf %13, %13 : vector<5x32xf32>
    %cst_9 = arith.constant dense<0.000000e+00> : vector<5xf32>
    %15 = vector.multi_reduction <add>, %14, %cst_9 [1] : vector<5x32xf32> to vector<5xf32>
    %16 = vector.shape_cast %15 : vector<5xf32> to vector<5x1xf32>
    %cst_10 = arith.constant 3.200000e+01 : f32
    %17 = vector.broadcast %cst_10 : f32 to vector<5x1xf32>
    %18 = arith.divf %16, %17 : vector<5x1xf32>
    %cst_11 = arith.constant 9.99999974E-6 : f32
    %19 = vector.broadcast %cst_11 : f32 to vector<5x1xf32>
    %20 = arith.addf %18, %19 : vector<5x1xf32>
    %21 = math.rsqrt %20 : vector<5x1xf32>
    %22 = vector.broadcast %21 : vector<5x1xf32> to vector<5x32xf32>
    %23 = arith.mulf %13, %22 : vector<5x32xf32>
    %24 = vector.broadcast %5 : vector<1x32xf32> to vector<5x32xf32>
    %25 = arith.mulf %23, %24 : vector<5x32xf32>
    %26 = vector.broadcast %7 : vector<1x32xf32> to vector<5x32xf32>
    %27 = arith.addf %25, %26 : vector<5x32xf32>
    %c0_12 = arith.constant 0 : index
    %c0_13 = arith.constant 0 : index
    %c0_14 = arith.constant 0 : index
    %c0_15 = arith.constant 0 : index
    %28 = vector.load %arg9[%c0_12, %c0_13, %c0_14, %c0_15] : memref<1x12x32x8xbf16, #tpu.memory_space<vmem>>, vector<1x12x32x8xbf16>
    %29 = vector.shape_cast %28 : vector<1x12x32x8xbf16> to vector<12x32x8xbf16>
    %c0_16 = arith.constant 0 : index
    %c0_17 = arith.constant 0 : index
    %c0_18 = arith.constant 0 : index
    %c0_19 = arith.constant 0 : index
    %30 = vector.load %arg10[%c0_16, %c0_17, %c0_18, %c0_19] : memref<1x12x1x8xf32, #tpu.memory_space<vmem>>, vector<1x12x1x8xf32>
    %31 = vector.shape_cast %30 : vector<1x12x1x8xf32> to vector<12x1x8xf32>
    %32 = arith.truncf %27 : vector<5x32xf32> to vector<5x32xbf16>
    %33 = vector.shape_cast %32 : vector<5x32xbf16> to vector<1x5x32xbf16>
    %34 = vector.shape_cast %33 : vector<1x5x32xbf16> to vector<1x5x32xbf16>
    %35 = vector.broadcast %34 : vector<1x5x32xbf16> to vector<12x5x32xbf16>
    "tpu.trace_start"() <{level = 10 : i32, message = "gsd,gdf->gsf"}> : () -> ()
    %cst_20 = arith.constant dense<0.000000e+00> : vector<12x5x8xf32>
    %36 = tpu.matmul %35, %29, %cst_20 {dimension_numbers = #tpu.dot_dimension_numbers<[2], [1], [1], [2], [0, 0, 0, 1, 1, 2], [0], [0]>} : vector<12x5x32xbf16>, vector<12x32x8xbf16>, vector<12x5x8xf32> -> vector<12x5x8xf32>
    "tpu.trace_stop"() : () -> ()
    %37 = vector.broadcast %31 : vector<12x1x8xf32> to vector<12x5x8xf32>
    %38 = arith.addf %36, %37 : vector<12x5x8xf32>
    %39 = vector.extract_strided_slice %38 {offsets = [0, 0, 0], sizes = [4, 5, 8], strides = [1, 1, 1]} : vector<12x5x8xf32> to vector<4x5x8xf32>
    %40 = vector.extract_strided_slice %38 {offsets = [4, 0, 0], sizes = [4, 5, 8], strides = [1, 1, 1]} : vector<12x5x8xf32> to vector<4x5x8xf32>
    %41 = vector.extract_strided_slice %38 {offsets = [8, 0, 0], sizes = [4, 5, 8], strides = [1, 1, 1]} : vector<12x5x8xf32> to vector<4x5x8xf32>
    %c0_21 = arith.constant 0 : index
    %c0_22 = arith.constant 0 : index
    %c0_23 = arith.constant 0 : index
    %c0_24 = arith.constant 0 : index
    %42 = vector.load %arg11[%c0_21, %c0_22, %c0_23, %c0_24] : memref<1x4x8x32xbf16, #tpu.memory_space<vmem>>, vector<1x4x8x32xbf16>
    %43 = vector.shape_cast %42 : vector<1x4x8x32xbf16> to vector<4x8x32xbf16>
    %c0_25 = arith.constant 0 : index
    %c0_26 = arith.constant 0 : index
    %c0_27 = arith.constant 0 : index
    %44 = vector.load %arg12[%c0_25, %c0_26, %c0_27] : memref<1x1x32xf32, #tpu.memory_space<vmem>>, vector<1x1x32xf32>
    %45 = vector.shape_cast %44 : vector<1x1x32xf32> to vector<1x32xf32>
    %46 = arith.truncf %39 : vector<4x5x8xf32> to vector<4x5x8xbf16>
    %47 = arith.truncf %40 : vector<4x5x8xf32> to vector<4x5x8xbf16>
    "tpu.trace_start"() <{level = 10 : i32, message = "hqd,hkd->hqk"}> : () -> ()
    %cst_28 = arith.constant dense<0.000000e+00> : vector<4x5x5xf32>
    %48 = tpu.matmul %46, %47, %cst_28 {dimension_numbers = #tpu.dot_dimension_numbers<[2], [2], [1], [1], [0, 0, 0, 1, 1, 1], [0], [0]>} : vector<4x5x8xbf16>, vector<4x5x8xbf16>, vector<4x5x5xf32> -> vector<4x5x5xf32>
    "tpu.trace_stop"() : () -> ()
    %cst_29 = arith.constant dense<0xFF800000> : vector<4x5xf32>
    %49 = vector.multi_reduction <maximumf>, %48, %cst_29 [2] : vector<4x5x5xf32> to vector<4x5xf32>
    %50 = vector.shape_cast %49 : vector<4x5xf32> to vector<4x5x1xf32>
    %51 = vector.broadcast %50 : vector<4x5x1xf32> to vector<4x5x5xf32>
    %52 = arith.subf %48, %51 : vector<4x5x5xf32>
    %53 = math.exp %52 : vector<4x5x5xf32>
    %cst_30 = arith.constant dense<0.000000e+00> : vector<4x5xf32>
    %54 = vector.multi_reduction <add>, %53, %cst_30 [2] : vector<4x5x5xf32> to vector<4x5xf32>
    %55 = vector.shape_cast %54 : vector<4x5xf32> to vector<4x5x1xf32>
    %56 = tpu.reciprocal %55 {approx = true} : vector<4x5x1xf32> -> vector<4x5x1xf32>
    %57 = vector.broadcast %56 : vector<4x5x1xf32> to vector<4x5x5xf32>
    %58 = arith.mulf %53, %57 : vector<4x5x5xf32>
    %59 = arith.truncf %58 : vector<4x5x5xf32> to vector<4x5x5xbf16>
    %60 = arith.truncf %41 : vector<4x5x8xf32> to vector<4x5x8xbf16>
    "tpu.trace_start"() <{level = 10 : i32, message = "hqk,hkd->hqd"}> : () -> ()
    %cst_31 = arith.constant dense<0.000000e+00> : vector<4x5x8xf32>
    %61 = tpu.matmul %59, %60, %cst_31 {dimension_numbers = #tpu.dot_dimension_numbers<[2], [1], [1], [2], [0, 0, 0, 1, 1, 2], [0], [0]>} : vector<4x5x5xbf16>, vector<4x5x8xbf16>, vector<4x5x8xf32> -> vector<4x5x8xf32>
    "tpu.trace_stop"() : () -> ()
    %62 = arith.truncf %61 : vector<4x5x8xf32> to vector<4x5x8xbf16>
    "tpu.trace_start"() <{level = 10 : i32, message = "hqd,hdf->hqf"}> : () -> ()
    %cst_32 = arith.constant dense<0.000000e+00> : vector<4x5x32xf32>
    %63 = tpu.matmul %62, %43, %cst_32 {dimension_numbers = #tpu.dot_dimension_numbers<[2], [1], [1], [2], [0, 0, 0, 1, 1, 2], [0], [0]>} : vector<4x5x8xbf16>, vector<4x8x32xbf16>, vector<4x5x32xf32> -> vector<4x5x32xf32>
    "tpu.trace_stop"() : () -> ()
    %cst_33 = arith.constant dense<0.000000e+00> : vector<5x32xf32>
    %64 = vector.multi_reduction <add>, %63, %cst_33 [0] : vector<4x5x32xf32> to vector<5x32xf32>
    %65 = vector.broadcast %45 : vector<1x32xf32> to vector<5x32xf32>
    %66 = arith.addf %64, %65 : vector<5x32xf32>
    %67 = arith.addf %3, %66 : vector<5x32xf32>
    %c0_34 = arith.constant 0 : index
    %c0_35 = arith.constant 0 : index
    %c0_36 = arith.constant 0 : index
    %68 = vector.load %arg13[%c0_34, %c0_35, %c0_36] : memref<1x1x32xf32, #tpu.memory_space<vmem>>, vector<1x1x32xf32>
    %69 = vector.shape_cast %68 : vector<1x1x32xf32> to vector<1x32xf32>
    %c0_37 = arith.constant 0 : index
    %c0_38 = arith.constant 0 : index
    %c0_39 = arith.constant 0 : index
    %70 = vector.load %arg14[%c0_37, %c0_38, %c0_39] : memref<1x1x32xf32, #tpu.memory_space<vmem>>, vector<1x1x32xf32>
    %71 = vector.shape_cast %70 : vector<1x1x32xf32> to vector<1x32xf32>
    %cst_40 = arith.constant dense<0.000000e+00> : vector<5xf32>
    %72 = vector.multi_reduction <add>, %67, %cst_40 [1] : vector<5x32xf32> to vector<5xf32>
    %73 = vector.shape_cast %72 : vector<5xf32> to vector<5x1xf32>
    %cst_41 = arith.constant 3.200000e+01 : f32
    %74 = vector.broadcast %cst_41 : f32 to vector<5x1xf32>
    %75 = arith.divf %73, %74 : vector<5x1xf32>
    %76 = vector.broadcast %75 : vector<5x1xf32> to vector<5x32xf32>
    %77 = arith.subf %67, %76 : vector<5x32xf32>
    %78 = arith.mulf %77, %77 : vector<5x32xf32>
    %cst_42 = arith.constant dense<0.000000e+00> : vector<5xf32>
    %79 = vector.multi_reduction <add>, %78, %cst_42 [1] : vector<5x32xf32> to vector<5xf32>
    %80 = vector.shape_cast %79 : vector<5xf32> to vector<5x1xf32>
    %cst_43 = arith.constant 3.200000e+01 : f32
    %81 = vector.broadcast %cst_43 : f32 to vector<5x1xf32>
    %82 = arith.divf %80, %81 : vector<5x1xf32>
    %cst_44 = arith.constant 9.99999974E-6 : f32
    %83 = vector.broadcast %cst_44 : f32 to vector<5x1xf32>
    %84 = arith.addf %82, %83 : vector<5x1xf32>
    %85 = math.rsqrt %84 : vector<5x1xf32>
    %86 = vector.broadcast %85 : vector<5x1xf32> to vector<5x32xf32>
    %87 = arith.mulf %77, %86 : vector<5x32xf32>
    %88 = vector.broadcast %69 : vector<1x32xf32> to vector<5x32xf32>
    %89 = arith.mulf %87, %88 : vector<5x32xf32>
    %90 = vector.broadcast %71 : vector<1x32xf32> to vector<5x32xf32>
    %91 = arith.addf %89, %90 : vector<5x32xf32>
    %92 = arith.truncf %91 : vector<5x32xf32> to vector<5x32xbf16>
    %c0_45 = arith.constant 0 : index
    %c0_46 = arith.constant 0 : index
    %c0_47 = arith.constant 0 : index
    %93 = vector.load %arg15[%c0_45, %c0_46, %c0_47] : memref<1x32x64xbf16, #tpu.memory_space<vmem>>, vector<1x32x64xbf16>
    %94 = vector.shape_cast %93 : vector<1x32x64xbf16> to vector<32x64xbf16>
    %cst_48 = arith.constant dense<0.000000e+00> : vector<5x64xf32>
    %95 = tpu.matmul %92, %94, %cst_48 {dimension_numbers = #tpu.dot_dimension_numbers<[1], [0], [0], [1], [0, 0, 1, 1], [], []>} : vector<5x32xbf16>, vector<32x64xbf16>, vector<5x64xf32> -> vector<5x64xf32>
    %c0_49 = arith.constant 0 : index
    %c0_50 = arith.constant 0 : index
    %c0_51 = arith.constant 0 : index
    %96 = vector.load %arg16[%c0_49, %c0_50, %c0_51] : memref<1x1x64xf32, #tpu.memory_space<vmem>>, vector<1x1x64xf32>
    %97 = vector.shape_cast %96 : vector<1x1x64xf32> to vector<1x64xf32>
    %98 = vector.broadcast %97 : vector<1x64xf32> to vector<5x64xf32>
    %99 = arith.addf %95, %98 : vector<5x64xf32>
    %cst_52 = arith.constant 5.000000e-01 : f32
    %100 = vector.broadcast %cst_52 : f32 to vector<5x64xf32>
    %101 = arith.mulf %100, %99 : vector<5x64xf32>
    %cst_53 = arith.constant 0.707106769 : f32
    %102 = vector.broadcast %cst_53 : f32 to vector<5x64xf32>
    %103 = arith.mulf %99, %102 : vector<5x64xf32>
    %104 = math.absf %103 : vector<5x64xf32>
    %cst_54 = arith.constant 0.327591091 : f32
    %105 = vector.broadcast %cst_54 : f32 to vector<5x64xf32>
    %106 = arith.mulf %105, %104 : vector<5x64xf32>
    %cst_55 = arith.constant 1.000000e+00 : f32
    %107 = vector.broadcast %cst_55 : f32 to vector<5x64xf32>
    %108 = arith.addf %107, %106 : vector<5x64xf32>
    %109 = tpu.reciprocal %108 {approx = true} : vector<5x64xf32> -> vector<5x64xf32>
    %cst_56 = arith.constant 1.06140542 : f32
    %110 = vector.broadcast %cst_56 : f32 to vector<5x64xf32>
    %111 = arith.mulf %110, %109 : vector<5x64xf32>
    %cst_57 = arith.constant -1.45315206 : f32
    %112 = vector.broadcast %cst_57 : f32 to vector<5x64xf32>
    %113 = arith.addf %111, %112 : vector<5x64xf32>
    %114 = arith.mulf %113, %109 : vector<5x64xf32>
    %cst_58 = arith.constant 1.42141378 : f32
    %115 = vector.broadcast %cst_58 : f32 to vector<5x64xf32>
    %116 = arith.addf %114, %115 : vector<5x64xf32>
    %117 = arith.mulf %116, %109 : vector<5x64xf32>
    %cst_59 = arith.constant -0.284496725 : f32
    %118 = vector.broadcast %cst_59 : f32 to vector<5x64xf32>
    %119 = arith.addf %117, %118 : vector<5x64xf32>
    %120 = arith.mulf %119, %109 : vector<5x64xf32>
    %cst_60 = arith.constant 0.254829586 : f32
    %121 = vector.broadcast %cst_60 : f32 to vector<5x64xf32>
    %122 = arith.addf %120, %121 : vector<5x64xf32>
    %123 = arith.mulf %122, %109 : vector<5x64xf32>
    %cst_61 = arith.constant 0.000000e+00 : f32
    %124 = vector.broadcast %cst_61 : f32 to vector<5x64xf32>
    %125 = arith.subf %124, %104 : vector<5x64xf32>
    %126 = arith.mulf %125, %104 : vector<5x64xf32>
    %127 = math.exp %126 : vector<5x64xf32>
    %128 = arith.mulf %123, %127 : vector<5x64xf32>
    %cst_62 = arith.constant 1.000000e+00 : f32
    %129 = vector.broadcast %cst_62 : f32 to vector<5x64xf32>
    %130 = arith.subf %129, %128 : vector<5x64xf32>
    %cst_63 = arith.constant 0.000000e+00 : f32
    %131 = vector.broadcast %cst_63 : f32 to vector<5x64xf32>
    %132 = arith.cmpf oge, %103, %131 : vector<5x64xf32>
    %cst_64 = arith.constant 0.000000e+00 : f32
    %133 = vector.broadcast %cst_64 : f32 to vector<5x64xf32>
    %134 = arith.subf %133, %130 : vector<5x64xf32>
    %135 = arith.select %132, %130, %134 : vector<5x64xi1>, vector<5x64xf32>
    %cst_65 = arith.constant 1.000000e+00 : f32
    %136 = vector.broadcast %cst_65 : f32 to vector<5x64xf32>
    %137 = arith.addf %136, %135 : vector<5x64xf32>
    %138 = arith.mulf %101, %137 : vector<5x64xf32>
    %139 = arith.truncf %138 : vector<5x64xf32> to vector<5x64xbf16>
    %c0_66 = arith.constant 0 : index
    %c0_67 = arith.constant 0 : index
    %c0_68 = arith.constant 0 : index
    %140 = vector.load %arg17[%c0_66, %c0_67, %c0_68] : memref<1x64x32xbf16, #tpu.memory_space<vmem>>, vector<1x64x32xbf16>
    %141 = vector.shape_cast %140 : vector<1x64x32xbf16> to vector<64x32xbf16>
    %cst_69 = arith.constant dense<0.000000e+00> : vector<5x32xf32>
    %142 = tpu.matmul %139, %141, %cst_69 {dimension_numbers = #tpu.dot_dimension_numbers<[1], [0], [0], [1], [0, 0, 1, 1], [], []>} : vector<5x64xbf16>, vector<64x32xbf16>, vector<5x32xf32> -> vector<5x32xf32>
    %143 = arith.addf %67, %142 : vector<5x32xf32>
    %c0_70 = arith.constant 0 : index
    %c0_71 = arith.constant 0 : index
    %c0_72 = arith.constant 0 : index
    %144 = vector.load %arg18[%c0_70, %c0_71, %c0_72] : memref<1x1x32xf32, #tpu.memory_space<vmem>>, vector<1x1x32xf32>
    %145 = vector.shape_cast %144 : vector<1x1x32xf32> to vector<1x32xf32>
    %146 = vector.broadcast %145 : vector<1x32xf32> to vector<5x32xf32>
    %147 = arith.addf %143, %146 : vector<5x32xf32>
    %c0_73 = arith.constant 0 : index
    %c0_74 = arith.constant 0 : index
    %148 = vector.load %arg20[%c0_73, %c0_74] : memref<5x32xf32, #tpu.memory_space<vmem>>, vector<5x32xf32>
    tpu.vector_store %arg20[%c0_73, %c0_74], %147 {strides = array<i32>} : memref<5x32xf32, #tpu.memory_space<vmem>>, vector<5x32xf32>,
    %c1_i32 = arith.constant 1 : i32
    %149 = arith.cmpi eq, %arg1, %c1_i32 : i32
    %150 = arith.extui %149 : i1 to i32
    %c0_i32_75 = arith.constant 0 : i32
    %151 = arith.cmpi ne, %150, %c0_i32_75 : i32
    scf.if %151 {
      %c0_76 = arith.constant 0 : index
      %c0_77 = arith.constant 0 : index
      %152 = vector.load %arg5[%c0_76, %c0_77] : memref<1x32xf32, #tpu.memory_space<vmem>>, vector<1x32xf32>
      %c0_78 = arith.constant 0 : index
      %c0_79 = arith.constant 0 : index
      %153 = vector.load %arg6[%c0_78, %c0_79] : memref<1x32xf32, #tpu.memory_space<vmem>>, vector<1x32xf32>
      %cst_80 = arith.constant dense<0.000000e+00> : vector<5xf32>
      %154 = vector.multi_reduction <add>, %147, %cst_80 [1] : vector<5x32xf32> to vector<5xf32>
      %155 = vector.shape_cast %154 : vector<5xf32> to vector<5x1xf32>
      %cst_81 = arith.constant 3.200000e+01 : f32
      %156 = vector.broadcast %cst_81 : f32 to vector<5x1xf32>
      %157 = arith.divf %155, %156 : vector<5x1xf32>
      %158 = vector.broadcast %157 : vector<5x1xf32> to vector<5x32xf32>
      %159 = arith.subf %147, %158 : vector<5x32xf32>
      %160 = arith.mulf %159, %159 : vector<5x32xf32>
      %cst_82 = arith.constant dense<0.000000e+00> : vector<5xf32>
      %161 = vector.multi_reduction <add>, %160, %cst_82 [1] : vector<5x32xf32> to vector<5xf32>
      %162 = vector.shape_cast %161 : vector<5xf32> to vector<5x1xf32>
      %cst_83 = arith.constant 3.200000e+01 : f32
      %163 = vector.broadcast %cst_83 : f32 to vector<5x1xf32>
      %164 = arith.divf %162, %163 : vector<5x1xf32>
      %cst_84 = arith.constant 9.99999974E-6 : f32
      %165 = vector.broadcast %cst_84 : f32 to vector<5x1xf32>
      %166 = arith.addf %164, %165 : vector<5x1xf32>
      %167 = math.rsqrt %166 : vector<5x1xf32>
      %168 = vector.broadcast %167 : vector<5x1xf32> to vector<5x32xf32>
      %169 = arith.mulf %159, %168 : vector<5x32xf32>
      %170 = vector.broadcast %152 : vector<1x32xf32> to vector<5x32xf32>
      %171 = arith.mulf %169, %170 : vector<5x32xf32>
      %172 = vector.broadcast %153 : vector<1x32xf32> to vector<5x32xf32>
      %173 = arith.addf %171, %172 : vector<5x32xf32>
      %c0_85 = arith.constant 0 : index
      %c0_86 = arith.constant 0 : index
      %c0_87 = arith.constant 0 : index
      %174 = vector.load %arg19[%c0_85, %c0_86, %c0_87] : memref<1x5x32xf32, #tpu.memory_space<vmem>>, vector<1x5x32xf32>
      %175 = vector.shape_cast %174 : vector<1x5x32xf32> to vector<5x32xf32>
      %176 = vector.shape_cast %173 : vector<5x32xf32> to vector<1x5x32xf32>
      tpu.vector_store %arg19[%c0_85, %c0_86, %c0_87], %176 {strides = array<i32>} : memref<1x5x32xf32, #tpu.memory_space<vmem>>, vector<1x5x32xf32>,
    } else {
    }
    return
  }
  func.func @transform_0(%arg0: i32, %arg1: i32) -> (i32, i32, i32) {
    %c0_i32 = arith.constant 0 : i32
    %c0_i32_0 = arith.constant 0 : i32
    %c0_i32_1 = arith.constant 0 : i32
    return %arg0, %c0_i32, %c0_i32_0 : i32, i32, i32
  }
  func.func @transform_1(%arg0: i32, %arg1: i32) -> (i32, i32) {
    %c0_i32 = arith.constant 0 : i32
    %c0_i32_0 = arith.constant 0 : i32
    %c0_i32_1 = arith.constant 0 : i32
    return %c0_i32, %c0_i32_0 : i32, i32
  }
  func.func @transform_2(%arg0: i32, %arg1: i32) -> (i32, i32) {
    %c0_i32 = arith.constant 0 : i32
    %c0_i32_0 = arith.constant 0 : i32
    %c0_i32_1 = arith.constant 0 : i32
    return %c0_i32, %c0_i32_0 : i32, i32
  }
  func.func @transform_3(%arg0: i32, %arg1: i32) -> (i32, i32) {
    %c0_i32 = arith.constant 0 : i32
    %c0_i32_0 = arith.constant 0 : i32
    %c0_i32_1 = arith.constant 0 : i32
    return %c0_i32, %c0_i32_0 : i32, i32
  }
  func.func @transform_4(%arg0: i32, %arg1: i32) -> (i32, i32) {
    %c0_i32 = arith.constant 0 : i32
    %c0_i32_0 = arith.constant 0 : i32
    %c0_i32_1 = arith.constant 0 : i32
    return %c0_i32, %c0_i32_0 : i32, i32
  }
  func.func @transform_5(%arg0: i32, %arg1: i32) -> (i32, i32, i32) {
    %c0_i32 = arith.constant 0 : i32
    %c0_i32_0 = arith.constant 0 : i32
    %c0_i32_1 = arith.constant 0 : i32
    return %arg1, %c0_i32, %c0_i32_0 : i32, i32, i32
  }
  func.func @transform_6(%arg0: i32, %arg1: i32) -> (i32, i32, i32) {
    %c0_i32 = arith.constant 0 : i32
    %c0_i32_0 = arith.constant 0 : i32
    %c0_i32_1 = arith.constant 0 : i32
    return %arg1, %c0_i32, %c0_i32_0 : i32, i32, i32
  }
  func.func @transform_7(%arg0: i32, %arg1: i32) -> (i32, i32, i32, i32) {
    %c0_i32 = arith.constant 0 : i32
    %c0_i32_0 = arith.constant 0 : i32
    %c0_i32_1 = arith.constant 0 : i32
    %c0_i32_2 = arith.constant 0 : i32
    return %arg1, %c0_i32, %c0_i32_0, %c0_i32_1 : i32, i32, i32, i32
  }
  func.func @transform_8(%arg0: i32, %arg1: i32) -> (i32, i32, i32, i32) {
    %c0_i32 = arith.constant 0 : i32
    %c0_i32_0 = arith.constant 0 : i32
    %c0_i32_1 = arith.constant 0 : i32
    %c0_i32_2 = arith.constant 0 : i32
    return %arg1, %c0_i32, %c0_i32_0, %c0_i32_1 : i32, i32, i32, i32
  }
  func.func @transform_9(%arg0: i32, %arg1: i32) -> (i32, i32, i32, i32) {
    %c0_i32 = arith.constant 0 : i32
    %c0_i32_0 = arith.constant 0 : i32
    %c0_i32_1 = arith.constant 0 : i32
    %c0_i32_2 = arith.constant 0 : i32
    return %arg1, %c0_i32, %c0_i32_0, %c0_i32_1 : i32, i32, i32, i32
  }
  func.func @transform_10(%arg0: i32, %arg1: i32) -> (i32, i32, i32) {
    %c0_i32 = arith.constant 0 : i32
    %c0_i32_0 = arith.constant 0 : i32
    %c0_i32_1 = arith.constant 0 : i32
    return %arg1, %c0_i32, %c0_i32_0 : i32, i32, i32
  }
  func.func @transform_11(%arg0: i32, %arg1: i32) -> (i32, i32, i32) {
    %c0_i32 = arith.constant 0 : i32
    %c0_i32_0 = arith.constant 0 : i32
    %c0_i32_1 = arith.constant 0 : i32
    return %arg1, %c0_i32, %c0_i32_0 : i32, i32, i32
  }
  func.func @transform_12(%arg0: i32, %arg1: i32) -> (i32, i32, i32) {
    %c0_i32 = arith.constant 0 : i32
    %c0_i32_0 = arith.constant 0 : i32
    %c0_i32_1 = arith.constant 0 : i32
    return %arg1, %c0_i32, %c0_i32_0 : i32, i32, i32
  }
  func.func @transform_13(%arg0: i32, %arg1: i32) -> (i32, i32, i32) {
    %c0_i32 = arith.constant 0 : i32
    %c0_i32_0 = arith.constant 0 : i32
    %c0_i32_1 = arith.constant 0 : i32
    return %arg1, %c0_i32, %c0_i32_0 : i32, i32, i32
  }
  func.func @transform_14(%arg0: i32, %arg1: i32) -> (i32, i32, i32) {
    %c0_i32 = arith.constant 0 : i32
    %c0_i32_0 = arith.constant 0 : i32
    %c0_i32_1 = arith.constant 0 : i32
    return %arg1, %c0_i32, %c0_i32_0 : i32, i32, i32
  }
  func.func @transform_15(%arg0: i32, %arg1: i32) -> (i32, i32, i32) {
    %c0_i32 = arith.constant 0 : i32
    %c0_i32_0 = arith.constant 0 : i32
    %c0_i32_1 = arith.constant 0 : i32
    return %arg1, %c0_i32, %c0_i32_0 : i32, i32, i32
  }
  func.func @transform_16(%arg0: i32, %arg1: i32) -> (i32, i32, i32) {
    %c0_i32 = arith.constant 0 : i32
    %c0_i32_0 = arith.constant 0 : i32
    %c0_i32_1 = arith.constant 0 : i32
    return %arg1, %c0_i32, %c0_i32_0 : i32, i32, i32
  }
  func.func @transform_17(%arg0: i32, %arg1: i32) -> (i32, i32, i32) {
    %c0_i32 = arith.constant 0 : i32
    %c0_i32_0 = arith.constant 0 : i32
    %c0_i32_1 = arith.constant 0 : i32
    return %arg0, %c0_i32, %c0_i32_0 : i32, i32, i32
  }
}

module attributes {stable_mosaic.version = 11 : i64} {
  func.func @_qformer_kernel(%arg0: i32, %arg1: i32, %arg2: memref<1x5x32xf32, #tpu.memory_space<vmem>>, %arg3: memref<8x32xf32, #tpu.memory_space<vmem>>, %arg4: memref<32x16xbf16, #tpu.memory_space<vmem>>, %arg5: memref<1x16xf32, #tpu.memory_space<vmem>>, %arg6: memref<1x12x32x8xbf16, #tpu.memory_space<vmem>>, %arg7: memref<1x12x1x8xf32, #tpu.memory_space<vmem>>, %arg8: memref<1x4x8x32xbf16, #tpu.memory_space<vmem>>, %arg9: memref<1x1x32xf32, #tpu.memory_space<vmem>>, %arg10: memref<1x1x32xf32, #tpu.memory_space<vmem>>, %arg11: memref<1x1x32xf32, #tpu.memory_space<vmem>>, %arg12: memref<1x4x32x8xbf16, #tpu.memory_space<vmem>>, %arg13: memref<1x4x1x8xf32, #tpu.memory_space<vmem>>, %arg14: memref<1x8x32x8xbf16, #tpu.memory_space<vmem>>, %arg15: memref<1x8x1x8xf32, #tpu.memory_space<vmem>>, %arg16: memref<1x4x8x32xbf16, #tpu.memory_space<vmem>>, %arg17: memref<1x1x32xf32, #tpu.memory_space<vmem>>, %arg18: memref<1x1x32xf32, #tpu.memory_space<vmem>>, %arg19: memref<1x1x32xf32, #tpu.memory_space<vmem>>, %arg20: memref<1x32x64xbf16, #tpu.memory_space<vmem>>, %arg21: memref<1x1x64xf32, #tpu.memory_space<vmem>>, %arg22: memref<1x64x32xbf16, #tpu.memory_space<vmem>>, %arg23: memref<1x1x32xf32, #tpu.memory_space<vmem>>, %arg24: memref<1x1x32xf32, #tpu.memory_space<vmem>>, %arg25: memref<1x1x32xf32, #tpu.memory_space<vmem>>, %arg26: memref<1x8x16xf32, #tpu.memory_space<vmem>>, %arg27: memref<8x32xf32, #tpu.memory_space<vmem>>) attributes {dimension_semantics = [#tpu.dimension_semantics<parallel>, #tpu.dimension_semantics<arbitrary>], iteration_bounds = array<i64: 2, 2>, scalar_prefetch = 0 : i64, scratch_operands = 1 : i64, tpu.core_type = #tpu.core_type<tc>, window_params = [{transform_indices = @transform_0, window_bounds = array<i64: 1, 5, 32>}, {pipeline_mode = #tpu.pipeline_mode<synchronous>, transform_indices = @transform_1, window_bounds = array<i64: 8, 32>}, {pipeline_mode = #tpu.pipeline_mode<synchronous>, transform_indices = @transform_2, window_bounds = array<i64: 32, 16>}, {pipeline_mode = #tpu.pipeline_mode<synchronous>, transform_indices = @transform_3, window_bounds = array<i64: 1, 16>}, {transform_indices = @transform_4, window_bounds = array<i64: 1, 12, 32, 8>}, {transform_indices = @transform_5, window_bounds = array<i64: 1, 12, 1, 8>}, {transform_indices = @transform_6, window_bounds = array<i64: 1, 4, 8, 32>}, {transform_indices = @transform_7, window_bounds = array<i64: 1, 1, 32>}, {transform_indices = @transform_8, window_bounds = array<i64: 1, 1, 32>}, {transform_indices = @transform_9, window_bounds = array<i64: 1, 1, 32>}, {transform_indices = @transform_10, window_bounds = array<i64: 1, 4, 32, 8>}, {transform_indices = @transform_11, window_bounds = array<i64: 1, 4, 1, 8>}, {transform_indices = @transform_12, window_bounds = array<i64: 1, 8, 32, 8>}, {transform_indices = @transform_13, window_bounds = array<i64: 1, 8, 1, 8>}, {transform_indices = @transform_14, window_bounds = array<i64: 1, 4, 8, 32>}, {transform_indices = @transform_15, window_bounds = array<i64: 1, 1, 32>}, {transform_indices = @transform_16, window_bounds = array<i64: 1, 1, 32>}, {transform_indices = @transform_17, window_bounds = array<i64: 1, 1, 32>}, {transform_indices = @transform_18, window_bounds = array<i64: 1, 32, 64>}, {transform_indices = @transform_19, window_bounds = array<i64: 1, 1, 64>}, {transform_indices = @transform_20, window_bounds = array<i64: 1, 64, 32>}, {transform_indices = @transform_21, window_bounds = array<i64: 1, 1, 32>}, {transform_indices = @transform_22, window_bounds = array<i64: 1, 1, 32>}, {transform_indices = @transform_23, window_bounds = array<i64: 1, 1, 32>}, {transform_indices = @transform_24, window_bounds = array<i64: 1, 8, 16>}]} {
    %c0_i32 = arith.constant 0 : i32
    %0 = arith.cmpi eq, %arg1, %c0_i32 : i32
    %1 = arith.extui %0 : i1 to i32
    %c0_i32_0 = arith.constant 0 : i32
    %2 = arith.cmpi ne, %1, %c0_i32_0 : i32
    scf.if %2 {
      %c0_121 = arith.constant 0 : index
      %c0_122 = arith.constant 0 : index
      %228 = vector.load %arg3[%c0_121, %c0_122] : memref<8x32xf32, #tpu.memory_space<vmem>>, vector<8x32xf32>
      %c0_123 = arith.constant 0 : index
      %c0_124 = arith.constant 0 : index
      %229 = vector.load %arg27[%c0_123, %c0_124] : memref<8x32xf32, #tpu.memory_space<vmem>>, vector<8x32xf32>
      tpu.vector_store %arg27[%c0_123, %c0_124], %228 {strides = array<i32>} : memref<8x32xf32, #tpu.memory_space<vmem>>, vector<8x32xf32>,
    } else {
    }
    %c0 = arith.constant 0 : index
    %c0_1 = arith.constant 0 : index
    %3 = vector.load %arg27[%c0, %c0_1] : memref<8x32xf32, #tpu.memory_space<vmem>>, vector<8x32xf32>
    %c0_2 = arith.constant 0 : index
    %c0_3 = arith.constant 0 : index
    %c0_4 = arith.constant 0 : index
    %4 = vector.load %arg2[%c0_2, %c0_3, %c0_4] : memref<1x5x32xf32, #tpu.memory_space<vmem>>, vector<1x5x32xf32>
    %5 = vector.shape_cast %4 : vector<1x5x32xf32> to vector<5x32xf32>
    %c0_5 = arith.constant 0 : index
    %c0_6 = arith.constant 0 : index
    %c0_7 = arith.constant 0 : index
    %c0_8 = arith.constant 0 : index
    %6 = vector.load %arg6[%c0_5, %c0_6, %c0_7, %c0_8] : memref<1x12x32x8xbf16, #tpu.memory_space<vmem>>, vector<1x12x32x8xbf16>
    %7 = vector.shape_cast %6 : vector<1x12x32x8xbf16> to vector<12x32x8xbf16>
    %c0_9 = arith.constant 0 : index
    %c0_10 = arith.constant 0 : index
    %c0_11 = arith.constant 0 : index
    %c0_12 = arith.constant 0 : index
    %8 = vector.load %arg7[%c0_9, %c0_10, %c0_11, %c0_12] : memref<1x12x1x8xf32, #tpu.memory_space<vmem>>, vector<1x12x1x8xf32>
    %9 = vector.shape_cast %8 : vector<1x12x1x8xf32> to vector<12x1x8xf32>
    %10 = arith.truncf %3 : vector<8x32xf32> to vector<8x32xbf16>
    %11 = vector.shape_cast %10 : vector<8x32xbf16> to vector<1x8x32xbf16>
    %12 = vector.shape_cast %11 : vector<1x8x32xbf16> to vector<1x8x32xbf16>
    %13 = vector.broadcast %12 : vector<1x8x32xbf16> to vector<12x8x32xbf16>
    "tpu.trace_start"() <{level = 10 : i32, message = "gsd,gdf->gsf"}> : () -> ()
    %cst = arith.constant dense<0.000000e+00> : vector<12x8x8xf32>
    %14 = tpu.matmul %13, %7, %cst {dimension_numbers = #tpu.dot_dimension_numbers<[2], [1], [1], [2], [0, 0, 0, 1, 1, 2], [0], [0]>} : vector<12x8x32xbf16>, vector<12x32x8xbf16>, vector<12x8x8xf32> -> vector<12x8x8xf32>
    "tpu.trace_stop"() : () -> ()
    %15 = vector.broadcast %9 : vector<12x1x8xf32> to vector<12x8x8xf32>
    %16 = arith.addf %14, %15 : vector<12x8x8xf32>
    %17 = vector.extract_strided_slice %16 {offsets = [0, 0, 0], sizes = [4, 8, 8], strides = [1, 1, 1]} : vector<12x8x8xf32> to vector<4x8x8xf32>
    %18 = vector.extract_strided_slice %16 {offsets = [4, 0, 0], sizes = [4, 8, 8], strides = [1, 1, 1]} : vector<12x8x8xf32> to vector<4x8x8xf32>
    %19 = vector.extract_strided_slice %16 {offsets = [8, 0, 0], sizes = [4, 8, 8], strides = [1, 1, 1]} : vector<12x8x8xf32> to vector<4x8x8xf32>
    %c0_13 = arith.constant 0 : index
    %c0_14 = arith.constant 0 : index
    %c0_15 = arith.constant 0 : index
    %c0_16 = arith.constant 0 : index
    %20 = vector.load %arg8[%c0_13, %c0_14, %c0_15, %c0_16] : memref<1x4x8x32xbf16, #tpu.memory_space<vmem>>, vector<1x4x8x32xbf16>
    %21 = vector.shape_cast %20 : vector<1x4x8x32xbf16> to vector<4x8x32xbf16>
    %c0_17 = arith.constant 0 : index
    %c0_18 = arith.constant 0 : index
    %c0_19 = arith.constant 0 : index
    %22 = vector.load %arg9[%c0_17, %c0_18, %c0_19] : memref<1x1x32xf32, #tpu.memory_space<vmem>>, vector<1x1x32xf32>
    %23 = vector.shape_cast %22 : vector<1x1x32xf32> to vector<1x32xf32>
    %24 = arith.truncf %17 : vector<4x8x8xf32> to vector<4x8x8xbf16>
    %25 = arith.truncf %18 : vector<4x8x8xf32> to vector<4x8x8xbf16>
    "tpu.trace_start"() <{level = 10 : i32, message = "hqd,hkd->hqk"}> : () -> ()
    %cst_20 = arith.constant dense<0.000000e+00> : vector<4x8x8xf32>
    %26 = tpu.matmul %24, %25, %cst_20 {dimension_numbers = #tpu.dot_dimension_numbers<[2], [2], [1], [1], [0, 0, 0, 1, 1, 1], [0], [0]>} : vector<4x8x8xbf16>, vector<4x8x8xbf16>, vector<4x8x8xf32> -> vector<4x8x8xf32>
    "tpu.trace_stop"() : () -> ()
    %cst_21 = arith.constant dense<0xFF800000> : vector<4x8xf32>
    %27 = vector.multi_reduction <maximumf>, %26, %cst_21 [2] : vector<4x8x8xf32> to vector<4x8xf32>
    %28 = vector.shape_cast %27 : vector<4x8xf32> to vector<4x8x1xf32>
    %29 = vector.broadcast %28 : vector<4x8x1xf32> to vector<4x8x8xf32>
    %30 = arith.subf %26, %29 : vector<4x8x8xf32>
    %31 = math.exp %30 : vector<4x8x8xf32>
    %cst_22 = arith.constant dense<0.000000e+00> : vector<4x8xf32>
    %32 = vector.multi_reduction <add>, %31, %cst_22 [2] : vector<4x8x8xf32> to vector<4x8xf32>
    %33 = vector.shape_cast %32 : vector<4x8xf32> to vector<4x8x1xf32>
    %34 = tpu.reciprocal %33 {approx = true} : vector<4x8x1xf32> -> vector<4x8x1xf32>
    %35 = vector.broadcast %34 : vector<4x8x1xf32> to vector<4x8x8xf32>
    %36 = arith.mulf %31, %35 : vector<4x8x8xf32>
    %37 = arith.truncf %36 : vector<4x8x8xf32> to vector<4x8x8xbf16>
    %38 = arith.truncf %19 : vector<4x8x8xf32> to vector<4x8x8xbf16>
    "tpu.trace_start"() <{level = 10 : i32, message = "hqk,hkd->hqd"}> : () -> ()
    %cst_23 = arith.constant dense<0.000000e+00> : vector<4x8x8xf32>
    %39 = tpu.matmul %37, %38, %cst_23 {dimension_numbers = #tpu.dot_dimension_numbers<[2], [1], [1], [2], [0, 0, 0, 1, 1, 2], [0], [0]>} : vector<4x8x8xbf16>, vector<4x8x8xbf16>, vector<4x8x8xf32> -> vector<4x8x8xf32>
    "tpu.trace_stop"() : () -> ()
    %40 = arith.truncf %39 : vector<4x8x8xf32> to vector<4x8x8xbf16>
    "tpu.trace_start"() <{level = 10 : i32, message = "hqd,hdf->hqf"}> : () -> ()
    %cst_24 = arith.constant dense<0.000000e+00> : vector<4x8x32xf32>
    %41 = tpu.matmul %40, %21, %cst_24 {dimension_numbers = #tpu.dot_dimension_numbers<[2], [1], [1], [2], [0, 0, 0, 1, 1, 2], [0], [0]>} : vector<4x8x8xbf16>, vector<4x8x32xbf16>, vector<4x8x32xf32> -> vector<4x8x32xf32>
    "tpu.trace_stop"() : () -> ()
    %cst_25 = arith.constant dense<0.000000e+00> : vector<8x32xf32>
    %42 = vector.multi_reduction <add>, %41, %cst_25 [0] : vector<4x8x32xf32> to vector<8x32xf32>
    %43 = vector.broadcast %23 : vector<1x32xf32> to vector<8x32xf32>
    %44 = arith.addf %42, %43 : vector<8x32xf32>
    %45 = arith.addf %3, %44 : vector<8x32xf32>
    %c0_26 = arith.constant 0 : index
    %c0_27 = arith.constant 0 : index
    %c0_28 = arith.constant 0 : index
    %46 = vector.load %arg10[%c0_26, %c0_27, %c0_28] : memref<1x1x32xf32, #tpu.memory_space<vmem>>, vector<1x1x32xf32>
    %47 = vector.shape_cast %46 : vector<1x1x32xf32> to vector<1x32xf32>
    %c0_29 = arith.constant 0 : index
    %c0_30 = arith.constant 0 : index
    %c0_31 = arith.constant 0 : index
    %48 = vector.load %arg11[%c0_29, %c0_30, %c0_31] : memref<1x1x32xf32, #tpu.memory_space<vmem>>, vector<1x1x32xf32>
    %49 = vector.shape_cast %48 : vector<1x1x32xf32> to vector<1x32xf32>
    %cst_32 = arith.constant dense<0.000000e+00> : vector<8xf32>
    %50 = vector.multi_reduction <add>, %45, %cst_32 [1] : vector<8x32xf32> to vector<8xf32>
    %51 = vector.shape_cast %50 : vector<8xf32> to vector<8x1xf32>
    %cst_33 = arith.constant 3.200000e+01 : f32
    %52 = vector.broadcast %cst_33 : f32 to vector<8x1xf32>
    %53 = arith.divf %51, %52 : vector<8x1xf32>
    %54 = vector.broadcast %53 : vector<8x1xf32> to vector<8x32xf32>
    %55 = arith.subf %45, %54 : vector<8x32xf32>
    %56 = arith.mulf %55, %55 : vector<8x32xf32>
    %cst_34 = arith.constant dense<0.000000e+00> : vector<8xf32>
    %57 = vector.multi_reduction <add>, %56, %cst_34 [1] : vector<8x32xf32> to vector<8xf32>
    %58 = vector.shape_cast %57 : vector<8xf32> to vector<8x1xf32>
    %cst_35 = arith.constant 3.200000e+01 : f32
    %59 = vector.broadcast %cst_35 : f32 to vector<8x1xf32>
    %60 = arith.divf %58, %59 : vector<8x1xf32>
    %cst_36 = arith.constant 9.99999996E-13 : f32
    %61 = vector.broadcast %cst_36 : f32 to vector<8x1xf32>
    %62 = arith.addf %60, %61 : vector<8x1xf32>
    %63 = math.rsqrt %62 : vector<8x1xf32>
    %64 = vector.broadcast %63 : vector<8x1xf32> to vector<8x32xf32>
    %65 = arith.mulf %55, %64 : vector<8x32xf32>
    %66 = vector.broadcast %47 : vector<1x32xf32> to vector<8x32xf32>
    %67 = arith.mulf %65, %66 : vector<8x32xf32>
    %68 = vector.broadcast %49 : vector<1x32xf32> to vector<8x32xf32>
    %69 = arith.addf %67, %68 : vector<8x32xf32>
    %c0_37 = arith.constant 0 : index
    %c0_38 = arith.constant 0 : index
    %c0_39 = arith.constant 0 : index
    %c0_40 = arith.constant 0 : index
    %70 = vector.load %arg12[%c0_37, %c0_38, %c0_39, %c0_40] : memref<1x4x32x8xbf16, #tpu.memory_space<vmem>>, vector<1x4x32x8xbf16>
    %71 = vector.shape_cast %70 : vector<1x4x32x8xbf16> to vector<4x32x8xbf16>
    %c0_41 = arith.constant 0 : index
    %c0_42 = arith.constant 0 : index
    %c0_43 = arith.constant 0 : index
    %c0_44 = arith.constant 0 : index
    %72 = vector.load %arg13[%c0_41, %c0_42, %c0_43, %c0_44] : memref<1x4x1x8xf32, #tpu.memory_space<vmem>>, vector<1x4x1x8xf32>
    %73 = vector.shape_cast %72 : vector<1x4x1x8xf32> to vector<4x1x8xf32>
    %74 = arith.truncf %69 : vector<8x32xf32> to vector<8x32xbf16>
    %75 = vector.shape_cast %74 : vector<8x32xbf16> to vector<1x8x32xbf16>
    %76 = vector.shape_cast %75 : vector<1x8x32xbf16> to vector<1x8x32xbf16>
    %77 = vector.broadcast %76 : vector<1x8x32xbf16> to vector<4x8x32xbf16>
    "tpu.trace_start"() <{level = 10 : i32, message = "gsd,gdf->gsf"}> : () -> ()
    %cst_45 = arith.constant dense<0.000000e+00> : vector<4x8x8xf32>
    %78 = tpu.matmul %77, %71, %cst_45 {dimension_numbers = #tpu.dot_dimension_numbers<[2], [1], [1], [2], [0, 0, 0, 1, 1, 2], [0], [0]>} : vector<4x8x32xbf16>, vector<4x32x8xbf16>, vector<4x8x8xf32> -> vector<4x8x8xf32>
    "tpu.trace_stop"() : () -> ()
    %79 = vector.broadcast %73 : vector<4x1x8xf32> to vector<4x8x8xf32>
    %80 = arith.addf %78, %79 : vector<4x8x8xf32>
    %c0_46 = arith.constant 0 : index
    %c0_47 = arith.constant 0 : index
    %c0_48 = arith.constant 0 : index
    %c0_49 = arith.constant 0 : index
    %81 = vector.load %arg14[%c0_46, %c0_47, %c0_48, %c0_49] : memref<1x8x32x8xbf16, #tpu.memory_space<vmem>>, vector<1x8x32x8xbf16>
    %82 = vector.shape_cast %81 : vector<1x8x32x8xbf16> to vector<8x32x8xbf16>
    %c0_50 = arith.constant 0 : index
    %c0_51 = arith.constant 0 : index
    %c0_52 = arith.constant 0 : index
    %c0_53 = arith.constant 0 : index
    %83 = vector.load %arg15[%c0_50, %c0_51, %c0_52, %c0_53] : memref<1x8x1x8xf32, #tpu.memory_space<vmem>>, vector<1x8x1x8xf32>
    %84 = vector.shape_cast %83 : vector<1x8x1x8xf32> to vector<8x1x8xf32>
    %85 = arith.truncf %5 : vector<5x32xf32> to vector<5x32xbf16>
    %86 = vector.shape_cast %85 : vector<5x32xbf16> to vector<1x5x32xbf16>
    %87 = vector.shape_cast %86 : vector<1x5x32xbf16> to vector<1x5x32xbf16>
    %88 = vector.broadcast %87 : vector<1x5x32xbf16> to vector<8x5x32xbf16>
    "tpu.trace_start"() <{level = 10 : i32, message = "gsd,gdf->gsf"}> : () -> ()
    %cst_54 = arith.constant dense<0.000000e+00> : vector<8x5x8xf32>
    %89 = tpu.matmul %88, %82, %cst_54 {dimension_numbers = #tpu.dot_dimension_numbers<[2], [1], [1], [2], [0, 0, 0, 1, 1, 2], [0], [0]>} : vector<8x5x32xbf16>, vector<8x32x8xbf16>, vector<8x5x8xf32> -> vector<8x5x8xf32>
    "tpu.trace_stop"() : () -> ()
    %90 = vector.broadcast %84 : vector<8x1x8xf32> to vector<8x5x8xf32>
    %91 = arith.addf %89, %90 : vector<8x5x8xf32>
    %92 = vector.extract_strided_slice %91 {offsets = [0, 0, 0], sizes = [4, 5, 8], strides = [1, 1, 1]} : vector<8x5x8xf32> to vector<4x5x8xf32>
    %93 = vector.extract_strided_slice %91 {offsets = [4, 0, 0], sizes = [4, 5, 8], strides = [1, 1, 1]} : vector<8x5x8xf32> to vector<4x5x8xf32>
    %c0_55 = arith.constant 0 : index
    %c0_56 = arith.constant 0 : index
    %c0_57 = arith.constant 0 : index
    %c0_58 = arith.constant 0 : index
    %94 = vector.load %arg16[%c0_55, %c0_56, %c0_57, %c0_58] : memref<1x4x8x32xbf16, #tpu.memory_space<vmem>>, vector<1x4x8x32xbf16>
    %95 = vector.shape_cast %94 : vector<1x4x8x32xbf16> to vector<4x8x32xbf16>
    %c0_59 = arith.constant 0 : index
    %c0_60 = arith.constant 0 : index
    %c0_61 = arith.constant 0 : index
    %96 = vector.load %arg17[%c0_59, %c0_60, %c0_61] : memref<1x1x32xf32, #tpu.memory_space<vmem>>, vector<1x1x32xf32>
    %97 = vector.shape_cast %96 : vector<1x1x32xf32> to vector<1x32xf32>
    %98 = arith.truncf %80 : vector<4x8x8xf32> to vector<4x8x8xbf16>
    %99 = arith.truncf %92 : vector<4x5x8xf32> to vector<4x5x8xbf16>
    "tpu.trace_start"() <{level = 10 : i32, message = "hqd,hkd->hqk"}> : () -> ()
    %cst_62 = arith.constant dense<0.000000e+00> : vector<4x8x5xf32>
    %100 = tpu.matmul %98, %99, %cst_62 {dimension_numbers = #tpu.dot_dimension_numbers<[2], [2], [1], [1], [0, 0, 0, 1, 1, 1], [0], [0]>} : vector<4x8x8xbf16>, vector<4x5x8xbf16>, vector<4x8x5xf32> -> vector<4x8x5xf32>
    "tpu.trace_stop"() : () -> ()
    %cst_63 = arith.constant dense<0xFF800000> : vector<4x8xf32>
    %101 = vector.multi_reduction <maximumf>, %100, %cst_63 [2] : vector<4x8x5xf32> to vector<4x8xf32>
    %102 = vector.shape_cast %101 : vector<4x8xf32> to vector<4x8x1xf32>
    %103 = vector.broadcast %102 : vector<4x8x1xf32> to vector<4x8x5xf32>
    %104 = arith.subf %100, %103 : vector<4x8x5xf32>
    %105 = math.exp %104 : vector<4x8x5xf32>
    %cst_64 = arith.constant dense<0.000000e+00> : vector<4x8xf32>
    %106 = vector.multi_reduction <add>, %105, %cst_64 [2] : vector<4x8x5xf32> to vector<4x8xf32>
    %107 = vector.shape_cast %106 : vector<4x8xf32> to vector<4x8x1xf32>
    %108 = tpu.reciprocal %107 {approx = true} : vector<4x8x1xf32> -> vector<4x8x1xf32>
    %109 = vector.broadcast %108 : vector<4x8x1xf32> to vector<4x8x5xf32>
    %110 = arith.mulf %105, %109 : vector<4x8x5xf32>
    %111 = arith.truncf %110 : vector<4x8x5xf32> to vector<4x8x5xbf16>
    %112 = arith.truncf %93 : vector<4x5x8xf32> to vector<4x5x8xbf16>
    "tpu.trace_start"() <{level = 10 : i32, message = "hqk,hkd->hqd"}> : () -> ()
    %cst_65 = arith.constant dense<0.000000e+00> : vector<4x8x8xf32>
    %113 = tpu.matmul %111, %112, %cst_65 {dimension_numbers = #tpu.dot_dimension_numbers<[2], [1], [1], [2], [0, 0, 0, 1, 1, 2], [0], [0]>} : vector<4x8x5xbf16>, vector<4x5x8xbf16>, vector<4x8x8xf32> -> vector<4x8x8xf32>
    "tpu.trace_stop"() : () -> ()
    %114 = arith.truncf %113 : vector<4x8x8xf32> to vector<4x8x8xbf16>
    "tpu.trace_start"() <{level = 10 : i32, message = "hqd,hdf->hqf"}> : () -> ()
    %cst_66 = arith.constant dense<0.000000e+00> : vector<4x8x32xf32>
    %115 = tpu.matmul %114, %95, %cst_66 {dimension_numbers = #tpu.dot_dimension_numbers<[2], [1], [1], [2], [0, 0, 0, 1, 1, 2], [0], [0]>} : vector<4x8x8xbf16>, vector<4x8x32xbf16>, vector<4x8x32xf32> -> vector<4x8x32xf32>
    "tpu.trace_stop"() : () -> ()
    %cst_67 = arith.constant dense<0.000000e+00> : vector<8x32xf32>
    %116 = vector.multi_reduction <add>, %115, %cst_67 [0] : vector<4x8x32xf32> to vector<8x32xf32>
    %117 = vector.broadcast %97 : vector<1x32xf32> to vector<8x32xf32>
    %118 = arith.addf %116, %117 : vector<8x32xf32>
    %119 = arith.addf %69, %118 : vector<8x32xf32>
    %c0_68 = arith.constant 0 : index
    %c0_69 = arith.constant 0 : index
    %c0_70 = arith.constant 0 : index
    %120 = vector.load %arg18[%c0_68, %c0_69, %c0_70] : memref<1x1x32xf32, #tpu.memory_space<vmem>>, vector<1x1x32xf32>
    %121 = vector.shape_cast %120 : vector<1x1x32xf32> to vector<1x32xf32>
    %c0_71 = arith.constant 0 : index
    %c0_72 = arith.constant 0 : index
    %c0_73 = arith.constant 0 : index
    %122 = vector.load %arg19[%c0_71, %c0_72, %c0_73] : memref<1x1x32xf32, #tpu.memory_space<vmem>>, vector<1x1x32xf32>
    %123 = vector.shape_cast %122 : vector<1x1x32xf32> to vector<1x32xf32>
    %cst_74 = arith.constant dense<0.000000e+00> : vector<8xf32>
    %124 = vector.multi_reduction <add>, %119, %cst_74 [1] : vector<8x32xf32> to vector<8xf32>
    %125 = vector.shape_cast %124 : vector<8xf32> to vector<8x1xf32>
    %cst_75 = arith.constant 3.200000e+01 : f32
    %126 = vector.broadcast %cst_75 : f32 to vector<8x1xf32>
    %127 = arith.divf %125, %126 : vector<8x1xf32>
    %128 = vector.broadcast %127 : vector<8x1xf32> to vector<8x32xf32>
    %129 = arith.subf %119, %128 : vector<8x32xf32>
    %130 = arith.mulf %129, %129 : vector<8x32xf32>
    %cst_76 = arith.constant dense<0.000000e+00> : vector<8xf32>
    %131 = vector.multi_reduction <add>, %130, %cst_76 [1] : vector<8x32xf32> to vector<8xf32>
    %132 = vector.shape_cast %131 : vector<8xf32> to vector<8x1xf32>
    %cst_77 = arith.constant 3.200000e+01 : f32
    %133 = vector.broadcast %cst_77 : f32 to vector<8x1xf32>
    %134 = arith.divf %132, %133 : vector<8x1xf32>
    %cst_78 = arith.constant 9.99999996E-13 : f32
    %135 = vector.broadcast %cst_78 : f32 to vector<8x1xf32>
    %136 = arith.addf %134, %135 : vector<8x1xf32>
    %137 = math.rsqrt %136 : vector<8x1xf32>
    %138 = vector.broadcast %137 : vector<8x1xf32> to vector<8x32xf32>
    %139 = arith.mulf %129, %138 : vector<8x32xf32>
    %140 = vector.broadcast %121 : vector<1x32xf32> to vector<8x32xf32>
    %141 = arith.mulf %139, %140 : vector<8x32xf32>
    %142 = vector.broadcast %123 : vector<1x32xf32> to vector<8x32xf32>
    %143 = arith.addf %141, %142 : vector<8x32xf32>
    %144 = arith.truncf %143 : vector<8x32xf32> to vector<8x32xbf16>
    %c0_79 = arith.constant 0 : index
    %c0_80 = arith.constant 0 : index
    %c0_81 = arith.constant 0 : index
    %145 = vector.load %arg20[%c0_79, %c0_80, %c0_81] : memref<1x32x64xbf16, #tpu.memory_space<vmem>>, vector<1x32x64xbf16>
    %146 = vector.shape_cast %145 : vector<1x32x64xbf16> to vector<32x64xbf16>
    %cst_82 = arith.constant dense<0.000000e+00> : vector<8x64xf32>
    %147 = tpu.matmul %144, %146, %cst_82 {dimension_numbers = #tpu.dot_dimension_numbers<[1], [0], [0], [1], [0, 0, 1, 1], [], []>} : vector<8x32xbf16>, vector<32x64xbf16>, vector<8x64xf32> -> vector<8x64xf32>
    %c0_83 = arith.constant 0 : index
    %c0_84 = arith.constant 0 : index
    %c0_85 = arith.constant 0 : index
    %148 = vector.load %arg21[%c0_83, %c0_84, %c0_85] : memref<1x1x64xf32, #tpu.memory_space<vmem>>, vector<1x1x64xf32>
    %149 = vector.shape_cast %148 : vector<1x1x64xf32> to vector<1x64xf32>
    %150 = vector.broadcast %149 : vector<1x64xf32> to vector<8x64xf32>
    %151 = arith.addf %147, %150 : vector<8x64xf32>
    %cst_86 = arith.constant 5.000000e-01 : f32
    %152 = vector.broadcast %cst_86 : f32 to vector<8x64xf32>
    %153 = arith.mulf %152, %151 : vector<8x64xf32>
    %cst_87 = arith.constant 0.707106769 : f32
    %154 = vector.broadcast %cst_87 : f32 to vector<8x64xf32>
    %155 = arith.mulf %151, %154 : vector<8x64xf32>
    %156 = math.absf %155 : vector<8x64xf32>
    %cst_88 = arith.constant 0.327591091 : f32
    %157 = vector.broadcast %cst_88 : f32 to vector<8x64xf32>
    %158 = arith.mulf %157, %156 : vector<8x64xf32>
    %cst_89 = arith.constant 1.000000e+00 : f32
    %159 = vector.broadcast %cst_89 : f32 to vector<8x64xf32>
    %160 = arith.addf %159, %158 : vector<8x64xf32>
    %161 = tpu.reciprocal %160 {approx = true} : vector<8x64xf32> -> vector<8x64xf32>
    %cst_90 = arith.constant 1.06140542 : f32
    %162 = vector.broadcast %cst_90 : f32 to vector<8x64xf32>
    %163 = arith.mulf %162, %161 : vector<8x64xf32>
    %cst_91 = arith.constant -1.45315206 : f32
    %164 = vector.broadcast %cst_91 : f32 to vector<8x64xf32>
    %165 = arith.addf %163, %164 : vector<8x64xf32>
    %166 = arith.mulf %165, %161 : vector<8x64xf32>
    %cst_92 = arith.constant 1.42141378 : f32
    %167 = vector.broadcast %cst_92 : f32 to vector<8x64xf32>
    %168 = arith.addf %166, %167 : vector<8x64xf32>
    %169 = arith.mulf %168, %161 : vector<8x64xf32>
    %cst_93 = arith.constant -0.284496725 : f32
    %170 = vector.broadcast %cst_93 : f32 to vector<8x64xf32>
    %171 = arith.addf %169, %170 : vector<8x64xf32>
    %172 = arith.mulf %171, %161 : vector<8x64xf32>
    %cst_94 = arith.constant 0.254829586 : f32
    %173 = vector.broadcast %cst_94 : f32 to vector<8x64xf32>
    %174 = arith.addf %172, %173 : vector<8x64xf32>
    %175 = arith.mulf %174, %161 : vector<8x64xf32>
    %cst_95 = arith.constant 0.000000e+00 : f32
    %176 = vector.broadcast %cst_95 : f32 to vector<8x64xf32>
    %177 = arith.subf %176, %156 : vector<8x64xf32>
    %178 = arith.mulf %177, %156 : vector<8x64xf32>
    %179 = math.exp %178 : vector<8x64xf32>
    %180 = arith.mulf %175, %179 : vector<8x64xf32>
    %cst_96 = arith.constant 1.000000e+00 : f32
    %181 = vector.broadcast %cst_96 : f32 to vector<8x64xf32>
    %182 = arith.subf %181, %180 : vector<8x64xf32>
    %cst_97 = arith.constant 0.000000e+00 : f32
    %183 = vector.broadcast %cst_97 : f32 to vector<8x64xf32>
    %184 = arith.cmpf oge, %155, %183 : vector<8x64xf32>
    %cst_98 = arith.constant 0.000000e+00 : f32
    %185 = vector.broadcast %cst_98 : f32 to vector<8x64xf32>
    %186 = arith.subf %185, %182 : vector<8x64xf32>
    %187 = arith.select %184, %182, %186 : vector<8x64xi1>, vector<8x64xf32>
    %cst_99 = arith.constant 1.000000e+00 : f32
    %188 = vector.broadcast %cst_99 : f32 to vector<8x64xf32>
    %189 = arith.addf %188, %187 : vector<8x64xf32>
    %190 = arith.mulf %153, %189 : vector<8x64xf32>
    %191 = arith.truncf %190 : vector<8x64xf32> to vector<8x64xbf16>
    %c0_100 = arith.constant 0 : index
    %c0_101 = arith.constant 0 : index
    %c0_102 = arith.constant 0 : index
    %192 = vector.load %arg22[%c0_100, %c0_101, %c0_102] : memref<1x64x32xbf16, #tpu.memory_space<vmem>>, vector<1x64x32xbf16>
    %193 = vector.shape_cast %192 : vector<1x64x32xbf16> to vector<64x32xbf16>
    %cst_103 = arith.constant dense<0.000000e+00> : vector<8x32xf32>
    %194 = tpu.matmul %191, %193, %cst_103 {dimension_numbers = #tpu.dot_dimension_numbers<[1], [0], [0], [1], [0, 0, 1, 1], [], []>} : vector<8x64xbf16>, vector<64x32xbf16>, vector<8x32xf32> -> vector<8x32xf32>
    %c0_104 = arith.constant 0 : index
    %c0_105 = arith.constant 0 : index
    %c0_106 = arith.constant 0 : index
    %195 = vector.load %arg23[%c0_104, %c0_105, %c0_106] : memref<1x1x32xf32, #tpu.memory_space<vmem>>, vector<1x1x32xf32>
    %196 = vector.shape_cast %195 : vector<1x1x32xf32> to vector<1x32xf32>
    %197 = vector.broadcast %196 : vector<1x32xf32> to vector<8x32xf32>
    %198 = arith.addf %194, %197 : vector<8x32xf32>
    %199 = arith.addf %143, %198 : vector<8x32xf32>
    %c0_107 = arith.constant 0 : index
    %c0_108 = arith.constant 0 : index
    %c0_109 = arith.constant 0 : index
    %200 = vector.load %arg24[%c0_107, %c0_108, %c0_109] : memref<1x1x32xf32, #tpu.memory_space<vmem>>, vector<1x1x32xf32>
    %201 = vector.shape_cast %200 : vector<1x1x32xf32> to vector<1x32xf32>
    %c0_110 = arith.constant 0 : index
    %c0_111 = arith.constant 0 : index
    %c0_112 = arith.constant 0 : index
    %202 = vector.load %arg25[%c0_110, %c0_111, %c0_112] : memref<1x1x32xf32, #tpu.memory_space<vmem>>, vector<1x1x32xf32>
    %203 = vector.shape_cast %202 : vector<1x1x32xf32> to vector<1x32xf32>
    %cst_113 = arith.constant dense<0.000000e+00> : vector<8xf32>
    %204 = vector.multi_reduction <add>, %199, %cst_113 [1] : vector<8x32xf32> to vector<8xf32>
    %205 = vector.shape_cast %204 : vector<8xf32> to vector<8x1xf32>
    %cst_114 = arith.constant 3.200000e+01 : f32
    %206 = vector.broadcast %cst_114 : f32 to vector<8x1xf32>
    %207 = arith.divf %205, %206 : vector<8x1xf32>
    %208 = vector.broadcast %207 : vector<8x1xf32> to vector<8x32xf32>
    %209 = arith.subf %199, %208 : vector<8x32xf32>
    %210 = arith.mulf %209, %209 : vector<8x32xf32>
    %cst_115 = arith.constant dense<0.000000e+00> : vector<8xf32>
    %211 = vector.multi_reduction <add>, %210, %cst_115 [1] : vector<8x32xf32> to vector<8xf32>
    %212 = vector.shape_cast %211 : vector<8xf32> to vector<8x1xf32>
    %cst_116 = arith.constant 3.200000e+01 : f32
    %213 = vector.broadcast %cst_116 : f32 to vector<8x1xf32>
    %214 = arith.divf %212, %213 : vector<8x1xf32>
    %cst_117 = arith.constant 9.99999996E-13 : f32
    %215 = vector.broadcast %cst_117 : f32 to vector<8x1xf32>
    %216 = arith.addf %214, %215 : vector<8x1xf32>
    %217 = math.rsqrt %216 : vector<8x1xf32>
    %218 = vector.broadcast %217 : vector<8x1xf32> to vector<8x32xf32>
    %219 = arith.mulf %209, %218 : vector<8x32xf32>
    %220 = vector.broadcast %201 : vector<1x32xf32> to vector<8x32xf32>
    %221 = arith.mulf %219, %220 : vector<8x32xf32>
    %222 = vector.broadcast %203 : vector<1x32xf32> to vector<8x32xf32>
    %223 = arith.addf %221, %222 : vector<8x32xf32>
    %c0_118 = arith.constant 0 : index
    %c0_119 = arith.constant 0 : index
    %224 = vector.load %arg27[%c0_118, %c0_119] : memref<8x32xf32, #tpu.memory_space<vmem>>, vector<8x32xf32>
    tpu.vector_store %arg27[%c0_118, %c0_119], %223 {strides = array<i32>} : memref<8x32xf32, #tpu.memory_space<vmem>>, vector<8x32xf32>,
    %c1_i32 = arith.constant 1 : i32
    %225 = arith.cmpi eq, %arg1, %c1_i32 : i32
    %226 = arith.extui %225 : i1 to i32
    %c0_i32_120 = arith.constant 0 : i32
    %227 = arith.cmpi ne, %226, %c0_i32_120 : i32
    scf.if %227 {
      %228 = arith.truncf %223 : vector<8x32xf32> to vector<8x32xbf16>
      %c0_121 = arith.constant 0 : index
      %c0_122 = arith.constant 0 : index
      %229 = vector.load %arg4[%c0_121, %c0_122] : memref<32x16xbf16, #tpu.memory_space<vmem>>, vector<32x16xbf16>
      %cst_123 = arith.constant dense<0.000000e+00> : vector<8x16xf32>
      %230 = tpu.matmul %228, %229, %cst_123 {dimension_numbers = #tpu.dot_dimension_numbers<[1], [0], [0], [1], [0, 0, 1, 1], [], []>} : vector<8x32xbf16>, vector<32x16xbf16>, vector<8x16xf32> -> vector<8x16xf32>
      %c0_124 = arith.constant 0 : index
      %c0_125 = arith.constant 0 : index
      %231 = vector.load %arg5[%c0_124, %c0_125] : memref<1x16xf32, #tpu.memory_space<vmem>>, vector<1x16xf32>
      %232 = vector.broadcast %231 : vector<1x16xf32> to vector<8x16xf32>
      %233 = arith.addf %230, %232 : vector<8x16xf32>
      %c0_126 = arith.constant 0 : index
      %c0_127 = arith.constant 0 : index
      %c0_128 = arith.constant 0 : index
      %234 = vector.load %arg26[%c0_126, %c0_127, %c0_128] : memref<1x8x16xf32, #tpu.memory_space<vmem>>, vector<1x8x16xf32>
      %235 = vector.shape_cast %234 : vector<1x8x16xf32> to vector<8x16xf32>
      %236 = vector.shape_cast %233 : vector<8x16xf32> to vector<1x8x16xf32>
      tpu.vector_store %arg26[%c0_126, %c0_127, %c0_128], %236 {strides = array<i32>} : memref<1x8x16xf32, #tpu.memory_space<vmem>>, vector<1x8x16xf32>,
    } else {
    }
    return
  }
  func.func @transform_0(%arg0: i32, %arg1: i32) -> (i32, i32, i32) {
    %c0_i32 = arith.constant 0 : i32
    %c0_i32_0 = arith.constant 0 : i32
    %c0_i32_1 = arith.constant 0 : i32
    return %arg0, %c0_i32, %c0_i32_0 : i32, i32, i32
  }
  func.func @transform_1(%arg0: i32, %arg1: i32) -> (i32, i32) {
    %c0_i32 = arith.constant 0 : i32
    %c0_i32_0 = arith.constant 0 : i32
    %c0_i32_1 = arith.constant 0 : i32
    return %c0_i32, %c0_i32_0 : i32, i32
  }
  func.func @transform_2(%arg0: i32, %arg1: i32) -> (i32, i32) {
    %c0_i32 = arith.constant 0 : i32
    %c0_i32_0 = arith.constant 0 : i32
    %c0_i32_1 = arith.constant 0 : i32
    return %c0_i32, %c0_i32_0 : i32, i32
  }
  func.func @transform_3(%arg0: i32, %arg1: i32) -> (i32, i32) {
    %c0_i32 = arith.constant 0 : i32
    %c0_i32_0 = arith.constant 0 : i32
    %c0_i32_1 = arith.constant 0 : i32
    return %c0_i32, %c0_i32_0 : i32, i32
  }
  func.func @transform_4(%arg0: i32, %arg1: i32) -> (i32, i32, i32, i32) {
    %c0_i32 = arith.constant 0 : i32
    %c0_i32_0 = arith.constant 0 : i32
    %c0_i32_1 = arith.constant 0 : i32
    %c0_i32_2 = arith.constant 0 : i32
    return %arg1, %c0_i32, %c0_i32_0, %c0_i32_1 : i32, i32, i32, i32
  }
  func.func @transform_5(%arg0: i32, %arg1: i32) -> (i32, i32, i32, i32) {
    %c0_i32 = arith.constant 0 : i32
    %c0_i32_0 = arith.constant 0 : i32
    %c0_i32_1 = arith.constant 0 : i32
    %c0_i32_2 = arith.constant 0 : i32
    return %arg1, %c0_i32, %c0_i32_0, %c0_i32_1 : i32, i32, i32, i32
  }
  func.func @transform_6(%arg0: i32, %arg1: i32) -> (i32, i32, i32, i32) {
    %c0_i32 = arith.constant 0 : i32
    %c0_i32_0 = arith.constant 0 : i32
    %c0_i32_1 = arith.constant 0 : i32
    %c0_i32_2 = arith.constant 0 : i32
    return %arg1, %c0_i32, %c0_i32_0, %c0_i32_1 : i32, i32, i32, i32
  }
  func.func @transform_7(%arg0: i32, %arg1: i32) -> (i32, i32, i32) {
    %c0_i32 = arith.constant 0 : i32
    %c0_i32_0 = arith.constant 0 : i32
    %c0_i32_1 = arith.constant 0 : i32
    return %arg1, %c0_i32, %c0_i32_0 : i32, i32, i32
  }
  func.func @transform_8(%arg0: i32, %arg1: i32) -> (i32, i32, i32) {
    %c0_i32 = arith.constant 0 : i32
    %c0_i32_0 = arith.constant 0 : i32
    %c0_i32_1 = arith.constant 0 : i32
    return %arg1, %c0_i32, %c0_i32_0 : i32, i32, i32
  }
  func.func @transform_9(%arg0: i32, %arg1: i32) -> (i32, i32, i32) {
    %c0_i32 = arith.constant 0 : i32
    %c0_i32_0 = arith.constant 0 : i32
    %c0_i32_1 = arith.constant 0 : i32
    return %arg1, %c0_i32, %c0_i32_0 : i32, i32, i32
  }
  func.func @transform_10(%arg0: i32, %arg1: i32) -> (i32, i32, i32, i32) {
    %c0_i32 = arith.constant 0 : i32
    %c0_i32_0 = arith.constant 0 : i32
    %c0_i32_1 = arith.constant 0 : i32
    %c0_i32_2 = arith.constant 0 : i32
    return %arg1, %c0_i32, %c0_i32_0, %c0_i32_1 : i32, i32, i32, i32
  }
  func.func @transform_11(%arg0: i32, %arg1: i32) -> (i32, i32, i32, i32) {
    %c0_i32 = arith.constant 0 : i32
    %c0_i32_0 = arith.constant 0 : i32
    %c0_i32_1 = arith.constant 0 : i32
    %c0_i32_2 = arith.constant 0 : i32
    return %arg1, %c0_i32, %c0_i32_0, %c0_i32_1 : i32, i32, i32, i32
  }
  func.func @transform_12(%arg0: i32, %arg1: i32) -> (i32, i32, i32, i32) {
    %c0_i32 = arith.constant 0 : i32
    %c0_i32_0 = arith.constant 0 : i32
    %c0_i32_1 = arith.constant 0 : i32
    %c0_i32_2 = arith.constant 0 : i32
    return %arg1, %c0_i32, %c0_i32_0, %c0_i32_1 : i32, i32, i32, i32
  }
  func.func @transform_13(%arg0: i32, %arg1: i32) -> (i32, i32, i32, i32) {
    %c0_i32 = arith.constant 0 : i32
    %c0_i32_0 = arith.constant 0 : i32
    %c0_i32_1 = arith.constant 0 : i32
    %c0_i32_2 = arith.constant 0 : i32
    return %arg1, %c0_i32, %c0_i32_0, %c0_i32_1 : i32, i32, i32, i32
  }
  func.func @transform_14(%arg0: i32, %arg1: i32) -> (i32, i32, i32, i32) {
    %c0_i32 = arith.constant 0 : i32
    %c0_i32_0 = arith.constant 0 : i32
    %c0_i32_1 = arith.constant 0 : i32
    %c0_i32_2 = arith.constant 0 : i32
    return %arg1, %c0_i32, %c0_i32_0, %c0_i32_1 : i32, i32, i32, i32
  }
  func.func @transform_15(%arg0: i32, %arg1: i32) -> (i32, i32, i32) {
    %c0_i32 = arith.constant 0 : i32
    %c0_i32_0 = arith.constant 0 : i32
    %c0_i32_1 = arith.constant 0 : i32
    return %arg1, %c0_i32, %c0_i32_0 : i32, i32, i32
  }
  func.func @transform_16(%arg0: i32, %arg1: i32) -> (i32, i32, i32) {
    %c0_i32 = arith.constant 0 : i32
    %c0_i32_0 = arith.constant 0 : i32
    %c0_i32_1 = arith.constant 0 : i32
    return %arg1, %c0_i32, %c0_i32_0 : i32, i32, i32
  }
  func.func @transform_17(%arg0: i32, %arg1: i32) -> (i32, i32, i32) {
    %c0_i32 = arith.constant 0 : i32
    %c0_i32_0 = arith.constant 0 : i32
    %c0_i32_1 = arith.constant 0 : i32
    return %arg1, %c0_i32, %c0_i32_0 : i32, i32, i32
  }
  func.func @transform_18(%arg0: i32, %arg1: i32) -> (i32, i32, i32) {
    %c0_i32 = arith.constant 0 : i32
    %c0_i32_0 = arith.constant 0 : i32
    %c0_i32_1 = arith.constant 0 : i32
    return %arg1, %c0_i32, %c0_i32_0 : i32, i32, i32
  }
  func.func @transform_19(%arg0: i32, %arg1: i32) -> (i32, i32, i32) {
    %c0_i32 = arith.constant 0 : i32
    %c0_i32_0 = arith.constant 0 : i32
    %c0_i32_1 = arith.constant 0 : i32
    return %arg1, %c0_i32, %c0_i32_0 : i32, i32, i32
  }
  func.func @transform_20(%arg0: i32, %arg1: i32) -> (i32, i32, i32) {
    %c0_i32 = arith.constant 0 : i32
    %c0_i32_0 = arith.constant 0 : i32
    %c0_i32_1 = arith.constant 0 : i32
    return %arg1, %c0_i32, %c0_i32_0 : i32, i32, i32
  }
  func.func @transform_21(%arg0: i32, %arg1: i32) -> (i32, i32, i32) {
    %c0_i32 = arith.constant 0 : i32
    %c0_i32_0 = arith.constant 0 : i32
    %c0_i32_1 = arith.constant 0 : i32
    return %arg1, %c0_i32, %c0_i32_0 : i32, i32, i32
  }
  func.func @transform_22(%arg0: i32, %arg1: i32) -> (i32, i32, i32) {
    %c0_i32 = arith.constant 0 : i32
    %c0_i32_0 = arith.constant 0 : i32
    %c0_i32_1 = arith.constant 0 : i32
    return %arg1, %c0_i32, %c0_i32_0 : i32, i32, i32
  }
  func.func @transform_23(%arg0: i32, %arg1: i32) -> (i32, i32, i32) {
    %c0_i32 = arith.constant 0 : i32
    %c0_i32_0 = arith.constant 0 : i32
    %c0_i32_1 = arith.constant 0 : i32
    return %arg1, %c0_i32, %c0_i32_0 : i32, i32, i32
  }
  func.func @transform_24(%arg0: i32, %arg1: i32) -> (i32, i32, i32) {
    %c0_i32 = arith.constant 0 : i32
    %c0_i32_0 = arith.constant 0 : i32
    %c0_i32_1 = arith.constant 0 : i32
    return %arg0, %c0_i32, %c0_i32_0 : i32, i32, i32
  }
}

</mosaic_0001>

<llo_original>
// kernel: _lambda_.2
$region0: #{_lambda_.2}
  #allocation0 [shape = 'u32[]', space=smem, size = 0x4, offset = 0x4, fixed_abs, tag = 'smem constant byte address 0x4 - core index']
  #allocation1 [shape = 'u32[144,128]{1,0:T(1,128)}', space=vmem, size = 0x12000, scoped, tag = 'internal scratch']
  #allocation2 [shape = 'f32[5,32]{1,0:T(8,128)}', space=vmem, size = 0x1000, scoped, tag = 'scratch operand']
  %s0 = inlined_call_operand.vmem [shape: bf16[2,5,256], index: 0, kind: input, shape index: {}]
  %s1 = inlined_call_operand.vmem [shape: f32[5,32], index: 1, kind: input, shape index: {}]
  %s2 = inlined_call_operand.vmem [shape: bf16[256,32], index: 2, kind: input, shape index: {}]
  %s3 = inlined_call_operand.vmem [shape: f32[1,32], index: 3, kind: input, shape index: {}]
  %s4 = inlined_call_operand.vmem [shape: f32[1,32], index: 4, kind: input, shape index: {}]
  %s5 = inlined_call_operand.vmem [shape: f32[2,1,32], index: 5, kind: input, shape index: {}, may-alias: {5,11}]
  %s6 = inlined_call_operand.vmem [shape: f32[2,1,32], index: 6, kind: input, shape index: {}, may-alias: {6,10,12,16}]
  %s7 = inlined_call_operand.vmem [shape: bf16[2,12,32,8], index: 7, kind: input, shape index: {}]
  %s8 = inlined_call_operand.vmem [shape: f32[2,12,1,8], index: 8, kind: input, shape index: {}]
  %s9 = inlined_call_operand.vmem [shape: bf16[2,4,8,32], index: 9, kind: input, shape index: {}]
  %s10 = inlined_call_operand.vmem [shape: f32[2,1,32], index: 10, kind: input, shape index: {}, may-alias: {6,10,12,16}]
  %s11 = inlined_call_operand.vmem [shape: f32[2,1,32], index: 11, kind: input, shape index: {}, may-alias: {5,11}]
  %s12 = inlined_call_operand.vmem [shape: f32[2,1,32], index: 12, kind: input, shape index: {}, may-alias: {6,10,12,16}]
  %s13 = inlined_call_operand.vmem [shape: bf16[2,32,64], index: 13, kind: input, shape index: {}]
  %s14 = inlined_call_operand.vmem [shape: f32[2,1,64], index: 14, kind: input, shape index: {}]
  %s15 = inlined_call_operand.vmem [shape: bf16[2,64,32], index: 15, kind: input, shape index: {}]
  %s16 = inlined_call_operand.vmem [shape: f32[2,1,32], index: 16, kind: input, shape index: {}, may-alias: {6,10,12,16}]
  %s17 = inlined_call_operand.vmem [shape: f32[2,5,32], index: 17, kind: output, shape index: {}]
  %s18 = sld [smem:[#allocation0]]
  $region109: #{_lambda_.2} parent=0
    _
  %s20 = ssub.s32 1, %s18
  %s21 = scalar_select 0, %s20, %s18
  loop: start=0, step=1, limit=6
  $region2: #{_lambda_.2} parent=0 // loop_pre_header
    _
  $region3: #{_lambda_.2} parent=0 // loop_header
    %s23 = sphi 0, %s27
    %p24 = scmp.ge.s32.totalorder %s23, 6
    %s30 = sphi 0, %s42
    %s31 = sphi 0, %s38
    %s32 = sphi 0, %s30
    %s33 = sphi 0, %s31
    %s34 = sphi 0, %s32
    %s35 = sphi 0, %s33
    %s45 = sphi 0, %s47
    %s48 = sphi 0, %s45
    %s49 = sphi 0, %s48
    %s65 = sphi 0, %s49
    %s69 = sphi 0, %s69
    %s71 = sphi 0, %s69
    %s72 = sphi 0, %s71
    %s86 = sphi 0, %s72
    %s90 = sphi 0, %s90
    %s92 = sphi 0, %s90
    %s93 = sphi 0, %s92
    %s107 = sphi 0, %s93
    %s111 = sphi 0, %s111
    %s113 = sphi 0, %s111
    %s114 = sphi 0, %s113
    %s128 = sphi 0, %s114
    %s132 = sphi 0, %s132
    %s134 = sphi 0, %s132
    %s135 = sphi 0, %s134
    %s149 = sphi 0, %s135
    %s155 = sphi 0, %s157
    %s158 = sphi 0, %s155
    %s159 = sphi 0, %s158
    %s175 = sphi 0, %s159
    %s181 = sphi 0, %s183
    %s184 = sphi 0, %s181
    %s185 = sphi 0, %s184
    %s201 = sphi 0, %s185
    %s207 = sphi 0, %s209
    %s210 = sphi 0, %s207
    %s211 = sphi 0, %s210
    %s227 = sphi 0, %s211
    %s233 = sphi 0, %s235
    %s236 = sphi 0, %s233
    %s237 = sphi 0, %s236
    %s253 = sphi 0, %s237
    %s259 = sphi 0, %s261
    %s262 = sphi 0, %s259
    %s263 = sphi 0, %s262
    %s279 = sphi 0, %s263
    %s285 = sphi 0, %s287
    %s288 = sphi 0, %s285
    %s289 = sphi 0, %s288
    %s305 = sphi 0, %s289
    %s311 = sphi 0, %s313
    %s314 = sphi 0, %s311
    %s315 = sphi 0, %s314
    %s331 = sphi 0, %s315
    %s337 = sphi 0, %s339
    %s340 = sphi 0, %s337
    %s341 = sphi 0, %s340
    %s357 = sphi 0, %s341
    %s363 = sphi 0, %s365
    %s366 = sphi 0, %s363
    %s367 = sphi 0, %s366
    %s383 = sphi 0, %s367
    %s389 = sphi 0, %s391
    %s392 = sphi 0, %s389
    %s393 = sphi 0, %s392
    %s409 = sphi 0, %s393
    %s415 = sphi 0, %s417
    %s418 = sphi 0, %s415
    %s419 = sphi 0, %s418
    %s435 = sphi 0, %s419
    %s441 = sphi 0, %s443
    %s444 = sphi 0, %s441
    %s445 = sphi 0, %s444
    %s461 = sphi 0, %s445
    %s467 = sphi 0, %s469
    %s470 = sphi 0, %s467
    %s471 = sphi 0, %s470
    %s487 = sphi 0, %s471
  $region4: #{_lambda_.2} parent=0 // loop_header_branch
    %26 = sbr.rel (%p24) target = $region8
  $region5: #{_lambda_.2} parent=0 // loop_body
    %s28 = ssub.s32 %s23, 1
    %s29 = ssub.s32 %s23, 2
    %s36 = sadd.s32 1, %s31
    %p37 = scmp.ge.s32.totalorder %s36, 2
    %s38 = scalar_select %p37, 0, %s36
    %s39 = sadd.s32 1, %s30
    %s40 = scalar_select %p37, %s39, %s30
    %p41 = scmp.ge.s32.totalorder %s40, 2
    %s42 = scalar_select %p41, 0, %s40
    %s43 = ssub.s32 %s30, %s42
    %p44 = scmp.eq.s32.totalorder %s43, 0
    %s46 = sadd.s32 %s45, 1
    %s47 = scalar_select %p44, %s45, %s46
    %p50 = pneg %p44
    %p51 = scmp.eq.s32.totalorder %s23, 3
    %p52 = por %p50, %p51
    %p53 = scmp.ne.s32.totalorder %s45, %s48
    %p54 = scmp.eq.s32.totalorder %s23, 0
    %p55 = por %p53, %p54
    %p56 = scmp.ne.s32.totalorder %s45, %s48
    %p57 = scmp.eq.s32.totalorder %s28, 3
    %p58 = por %p56, %p57
    %p59 = scmp.ne.s32.totalorder %s48, %s49
    %p60 = scmp.eq.s32.totalorder %s28, 0
    %p61 = por %p59, %p60
    %p62 = scmp.ne.s32.totalorder %s48, %s49
    %p63 = scmp.eq.s32.totalorder %s29, 3
    %p64 = por %p62, %p63
    %p66 = scmp.ne.s32.totalorder %s49, %s65
    %p67 = scmp.eq.s32.totalorder %s29, 0
    %p68 = por %p66, %p67
    %s70 = sadd.s32 %s69, 1
    %p73 = scmp.eq.s32.totalorder %s23, 3
    %p74 = scmp.ne.s32.totalorder %s69, %s71
    %p75 = scmp.eq.s32.totalorder %s23, 0
    %p76 = por %p74, %p75
    %p77 = scmp.ne.s32.totalorder %s69, %s71
    %p78 = scmp.eq.s32.totalorder %s28, 3
    %p79 = por %p77, %p78
    %p80 = scmp.ne.s32.totalorder %s71, %s72
    %p81 = scmp.eq.s32.totalorder %s28, 0
    %p82 = por %p80, %p81
    %p83 = scmp.ne.s32.totalorder %s71, %s72
    %p84 = scmp.eq.s32.totalorder %s29, 3
    %p85 = por %p83, %p84
    %p87 = scmp.ne.s32.totalorder %s72, %s86
    %p88 = scmp.eq.s32.totalorder %s29, 0
    %p89 = por %p87, %p88
    %s91 = sadd.s32 %s90, 1
    %p94 = scmp.eq.s32.totalorder %s23, 3
    %p95 = scmp.ne.s32.totalorder %s90, %s92
    %p96 = scmp.eq.s32.totalorder %s23, 0
    %p97 = por %p95, %p96
    %p98 = scmp.ne.s32.totalorder %s90, %s92
    %p99 = scmp.eq.s32.totalorder %s28, 3
    %p100 = por %p98, %p99
    %p101 = scmp.ne.s32.totalorder %s92, %s93
    %p102 = scmp.eq.s32.totalorder %s28, 0
    %p103 = por %p101, %p102
    %p104 = scmp.ne.s32.totalorder %s92, %s93
    %p105 = scmp.eq.s32.totalorder %s29, 3
    %p106 = por %p104, %p105
    %p108 = scmp.ne.s32.totalorder %s93, %s107
    %p109 = scmp.eq.s32.totalorder %s29, 0
    %p110 = por %p108, %p109
    %s112 = sadd.s32 %s111, 1
    %p115 = scmp.eq.s32.totalorder %s23, 3
    %p116 = scmp.ne.s32.totalorder %s111, %s113
    %p117 = scmp.eq.s32.totalorder %s23, 0
    %p118 = por %p116, %p117
    %p119 = scmp.ne.s32.totalorder %s111, %s113
    %p120 = scmp.eq.s32.totalorder %s28, 3
    %p121 = por %p119, %p120
    %p122 = scmp.ne.s32.totalorder %s113, %s114
    %p123 = scmp.eq.s32.totalorder %s28, 0
    %p124 = por %p122, %p123
    %p125 = scmp.ne.s32.totalorder %s113, %s114
    %p126 = scmp.eq.s32.totalorder %s29, 3
    %p127 = por %p125, %p126
    %p129 = scmp.ne.s32.totalorder %s114, %s128
    %p130 = scmp.eq.s32.totalorder %s29, 0
    %p131 = por %p129, %p130
    %s133 = sadd.s32 %s132, 1
    %p136 = scmp.eq.s32.totalorder %s23, 3
    %p137 = scmp.ne.s32.totalorder %s132, %s134
    %p138 = scmp.eq.s32.totalorder %s23, 0
    %p139 = por %p137, %p138
    %p140 = scmp.ne.s32.totalorder %s132, %s134
    %p141 = scmp.eq.s32.totalorder %s28, 3
    %p142 = por %p140, %p141
    %p143 = scmp.ne.s32.totalorder %s134, %s135
    %p144 = scmp.eq.s32.totalorder %s28, 0
    %p145 = por %p143, %p144
    %p146 = scmp.ne.s32.totalorder %s134, %s135
    %p147 = scmp.eq.s32.totalorder %s29, 3
    %p148 = por %p146, %p147
    %p150 = scmp.ne.s32.totalorder %s135, %s149
    %p151 = scmp.eq.s32.totalorder %s29, 0
    %p152 = por %p150, %p151
    %s153 = ssub.s32 %s31, %s38
    %p154 = scmp.eq.s32.totalorder %s153, 0
    %s156 = sadd.s32 %s155, 1
    %s157 = scalar_select %p154, %s155, %s156
    %p160 = pneg %p154
    %p161 = scmp.eq.s32.totalorder %s23, 3
    %p162 = por %p160, %p161
    %p163 = scmp.ne.s32.totalorder %s155, %s158
    %p164 = scmp.eq.s32.totalorder %s23, 0
    %p165 = por %p163, %p164
    %p166 = scmp.ne.s32.totalorder %s155, %s158
    %p167 = scmp.eq.s32.totalorder %s28, 3
    %p168 = por %p166, %p167
    %p169 = scmp.ne.s32.totalorder %s158, %s159
    %p170 = scmp.eq.s32.totalorder %s28, 0
    %p171 = por %p169, %p170
    %p172 = scmp.ne.s32.totalorder %s158, %s159
    %p173 = scmp.eq.s32.totalorder %s29, 3
    %p174 = por %p172, %p173
    %p176 = scmp.ne.s32.totalorder %s159, %s175
    %p177 = scmp.eq.s32.totalorder %s29, 0
    %p178 = por %p176, %p177
    %s179 = ssub.s32 %s31, %s38
    %p180 = scmp.eq.s32.totalorder %s179, 0
    %s182 = sadd.s32 %s181, 1
    %s183 = scalar_select %p180, %s181, %s182
    %p186 = pneg %p180
    %p187 = scmp.eq.s32.totalorder %s23, 3
    %p188 = por %p186, %p187
    %p189 = scmp.ne.s32.totalorder %s181, %s184
    %p190 = scmp.eq.s32.totalorder %s23, 0
    %p191 = por %p189, %p190
    %p192 = scmp.ne.s32.totalorder %s181, %s184
    %p193 = scmp.eq.s32.totalorder %s28, 3
    %p194 = por %p192, %p193
    %p195 = scmp.ne.s32.totalorder %s184, %s185
    %p196 = scmp.eq.s32.totalorder %s28, 0
    %p197 = por %p195, %p196
    %p198 = scmp.ne.s32.totalorder %s184, %s185
    %p199 = scmp.eq.s32.totalorder %s29, 3
    %p200 = por %p198, %p199
    %p202 = scmp.ne.s32.totalorder %s185, %s201
    %p203 = scmp.eq.s32.totalorder %s29, 0
    %p204 = por %p202, %p203
    %s205 = ssub.s32 %s31, %s38
    %p206 = scmp.eq.s32.totalorder %s205, 0
    %s208 = sadd.s32 %s207, 1
    %s209 = scalar_select %p206, %s207, %s208
    %p212 = pneg %p206
    %p213 = scmp.eq.s32.totalorder %s23, 3
    %p214 = por %p212, %p213
    %p215 = scmp.ne.s32.totalorder %s207, %s210
    %p216 = scmp.eq.s32.totalorder %s23, 0
    %p217 = por %p215, %p216
    %p218 = scmp.ne.s32.totalorder %s207, %s210
    %p219 = scmp.eq.s32.totalorder %s28, 3
    %p220 = por %p218, %p219
    %p221 = scmp.ne.s32.totalorder %s210, %s211
    %p222 = scmp.eq.s32.totalorder %s28, 0
    %p223 = por %p221, %p222
    %p224 = scmp.ne.s32.totalorder %s210, %s211
    %p225 = scmp.eq.s32.totalorder %s29, 3
    %p226 = por %p224, %p225
    %p228 = scmp.ne.s32.totalorder %s211, %s227
    %p229 = scmp.eq.s32.totalorder %s29, 0
    %p230 = por %p228, %p229
    %s231 = ssub.s32 %s31, %s38
    %p232 = scmp.eq.s32.totalorder %s231, 0
    %s234 = sadd.s32 %s233, 1
    %s235 = scalar_select %p232, %s233, %s234
    %p238 = pneg %p232
    %p239 = scmp.eq.s32.totalorder %s23, 3
    %p240 = por %p238, %p239
    %p241 = scmp.ne.s32.totalorder %s233, %s236
    %p242 = scmp.eq.s32.totalorder %s23, 0
    %p243 = por %p241, %p242
    %p244 = scmp.ne.s32.totalorder %s233, %s236
    %p245 = scmp.eq.s32.totalorder %s28, 3
    %p246 = por %p244, %p245
    %p247 = scmp.ne.s32.totalorder %s236, %s237
    %p248 = scmp.eq.s32.totalorder %s28, 0
    %p249 = por %p247, %p248
    %p250 = scmp.ne.s32.totalorder %s236, %s237
    %p251 = scmp.eq.s32.totalorder %s29, 3
    %p252 = por %p250, %p251
    %p254 = scmp.ne.s32.totalorder %s237, %s253
    %p255 = scmp.eq.s32.totalorder %s29, 0
    %p256 = por %p254, %p255
    %s257 = ssub.s32 %s31, %s38
    %p258 = scmp.eq.s32.totalorder %s257, 0
    %s260 = sadd.s32 %s259, 1
    %s261 = scalar_select %p258, %s259, %s260
    %p264 = pneg %p258
    %p265 = scmp.eq.s32.totalorder %s23, 3
    %p266 = por %p264, %p265
    %p267 = scmp.ne.s32.totalorder %s259, %s262
    %p268 = scmp.eq.s32.totalorder %s23, 0
    %p269 = por %p267, %p268
    %p270 = scmp.ne.s32.totalorder %s259, %s262
    %p271 = scmp.eq.s32.totalorder %s28, 3
    %p272 = por %p270, %p271
    %p273 = scmp.ne.s32.totalorder %s262, %s263
    %p274 = scmp.eq.s32.totalorder %s28, 0
    %p275 = por %p273, %p274
    %p276 = scmp.ne.s32.totalorder %s262, %s263
    %p277 = scmp.eq.s32.totalorder %s29, 3
    %p278 = por %p276, %p277
    %p280 = scmp.ne.s32.totalorder %s263, %s279
    %p281 = scmp.eq.s32.totalorder %s29, 0
    %p282 = por %p280, %p281
    %s283 = ssub.s32 %s31, %s38
    %p284 = scmp.eq.s32.totalorder %s283, 0
    %s286 = sadd.s32 %s285, 1
    %s287 = scalar_select %p284, %s285, %s286
    %p290 = pneg %p284
    %p291 = scmp.eq.s32.totalorder %s23, 3
    %p292 = por %p290, %p291
    %p293 = scmp.ne.s32.totalorder %s285, %s288
    %p294 = scmp.eq.s32.totalorder %s23, 0
    %p295 = por %p293, %p294
    %p296 = scmp.ne.s32.totalorder %s285, %s288
    %p297 = scmp.eq.s32.totalorder %s28, 3
    %p298 = por %p296, %p297
    %p299 = scmp.ne.s32.totalorder %s288, %s289
    %p300 = scmp.eq.s32.totalorder %s28, 0
    %p301 = por %p299, %p300
    %p302 = scmp.ne.s32.totalorder %s288, %s289
    %p303 = scmp.eq.s32.totalorder %s29, 3
    %p304 = por %p302, %p303
    %p306 = scmp.ne.s32.totalorder %s289, %s305
    %p307 = scmp.eq.s32.totalorder %s29, 0
    %p308 = por %p306, %p307
    %s309 = ssub.s32 %s31, %s38
    %p310 = scmp.eq.s32.totalorder %s309, 0
    %s312 = sadd.s32 %s311, 1
    %s313 = scalar_select %p310, %s311, %s312
    %p316 = pneg %p310
    %p317 = scmp.eq.s32.totalorder %s23, 3
    %p318 = por %p316, %p317
    %p319 = scmp.ne.s32.totalorder %s311, %s314
    %p320 = scmp.eq.s32.totalorder %s23, 0
    %p321 = por %p319, %p320
    %p322 = scmp.ne.s32.totalorder %s311, %s314
    %p323 = scmp.eq.s32.totalorder %s28, 3
    %p324 = por %p322, %p323
    %p325 = scmp.ne.s32.totalorder %s314, %s315
    %p326 = scmp.eq.s32.totalorder %s28, 0
    %p327 = por %p325, %p326
    %p328 = scmp.ne.s32.totalorder %s314, %s315
    %p329 = scmp.eq.s32.totalorder %s29, 3
    %p330 = por %p328, %p329
    %p332 = scmp.ne.s32.totalorder %s315, %s331
    %p333 = scmp.eq.s32.totalorder %s29, 0
    %p334 = por %p332, %p333
    %s335 = ssub.s32 %s31, %s38
    %p336 = scmp.eq.s32.totalorder %s335, 0
    %s338 = sadd.s32 %s337, 1
    %s339 = scalar_select %p336, %s337, %s338
    %p342 = pneg %p336
    %p343 = scmp.eq.s32.totalorder %s23, 3
    %p344 = por %p342, %p343
    %p345 = scmp.ne.s32.totalorder %s337, %s340
    %p346 = scmp.eq.s32.totalorder %s23, 0
    %p347 = por %p345, %p346
    %p348 = scmp.ne.s32.totalorder %s337, %s340
    %p349 = scmp.eq.s32.totalorder %s28, 3
    %p350 = por %p348, %p349
    %p351 = scmp.ne.s32.totalorder %s340, %s341
    %p352 = scmp.eq.s32.totalorder %s28, 0
    %p353 = por %p351, %p352
    %p354 = scmp.ne.s32.totalorder %s340, %s341
    %p355 = scmp.eq.s32.totalorder %s29, 3
    %p356 = por %p354, %p355
    %p358 = scmp.ne.s32.totalorder %s341, %s357
    %p359 = scmp.eq.s32.totalorder %s29, 0
    %p360 = por %p358, %p359
    %s361 = ssub.s32 %s31, %s38
    %p362 = scmp.eq.s32.totalorder %s361, 0
    %s364 = sadd.s32 %s363, 1
    %s365 = scalar_select %p362, %s363, %s364
    %p368 = pneg %p362
    %p369 = scmp.eq.s32.totalorder %s23, 3
    %p370 = por %p368, %p369
    %p371 = scmp.ne.s32.totalorder %s363, %s366
    %p372 = scmp.eq.s32.totalorder %s23, 0
    %p373 = por %p371, %p372
    %p374 = scmp.ne.s32.totalorder %s363, %s366
    %p375 = scmp.eq.s32.totalorder %s28, 3
    %p376 = por %p374, %p375
    %p377 = scmp.ne.s32.totalorder %s366, %s367
    %p378 = scmp.eq.s32.totalorder %s28, 0
    %p379 = por %p377, %p378
    %p380 = scmp.ne.s32.totalorder %s366, %s367
    %p381 = scmp.eq.s32.totalorder %s29, 3
    %p382 = por %p380, %p381
    %p384 = scmp.ne.s32.totalorder %s367, %s383
    %p385 = scmp.eq.s32.totalorder %s29, 0
    %p386 = por %p384, %p385
    %s387 = ssub.s32 %s31, %s38
    %p388 = scmp.eq.s32.totalorder %s387, 0
    %s390 = sadd.s32 %s389, 1
    %s391 = scalar_select %p388, %s389, %s390
    %p394 = pneg %p388
    %p395 = scmp.eq.s32.totalorder %s23, 3
    %p396 = por %p394, %p395
    %p397 = scmp.ne.s32.totalorder %s389, %s392
    %p398 = scmp.eq.s32.totalorder %s23, 0
    %p399 = por %p397, %p398
    %p400 = scmp.ne.s32.totalorder %s389, %s392
    %p401 = scmp.eq.s32.totalorder %s28, 3
    %p402 = por %p400, %p401
    %p403 = scmp.ne.s32.totalorder %s392, %s393
    %p404 = scmp.eq.s32.totalorder %s28, 0
    %p405 = por %p403, %p404
    %p406 = scmp.ne.s32.totalorder %s392, %s393
    %p407 = scmp.eq.s32.totalorder %s29, 3
    %p408 = por %p406, %p407
    %p410 = scmp.ne.s32.totalorder %s393, %s409
    %p411 = scmp.eq.s32.totalorder %s29, 0
    %p412 = por %p410, %p411
    %s413 = ssub.s32 %s31, %s38
    %p414 = scmp.eq.s32.totalorder %s413, 0
    %s416 = sadd.s32 %s415, 1
    %s417 = scalar_select %p414, %s415, %s416
    %p420 = pneg %p414
    %p421 = scmp.eq.s32.totalorder %s23, 3
    %p422 = por %p420, %p421
    %p423 = scmp.ne.s32.totalorder %s415, %s418
    %p424 = scmp.eq.s32.totalorder %s23, 0
    %p425 = por %p423, %p424
    %p426 = scmp.ne.s32.totalorder %s415, %s418
    %p427 = scmp.eq.s32.totalorder %s28, 3
    %p428 = por %p426, %p427
    %p429 = scmp.ne.s32.totalorder %s418, %s419
    %p430 = scmp.eq.s32.totalorder %s28, 0
    %p431 = por %p429, %p430
    %p432 = scmp.ne.s32.totalorder %s418, %s419
    %p433 = scmp.eq.s32.totalorder %s29, 3
    %p434 = por %p432, %p433
    %p436 = scmp.ne.s32.totalorder %s419, %s435
    %p437 = scmp.eq.s32.totalorder %s29, 0
    %p438 = por %p436, %p437
    %s439 = ssub.s32 %s31, %s38
    %p440 = scmp.eq.s32.totalorder %s439, 0
    %s442 = sadd.s32 %s441, 1
    %s443 = scalar_select %p440, %s441, %s442
    %p446 = pneg %p440
    %p447 = scmp.eq.s32.totalorder %s23, 3
    %p448 = por %p446, %p447
    %p449 = scmp.ne.s32.totalorder %s441, %s444
    %p450 = scmp.eq.s32.totalorder %s23, 0
    %p451 = por %p449, %p450
    %p452 = scmp.ne.s32.totalorder %s441, %s444
    %p453 = scmp.eq.s32.totalorder %s28, 3
    %p454 = por %p452, %p453
    %p455 = scmp.ne.s32.totalorder %s444, %s445
    %p456 = scmp.eq.s32.totalorder %s28, 0
    %p457 = por %p455, %p456
    %p458 = scmp.ne.s32.totalorder %s444, %s445
    %p459 = scmp.eq.s32.totalorder %s29, 3
    %p460 = por %p458, %p459
    %p462 = scmp.ne.s32.totalorder %s445, %s461
    %p463 = scmp.eq.s32.totalorder %s29, 0
    %p464 = por %p462, %p463
    %s465 = ssub.s32 %s30, %s42
    %p466 = scmp.eq.s32.totalorder %s465, 0
    %s468 = sadd.s32 %s467, 1
    %s469 = scalar_select %p466, %s467, %s468
    %p472 = pneg %p466
    %p473 = scmp.eq.s32.totalorder %s23, 3
    %p474 = por %p472, %p473
    %p475 = scmp.ne.s32.totalorder %s467, %s470
    %p476 = scmp.eq.s32.totalorder %s23, 0
    %p477 = por %p475, %p476
    %p478 = scmp.ne.s32.totalorder %s467, %s470
    %p479 = scmp.eq.s32.totalorder %s28, 3
    %p480 = por %p478, %p479
    %p481 = scmp.ne.s32.totalorder %s470, %s471
    %p482 = scmp.eq.s32.totalorder %s28, 0
    %p483 = por %p481, %p482
    %p484 = scmp.ne.s32.totalorder %s470, %s471
    %p485 = scmp.eq.s32.totalorder %s29, 3
    %p486 = por %p484, %p485
    %p488 = scmp.ne.s32.totalorder %s471, %s487
    %p489 = scmp.eq.s32.totalorder %s29, 0
    %p490 = por %p488, %p489
    %p491 = scmp.le.s32.totalorder 1, %s23
    %p492 = scmp.lt.s32.totalorder %s23, 5
    %p493 = pnand %p491, %p492
    %p494 = pneg %p493
    // Predicated region
    $region9: #{_lambda_.2} parent=5 // pred_check
      _
    $region10: #{_lambda_.2} parent=5 // pred_check_branch
      %496 = sbr.rel (%p493) target = $region12
    $region11: #{_lambda_.2} parent=5 // pred_region
      %s497 = ssub.s32 %s23, 1
      // Predicated region
      $region13: #{_lambda_.2} parent=11 // pred_check
        %p498 = pneg %p82
      $region14: #{_lambda_.2} parent=11 // pred_check_branch
        %500 = sbr.rel (%p498) target = $region16
      $region15: #{_lambda_.2} parent=11 // pred_region
        _
      $region16: #{_lambda_.2} parent=11 // pred_fallthru
        _
      // Predicated region
      $region17: #{_lambda_.2} parent=11 // pred_check
        %p501 = pneg %p103
      $region18: #{_lambda_.2} parent=11 // pred_check_branch
        %503 = sbr.rel (%p501) target = $region20
      $region19: #{_lambda_.2} parent=11 // pred_region
        _
      $region20: #{_lambda_.2} parent=11 // pred_fallthru
        _
      // Predicated region
      $region21: #{_lambda_.2} parent=11 // pred_check
        %p504 = pneg %p124
      $region22: #{_lambda_.2} parent=11 // pred_check_branch
        %506 = sbr.rel (%p504) target = $region24
      $region23: #{_lambda_.2} parent=11 // pred_region
        _
      $region24: #{_lambda_.2} parent=11 // pred_fallthru
        _
      // Predicated region
      $region25: #{_lambda_.2} parent=11 // pred_check
        %p507 = pneg %p145
      $region26: #{_lambda_.2} parent=11 // pred_check_branch
        %509 = sbr.rel (%p507) target = $region28
      $region27: #{_lambda_.2} parent=11 // pred_region
        _
      $region28: #{_lambda_.2} parent=11 // pred_fallthru
        _
    $region12: #{_lambda_.2} parent=5 // pred_fallthru
      _
    %p510 = scmp.lt.s32.totalorder %s23, 4
    // Predicated region
    $region29: #{_lambda_.2} parent=5 // pred_check
      %p511 = pneg %p510
    $region30: #{_lambda_.2} parent=5 // pred_check_branch
      %513 = sbr.rel (%p511) target = $region32
    $region31: #{_lambda_.2} parent=5 // pred_region
      // Predicated region
      $region33: #{_lambda_.2} parent=31 // pred_check
        %p514 = pneg %p55
      $region34: #{_lambda_.2} parent=31 // pred_check_branch
        %516 = sbr.rel (%p514) target = $region36
      $region35: #{_lambda_.2} parent=31 // pred_region
        %p517 = scmp.lt.s32.totalorder %s30, 1
        %s518 = scalar_select %p517, %s30, 1
        %s519 = smul.addr %s518, 2
        %s520 = smul.addr %s519, 4
        %s521 = scalar_lea.vmem %s0, %s520
      $region36: #{_lambda_.2} parent=31 // pred_fallthru
        _
      // Predicated region
      $region37: #{_lambda_.2} parent=31 // pred_check
        %p522 = pneg %p165
      $region38: #{_lambda_.2} parent=31 // pred_check_branch
        %524 = sbr.rel (%p522) target = $region40
      $region39: #{_lambda_.2} parent=31 // pred_region
        %p525 = scmp.lt.s32.totalorder %s31, 1
        %s526 = scalar_select %p525, %s31, 1
        %s527 = scalar_lea.vmem %s5, %s526
      $region40: #{_lambda_.2} parent=31 // pred_fallthru
        _
      // Predicated region
      $region41: #{_lambda_.2} parent=31 // pred_check
        %p528 = pneg %p191
      $region42: #{_lambda_.2} parent=31 // pred_check_branch
        %530 = sbr.rel (%p528) target = $region44
      $region43: #{_lambda_.2} parent=31 // pred_region
        %p531 = scmp.lt.s32.totalorder %s31, 1
        %s532 = scalar_select %p531, %s31, 1
        %s533 = scalar_lea.vmem %s6, %s532
      $region44: #{_lambda_.2} parent=31 // pred_fallthru
        _
      // Predicated region
      $region45: #{_lambda_.2} parent=31 // pred_check
        %p534 = pneg %p217
      $region46: #{_lambda_.2} parent=31 // pred_check_branch
        %536 = sbr.rel (%p534) target = $region48
      $region47: #{_lambda_.2} parent=31 // pred_region
        %p537 = scmp.lt.s32.totalorder %s31, 1
        %s538 = scalar_select %p537, %s31, 1
        %s539 = smul.addr %s538, 48
        %s540 = smul.addr %s539, 4
        %s541 = scalar_lea.vmem %s7, %s540
      $region48: #{_lambda_.2} parent=31 // pred_fallthru
        _
      // Predicated region
      $region49: #{_lambda_.2} parent=31 // pred_check
        %p542 = pneg %p243
      $region50: #{_lambda_.2} parent=31 // pred_check_branch
        %544 = sbr.rel (%p542) target = $region52
      $region51: #{_lambda_.2} parent=31 // pred_region
        %p545 = scmp.lt.s32.totalorder %s31, 1
        %s546 = scalar_select %p545, %s31, 1
        %s547 = smul.addr %s546, 12
        %s548 = scalar_lea.vmem %s8, %s547
      $region52: #{_lambda_.2} parent=31 // pred_fallthru
        _
      // Predicated region
      $region53: #{_lambda_.2} parent=31 // pred_check
        %p549 = pneg %p269
      $region54: #{_lambda_.2} parent=31 // pred_check_branch
        %551 = sbr.rel (%p549) target = $region56
      $region55: #{_lambda_.2} parent=31 // pred_region
        %p552 = scmp.lt.s32.totalorder %s31, 1
        %s553 = scalar_select %p552, %s31, 1
        %s554 = smul.addr %s553, 4
        %s555 = smul.addr %s554, 4
        %s556 = scalar_lea.vmem %s9, %s555
      $region56: #{_lambda_.2} parent=31 // pred_fallthru
        _
      // Predicated region
      $region57: #{_lambda_.2} parent=31 // pred_check
        %p557 = pneg %p295
      $region58: #{_lambda_.2} parent=31 // pred_check_branch
        %559 = sbr.rel (%p557) target = $region60
      $region59: #{_lambda_.2} parent=31 // pred_region
        %p560 = scmp.lt.s32.totalorder %s31, 1
        %s561 = scalar_select %p560, %s31, 1
        %s562 = scalar_lea.vmem %s10, %s561
      $region60: #{_lambda_.2} parent=31 // pred_fallthru
        _
      // Predicated region
      $region61: #{_lambda_.2} parent=31 // pred_check
        %p563 = pneg %p321
      $region62: #{_lambda_.2} parent=31 // pred_check_branch
        %565 = sbr.rel (%p563) target = $region64
      $region63: #{_lambda_.2} parent=31 // pred_region
        %p566 = scmp.lt.s32.totalorder %s31, 1
        %s567 = scalar_select %p566, %s31, 1
        %s568 = scalar_lea.vmem %s11, %s567
      $region64: #{_lambda_.2} parent=31 // pred_fallthru
        _
      // Predicated region
      $region65: #{_lambda_.2} parent=31 // pred_check
        %p569 = pneg %p347
      $region66: #{_lambda_.2} parent=31 // pred_check_branch
        %571 = sbr.rel (%p569) target = $region68
      $region67: #{_lambda_.2} parent=31 // pred_region
        %p572 = scmp.lt.s32.totalorder %s31, 1
        %s573 = scalar_select %p572, %s31, 1
        %s574 = scalar_lea.vmem %s12, %s573
      $region68: #{_lambda_.2} parent=31 // pred_fallthru
        _
      // Predicated region
      $region69: #{_lambda_.2} parent=31 // pred_check
        %p575 = pneg %p373
      $region70: #{_lambda_.2} parent=31 // pred_check_branch
        %577 = sbr.rel (%p575) target = $region72
      $region71: #{_lambda_.2} parent=31 // pred_region
        %p578 = scmp.lt.s32.totalorder %s31, 1
        %s579 = scalar_select %p578, %s31, 1
        %s580 = smul.addr %s579, 4
        %s581 = smul.addr %s580, 4
        %s582 = scalar_lea.vmem %s13, %s581
      $region72: #{_lambda_.2} parent=31 // pred_fallthru
        _
      // Predicated region
      $region73: #{_lambda_.2} parent=31 // pred_check
        %p583 = pneg %p399
      $region74: #{_lambda_.2} parent=31 // pred_check_branch
        %585 = sbr.rel (%p583) target = $region76
      $region75: #{_lambda_.2} parent=31 // pred_region
        %p586 = scmp.lt.s32.totalorder %s31, 1
        %s587 = scalar_select %p586, %s31, 1
        %s588 = scalar_lea.vmem %s14, %s587
      $region76: #{_lambda_.2} parent=31 // pred_fallthru
        _
      // Predicated region
      $region77: #{_lambda_.2} parent=31 // pred_check
        %p589 = pneg %p425
      $region78: #{_lambda_.2} parent=31 // pred_check_branch
        %591 = sbr.rel (%p589) target = $region80
      $region79: #{_lambda_.2} parent=31 // pred_region
        %p592 = scmp.lt.s32.totalorder %s31, 1
        %s593 = scalar_select %p592, %s31, 1
        %s594 = smul.addr %s593, 8
        %s595 = smul.addr %s594, 4
        %s596 = scalar_lea.vmem %s15, %s595
      $region80: #{_lambda_.2} parent=31 // pred_fallthru
        _
      // Predicated region
      $region81: #{_lambda_.2} parent=31 // pred_check
        %p597 = pneg %p451
      $region82: #{_lambda_.2} parent=31 // pred_check_branch
        %599 = sbr.rel (%p597) target = $region84
      $region83: #{_lambda_.2} parent=31 // pred_region
        %p600 = scmp.lt.s32.totalorder %s31, 1
        %s601 = scalar_select %p600, %s31, 1
        %s602 = scalar_lea.vmem %s16, %s601
      $region84: #{_lambda_.2} parent=31 // pred_fallthru
        _
    $region32: #{_lambda_.2} parent=5 // pred_fallthru
      _
    %p603 = scmp.le.s32.totalorder 1, %s23
    %p604 = scmp.lt.s32.totalorder %s23, 5
    %p605 = pnand %p603, %p604
    %p606 = pneg %p605
    // Predicated region
    $region85: #{_lambda_.2} parent=5 // pred_check
      _
    $region86: #{_lambda_.2} parent=5 // pred_check_branch
      %608 = sbr.rel (%p605) target = $region88
    $region87: #{_lambda_.2} parent=5 // pred_region
      %s609 = ssub.s32 %s23, 1
      %p610 = scmp.lt.s32.totalorder %s32, 1
      %s611 = scalar_select %p610, %s32, 1
      %s612 = smul.addr %s611, 2
      %s613 = smul.addr %s612, 4
      %s614 = scalar_lea.vmem %s0, %s613
      %p615 = pneg %p61
      %p616 = pneg %p58
      %p617 = pneg %p82
      %p618 = pneg %p79
      %p619 = pneg %p103
      %p620 = pneg %p100
      %p621 = pneg %p124
      %p622 = pneg %p121
      %p623 = pneg %p145
      %p624 = pneg %p142
      %p625 = scmp.lt.s32.totalorder %s33, 1
      %s626 = scalar_select %p625, %s33, 1
      %s627 = scalar_lea.vmem %s5, %s626
      %p628 = pneg %p171
      %p629 = pneg %p168
      %p630 = scmp.lt.s32.totalorder %s33, 1
      %s631 = scalar_select %p630, %s33, 1
      %s632 = scalar_lea.vmem %s6, %s631
      %p633 = pneg %p197
      %p634 = pneg %p194
      %p635 = scmp.lt.s32.totalorder %s33, 1
      %s636 = scalar_select %p635, %s33, 1
      %s637 = smul.addr %s636, 48
      %s638 = smul.addr %s637, 4
      %s639 = scalar_lea.vmem %s7, %s638
      %p640 = pneg %p223
      %p641 = pneg %p220
      %p642 = scmp.lt.s32.totalorder %s33, 1
      %s643 = scalar_select %p642, %s33, 1
      %s644 = smul.addr %s643, 12
      %s645 = scalar_lea.vmem %s8, %s644
      %p646 = pneg %p249
      %p647 = pneg %p246
      %p648 = scmp.lt.s32.totalorder %s33, 1
      %s649 = scalar_select %p648, %s33, 1
      %s650 = smul.addr %s649, 4
      %s651 = smul.addr %s650, 4
      %s652 = scalar_lea.vmem %s9, %s651
      %p653 = pneg %p275
      %p654 = pneg %p272
      %p655 = scmp.lt.s32.totalorder %s33, 1
      %s656 = scalar_select %p655, %s33, 1
      %s657 = scalar_lea.vmem %s10, %s656
      %p658 = pneg %p301
      %p659 = pneg %p298
      %p660 = scmp.lt.s32.totalorder %s33, 1
      %s661 = scalar_select %p660, %s33, 1
      %s662 = scalar_lea.vmem %s11, %s661
      %p663 = pneg %p327
      %p664 = pneg %p324
      %p665 = scmp.lt.s32.totalorder %s33, 1
      %s666 = scalar_select %p665, %s33, 1
      %s667 = scalar_lea.vmem %s12, %s666
      %p668 = pneg %p353
      %p669 = pneg %p350
      %p670 = scmp.lt.s32.totalorder %s33, 1
      %s671 = scalar_select %p670, %s33, 1
      %s672 = smul.addr %s671, 4
      %s673 = smul.addr %s672, 4
      %s674 = scalar_lea.vmem %s13, %s673
      %p675 = pneg %p379
      %p676 = pneg %p376
      %p677 = scmp.lt.s32.totalorder %s33, 1
      %s678 = scalar_select %p677, %s33, 1
      %s679 = scalar_lea.vmem %s14, %s678
      %p680 = pneg %p405
      %p681 = pneg %p402
      %p682 = scmp.lt.s32.totalorder %s33, 1
      %s683 = scalar_select %p682, %s33, 1
      %s684 = smul.addr %s683, 8
      %s685 = smul.addr %s684, 4
      %s686 = scalar_lea.vmem %s15, %s685
      %p687 = pneg %p431
      %p688 = pneg %p428
      %p689 = scmp.lt.s32.totalorder %s33, 1
      %s690 = scalar_select %p689, %s33, 1
      %s691 = scalar_lea.vmem %s16, %s690
      %p692 = pneg %p457
      %p693 = pneg %p454
      %p694 = pneg %p483
      %p695 = pneg %p480
      %p696 = scmp.lt.s32.totalorder %s32, 1
      %s697 = scalar_select %p696, %s32, 1
      %s698 = smul.addr %s697, 8
      %s699 = scalar_lea.vmem %s17, %s698
      %p700 = scmp.lt.s32.totalorder %s32, 1
      %s701 = scalar_select %p700, %s32, 1
      %s702 = smul.addr %s701, 2
      %s703 = smul.addr %s702, 4
      %s704 = scalar_lea.vmem %s0, %s703
      %p705 = scmp.lt.s32.totalorder %s33, 1
      %s706 = scalar_select %p705, %s33, 1
      %s707 = scalar_lea.vmem %s5, %s706
      %p708 = scmp.lt.s32.totalorder %s33, 1
      %s709 = scalar_select %p708, %s33, 1
      %s710 = scalar_lea.vmem %s6, %s709
      %p711 = scmp.lt.s32.totalorder %s33, 1
      %s712 = scalar_select %p711, %s33, 1
      %s713 = smul.addr %s712, 48
      %s714 = smul.addr %s713, 4
      %s715 = scalar_lea.vmem %s7, %s714
      %p716 = scmp.lt.s32.totalorder %s33, 1
      %s717 = scalar_select %p716, %s33, 1
      %s718 = smul.addr %s717, 12
      %s719 = scalar_lea.vmem %s8, %s718
      %p720 = scmp.lt.s32.totalorder %s33, 1
      %s721 = scalar_select %p720, %s33, 1
      %s722 = smul.addr %s721, 4
      %s723 = smul.addr %s722, 4
      %s724 = scalar_lea.vmem %s9, %s723
      %p725 = scmp.lt.s32.totalorder %s33, 1
      %s726 = scalar_select %p725, %s33, 1
      %s727 = scalar_lea.vmem %s10, %s726
      %p728 = scmp.lt.s32.totalorder %s33, 1
      %s729 = scalar_select %p728, %s33, 1
      %s730 = scalar_lea.vmem %s11, %s729
      %p731 = scmp.lt.s32.totalorder %s33, 1
      %s732 = scalar_select %p731, %s33, 1
      %s733 = scalar_lea.vmem %s12, %s732
      %p734 = scmp.lt.s32.totalorder %s33, 1
      %s735 = scalar_select %p734, %s33, 1
      %s736 = smul.addr %s735, 4
      %s737 = smul.addr %s736, 4
      %s738 = scalar_lea.vmem %s13, %s737
      %p739 = scmp.lt.s32.totalorder %s33, 1
      %s740 = scalar_select %p739, %s33, 1
      %s741 = scalar_lea.vmem %s14, %s740
      %p742 = scmp.lt.s32.totalorder %s33, 1
      %s743 = scalar_select %p742, %s33, 1
      %s744 = smul.addr %s743, 8
      %s745 = smul.addr %s744, 4
      %s746 = scalar_lea.vmem %s15, %s745
      %p747 = scmp.lt.s32.totalorder %s33, 1
      %s748 = scalar_select %p747, %s33, 1
      %s749 = scalar_lea.vmem %s16, %s748
      %p750 = scmp.lt.s32.totalorder %s32, 1
      %s751 = scalar_select %p750, %s32, 1
      %s752 = smul.addr %s751, 8
      %s753 = scalar_lea.vmem %s17, %s752
      %p755 = scmp.eq.s32.totalorder %s33, 0
      // Predicated region
      $region89: #{_lambda_.2} parent=87 // pred_check
        %p756 = pneg %p755
      $region90: #{_lambda_.2} parent=87 // pred_check_branch
        %758 = sbr.rel (%p756) target = $region92
      $region91: #{_lambda_.2} parent=87 // pred_region
        %v759 = vld [vmem:[%s704] sm:$0x77]
        %v760 = vld [vmem:[%s2] sm:$0xf]
        %v761 = vld [vmem:[%s2 + $0x4] sm:$0xf]
        %v762 = vld [vmem:[%s2 + $0x8] sm:$0xf]
        %v763 = vld [vmem:[%s2 + $0xc] sm:$0xf]
        %v764 = vld [vmem:[%s2 + $0x10] sm:$0xf]
        %v765 = vld [vmem:[%s2 + $0x14] sm:$0xf]
        %v766 = vld [vmem:[%s2 + $0x18] sm:$0xf]
        %v767 = vld [vmem:[%s2 + $0x1c] sm:$0xf]
        %v768 = vld [vmem:[%s2 + $0x20] sm:$0xf]
        %v769 = vld [vmem:[%s2 + $0x24] sm:$0xf]
        %v770 = vld [vmem:[%s2 + $0x28] sm:$0xf]
        %v771 = vld [vmem:[%s2 + $0x2c] sm:$0xf]
        %v772 = vld [vmem:[%s2 + $0x30] sm:$0xf]
        %v773 = vld [vmem:[%s2 + $0x34] sm:$0xf]
        %v774 = vld [vmem:[%s2 + $0x38] sm:$0xf]
        %v775 = vld [vmem:[%s2 + $0x3c] sm:$0xf]
        %v776 = vld [vmem:[%s2 + $0x40] sm:$0xf]
        %v777 = vld [vmem:[%s2 + $0x44] sm:$0xf]
        %v778 = vld [vmem:[%s2 + $0x48] sm:$0xf]
        %v779 = vld [vmem:[%s2 + $0x4c] sm:$0xf]
        %v780 = vld [vmem:[%s2 + $0x50] sm:$0xf]
        %v781 = vld [vmem:[%s2 + $0x54] sm:$0xf]
        %v782 = vld [vmem:[%s2 + $0x58] sm:$0xf]
        %v783 = vld [vmem:[%s2 + $0x5c] sm:$0xf]
        %v784 = vld [vmem:[%s2 + $0x60] sm:$0xf]
        %v785 = vld [vmem:[%s2 + $0x64] sm:$0xf]
        %v786 = vld [vmem:[%s2 + $0x68] sm:$0xf]
        %v787 = vld [vmem:[%s2 + $0x6c] sm:$0xf]
        %v788 = vld [vmem:[%s2 + $0x70] sm:$0xf]
        %v789 = vld [vmem:[%s2 + $0x74] sm:$0xf]
        %v790 = vld [vmem:[%s2 + $0x78] sm:$0xf]
        %v791 = vld [vmem:[%s2 + $0x7c] sm:$0xf]
        %v792 = vld [vmem:[%s1] sm:$0x1f]
        %v794 = vunpack.c.l.b16 %v759
        %v795 = vunpack.c.h.b16 %v759
        %v796 = vpack.c.b16 %v794, %v794
        %v797 = vpack.c.b16 %v795, %v795
        %v832 = vunpack.c.l.b16 %v760
        %v833 = vunpack.c.l.b16 %v761
        %v834 = vunpack.c.l.b16 %v762
        %v835 = vunpack.c.l.b16 %v763
        %v836 = vunpack.c.l.b16 %v764
        %v837 = vunpack.c.l.b16 %v765
        %v838 = vunpack.c.l.b16 %v766
        %v839 = vunpack.c.l.b16 %v767
        %v840 = vunpack.c.l.b16 %v768
        %v841 = vunpack.c.l.b16 %v769
        %v842 = vunpack.c.l.b16 %v770
        %v843 = vunpack.c.l.b16 %v771
        %v844 = vunpack.c.l.b16 %v772
        %v845 = vunpack.c.l.b16 %v773
        %v846 = vunpack.c.l.b16 %v774
        %v847 = vunpack.c.l.b16 %v775
        %v848 = vunpack.c.l.b16 %v776
        %v849 = vunpack.c.l.b16 %v777
        %v850 = vunpack.c.l.b16 %v778
        %v851 = vunpack.c.l.b16 %v779
        %v852 = vunpack.c.l.b16 %v780
        %v853 = vunpack.c.l.b16 %v781
        %v854 = vunpack.c.l.b16 %v782
        %v855 = vunpack.c.l.b16 %v783
        %v856 = vunpack.c.l.b16 %v784
        %v857 = vunpack.c.l.b16 %v785
        %v858 = vunpack.c.l.b16 %v786
        %v859 = vunpack.c.l.b16 %v787
        %v860 = vunpack.c.l.b16 %v788
        %v861 = vunpack.c.l.b16 %v789
        %v862 = vunpack.c.l.b16 %v790
        %v863 = vunpack.c.l.b16 %v791
        %v864 = vpack.c.b16 %v833, %v832
        %v865 = vpack.c.b16 %v835, %v834
        %v866 = vpack.c.b16 %v837, %v836
        %v867 = vpack.c.b16 %v839, %v838
        %v868 = vpack.c.b16 %v841, %v840
        %v869 = vpack.c.b16 %v843, %v842
        %v870 = vpack.c.b16 %v845, %v844
        %v871 = vpack.c.b16 %v847, %v846
        %v872 = vpack.c.b16 %v849, %v848
        %v873 = vpack.c.b16 %v851, %v850
        %v874 = vpack.c.b16 %v853, %v852
        %v875 = vpack.c.b16 %v855, %v854
        %v876 = vpack.c.b16 %v857, %v856
        %v877 = vpack.c.b16 %v859, %v858
        %v878 = vpack.c.b16 %v861, %v860
        %v879 = vpack.c.b16 %v863, %v862
        %896 = vmatprep.subr.bf16.mxu0 0
        %897 = vmatpush1.bf16.msra.mxu0 %v864
        %898 = vmatprep.subr.bf16.mxu0 0
        %899 = vmatpush1.bf16.msra.mxu0 %v865
        %900 = vmatprep.subr.bf16.mxu0 0
        %901 = vmatpush1.bf16.msra.mxu0 %v866
        %902 = vmatprep.subr.bf16.mxu0 0
        %903 = vmatpush1.bf16.msra.mxu0 %v867
        %904 = vmatprep.subr.bf16.mxu0 0
        %905 = vmatpush1.bf16.msra.mxu0 %v868
        %906 = vmatprep.subr.bf16.mxu0 0
        %907 = vmatpush1.bf16.msra.mxu0 %v869
        %908 = vmatprep.subr.bf16.mxu0 0
        %909 = vmatpush1.bf16.msra.mxu0 %v870
        %910 = vmatprep.subr.bf16.mxu0 0
        %911 = vmatpush1.bf16.msra.mxu0 %v871
        %912 = vmatprep.subr.bf16.mxu0 0
        %913 = vmatpush1.bf16.msra.mxu0 %v872
        %914 = vmatprep.subr.bf16.mxu0 0
        %915 = vmatpush1.bf16.msra.mxu0 %v873
        %916 = vmatprep.subr.bf16.mxu0 0
        %917 = vmatpush1.bf16.msra.mxu0 %v874
        %918 = vmatprep.subr.bf16.mxu0 0
        %919 = vmatpush1.bf16.msra.mxu0 %v875
        %920 = vmatprep.subr.bf16.mxu0 0
        %921 = vmatpush1.bf16.msra.mxu0 %v876
        %922 = vmatprep.subr.bf16.mxu0 0
        %923 = vmatpush1.bf16.msra.mxu0 %v877
        %924 = vmatprep.subr.bf16.mxu0 0
        %925 = vmatpush1.bf16.msra.mxu0 %v878
        %926 = vmatprep.subr.bf16.mxu0 0
        %927 = vmatpush1.bf16.msra.mxu0 %v879
        %928 = vmatprep.mubr.bf16.mxu0 %v797
        %929 = vmatmul.mubr.bf16.gmra.mrb[0].mxu0 %v796
        %v930 = vpop.f32.mrb[0].mxu0
        %v931 = vadd.f32 %v792, %v930
        %v932 = vpop.f32.mrb[0].mxu0
        %v933 = vpop.f32.mrb[0].mxu0
        %v934 = vpop.f32.mrb[0].mxu0
        %935 = vdwg.mxu0
        %vm936 = vcmask 258048
        %937 = vst.msk [vmem:[#allocation2] sm:$0x1f] %vm936, %v931
      $region92: #{_lambda_.2} parent=87 // pred_fallthru
        _
      %v938 = vld [vmem:[#allocation2] sm:$0x1f]
      %v939 = vld [vmem:[%s707] sm:$0x1]
      %v940 = vld [vmem:[%s710] sm:$0x1]
      %vm941 = vcmask 258048
      %v942 = vsel %vm941, %v938, 0.0
      %943 = vadd.xlane.f32.xlu0 %v942
      %v944 = vpop.xlane.xlu0 %943
      %v945 = vrcp.pop 32.0
      %v946 = vmul.f32 %v944, %v945
      %v947 = vsub.f32 %v938, %v946
      %v948 = vmul.f32 %v947, %v947
      %v949 = vsel %vm941, %v948, 0.0
      %950 = vadd.xlane.f32.xlu0 %v949
      %v951 = vpop.xlane.xlu0 %950
      %v952 = vmul.f32 %v951, %v945
      %v953 = vadd.f32 %v952, 1e-05
      %v954 = vrsqrt.pop %v953
      %v955 = vmul.f32 %v947, %v954
      %v957 = vlaneseq
      %v958 = vshrl.u32 %v957, 7
      %v959 = vsub.s32 0, %v958
      %v960 = vrot.slane %v939, %v959
      %v962 = vmul.f32 %v955, %v960
      %v964 = vlaneseq
      %v965 = vshrl.u32 %v964, 7
      %v966 = vsub.s32 0, %v965
      %v967 = vrot.slane %v940, %v966
      %v969 = vadd.f32 %v962, %v967
      %v970 = vld [vmem:[%s715] sm:$0xf]
      %v971 = vld [vmem:[%s715 + $0x4] sm:$0xf]
      %v972 = vld [vmem:[%s715 + $0x8] sm:$0xf]
      %v973 = vld [vmem:[%s715 + $0xc] sm:$0xf]
      %v974 = vld [vmem:[%s715 + $0x10] sm:$0xf]
      %v975 = vld [vmem:[%s715 + $0x14] sm:$0xf]
      %v976 = vld [vmem:[%s715 + $0x18] sm:$0xf]
      %v977 = vld [vmem:[%s715 + $0x1c] sm:$0xf]
      %v978 = vld [vmem:[%s715 + $0x20] sm:$0xf]
      %v979 = vld [vmem:[%s715 + $0x24] sm:$0xf]
      %v980 = vld [vmem:[%s715 + $0x28] sm:$0xf]
      %v981 = vld [vmem:[%s715 + $0x2c] sm:$0xf]
      %v982 = vld [vmem:[%s715 + $0x30] sm:$0xf]
      %v983 = vld [vmem:[%s715 + $0x34] sm:$0xf]
      %v984 = vld [vmem:[%s715 + $0x38] sm:$0xf]
      %v985 = vld [vmem:[%s715 + $0x3c] sm:$0xf]
      %v986 = vld [vmem:[%s715 + $0x40] sm:$0xf]
      %v987 = vld [vmem:[%s715 + $0x44] sm:$0xf]
      %v988 = vld [vmem:[%s715 + $0x48] sm:$0xf]
      %v989 = vld [vmem:[%s715 + $0x4c] sm:$0xf]
      %v990 = vld [vmem:[%s715 + $0x50] sm:$0xf]
      %v991 = vld [vmem:[%s715 + $0x54] sm:$0xf]
      %v992 = vld [vmem:[%s715 + $0x58] sm:$0xf]
      %v993 = vld [vmem:[%s715 + $0x5c] sm:$0xf]
      %v994 = vld [vmem:[%s715 + $0x60] sm:$0xf]
      %v995 = vld [vmem:[%s715 + $0x64] sm:$0xf]
      %v996 = vld [vmem:[%s715 + $0x68] sm:$0xf]
      %v997 = vld [vmem:[%s715 + $0x6c] sm:$0xf]
      %v998 = vld [vmem:[%s715 + $0x70] sm:$0xf]
      %v999 = vld [vmem:[%s715 + $0x74] sm:$0xf]
      %v1000 = vld [vmem:[%s715 + $0x78] sm:$0xf]
      %v1001 = vld [vmem:[%s715 + $0x7c] sm:$0xf]
      %v1002 = vld [vmem:[%s715 + $0x80] sm:$0xf]
      %v1003 = vld [vmem:[%s715 + $0x84] sm:$0xf]
      %v1004 = vld [vmem:[%s715 + $0x88] sm:$0xf]
      %v1005 = vld [vmem:[%s715 + $0x8c] sm:$0xf]
      %v1006 = vld [vmem:[%s715 + $0x90] sm:$0xf]
      %v1007 = vld [vmem:[%s715 + $0x94] sm:$0xf]
      %v1008 = vld [vmem:[%s715 + $0x98] sm:$0xf]
      %v1009 = vld [vmem:[%s715 + $0x9c] sm:$0xf]
      %v1010 = vld [vmem:[%s715 + $0xa0] sm:$0xf]
      %v1011 = vld [vmem:[%s715 + $0xa4] sm:$0xf]
      %v1012 = vld [vmem:[%s715 + $0xa8] sm:$0xf]
      %v1013 = vld [vmem:[%s715 + $0xac] sm:$0xf]
      %v1014 = vld [vmem:[%s715 + $0xb0] sm:$0xf]
      %v1015 = vld [vmem:[%s715 + $0xb4] sm:$0xf]
      %v1016 = vld [vmem:[%s715 + $0xb8] sm:$0xf]
      %v1017 = vld [vmem:[%s715 + $0xbc] sm:$0xf]
      %v1018 = vld [vmem:[%s719] sm:$0x1]
      %v1019 = vld [vmem:[%s719 + $0x1] sm:$0x1]
      %v1020 = vld [vmem:[%s719 + $0x2] sm:$0x1]
      %v1021 = vld [vmem:[%s719 + $0x3] sm:$0x1]
      %v1022 = vld [vmem:[%s719 + $0x4] sm:$0x1]
      %v1023 = vld [vmem:[%s719 + $0x5] sm:$0x1]
      %v1024 = vld [vmem:[%s719 + $0x6] sm:$0x1]
      %v1025 = vld [vmem:[%s719 + $0x7] sm:$0x1]
      %v1026 = vld [vmem:[%s719 + $0x8] sm:$0x1]
      %v1027 = vld [vmem:[%s719 + $0x9] sm:$0x1]
      %v1028 = vld [vmem:[%s719 + $0xa] sm:$0x1]
      %v1029 = vld [vmem:[%s719 + $0xb] sm:$0x1]
      %v1030 = vpack.c.bf16 %v969, %v969
      %v1043 = vlaneseq
      %v1044 = vshrl.u32 %v1043, 7
      %v1045 = vsub.s32 0, %v1044
      %v1046 = vrot.slane %v1018, %v1045
      %v1047 = vlaneseq
      %v1048 = vshrl.u32 %v1047, 7
      %v1049 = vsub.s32 0, %v1048
      %v1050 = vrot.slane %v1019, %v1049
      %v1051 = vlaneseq
      %v1052 = vshrl.u32 %v1051, 7
      %v1053 = vsub.s32 0, %v1052
      %v1054 = vrot.slane %v1020, %v1053
      %v1055 = vlaneseq
      %v1056 = vshrl.u32 %v1055, 7
      %v1057 = vsub.s32 0, %v1056
      %v1058 = vrot.slane %v1021, %v1057
      %v1059 = vlaneseq
      %v1060 = vshrl.u32 %v1059, 7
      %v1061 = vsub.s32 0, %v1060
      %v1062 = vrot.slane %v1022, %v1061
      %v1063 = vlaneseq
      %v1064 = vshrl.u32 %v1063, 7
      %v1065 = vsub.s32 0, %v1064
      %v1066 = vrot.slane %v1023, %v1065
      %v1067 = vlaneseq
      %v1068 = vshrl.u32 %v1067, 7
      %v1069 = vsub.s32 0, %v1068
      %v1070 = vrot.slane %v1024, %v1069
      %v1071 = vlaneseq
      %v1072 = vshrl.u32 %v1071, 7
      %v1073 = vsub.s32 0, %v1072
      %v1074 = vrot.slane %v1025, %v1073
      %v1075 = vlaneseq
      %v1076 = vshrl.u32 %v1075, 7
      %v1077 = vsub.s32 0, %v1076
      %v1078 = vrot.slane %v1026, %v1077
      %v1079 = vlaneseq
      %v1080 = vshrl.u32 %v1079, 7
      %v1081 = vsub.s32 0, %v1080
      %v1082 = vrot.slane %v1027, %v1081
      %v1083 = vlaneseq
      %v1084 = vshrl.u32 %v1083, 7
      %v1085 = vsub.s32 0, %v1084
      %v1086 = vrot.slane %v1028, %v1085
      %v1087 = vlaneseq
      %v1088 = vshrl.u32 %v1087, 7
      %v1089 = vsub.s32 0, %v1088
      %v1090 = vrot.slane %v1029, %v1089
      %v1107 = vunpack.c.l.b16 %v970
      %v1108 = vunpack.c.l.b16 %v971
      %v1109 = vunpack.c.l.b16 %v972
      %v1110 = vunpack.c.l.b16 %v973
      %v1111 = vpack.c.b16 %v1108, %v1107
      %v1112 = vpack.c.b16 %v1110, %v1109
      %vm1115 = vcmask 261120
      %v1117 = vsel %vm1115, %v1030, 0
      %1119 = vmatprep.subr.bf16.mxu0 0
      %1120 = vmatpush1.bf16.msra.mxu0 %v1111
      %1121 = vmatprep.subr.bf16.mxu0 0
      %1122 = vmatpush1.bf16.msra.mxu0 %v1112
      %1123 = vmatprep.subr.bf16.mxu0 0
      %1124 = vmatpush1.bf16.msra.mxu0 0
      %1125 = vmatprep.subr.bf16.mxu0 0
      %1126 = vmatpush1.bf16.msra.mxu0 0
      %1127 = vmatprep.subr.bf16.mxu0 0
      %1128 = vmatpush1.bf16.msra.mxu0 0
      %1129 = vmatprep.subr.bf16.mxu0 0
      %1130 = vmatpush1.bf16.msra.mxu0 0
      %1131 = vmatprep.subr.bf16.mxu0 0
      %1132 = vmatpush1.bf16.msra.mxu0 0
      %1133 = vmatprep.subr.bf16.mxu0 0
      %1134 = vmatpush1.bf16.msra.mxu0 0
      %1135 = vmatprep.subr.bf16.mxu0 0
      %1136 = vmatpush1.bf16.msra.mxu0 0
      %1137 = vmatprep.subr.bf16.mxu0 0
      %1138 = vmatpush1.bf16.msra.mxu0 0
      %1139 = vmatprep.subr.bf16.mxu0 0
      %1140 = vmatpush1.bf16.msra.mxu0 0
      %1141 = vmatprep.subr.bf16.mxu0 0
      %1142 = vmatpush1.bf16.msra.mxu0 0
      %1143 = vmatprep.subr.bf16.mxu0 0
      %1144 = vmatpush1.bf16.msra.mxu0 0
      %1145 = vmatprep.subr.bf16.mxu0 0
      %1146 = vmatpush1.bf16.msra.mxu0 0
      %1147 = vmatprep.subr.bf16.mxu0 0
      %1148 = vmatpush1.bf16.msra.mxu0 0
      %1149 = vmatprep.subr.bf16.mxu0 0
      %1150 = vmatpush1.bf16.msra.mxu0 0
      %1151 = vmatprep.mubr.bf16.mxu0 0
      %1152 = vmatmul.mubr.bf16.gmra.mrb[0].mxu0 %v1117
      %v1153 = vpop.f32.mrb[0].mxu0
      %v1154 = vadd.f32 %v1046, %v1153
      %v1155 = vpop.f32.mrb[0].mxu0
      %v1156 = vpop.f32.mrb[0].mxu0
      %v1157 = vpop.f32.mrb[0].mxu0
      %1158 = vdwg.mxu0
      %v1163 = vunpack.c.l.b16 %v974
      %v1164 = vunpack.c.l.b16 %v975
      %v1165 = vunpack.c.l.b16 %v976
      %v1166 = vunpack.c.l.b16 %v977
      %v1167 = vpack.c.b16 %v1164, %v1163
      %v1168 = vpack.c.b16 %v1166, %v1165
      %1171 = vmatprep.subr.bf16.mxu0 0
      %1172 = vmatpush1.bf16.msra.mxu0 %v1167
      %1173 = vmatprep.subr.bf16.mxu0 0
      %1174 = vmatpush1.bf16.msra.mxu0 %v1168
      %1175 = vmatprep.subr.bf16.mxu0 0
      %1176 = vmatpush1.bf16.msra.mxu0 0
      %1177 = vmatprep.subr.bf16.mxu0 0
      %1178 = vmatpush1.bf16.msra.mxu0 0
      %1179 = vmatprep.subr.bf16.mxu0 0
      %1180 = vmatpush1.bf16.msra.mxu0 0
      %1181 = vmatprep.subr.bf16.mxu0 0
      %1182 = vmatpush1.bf16.msra.mxu0 0
      %1183 = vmatprep.subr.bf16.mxu0 0
      %1184 = vmatpush1.bf16.msra.mxu0 0
      %1185 = vmatprep.subr.bf16.mxu0 0
      %1186 = vmatpush1.bf16.msra.mxu0 0
      %1187 = vmatprep.subr.bf16.mxu0 0
      %1188 = vmatpush1.bf16.msra.mxu0 0
      %1189 = vmatprep.subr.bf16.mxu0 0
      %1190 = vmatpush1.bf16.msra.mxu0 0
      %1191 = vmatprep.subr.bf16.mxu0 0
      %1192 = vmatpush1.bf16.msra.mxu0 0
      %1193 = vmatprep.subr.bf16.mxu0 0
      %1194 = vmatpush1.bf16.msra.mxu0 0
      %1195 = vmatprep.subr.bf16.mxu0 0
      %1196 = vmatpush1.bf16.msra.mxu0 0
      %1197 = vmatprep.subr.bf16.mxu0 0
      %1198 = vmatpush1.bf16.msra.mxu0 0
      %1199 = vmatprep.subr.bf16.mxu0 0
      %1200 = vmatpush1.bf16.msra.mxu0 0
      %1201 = vmatprep.subr.bf16.mxu0 0
      %1202 = vmatpush1.bf16.msra.mxu0 0
      %1203 = vmatprep.mubr.bf16.mxu0 0
      %1204 = vmatmul.mubr.bf16.gmra.mrb[0].mxu0 %v1117
      %v1205 = vpop.f32.mrb[0].mxu0
      %v1206 = vadd.f32 %v1050, %v1205
      %v1207 = vpop.f32.mrb[0].mxu0
      %v1208 = vpop.f32.mrb[0].mxu0
      %v1209 = vpop.f32.mrb[0].mxu0
      %1210 = vdwg.mxu0
      %v1215 = vunpack.c.l.b16 %v978
      %v1216 = vunpack.c.l.b16 %v979
      %v1217 = vunpack.c.l.b16 %v980
      %v1218 = vunpack.c.l.b16 %v981
      %v1219 = vpack.c.b16 %v1216, %v1215
      %v1220 = vpack.c.b16 %v1218, %v1217
      %1223 = vmatprep.subr.bf16.mxu0 0
      %1224 = vmatpush1.bf16.msra.mxu0 %v1219
      %1225 = vmatprep.subr.bf16.mxu0 0
      %1226 = vmatpush1.bf16.msra.mxu0 %v1220
      %1227 = vmatprep.subr.bf16.mxu0 0
      %1228 = vmatpush1.bf16.msra.mxu0 0
      %1229 = vmatprep.subr.bf16.mxu0 0
      %1230 = vmatpush1.bf16.msra.mxu0 0
      %1231 = vmatprep.subr.bf16.mxu0 0
      %1232 = vmatpush1.bf16.msra.mxu0 0
      %1233 = vmatprep.subr.bf16.mxu0 0
      %1234 = vmatpush1.bf16.msra.mxu0 0
      %1235 = vmatprep.subr.bf16.mxu0 0
      %1236 = vmatpush1.bf16.msra.mxu0 0
      %1237 = vmatprep.subr.bf16.mxu0 0
      %1238 = vmatpush1.bf16.msra.mxu0 0
      %1239 = vmatprep.subr.bf16.mxu0 0
      %1240 = vmatpush1.bf16.msra.mxu0 0
      %1241 = vmatprep.subr.bf16.mxu0 0
      %1242 = vmatpush1.bf16.msra.mxu0 0
      %1243 = vmatprep.subr.bf16.mxu0 0
      %1244 = vmatpush1.bf16.msra.mxu0 0
      %1245 = vmatprep.subr.bf16.mxu0 0
      %1246 = vmatpush1.bf16.msra.mxu0 0
      %1247 = vmatprep.subr.bf16.mxu0 0
      %1248 = vmatpush1.bf16.msra.mxu0 0
      %1249 = vmatprep.subr.bf16.mxu0 0
      %1250 = vmatpush1.bf16.msra.mxu0 0
      %1251 = vmatprep.subr.bf16.mxu0 0
      %1252 = vmatpush1.bf16.msra.mxu0 0
      %1253 = vmatprep.subr.bf16.mxu0 0
      %1254 = vmatpush1.bf16.msra.mxu0 0
      %1255 = vmatprep.mubr.bf16.mxu0 0
      %1256 = vmatmul.mubr.bf16.gmra.mrb[0].mxu0 %v1117
      %v1257 = vpop.f32.mrb[0].mxu0
      %v1258 = vadd.f32 %v1054, %v1257
      %v1259 = vpop.f32.mrb[0].mxu0
      %v1260 = vpop.f32.mrb[0].mxu0
      %v1261 = vpop.f32.mrb[0].mxu0
      %1262 = vdwg.mxu0
      %v1267 = vunpack.c.l.b16 %v982
      %v1268 = vunpack.c.l.b16 %v983
      %v1269 = vunpack.c.l.b16 %v984
      %v1270 = vunpack.c.l.b16 %v985
      %v1271 = vpack.c.b16 %v1268, %v1267
      %v1272 = vpack.c.b16 %v1270, %v1269
      %1275 = vmatprep.subr.bf16.mxu0 0
      %1276 = vmatpush1.bf16.msra.mxu0 %v1271
      %1277 = vmatprep.subr.bf16.mxu0 0
      %1278 = vmatpush1.bf16.msra.mxu0 %v1272
      %1279 = vmatprep.subr.bf16.mxu0 0
      %1280 = vmatpush1.bf16.msra.mxu0 0
      %1281 = vmatprep.subr.bf16.mxu0 0
      %1282 = vmatpush1.bf16.msra.mxu0 0
      %1283 = vmatprep.subr.bf16.mxu0 0
      %1284 = vmatpush1.bf16.msra.mxu0 0
      %1285 = vmatprep.subr.bf16.mxu0 0
      %1286 = vmatpush1.bf16.msra.mxu0 0
      %1287 = vmatprep.subr.bf16.mxu0 0
      %1288 = vmatpush1.bf16.msra.mxu0 0
      %1289 = vmatprep.subr.bf16.mxu0 0
      %1290 = vmatpush1.bf16.msra.mxu0 0
      %1291 = vmatprep.subr.bf16.mxu0 0
      %1292 = vmatpush1.bf16.msra.mxu0 0
      %1293 = vmatprep.subr.bf16.mxu0 0
      %1294 = vmatpush1.bf16.msra.mxu0 0
      %1295 = vmatprep.subr.bf16.mxu0 0
      %1296 = vmatpush1.bf16.msra.mxu0 0
      %1297 = vmatprep.subr.bf16.mxu0 0
      %1298 = vmatpush1.bf16.msra.mxu0 0
      %1299 = vmatprep.subr.bf16.mxu0 0
      %1300 = vmatpush1.bf16.msra.mxu0 0
      %1301 = vmatprep.subr.bf16.mxu0 0
      %1302 = vmatpush1.bf16.msra.mxu0 0
      %1303 = vmatprep.subr.bf16.mxu0 0
      %1304 = vmatpush1.bf16.msra.mxu0 0
      %1305 = vmatprep.subr.bf16.mxu0 0
      %1306 = vmatpush1.bf16.msra.mxu0 0
      %1307 = vmatprep.mubr.bf16.mxu0 0
      %1308 = vmatmul.mubr.bf16.gmra.mrb[0].mxu0 %v1117
      %v1309 = vpop.f32.mrb[0].mxu0
      %v1310 = vadd.f32 %v1058, %v1309
      %v1311 = vpop.f32.mrb[0].mxu0
      %v1312 = vpop.f32.mrb[0].mxu0
      %v1313 = vpop.f32.mrb[0].mxu0
      %1314 = vdwg.mxu0
      %v1319 = vunpack.c.l.b16 %v986
      %v1320 = vunpack.c.l.b16 %v987
      %v1321 = vunpack.c.l.b16 %v988
      %v1322 = vunpack.c.l.b16 %v989
      %v1323 = vpack.c.b16 %v1320, %v1319
      %v1324 = vpack.c.b16 %v1322, %v1321
      %1327 = vmatprep.subr.bf16.mxu0 0
      %1328 = vmatpush1.bf16.msra.mxu0 %v1323
      %1329 = vmatprep.subr.bf16.mxu0 0
      %1330 = vmatpush1.bf16.msra.mxu0 %v1324
      %1331 = vmatprep.subr.bf16.mxu0 0
      %1332 = vmatpush1.bf16.msra.mxu0 0
      %1333 = vmatprep.subr.bf16.mxu0 0
      %1334 = vmatpush1.bf16.msra.mxu0 0
      %1335 = vmatprep.subr.bf16.mxu0 0
      %1336 = vmatpush1.bf16.msra.mxu0 0
      %1337 = vmatprep.subr.bf16.mxu0 0
      %1338 = vmatpush1.bf16.msra.mxu0 0
      %1339 = vmatprep.subr.bf16.mxu0 0
      %1340 = vmatpush1.bf16.msra.mxu0 0
      %1341 = vmatprep.subr.bf16.mxu0 0
      %1342 = vmatpush1.bf16.msra.mxu0 0
      %1343 = vmatprep.subr.bf16.mxu0 0
      %1344 = vmatpush1.bf16.msra.mxu0 0
      %1345 = vmatprep.subr.bf16.mxu0 0
      %1346 = vmatpush1.bf16.msra.mxu0 0
      %1347 = vmatprep.subr.bf16.mxu0 0
      %1348 = vmatpush1.bf16.msra.mxu0 0
      %1349 = vmatprep.subr.bf16.mxu0 0
      %1350 = vmatpush1.bf16.msra.mxu0 0
      %1351 = vmatprep.subr.bf16.mxu0 0
      %1352 = vmatpush1.bf16.msra.mxu0 0
      %1353 = vmatprep.subr.bf16.mxu0 0
      %1354 = vmatpush1.bf16.msra.mxu0 0
      %1355 = vmatprep.subr.bf16.mxu0 0
      %1356 = vmatpush1.bf16.msra.mxu0 0
      %1357 = vmatprep.subr.bf16.mxu0 0
      %1358 = vmatpush1.bf16.msra.mxu0 0
      %1359 = vmatprep.mubr.bf16.mxu0 0
      %1360 = vmatmul.mubr.bf16.gmra.mrb[0].mxu0 %v1117
      %v1361 = vpop.f32.mrb[0].mxu0
      %v1362 = vadd.f32 %v1062, %v1361
      %v1363 = vpop.f32.mrb[0].mxu0
      %v1364 = vpop.f32.mrb[0].mxu0
      %v1365 = vpop.f32.mrb[0].mxu0
      %1366 = vdwg.mxu0
      %v1371 = vunpack.c.l.b16 %v990
      %v1372 = vunpack.c.l.b16 %v991
      %v1373 = vunpack.c.l.b16 %v992
      %v1374 = vunpack.c.l.b16 %v993
      %v1375 = vpack.c.b16 %v1372, %v1371
      %v1376 = vpack.c.b16 %v1374, %v1373
      %1379 = vmatprep.subr.bf16.mxu0 0
      %1380 = vmatpush1.bf16.msra.mxu0 %v1375
      %1381 = vmatprep.subr.bf16.mxu0 0
      %1382 = vmatpush1.bf16.msra.mxu0 %v1376
      %1383 = vmatprep.subr.bf16.mxu0 0
      %1384 = vmatpush1.bf16.msra.mxu0 0
      %1385 = vmatprep.subr.bf16.mxu0 0
      %1386 = vmatpush1.bf16.msra.mxu0 0
      %1387 = vmatprep.subr.bf16.mxu0 0
      %1388 = vmatpush1.bf16.msra.mxu0 0
      %1389 = vmatprep.subr.bf16.mxu0 0
      %1390 = vmatpush1.bf16.msra.mxu0 0
      %1391 = vmatprep.subr.bf16.mxu0 0
      %1392 = vmatpush1.bf16.msra.mxu0 0
      %1393 = vmatprep.subr.bf16.mxu0 0
      %1394 = vmatpush1.bf16.msra.mxu0 0
      %1395 = vmatprep.subr.bf16.mxu0 0
      %1396 = vmatpush1.bf16.msra.mxu0 0
      %1397 = vmatprep.subr.bf16.mxu0 0
      %1398 = vmatpush1.bf16.msra.mxu0 0
      %1399 = vmatprep.subr.bf16.mxu0 0
      %1400 = vmatpush1.bf16.msra.mxu0 0
      %1401 = vmatprep.subr.bf16.mxu0 0
      %1402 = vmatpush1.bf16.msra.mxu0 0
      %1403 = vmatprep.subr.bf16.mxu0 0
      %1404 = vmatpush1.bf16.msra.mxu0 0
      %1405 = vmatprep.subr.bf16.mxu0 0
      %1406 = vmatpush1.bf16.msra.mxu0 0
      %1407 = vmatprep.subr.bf16.mxu0 0
      %1408 = vmatpush1.bf16.msra.mxu0 0
      %1409 = vmatprep.subr.bf16.mxu0 0
      %1410 = vmatpush1.bf16.msra.mxu0 0
      %1411 = vmatprep.mubr.bf16.mxu0 0
      %1412 = vmatmul.mubr.bf16.gmra.mrb[0].mxu0 %v1117
      %v1413 = vpop.f32.mrb[0].mxu0
      %v1414 = vadd.f32 %v1066, %v1413
      %v1415 = vpop.f32.mrb[0].mxu0
      %v1416 = vpop.f32.mrb[0].mxu0
      %v1417 = vpop.f32.mrb[0].mxu0
      %1418 = vdwg.mxu0
      %v1423 = vunpack.c.l.b16 %v994
      %v1424 = vunpack.c.l.b16 %v995
      %v1425 = vunpack.c.l.b16 %v996
      %v1426 = vunpack.c.l.b16 %v997
      %v1427 = vpack.c.b16 %v1424, %v1423
      %v1428 = vpack.c.b16 %v1426, %v1425
      %1431 = vmatprep.subr.bf16.mxu0 0
      %1432 = vmatpush1.bf16.msra.mxu0 %v1427
      %1433 = vmatprep.subr.bf16.mxu0 0
      %1434 = vmatpush1.bf16.msra.mxu0 %v1428
      %1435 = vmatprep.subr.bf16.mxu0 0
      %1436 = vmatpush1.bf16.msra.mxu0 0
      %1437 = vmatprep.subr.bf16.mxu0 0
      %1438 = vmatpush1.bf16.msra.mxu0 0
      %1439 = vmatprep.subr.bf16.mxu0 0
      %1440 = vmatpush1.bf16.msra.mxu0 0
      %1441 = vmatprep.subr.bf16.mxu0 0
      %1442 = vmatpush1.bf16.msra.mxu0 0
      %1443 = vmatprep.subr.bf16.mxu0 0
      %1444 = vmatpush1.bf16.msra.mxu0 0
      %1445 = vmatprep.subr.bf16.mxu0 0
      %1446 = vmatpush1.bf16.msra.mxu0 0
      %1447 = vmatprep.subr.bf16.mxu0 0
      %1448 = vmatpush1.bf16.msra.mxu0 0
      %1449 = vmatprep.subr.bf16.mxu0 0
      %1450 = vmatpush1.bf16.msra.mxu0 0
      %1451 = vmatprep.subr.bf16.mxu0 0
      %1452 = vmatpush1.bf16.msra.mxu0 0
      %1453 = vmatprep.subr.bf16.mxu0 0
      %1454 = vmatpush1.bf16.msra.mxu0 0
      %1455 = vmatprep.subr.bf16.mxu0 0
      %1456 = vmatpush1.bf16.msra.mxu0 0
      %1457 = vmatprep.subr.bf16.mxu0 0
      %1458 = vmatpush1.bf16.msra.mxu0 0
      %1459 = vmatprep.subr.bf16.mxu0 0
      %1460 = vmatpush1.bf16.msra.mxu0 0
      %1461 = vmatprep.subr.bf16.mxu0 0
      %1462 = vmatpush1.bf16.msra.mxu0 0
      %1463 = vmatprep.mubr.bf16.mxu0 0
      %1464 = vmatmul.mubr.bf16.gmra.mrb[0].mxu0 %v1117
      %v1465 = vpop.f32.mrb[0].mxu0
      %v1466 = vadd.f32 %v1070, %v1465
      %v1467 = vpop.f32.mrb[0].mxu0
      %v1468 = vpop.f32.mrb[0].mxu0
      %v1469 = vpop.f32.mrb[0].mxu0
      %1470 = vdwg.mxu0
      %v1475 = vunpack.c.l.b16 %v998
      %v1476 = vunpack.c.l.b16 %v999
      %v1477 = vunpack.c.l.b16 %v1000
      %v1478 = vunpack.c.l.b16 %v1001
      %v1479 = vpack.c.b16 %v1476, %v1475
      %v1480 = vpack.c.b16 %v1478, %v1477
      %1483 = vmatprep.subr.bf16.mxu0 0
      %1484 = vmatpush1.bf16.msra.mxu0 %v1479
      %1485 = vmatprep.subr.bf16.mxu0 0
      %1486 = vmatpush1.bf16.msra.mxu0 %v1480
      %1487 = vmatprep.subr.bf16.mxu0 0
      %1488 = vmatpush1.bf16.msra.mxu0 0
      %1489 = vmatprep.subr.bf16.mxu0 0
      %1490 = vmatpush1.bf16.msra.mxu0 0
      %1491 = vmatprep.subr.bf16.mxu0 0
      %1492 = vmatpush1.bf16.msra.mxu0 0
      %1493 = vmatprep.subr.bf16.mxu0 0
      %1494 = vmatpush1.bf16.msra.mxu0 0
      %1495 = vmatprep.subr.bf16.mxu0 0
      %1496 = vmatpush1.bf16.msra.mxu0 0
      %1497 = vmatprep.subr.bf16.mxu0 0
      %1498 = vmatpush1.bf16.msra.mxu0 0
      %1499 = vmatprep.subr.bf16.mxu0 0
      %1500 = vmatpush1.bf16.msra.mxu0 0
      %1501 = vmatprep.subr.bf16.mxu0 0
      %1502 = vmatpush1.bf16.msra.mxu0 0
      %1503 = vmatprep.subr.bf16.mxu0 0
      %1504 = vmatpush1.bf16.msra.mxu0 0
      %1505 = vmatprep.subr.bf16.mxu0 0
      %1506 = vmatpush1.bf16.msra.mxu0 0
      %1507 = vmatprep.subr.bf16.mxu0 0
      %1508 = vmatpush1.bf16.msra.mxu0 0
      %1509 = vmatprep.subr.bf16.mxu0 0
      %1510 = vmatpush1.bf16.msra.mxu0 0
      %1511 = vmatprep.subr.bf16.mxu0 0
      %1512 = vmatpush1.bf16.msra.mxu0 0
      %1513 = vmatprep.subr.bf16.mxu0 0
      %1514 = vmatpush1.bf16.msra.mxu0 0
      %1515 = vmatprep.mubr.bf16.mxu0 0
      %1516 = vmatmul.mubr.bf16.gmra.mrb[0].mxu0 %v1117
      %v1517 = vpop.f32.mrb[0].mxu0
      %v1518 = vadd.f32 %v1074, %v1517
      %v1519 = vpop.f32.mrb[0].mxu0
      %v1520 = vpop.f32.mrb[0].mxu0
      %v1521 = vpop.f32.mrb[0].mxu0
      %1522 = vdwg.mxu0
      %v1527 = vunpack.c.l.b16 %v1002
      %v1528 = vunpack.c.l.b16 %v1003
      %v1529 = vunpack.c.l.b16 %v1004
      %v1530 = vunpack.c.l.b16 %v1005
      %v1531 = vpack.c.b16 %v1528, %v1527
      %v1532 = vpack.c.b16 %v1530, %v1529
      %1535 = vmatprep.subr.bf16.mxu0 0
      %1536 = vmatpush1.bf16.msra.mxu0 %v1531
      %1537 = vmatprep.subr.bf16.mxu0 0
      %1538 = vmatpush1.bf16.msra.mxu0 %v1532
      %1539 = vmatprep.subr.bf16.mxu0 0
      %1540 = vmatpush1.bf16.msra.mxu0 0
      %1541 = vmatprep.subr.bf16.mxu0 0
      %1542 = vmatpush1.bf16.msra.mxu0 0
      %1543 = vmatprep.subr.bf16.mxu0 0
      %1544 = vmatpush1.bf16.msra.mxu0 0
      %1545 = vmatprep.subr.bf16.mxu0 0
      %1546 = vmatpush1.bf16.msra.mxu0 0
      %1547 = vmatprep.subr.bf16.mxu0 0
      %1548 = vmatpush1.bf16.msra.mxu0 0
      %1549 = vmatprep.subr.bf16.mxu0 0
      %1550 = vmatpush1.bf16.msra.mxu0 0
      %1551 = vmatprep.subr.bf16.mxu0 0
      %1552 = vmatpush1.bf16.msra.mxu0 0
      %1553 = vmatprep.subr.bf16.mxu0 0
      %1554 = vmatpush1.bf16.msra.mxu0 0
      %1555 = vmatprep.subr.bf16.mxu0 0
      %1556 = vmatpush1.bf16.msra.mxu0 0
      %1557 = vmatprep.subr.bf16.mxu0 0
      %1558 = vmatpush1.bf16.msra.mxu0 0
      %1559 = vmatprep.subr.bf16.mxu0 0
      %1560 = vmatpush1.bf16.msra.mxu0 0
      %1561 = vmatprep.subr.bf16.mxu0 0
      %1562 = vmatpush1.bf16.msra.mxu0 0
      %1563 = vmatprep.subr.bf16.mxu0 0
      %1564 = vmatpush1.bf16.msra.mxu0 0
      %1565 = vmatprep.subr.bf16.mxu0 0
      %1566 = vmatpush1.bf16.msra.mxu0 0
      %1567 = vmatprep.mubr.bf16.mxu0 0
      %1568 = vmatmul.mubr.bf16.gmra.mrb[0].mxu0 %v1117
      %v1569 = vpop.f32.mrb[0].mxu0
      %v1570 = vadd.f32 %v1078, %v1569
      %v1571 = vpop.f32.mrb[0].mxu0
      %v1572 = vpop.f32.mrb[0].mxu0
      %v1573 = vpop.f32.mrb[0].mxu0
      %1574 = vdwg.mxu0
      %v1579 = vunpack.c.l.b16 %v1006
      %v1580 = vunpack.c.l.b16 %v1007
      %v1581 = vunpack.c.l.b16 %v1008
      %v1582 = vunpack.c.l.b16 %v1009
      %v1583 = vpack.c.b16 %v1580, %v1579
      %v1584 = vpack.c.b16 %v1582, %v1581
      %1587 = vmatprep.subr.bf16.mxu0 0
      %1588 = vmatpush1.bf16.msra.mxu0 %v1583
      %1589 = vmatprep.subr.bf16.mxu0 0
      %1590 = vmatpush1.bf16.msra.mxu0 %v1584
      %1591 = vmatprep.subr.bf16.mxu0 0
      %1592 = vmatpush1.bf16.msra.mxu0 0
      %1593 = vmatprep.subr.bf16.mxu0 0
      %1594 = vmatpush1.bf16.msra.mxu0 0
      %1595 = vmatprep.subr.bf16.mxu0 0
      %1596 = vmatpush1.bf16.msra.mxu0 0
      %1597 = vmatprep.subr.bf16.mxu0 0
      %1598 = vmatpush1.bf16.msra.mxu0 0
      %1599 = vmatprep.subr.bf16.mxu0 0
      %1600 = vmatpush1.bf16.msra.mxu0 0
      %1601 = vmatprep.subr.bf16.mxu0 0
      %1602 = vmatpush1.bf16.msra.mxu0 0
      %1603 = vmatprep.subr.bf16.mxu0 0
      %1604 = vmatpush1.bf16.msra.mxu0 0
      %1605 = vmatprep.subr.bf16.mxu0 0
      %1606 = vmatpush1.bf16.msra.mxu0 0
      %1607 = vmatprep.subr.bf16.mxu0 0
      %1608 = vmatpush1.bf16.msra.mxu0 0
      %1609 = vmatprep.subr.bf16.mxu0 0
      %1610 = vmatpush1.bf16.msra.mxu0 0
      %1611 = vmatprep.subr.bf16.mxu0 0
      %1612 = vmatpush1.bf16.msra.mxu0 0
      %1613 = vmatprep.subr.bf16.mxu0 0
      %1614 = vmatpush1.bf16.msra.mxu0 0
      %1615 = vmatprep.subr.bf16.mxu0 0
      %1616 = vmatpush1.bf16.msra.mxu0 0
      %1617 = vmatprep.subr.bf16.mxu0 0
      %1618 = vmatpush1.bf16.msra.mxu0 0
      %1619 = vmatprep.mubr.bf16.mxu0 0
      %1620 = vmatmul.mubr.bf16.gmra.mrb[0].mxu0 %v1117
      %v1621 = vpop.f32.mrb[0].mxu0
      %v1622 = vadd.f32 %v1082, %v1621
      %v1623 = vpop.f32.mrb[0].mxu0
      %v1624 = vpop.f32.mrb[0].mxu0
      %v1625 = vpop.f32.mrb[0].mxu0
      %1626 = vdwg.mxu0
      %v1631 = vunpack.c.l.b16 %v1010
      %v1632 = vunpack.c.l.b16 %v1011
      %v1633 = vunpack.c.l.b16 %v1012
      %v1634 = vunpack.c.l.b16 %v1013
      %v1635 = vpack.c.b16 %v1632, %v1631
      %v1636 = vpack.c.b16 %v1634, %v1633
      %1639 = vmatprep.subr.bf16.mxu0 0
      %1640 = vmatpush1.bf16.msra.mxu0 %v1635
      %1641 = vmatprep.subr.bf16.mxu0 0
      %1642 = vmatpush1.bf16.msra.mxu0 %v1636
      %1643 = vmatprep.subr.bf16.mxu0 0
      %1644 = vmatpush1.bf16.msra.mxu0 0
      %1645 = vmatprep.subr.bf16.mxu0 0
      %1646 = vmatpush1.bf16.msra.mxu0 0
      %1647 = vmatprep.subr.bf16.mxu0 0
      %1648 = vmatpush1.bf16.msra.mxu0 0
      %1649 = vmatprep.subr.bf16.mxu0 0
      %1650 = vmatpush1.bf16.msra.mxu0 0
      %1651 = vmatprep.subr.bf16.mxu0 0
      %1652 = vmatpush1.bf16.msra.mxu0 0
      %1653 = vmatprep.subr.bf16.mxu0 0
      %1654 = vmatpush1.bf16.msra.mxu0 0
      %1655 = vmatprep.subr.bf16.mxu0 0
      %1656 = vmatpush1.bf16.msra.mxu0 0
      %1657 = vmatprep.subr.bf16.mxu0 0
      %1658 = vmatpush1.bf16.msra.mxu0 0
      %1659 = vmatprep.subr.bf16.mxu0 0
      %1660 = vmatpush1.bf16.msra.mxu0 0
      %1661 = vmatprep.subr.bf16.mxu0 0
      %1662 = vmatpush1.bf16.msra.mxu0 0
      %1663 = vmatprep.subr.bf16.mxu0 0
      %1664 = vmatpush1.bf16.msra.mxu0 0
      %1665 = vmatprep.subr.bf16.mxu0 0
      %1666 = vmatpush1.bf16.msra.mxu0 0
      %1667 = vmatprep.subr.bf16.mxu0 0
      %1668 = vmatpush1.bf16.msra.mxu0 0
      %1669 = vmatprep.subr.bf16.mxu0 0
      %1670 = vmatpush1.bf16.msra.mxu0 0
      %1671 = vmatprep.mubr.bf16.mxu0 0
      %1672 = vmatmul.mubr.bf16.gmra.mrb[0].mxu0 %v1117
      %v1673 = vpop.f32.mrb[0].mxu0
      %v1674 = vadd.f32 %v1086, %v1673
      %v1675 = vpop.f32.mrb[0].mxu0
      %v1676 = vpop.f32.mrb[0].mxu0
      %v1677 = vpop.f32.mrb[0].mxu0
      %1678 = vdwg.mxu0
      %v1683 = vunpack.c.l.b16 %v1014
      %v1684 = vunpack.c.l.b16 %v1015
      %v1685 = vunpack.c.l.b16 %v1016
      %v1686 = vunpack.c.l.b16 %v1017
      %v1687 = vpack.c.b16 %v1684, %v1683
      %v1688 = vpack.c.b16 %v1686, %v1685
      %1691 = vmatprep.subr.bf16.mxu0 0
      %1692 = vmatpush1.bf16.msra.mxu0 %v1687
      %1693 = vmatprep.subr.bf16.mxu0 0
      %1694 = vmatpush1.bf16.msra.mxu0 %v1688
      %1695 = vmatprep.subr.bf16.mxu0 0
      %1696 = vmatpush1.bf16.msra.mxu0 0
      %1697 = vmatprep.subr.bf16.mxu0 0
      %1698 = vmatpush1.bf16.msra.mxu0 0
      %1699 = vmatprep.subr.bf16.mxu0 0
      %1700 = vmatpush1.bf16.msra.mxu0 0
      %1701 = vmatprep.subr.bf16.mxu0 0
      %1702 = vmatpush1.bf16.msra.mxu0 0
      %1703 = vmatprep.subr.bf16.mxu0 0
      %1704 = vmatpush1.bf16.msra.mxu0 0
      %1705 = vmatprep.subr.bf16.mxu0 0
      %1706 = vmatpush1.bf16.msra.mxu0 0
      %1707 = vmatprep.subr.bf16.mxu0 0
      %1708 = vmatpush1.bf16.msra.mxu0 0
      %1709 = vmatprep.subr.bf16.mxu0 0
      %1710 = vmatpush1.bf16.msra.mxu0 0
      %1711 = vmatprep.subr.bf16.mxu0 0
      %1712 = vmatpush1.bf16.msra.mxu0 0
      %1713 = vmatprep.subr.bf16.mxu0 0
      %1714 = vmatpush1.bf16.msra.mxu0 0
      %1715 = vmatprep.subr.bf16.mxu0 0
      %1716 = vmatpush1.bf16.msra.mxu0 0
      %1717 = vmatprep.subr.bf16.mxu0 0
      %1718 = vmatpush1.bf16.msra.mxu0 0
      %1719 = vmatprep.subr.bf16.mxu0 0
      %1720 = vmatpush1.bf16.msra.mxu0 0
      %1721 = vmatprep.subr.bf16.mxu0 0
      %1722 = vmatpush1.bf16.msra.mxu0 0
      %1723 = vmatprep.mubr.bf16.mxu0 0
      %1724 = vmatmul.mubr.bf16.gmra.mrb[0].mxu0 %v1117
      %v1725 = vpop.f32.mrb[0].mxu0
      %v1726 = vadd.f32 %v1090, %v1725
      %v1727 = vpop.f32.mrb[0].mxu0
      %v1728 = vpop.f32.mrb[0].mxu0
      %v1729 = vpop.f32.mrb[0].mxu0
      %1730 = vdwg.mxu0
      %v1731 = vld [vmem:[%s724] sm:$0xf]
      %v1732 = vld [vmem:[%s724 + $0x4] sm:$0xf]
      %v1733 = vld [vmem:[%s724 + $0x8] sm:$0xf]
      %v1734 = vld [vmem:[%s724 + $0xc] sm:$0xf]
      %v1735 = vld [vmem:[%s727] sm:$0x1]
      %v1736 = vpack.c.bf16 %v1154, %v1154
      %v1737 = vpack.c.bf16 %v1206, %v1206
      %v1738 = vpack.c.bf16 %v1258, %v1258
      %v1739 = vpack.c.bf16 %v1310, %v1310
      %v1740 = vpack.c.bf16 %v1362, %v1362
      %v1741 = vpack.c.bf16 %v1414, %v1414
      %v1742 = vpack.c.bf16 %v1466, %v1466
      %v1743 = vpack.c.bf16 %v1518, %v1518
      %vm1744 = vcmask 64512
      %v1746 = vsel %vm1744, %v1736, 0
      %v1749 = vsel %vm1744, %v1740, 0
      %1751 = vmatprep.subr.bf16.mxu0 0
      %1752 = vmatpush1.bf16.xpose.msra.mxu0 %v1749
      %1753 = vmatprep.subr.bf16.mxu0 0
      %1754 = vmatpush1.bf16.xpose.msra.mxu0 0
      %1755 = vmatprep.subr.bf16.mxu0 0
      %1756 = vmatpush1.bf16.xpose.msra.mxu0 0
      %1757 = vmatprep.subr.bf16.mxu0 0
      %1758 = vmatpush1.bf16.xpose.msra.mxu0 0
      %1759 = vmatprep.subr.bf16.mxu0 0
      %1760 = vmatpush1.bf16.xpose.msra.mxu0 0
      %1761 = vmatprep.subr.bf16.mxu0 0
      %1762 = vmatpush1.bf16.xpose.msra.mxu0 0
      %1763 = vmatprep.subr.bf16.mxu0 0
      %1764 = vmatpush1.bf16.xpose.msra.mxu0 0
      %1765 = vmatprep.subr.bf16.mxu0 0
      %1766 = vmatpush1.bf16.xpose.msra.mxu0 0
      %1767 = vmatprep.subr.bf16.mxu0 0
      %1768 = vmatpush1.bf16.xpose.msra.mxu0 0
      %1769 = vmatprep.subr.bf16.mxu0 0
      %1770 = vmatpush1.bf16.xpose.msra.mxu0 0
      %1771 = vmatprep.subr.bf16.mxu0 0
      %1772 = vmatpush1.bf16.xpose.msra.mxu0 0
      %1773 = vmatprep.subr.bf16.mxu0 0
      %1774 = vmatpush1.bf16.xpose.msra.mxu0 0
      %1775 = vmatprep.subr.bf16.mxu0 0
      %1776 = vmatpush1.bf16.xpose.msra.mxu0 0
      %1777 = vmatprep.subr.bf16.mxu0 0
      %1778 = vmatpush1.bf16.xpose.msra.mxu0 0
      %1779 = vmatprep.subr.bf16.mxu0 0
      %1780 = vmatpush1.bf16.xpose.msra.mxu0 0
      %1781 = vmatprep.subr.bf16.mxu0 0
      %1782 = vmatpush1.bf16.xpose.msra.mxu0 0
      %1783 = vmatprep.mubr.bf16.mxu0 0
      %1784 = vmatmul.mubr.bf16.gmra.mrb[0].mxu0 %v1746
      %v1785 = vpop.f32.mrb[0].mxu0
      %v1786 = vadd.f32 0.0, %v1785
      %v1787 = vpop.f32.mrb[0].mxu0
      %v1788 = vpop.f32.mrb[0].mxu0
      %v1789 = vpop.f32.mrb[0].mxu0
      %1790 = vdwg.mxu0
      %v1792 = vsel %vm1744, %v1737, 0
      %v1795 = vsel %vm1744, %v1741, 0
      %1797 = vmatprep.subr.bf16.mxu0 0
      %1798 = vmatpush1.bf16.xpose.msra.mxu0 %v1795
      %1799 = vmatprep.subr.bf16.mxu0 0
      %1800 = vmatpush1.bf16.xpose.msra.mxu0 0
      %1801 = vmatprep.subr.bf16.mxu0 0
      %1802 = vmatpush1.bf16.xpose.msra.mxu0 0
      %1803 = vmatprep.subr.bf16.mxu0 0
      %1804 = vmatpush1.bf16.xpose.msra.mxu0 0
      %1805 = vmatprep.subr.bf16.mxu0 0
      %1806 = vmatpush1.bf16.xpose.msra.mxu0 0
      %1807 = vmatprep.subr.bf16.mxu0 0
      %1808 = vmatpush1.bf16.xpose.msra.mxu0 0
      %1809 = vmatprep.subr.bf16.mxu0 0
      %1810 = vmatpush1.bf16.xpose.msra.mxu0 0
      %1811 = vmatprep.subr.bf16.mxu0 0
      %1812 = vmatpush1.bf16.xpose.msra.mxu0 0
      %1813 = vmatprep.subr.bf16.mxu0 0
      %1814 = vmatpush1.bf16.xpose.msra.mxu0 0
      %1815 = vmatprep.subr.bf16.mxu0 0
      %1816 = vmatpush1.bf16.xpose.msra.mxu0 0
      %1817 = vmatprep.subr.bf16.mxu0 0
      %1818 = vmatpush1.bf16.xpose.msra.mxu0 0
      %1819 = vmatprep.subr.bf16.mxu0 0
      %1820 = vmatpush1.bf16.xpose.msra.mxu0 0
      %1821 = vmatprep.subr.bf16.mxu0 0
      %1822 = vmatpush1.bf16.xpose.msra.mxu0 0
      %1823 = vmatprep.subr.bf16.mxu0 0
      %1824 = vmatpush1.bf16.xpose.msra.mxu0 0
      %1825 = vmatprep.subr.bf16.mxu0 0
      %1826 = vmatpush1.bf16.xpose.msra.mxu0 0
      %1827 = vmatprep.subr.bf16.mxu0 0
      %1828 = vmatpush1.bf16.xpose.msra.mxu0 0
      %1829 = vmatprep.mubr.bf16.mxu0 0
      %1830 = vmatmul.mubr.bf16.gmra.mrb[0].mxu0 %v1792
      %v1831 = vpop.f32.mrb[0].mxu0
      %v1832 = vadd.f32 0.0, %v1831
      %v1833 = vpop.f32.mrb[0].mxu0
      %v1834 = vpop.f32.mrb[0].mxu0
      %v1835 = vpop.f32.mrb[0].mxu0
      %1836 = vdwg.mxu0
      %v1838 = vsel %vm1744, %v1738, 0
      %v1841 = vsel %vm1744, %v1742, 0
      %1843 = vmatprep.subr.bf16.mxu0 0
      %1844 = vmatpush1.bf16.xpose.msra.mxu0 %v1841
      %1845 = vmatprep.subr.bf16.mxu0 0
      %1846 = vmatpush1.bf16.xpose.msra.mxu0 0
      %1847 = vmatprep.subr.bf16.mxu0 0
      %1848 = vmatpush1.bf16.xpose.msra.mxu0 0
      %1849 = vmatprep.subr.bf16.mxu0 0
      %1850 = vmatpush1.bf16.xpose.msra.mxu0 0
      %1851 = vmatprep.subr.bf16.mxu0 0
      %1852 = vmatpush1.bf16.xpose.msra.mxu0 0
      %1853 = vmatprep.subr.bf16.mxu0 0
      %1854 = vmatpush1.bf16.xpose.msra.mxu0 0
      %1855 = vmatprep.subr.bf16.mxu0 0
      %1856 = vmatpush1.bf16.xpose.msra.mxu0 0
      %1857 = vmatprep.subr.bf16.mxu0 0
      %1858 = vmatpush1.bf16.xpose.msra.mxu0 0
      %1859 = vmatprep.subr.bf16.mxu0 0
      %1860 = vmatpush1.bf16.xpose.msra.mxu0 0
      %1861 = vmatprep.subr.bf16.mxu0 0
      %1862 = vmatpush1.bf16.xpose.msra.mxu0 0
      %1863 = vmatprep.subr.bf16.mxu0 0
      %1864 = vmatpush1.bf16.xpose.msra.mxu0 0
      %1865 = vmatprep.subr.bf16.mxu0 0
      %1866 = vmatpush1.bf16.xpose.msra.mxu0 0
      %1867 = vmatprep.subr.bf16.mxu0 0
      %1868 = vmatpush1.bf16.xpose.msra.mxu0 0
      %1869 = vmatprep.subr.bf16.mxu0 0
      %1870 = vmatpush1.bf16.xpose.msra.mxu0 0
      %1871 = vmatprep.subr.bf16.mxu0 0
      %1872 = vmatpush1.bf16.xpose.msra.mxu0 0
      %1873 = vmatprep.subr.bf16.mxu0 0
      %1874 = vmatpush1.bf16.xpose.msra.mxu0 0
      %1875 = vmatprep.mubr.bf16.mxu0 0
      %1876 = vmatmul.mubr.bf16.gmra.mrb[0].mxu0 %v1838
      %v1877 = vpop.f32.mrb[0].mxu0
      %v1878 = vadd.f32 0.0, %v1877
      %v1879 = vpop.f32.mrb[0].mxu0
      %v1880 = vpop.f32.mrb[0].mxu0
      %v1881 = vpop.f32.mrb[0].mxu0
      %1882 = vdwg.mxu0
      %v1884 = vsel %vm1744, %v1739, 0
      %v1887 = vsel %vm1744, %v1743, 0
      %1889 = vmatprep.subr.bf16.mxu0 0
      %1890 = vmatpush1.bf16.xpose.msra.mxu0 %v1887
      %1891 = vmatprep.subr.bf16.mxu0 0
      %1892 = vmatpush1.bf16.xpose.msra.mxu0 0
      %1893 = vmatprep.subr.bf16.mxu0 0
      %1894 = vmatpush1.bf16.xpose.msra.mxu0 0
      %1895 = vmatprep.subr.bf16.mxu0 0
      %1896 = vmatpush1.bf16.xpose.msra.mxu0 0
      %1897 = vmatprep.subr.bf16.mxu0 0
      %1898 = vmatpush1.bf16.xpose.msra.mxu0 0
      %1899 = vmatprep.subr.bf16.mxu0 0
      %1900 = vmatpush1.bf16.xpose.msra.mxu0 0
      %1901 = vmatprep.subr.bf16.mxu0 0
      %1902 = vmatpush1.bf16.xpose.msra.mxu0 0
      %1903 = vmatprep.subr.bf16.mxu0 0
      %1904 = vmatpush1.bf16.xpose.msra.mxu0 0
      %1905 = vmatprep.subr.bf16.mxu0 0
      %1906 = vmatpush1.bf16.xpose.msra.mxu0 0
      %1907 = vmatprep.subr.bf16.mxu0 0
      %1908 = vmatpush1.bf16.xpose.msra.mxu0 0
      %1909 = vmatprep.subr.bf16.mxu0 0
      %1910 = vmatpush1.bf16.xpose.msra.mxu0 0
      %1911 = vmatprep.subr.bf16.mxu0 0
      %1912 = vmatpush1.bf16.xpose.msra.mxu0 0
      %1913 = vmatprep.subr.bf16.mxu0 0
      %1914 = vmatpush1.bf16.xpose.msra.mxu0 0
      %1915 = vmatprep.subr.bf16.mxu0 0
      %1916 = vmatpush1.bf16.xpose.msra.mxu0 0
      %1917 = vmatprep.subr.bf16.mxu0 0
      %1918 = vmatpush1.bf16.xpose.msra.mxu0 0
      %1919 = vmatprep.subr.bf16.mxu0 0
      %1920 = vmatpush1.bf16.xpose.msra.mxu0 0
      %1921 = vmatprep.mubr.bf16.mxu0 0
      %1922 = vmatmul.mubr.bf16.gmra.mrb[0].mxu0 %v1884
      %v1923 = vpop.f32.mrb[0].mxu0
      %v1924 = vadd.f32 0.0, %v1923
      %v1925 = vpop.f32.mrb[0].mxu0
      %v1926 = vpop.f32.mrb[0].mxu0
      %v1927 = vpop.f32.mrb[0].mxu0
      %1928 = vdwg.mxu0
      %vm1929 = vcmask 36864
      %v1930 = vsel %vm1929, %v1786, -inf
      %1931 = vmax.xlane.f32.xlu0 %v1930
      %v1932 = vpop.xlane.xlu0 %1931
      %v1933 = vsel %vm1929, %v1832, -inf
      %1934 = vmax.xlane.f32.xlu0 %v1933
      %v1935 = vpop.xlane.xlu0 %1934
      %v1936 = vsel %vm1929, %v1878, -inf
      %1937 = vmax.xlane.f32.xlu0 %v1936
      %v1938 = vpop.xlane.xlu0 %1937
      %v1939 = vsel %vm1929, %v1924, -inf
      %1940 = vmax.xlane.f32.xlu0 %v1939
      %v1941 = vpop.xlane.xlu0 %1940
      %v1942 = vsub.f32 %v1786, %v1932
      %v1943 = vsub.f32 %v1832, %v1935
      %v1944 = vsub.f32 %v1878, %v1938
      %v1945 = vsub.f32 %v1924, %v1941
      %v1946 = vmul.f32 %v1942, 1.442695
      %v1947 = vpow.pop %v1946
      %v1948 = vmul.f32 %v1943, 1.442695
      %v1949 = vpow.pop %v1948
      %v1950 = vmul.f32 %v1944, 1.442695
      %v1951 = vpow.pop %v1950
      %v1952 = vmul.f32 %v1945, 1.442695
      %v1953 = vpow.pop %v1952
      %v1954 = vsel %vm1929, %v1947, 0.0
      %1955 = vadd.xlane.f32.xlu0 %v1954
      %v1956 = vpop.xlane.xlu0 %1955
      %v1957 = vsel %vm1929, %v1949, 0.0
      %1958 = vadd.xlane.f32.xlu0 %v1957
      %v1959 = vpop.xlane.xlu0 %1958
      %v1960 = vsel %vm1929, %v1951, 0.0
      %1961 = vadd.xlane.f32.xlu0 %v1960
      %v1962 = vpop.xlane.xlu0 %1961
      %v1963 = vsel %vm1929, %v1953, 0.0
      %1964 = vadd.xlane.f32.xlu0 %v1963
      %v1965 = vpop.xlane.xlu0 %1964
      %v1966 = vrcp.pop %v1956
      %v1967 = vrcp.pop %v1959
      %v1968 = vrcp.pop %v1962
      %v1969 = vrcp.pop %v1965
      %v1970 = vmul.f32 %v1947, %v1966
      %v1971 = vmul.f32 %v1949, %v1967
      %v1972 = vmul.f32 %v1951, %v1968
      %v1973 = vmul.f32 %v1953, %v1969
      %v1974 = vpack.c.bf16 %v1970, %v1970
      %v1975 = vpack.c.bf16 %v1971, %v1971
      %v1976 = vpack.c.bf16 %v1972, %v1972
      %v1977 = vpack.c.bf16 %v1973, %v1973
      %v1978 = vpack.c.bf16 %v1570, %v1570
      %v1979 = vpack.c.bf16 %v1622, %v1622
      %v1980 = vpack.c.bf16 %v1674, %v1674
      %v1981 = vpack.c.bf16 %v1726, %v1726
      %vm1982 = vcmask 39936
      %v1984 = vsel %vm1982, %v1974, 0
      %vm1986 = vcmask 1041408
      %vm1987 = vcmask 1042432
      %v1988 = vsel %vm1986, 4294967295, 65535
      %v1989 = vsel %vm1987, %v1988, 0
      %v1991 = vand.u32 %v1978, %v1989
      %1993 = vmatprep.subr.bf16.mxu0 0
      %1994 = vmatpush1.bf16.msra.mxu0 %v1991
      %1995 = vmatprep.subr.bf16.mxu0 0
      %1996 = vmatpush1.bf16.msra.mxu0 0
      %1997 = vmatprep.subr.bf16.mxu0 0
      %1998 = vmatpush1.bf16.msra.mxu0 0
      %1999 = vmatprep.subr.bf16.mxu0 0
      %2000 = vmatpush1.bf16.msra.mxu0 0
      %2001 = vmatprep.subr.bf16.mxu0 0
      %2002 = vmatpush1.bf16.msra.mxu0 0
      %2003 = vmatprep.subr.bf16.mxu0 0
      %2004 = vmatpush1.bf16.msra.mxu0 0
      %2005 = vmatprep.subr.bf16.mxu0 0
      %2006 = vmatpush1.bf16.msra.mxu0 0
      %2007 = vmatprep.subr.bf16.mxu0 0
      %2008 = vmatpush1.bf16.msra.mxu0 0
      %2009 = vmatprep.subr.bf16.mxu0 0
      %2010 = vmatpush1.bf16.msra.mxu0 0
      %2011 = vmatprep.subr.bf16.mxu0 0
      %2012 = vmatpush1.bf16.msra.mxu0 0
      %2013 = vmatprep.subr.bf16.mxu0 0
      %2014 = vmatpush1.bf16.msra.mxu0 0
      %2015 = vmatprep.subr.bf16.mxu0 0
      %2016 = vmatpush1.bf16.msra.mxu0 0
      %2017 = vmatprep.subr.bf16.mxu0 0
      %2018 = vmatpush1.bf16.msra.mxu0 0
      %2019 = vmatprep.subr.bf16.mxu0 0
      %2020 = vmatpush1.bf16.msra.mxu0 0
      %2021 = vmatprep.subr.bf16.mxu0 0
      %2022 = vmatpush1.bf16.msra.mxu0 0
      %2023 = vmatprep.subr.bf16.mxu0 0
      %2024 = vmatpush1.bf16.msra.mxu0 0
      %2025 = vmatprep.mubr.bf16.mxu0 0
      %2026 = vmatmul.mubr.bf16.gmra.mrb[0].mxu0 %v1984
      %v2027 = vpop.f32.mrb[0].mxu0
      %v2028 = vadd.f32 0.0, %v2027
      %v2029 = vpop.f32.mrb[0].mxu0
      %v2030 = vpop.f32.mrb[0].mxu0
      %v2031 = vpop.f32.mrb[0].mxu0
      %2032 = vdwg.mxu0
      %v2034 = vsel %vm1982, %v1975, 0
      %v2037 = vand.u32 %v1979, %v1989
      %2039 = vmatprep.subr.bf16.mxu0 0
      %2040 = vmatpush1.bf16.msra.mxu0 %v2037
      %2041 = vmatprep.subr.bf16.mxu0 0
      %2042 = vmatpush1.bf16.msra.mxu0 0
      %2043 = vmatprep.subr.bf16.mxu0 0
      %2044 = vmatpush1.bf16.msra.mxu0 0
      %2045 = vmatprep.subr.bf16.mxu0 0
      %2046 = vmatpush1.bf16.msra.mxu0 0
      %2047 = vmatprep.subr.bf16.mxu0 0
      %2048 = vmatpush1.bf16.msra.mxu0 0
      %2049 = vmatprep.subr.bf16.mxu0 0
      %2050 = vmatpush1.bf16.msra.mxu0 0
      %2051 = vmatprep.subr.bf16.mxu0 0
      %2052 = vmatpush1.bf16.msra.mxu0 0
      %2053 = vmatprep.subr.bf16.mxu0 0
      %2054 = vmatpush1.bf16.msra.mxu0 0
      %2055 = vmatprep.subr.bf16.mxu0 0
      %2056 = vmatpush1.bf16.msra.mxu0 0
      %2057 = vmatprep.subr.bf16.mxu0 0
      %2058 = vmatpush1.bf16.msra.mxu0 0
      %2059 = vmatprep.subr.bf16.mxu0 0
      %2060 = vmatpush1.bf16.msra.mxu0 0
      %2061 = vmatprep.subr.bf16.mxu0 0
      %2062 = vmatpush1.bf16.msra.mxu0 0
      %2063 = vmatprep.subr.bf16.mxu0 0
      %2064 = vmatpush1.bf16.msra.mxu0 0
      %2065 = vmatprep.subr.bf16.mxu0 0
      %2066 = vmatpush1.bf16.msra.mxu0 0
      %2067 = vmatprep.subr.bf16.mxu0 0
      %2068 = vmatpush1.bf16.msra.mxu0 0
      %2069 = vmatprep.subr.bf16.mxu0 0
      %2070 = vmatpush1.bf16.msra.mxu0 0
      %2071 = vmatprep.mubr.bf16.mxu0 0
      %2072 = vmatmul.mubr.bf16.gmra.mrb[0].mxu0 %v2034
      %v2073 = vpop.f32.mrb[0].mxu0
      %v2074 = vadd.f32 0.0, %v2073
      %v2075 = vpop.f32.mrb[0].mxu0
      %v2076 = vpop.f32.mrb[0].mxu0
      %v2077 = vpop.f32.mrb[0].mxu0
      %2078 = vdwg.mxu0
      %v2080 = vsel %vm1982, %v1976, 0
      %v2083 = vand.u32 %v1980, %v1989
      %2085 = vmatprep.subr.bf16.mxu0 0
      %2086 = vmatpush1.bf16.msra.mxu0 %v2083
      %2087 = vmatprep.subr.bf16.mxu0 0
      %2088 = vmatpush1.bf16.msra.mxu0 0
      %2089 = vmatprep.subr.bf16.mxu0 0
      %2090 = vmatpush1.bf16.msra.mxu0 0
      %2091 = vmatprep.subr.bf16.mxu0 0
      %2092 = vmatpush1.bf16.msra.mxu0 0
      %2093 = vmatprep.subr.bf16.mxu0 0
      %2094 = vmatpush1.bf16.msra.mxu0 0
      %2095 = vmatprep.subr.bf16.mxu0 0
      %2096 = vmatpush1.bf16.msra.mxu0 0
      %2097 = vmatprep.subr.bf16.mxu0 0
      %2098 = vmatpush1.bf16.msra.mxu0 0
      %2099 = vmatprep.subr.bf16.mxu0 0
      %2100 = vmatpush1.bf16.msra.mxu0 0
      %2101 = vmatprep.subr.bf16.mxu0 0
      %2102 = vmatpush1.bf16.msra.mxu0 0
      %2103 = vmatprep.subr.bf16.mxu0 0
      %2104 = vmatpush1.bf16.msra.mxu0 0
      %2105 = vmatprep.subr.bf16.mxu0 0
      %2106 = vmatpush1.bf16.msra.mxu0 0
      %2107 = vmatprep.subr.bf16.mxu0 0
      %2108 = vmatpush1.bf16.msra.mxu0 0
      %2109 = vmatprep.subr.bf16.mxu0 0
      %2110 = vmatpush1.bf16.msra.mxu0 0
      %2111 = vmatprep.subr.bf16.mxu0 0
      %2112 = vmatpush1.bf16.msra.mxu0 0
      %2113 = vmatprep.subr.bf16.mxu0 0
      %2114 = vmatpush1.bf16.msra.mxu0 0
      %2115 = vmatprep.subr.bf16.mxu0 0
      %2116 = vmatpush1.bf16.msra.mxu0 0
      %2117 = vmatprep.mubr.bf16.mxu0 0
      %2118 = vmatmul.mubr.bf16.gmra.mrb[0].mxu0 %v2080
      %v2119 = vpop.f32.mrb[0].mxu0
      %v2120 = vadd.f32 0.0, %v2119
      %v2121 = vpop.f32.mrb[0].mxu0
      %v2122 = vpop.f32.mrb[0].mxu0
      %v2123 = vpop.f32.mrb[0].mxu0
      %2124 = vdwg.mxu0
      %v2126 = vsel %vm1982, %v1977, 0
      %v2129 = vand.u32 %v1981, %v1989
      %2131 = vmatprep.subr.bf16.mxu0 0
      %2132 = vmatpush1.bf16.msra.mxu0 %v2129
      %2133 = vmatprep.subr.bf16.mxu0 0
      %2134 = vmatpush1.bf16.msra.mxu0 0
      %2135 = vmatprep.subr.bf16.mxu0 0
      %2136 = vmatpush1.bf16.msra.mxu0 0
      %2137 = vmatprep.subr.bf16.mxu0 0
      %2138 = vmatpush1.bf16.msra.mxu0 0
      %2139 = vmatprep.subr.bf16.mxu0 0
      %2140 = vmatpush1.bf16.msra.mxu0 0
      %2141 = vmatprep.subr.bf16.mxu0 0
      %2142 = vmatpush1.bf16.msra.mxu0 0
      %2143 = vmatprep.subr.bf16.mxu0 0
      %2144 = vmatpush1.bf16.msra.mxu0 0
      %2145 = vmatprep.subr.bf16.mxu0 0
      %2146 = vmatpush1.bf16.msra.mxu0 0
      %2147 = vmatprep.subr.bf16.mxu0 0
      %2148 = vmatpush1.bf16.msra.mxu0 0
      %2149 = vmatprep.subr.bf16.mxu0 0
      %2150 = vmatpush1.bf16.msra.mxu0 0
      %2151 = vmatprep.subr.bf16.mxu0 0
      %2152 = vmatpush1.bf16.msra.mxu0 0
      %2153 = vmatprep.subr.bf16.mxu0 0
      %2154 = vmatpush1.bf16.msra.mxu0 0
      %2155 = vmatprep.subr.bf16.mxu0 0
      %2156 = vmatpush1.bf16.msra.mxu0 0
      %2157 = vmatprep.subr.bf16.mxu0 0
      %2158 = vmatpush1.bf16.msra.mxu0 0
      %2159 = vmatprep.subr.bf16.mxu0 0
      %2160 = vmatpush1.bf16.msra.mxu0 0
      %2161 = vmatprep.subr.bf16.mxu0 0
      %2162 = vmatpush1.bf16.msra.mxu0 0
      %2163 = vmatprep.mubr.bf16.mxu0 0
      %2164 = vmatmul.mubr.bf16.gmra.mrb[0].mxu0 %v2126
      %v2165 = vpop.f32.mrb[0].mxu0
      %v2166 = vadd.f32 0.0, %v2165
      %v2167 = vpop.f32.mrb[0].mxu0
      %v2168 = vpop.f32.mrb[0].mxu0
      %v2169 = vpop.f32.mrb[0].mxu0
      %2170 = vdwg.mxu0
      %v2171 = vpack.c.bf16 %v2028, %v2028
      %v2172 = vpack.c.bf16 %v2074, %v2074
      %v2173 = vpack.c.bf16 %v2120, %v2120
      %v2174 = vpack.c.bf16 %v2166, %v2166
      %v2176 = vsel %vm1744, %v2171, 0
      %vm2178 = vcmask 1043456
      %v2180 = vsel %vm2178, %v1731, 0
      %2182 = vmatprep.subr.bf16.mxu0 0
      %2183 = vmatpush1.bf16.msra.mxu0 %v2180
      %2184 = vmatprep.subr.bf16.mxu0 0
      %2185 = vmatpush1.bf16.msra.mxu0 0
      %2186 = vmatprep.subr.bf16.mxu0 0
      %2187 = vmatpush1.bf16.msra.mxu0 0
      %2188 = vmatprep.subr.bf16.mxu0 0
      %2189 = vmatpush1.bf16.msra.mxu0 0
      %2190 = vmatprep.subr.bf16.mxu0 0
      %2191 = vmatpush1.bf16.msra.mxu0 0
      %2192 = vmatprep.subr.bf16.mxu0 0
      %2193 = vmatpush1.bf16.msra.mxu0 0
      %2194 = vmatprep.subr.bf16.mxu0 0
      %2195 = vmatpush1.bf16.msra.mxu0 0
      %2196 = vmatprep.subr.bf16.mxu0 0
      %2197 = vmatpush1.bf16.msra.mxu0 0
      %2198 = vmatprep.subr.bf16.mxu0 0
      %2199 = vmatpush1.bf16.msra.mxu0 0
      %2200 = vmatprep.subr.bf16.mxu0 0
      %2201 = vmatpush1.bf16.msra.mxu0 0
      %2202 = vmatprep.subr.bf16.mxu0 0
      %2203 = vmatpush1.bf16.msra.mxu0 0
      %2204 = vmatprep.subr.bf16.mxu0 0
      %2205 = vmatpush1.bf16.msra.mxu0 0
      %2206 = vmatprep.subr.bf16.mxu0 0
      %2207 = vmatpush1.bf16.msra.mxu0 0
      %2208 = vmatprep.subr.bf16.mxu0 0
      %2209 = vmatpush1.bf16.msra.mxu0 0
      %2210 = vmatprep.subr.bf16.mxu0 0
      %2211 = vmatpush1.bf16.msra.mxu0 0
      %2212 = vmatprep.subr.bf16.mxu0 0
      %2213 = vmatpush1.bf16.msra.mxu0 0
      %2214 = vmatprep.mubr.bf16.mxu0 0
      %2215 = vmatmul.mubr.bf16.gmra.mrb[0].mxu0 %v2176
      %v2216 = vpop.f32.mrb[0].mxu0
      %v2217 = vadd.f32 0.0, %v2216
      %v2218 = vpop.f32.mrb[0].mxu0
      %v2219 = vpop.f32.mrb[0].mxu0
      %v2220 = vpop.f32.mrb[0].mxu0
      %2221 = vdwg.mxu0
      %v2223 = vsel %vm1744, %v2172, 0
      %v2226 = vsel %vm2178, %v1732, 0
      %2228 = vmatprep.subr.bf16.mxu0 0
      %2229 = vmatpush1.bf16.msra.mxu0 %v2226
      %2230 = vmatprep.subr.bf16.mxu0 0
      %2231 = vmatpush1.bf16.msra.mxu0 0
      %2232 = vmatprep.subr.bf16.mxu0 0
      %2233 = vmatpush1.bf16.msra.mxu0 0
      %2234 = vmatprep.subr.bf16.mxu0 0
      %2235 = vmatpush1.bf16.msra.mxu0 0
      %2236 = vmatprep.subr.bf16.mxu0 0
      %2237 = vmatpush1.bf16.msra.mxu0 0
      %2238 = vmatprep.subr.bf16.mxu0 0
      %2239 = vmatpush1.bf16.msra.mxu0 0
      %2240 = vmatprep.subr.bf16.mxu0 0
      %2241 = vmatpush1.bf16.msra.mxu0 0
      %2242 = vmatprep.subr.bf16.mxu0 0
      %2243 = vmatpush1.bf16.msra.mxu0 0
      %2244 = vmatprep.subr.bf16.mxu0 0
      %2245 = vmatpush1.bf16.msra.mxu0 0
      %2246 = vmatprep.subr.bf16.mxu0 0
      %2247 = vmatpush1.bf16.msra.mxu0 0
      %2248 = vmatprep.subr.bf16.mxu0 0
      %2249 = vmatpush1.bf16.msra.mxu0 0
      %2250 = vmatprep.subr.bf16.mxu0 0
      %2251 = vmatpush1.bf16.msra.mxu0 0
      %2252 = vmatprep.subr.bf16.mxu0 0
      %2253 = vmatpush1.bf16.msra.mxu0 0
      %2254 = vmatprep.subr.bf16.mxu0 0
      %2255 = vmatpush1.bf16.msra.mxu0 0
      %2256 = vmatprep.subr.bf16.mxu0 0
      %2257 = vmatpush1.bf16.msra.mxu0 0
      %2258 = vmatprep.subr.bf16.mxu0 0
      %2259 = vmatpush1.bf16.msra.mxu0 0
      %2260 = vmatprep.mubr.bf16.mxu0 0
      %2261 = vmatmul.mubr.bf16.gmra.mrb[0].mxu0 %v2223
      %v2262 = vpop.f32.mrb[0].mxu0
      %v2263 = vadd.f32 0.0, %v2262
      %v2264 = vpop.f32.mrb[0].mxu0
      %v2265 = vpop.f32.mrb[0].mxu0
      %v2266 = vpop.f32.mrb[0].mxu0
      %2267 = vdwg.mxu0
      %v2269 = vsel %vm1744, %v2173, 0
      %v2272 = vsel %vm2178, %v1733, 0
      %2274 = vmatprep.subr.bf16.mxu0 0
      %2275 = vmatpush1.bf16.msra.mxu0 %v2272
      %2276 = vmatprep.subr.bf16.mxu0 0
      %2277 = vmatpush1.bf16.msra.mxu0 0
      %2278 = vmatprep.subr.bf16.mxu0 0
      %2279 = vmatpush1.bf16.msra.mxu0 0
      %2280 = vmatprep.subr.bf16.mxu0 0
      %2281 = vmatpush1.bf16.msra.mxu0 0
      %2282 = vmatprep.subr.bf16.mxu0 0
      %2283 = vmatpush1.bf16.msra.mxu0 0
      %2284 = vmatprep.subr.bf16.mxu0 0
      %2285 = vmatpush1.bf16.msra.mxu0 0
      %2286 = vmatprep.subr.bf16.mxu0 0
      %2287 = vmatpush1.bf16.msra.mxu0 0
      %2288 = vmatprep.subr.bf16.mxu0 0
      %2289 = vmatpush1.bf16.msra.mxu0 0
      %2290 = vmatprep.subr.bf16.mxu0 0
      %2291 = vmatpush1.bf16.msra.mxu0 0
      %2292 = vmatprep.subr.bf16.mxu0 0
      %2293 = vmatpush1.bf16.msra.mxu0 0
      %2294 = vmatprep.subr.bf16.mxu0 0
      %2295 = vmatpush1.bf16.msra.mxu0 0
      %2296 = vmatprep.subr.bf16.mxu0 0
      %2297 = vmatpush1.bf16.msra.mxu0 0
      %2298 = vmatprep.subr.bf16.mxu0 0
      %2299 = vmatpush1.bf16.msra.mxu0 0
      %2300 = vmatprep.subr.bf16.mxu0 0
      %2301 = vmatpush1.bf16.msra.mxu0 0
      %2302 = vmatprep.subr.bf16.mxu0 0
      %2303 = vmatpush1.bf16.msra.mxu0 0
      %2304 = vmatprep.subr.bf16.mxu0 0
      %2305 = vmatpush1.bf16.msra.mxu0 0
      %2306 = vmatprep.mubr.bf16.mxu0 0
      %2307 = vmatmul.mubr.bf16.gmra.mrb[0].mxu0 %v2269
      %v2308 = vpop.f32.mrb[0].mxu0
      %v2309 = vadd.f32 0.0, %v2308
      %v2310 = vpop.f32.mrb[0].mxu0
      %v2311 = vpop.f32.mrb[0].mxu0
      %v2312 = vpop.f32.mrb[0].mxu0
      %2313 = vdwg.mxu0
      %v2315 = vsel %vm1744, %v2174, 0
      %v2318 = vsel %vm2178, %v1734, 0
      %2320 = vmatprep.subr.bf16.mxu0 0
      %2321 = vmatpush1.bf16.msra.mxu0 %v2318
      %2322 = vmatprep.subr.bf16.mxu0 0
      %2323 = vmatpush1.bf16.msra.mxu0 0
      %2324 = vmatprep.subr.bf16.mxu0 0
      %2325 = vmatpush1.bf16.msra.mxu0 0
      %2326 = vmatprep.subr.bf16.mxu0 0
      %2327 = vmatpush1.bf16.msra.mxu0 0
      %2328 = vmatprep.subr.bf16.mxu0 0
      %2329 = vmatpush1.bf16.msra.mxu0 0
      %2330 = vmatprep.subr.bf16.mxu0 0
      %2331 = vmatpush1.bf16.msra.mxu0 0
      %2332 = vmatprep.subr.bf16.mxu0 0
      %2333 = vmatpush1.bf16.msra.mxu0 0
      %2334 = vmatprep.subr.bf16.mxu0 0
      %2335 = vmatpush1.bf16.msra.mxu0 0
      %2336 = vmatprep.subr.bf16.mxu0 0
      %2337 = vmatpush1.bf16.msra.mxu0 0
      %2338 = vmatprep.subr.bf16.mxu0 0
      %2339 = vmatpush1.bf16.msra.mxu0 0
      %2340 = vmatprep.subr.bf16.mxu0 0
      %2341 = vmatpush1.bf16.msra.mxu0 0
      %2342 = vmatprep.subr.bf16.mxu0 0
      %2343 = vmatpush1.bf16.msra.mxu0 0
      %2344 = vmatprep.subr.bf16.mxu0 0
      %2345 = vmatpush1.bf16.msra.mxu0 0
      %2346 = vmatprep.subr.bf16.mxu0 0
      %2347 = vmatpush1.bf16.msra.mxu0 0
      %2348 = vmatprep.subr.bf16.mxu0 0
      %2349 = vmatpush1.bf16.msra.mxu0 0
      %2350 = vmatprep.subr.bf16.mxu0 0
      %2351 = vmatpush1.bf16.msra.mxu0 0
      %2352 = vmatprep.mubr.bf16.mxu0 0
      %2353 = vmatmul.mubr.bf16.gmra.mrb[0].mxu0 %v2315
      %v2354 = vpop.f32.mrb[0].mxu0
      %v2355 = vadd.f32 0.0, %v2354
      %v2356 = vpop.f32.mrb[0].mxu0
      %v2357 = vpop.f32.mrb[0].mxu0
      %v2358 = vpop.f32.mrb[0].mxu0
      %2359 = vdwg.mxu0
      %v2360 = vsel %vm941, %v2217, 0.0
      %v2361 = vsel %vm941, %v2263, 0.0
      %v2362 = vadd.f32 %v2360, %v2361
      %v2363 = vsel %vm941, %v2309, 0.0
      %v2364 = vadd.f32 %v2362, %v2363
      %v2365 = vsel %vm941, %v2355, 0.0
      %v2366 = vadd.f32 %v2364, %v2365
      %v2368 = vlaneseq
      %v2369 = vshrl.u32 %v2368, 7
      %v2370 = vsub.s32 0, %v2369
      %v2371 = vrot.slane %v1735, %v2370
      %v2373 = vadd.f32 %v2366, %v2371
      %v2374 = vadd.f32 %v938, %v2373
      %v2375 = vld [vmem:[%s730] sm:$0x1]
      %v2376 = vld [vmem:[%s733] sm:$0x1]
      %v2377 = vsel %vm941, %v2374, 0.0
      %2378 = vadd.xlane.f32.xlu0 %v2377
      %v2379 = vpop.xlane.xlu0 %2378
      %v2380 = vmul.f32 %v2379, %v945
      %v2381 = vsub.f32 %v2374, %v2380
      %v2382 = vmul.f32 %v2381, %v2381
      %v2383 = vsel %vm941, %v2382, 0.0
      %2384 = vadd.xlane.f32.xlu0 %v2383
      %v2385 = vpop.xlane.xlu0 %2384
      %v2386 = vmul.f32 %v2385, %v945
      %v2387 = vadd.f32 %v2386, 1e-05
      %v2388 = vrsqrt.pop %v2387
      %v2389 = vmul.f32 %v2381, %v2388
      %v2391 = vlaneseq
      %v2392 = vshrl.u32 %v2391, 7
      %v2393 = vsub.s32 0, %v2392
      %v2394 = vrot.slane %v2375, %v2393
      %v2396 = vmul.f32 %v2389, %v2394
      %v2398 = vlaneseq
      %v2399 = vshrl.u32 %v2398, 7
      %v2400 = vsub.s32 0, %v2399
      %v2401 = vrot.slane %v2376, %v2400
      %v2403 = vadd.f32 %v2396, %v2401
      %v2404 = vpack.c.bf16 %v2403, %v2403
      %v2405 = vld [vmem:[%s738] sm:$0xf]
      %v2406 = vld [vmem:[%s738 + $0x4] sm:$0xf]
      %v2407 = vld [vmem:[%s738 + $0x8] sm:$0xf]
      %v2408 = vld [vmem:[%s738 + $0xc] sm:$0xf]
      %v2409 = vld [vmem:[%s741] sm:$0x1]
      %v2411 = vlaneseq
      %v2412 = vshrl.u32 %v2411, 7
      %v2413 = vsub.s32 0, %v2412
      %v2414 = vrot.slane %v2409, %v2413
      %v2420 = vunpack.c.l.b16 %v2405
      %v2421 = vunpack.c.l.b16 %v2406
      %v2422 = vunpack.c.l.b16 %v2407
      %v2423 = vunpack.c.l.b16 %v2408
      %v2424 = vpack.c.b16 %v2421, %v2420
      %v2425 = vpack.c.b16 %v2423, %v2422
      %v2429 = vsel %vm1115, %v2404, 0
      %2431 = vmatprep.subr.bf16.mxu0 0
      %2432 = vmatpush1.bf16.msra.mxu0 %v2424
      %2433 = vmatprep.subr.bf16.mxu0 0
      %2434 = vmatpush1.bf16.msra.mxu0 %v2425
      %2435 = vmatprep.subr.bf16.mxu0 0
      %2436 = vmatpush1.bf16.msra.mxu0 0
      %2437 = vmatprep.subr.bf16.mxu0 0
      %2438 = vmatpush1.bf16.msra.mxu0 0
      %2439 = vmatprep.subr.bf16.mxu0 0
      %2440 = vmatpush1.bf16.msra.mxu0 0
      %2441 = vmatprep.subr.bf16.mxu0 0
      %2442 = vmatpush1.bf16.msra.mxu0 0
      %2443 = vmatprep.subr.bf16.mxu0 0
      %2444 = vmatpush1.bf16.msra.mxu0 0
      %2445 = vmatprep.subr.bf16.mxu0 0
      %2446 = vmatpush1.bf16.msra.mxu0 0
      %2447 = vmatprep.subr.bf16.mxu0 0
      %2448 = vmatpush1.bf16.msra.mxu0 0
      %2449 = vmatprep.subr.bf16.mxu0 0
      %2450 = vmatpush1.bf16.msra.mxu0 0
      %2451 = vmatprep.subr.bf16.mxu0 0
      %2452 = vmatpush1.bf16.msra.mxu0 0
      %2453 = vmatprep.subr.bf16.mxu0 0
      %2454 = vmatpush1.bf16.msra.mxu0 0
      %2455 = vmatprep.subr.bf16.mxu0 0
      %2456 = vmatpush1.bf16.msra.mxu0 0
      %2457 = vmatprep.subr.bf16.mxu0 0
      %2458 = vmatpush1.bf16.msra.mxu0 0
      %2459 = vmatprep.subr.bf16.mxu0 0
      %2460 = vmatpush1.bf16.msra.mxu0 0
      %2461 = vmatprep.subr.bf16.mxu0 0
      %2462 = vmatpush1.bf16.msra.mxu0 0
      %2463 = vmatprep.mubr.bf16.mxu0 0
      %2464 = vmatmul.mubr.bf16.gmra.mrb[0].mxu0 %v2429
      %v2465 = vpop.f32.mrb[0].mxu0
      %v2466 = vadd.f32 %v2414, %v2465
      %v2467 = vpop.f32.mrb[0].mxu0
      %v2468 = vpop.f32.mrb[0].mxu0
      %v2469 = vpop.f32.mrb[0].mxu0
      %2470 = vdwg.mxu0
      %v2471 = vmul.f32 %v2466, 0.5
      %v2472 = vmul.f32 %v2466, 0.70710677
      %v2473 = vand.u32 2147483647, %v2472
      %v2474 = vmul.f32 %v2473, 0.3275911
      %v2475 = vadd.f32 %v2474, 1.0
      %v2476 = vrcp.pop %v2475
      %v2477 = vmul.f32 %v2476, 1.0614054
      %v2478 = vadd.f32 %v2477, -1.4531521
      %v2479 = vmul.f32 %v2478, %v2476
      %v2480 = vadd.f32 %v2479, 1.4214138
      %v2481 = vmul.f32 %v2480, %v2476
      %v2482 = vadd.f32 %v2481, -0.28449672
      %v2483 = vmul.f32 %v2482, %v2476
      %v2484 = vadd.f32 %v2483, 0.2548296
      %v2485 = vmul.f32 %v2484, %v2476
      %v2486 = vsub.f32 0.0, %v2473
      %v2487 = vmul.f32 %v2486, %v2473
      %v2488 = vmul.f32 %v2487, 1.442695
      %v2489 = vpow.pop %v2488
      %v2490 = vmul.f32 %v2485, %v2489
      %v2491 = vsub.f32 1.0, %v2490
      %vm2492 = vcmp.ge.f32.partialorder %v2472, 0.0
      %v2493 = vsub.f32 0.0, %v2491
      %v2494 = vsel %vm2492, %v2491, %v2493
      %v2495 = vadd.f32 %v2494, 1.0
      %v2496 = vmul.f32 %v2471, %v2495
      %v2497 = vpack.c.bf16 %v2496, %v2496
      %v2498 = vld [vmem:[%s746] sm:$0xf]
      %v2499 = vld [vmem:[%s746 + $0x4] sm:$0xf]
      %v2500 = vld [vmem:[%s746 + $0x8] sm:$0xf]
      %v2501 = vld [vmem:[%s746 + $0xc] sm:$0xf]
      %v2502 = vld [vmem:[%s746 + $0x10] sm:$0xf]
      %v2503 = vld [vmem:[%s746 + $0x14] sm:$0xf]
      %v2504 = vld [vmem:[%s746 + $0x18] sm:$0xf]
      %v2505 = vld [vmem:[%s746 + $0x1c] sm:$0xf]
      %v2514 = vunpack.c.l.b16 %v2498
      %v2515 = vunpack.c.l.b16 %v2499
      %v2516 = vunpack.c.l.b16 %v2500
      %v2517 = vunpack.c.l.b16 %v2501
      %v2518 = vunpack.c.l.b16 %v2502
      %v2519 = vunpack.c.l.b16 %v2503
      %v2520 = vunpack.c.l.b16 %v2504
      %v2521 = vunpack.c.l.b16 %v2505
      %v2522 = vpack.c.b16 %v2515, %v2514
      %v2523 = vpack.c.b16 %v2517, %v2516
      %v2524 = vpack.c.b16 %v2519, %v2518
      %v2525 = vpack.c.b16 %v2521, %v2520
      %vm2530 = vcmask 523264
      %v2532 = vsel %vm2530, %v2497, 0
      %2534 = vmatprep.subr.bf16.mxu0 0
      %2535 = vmatpush1.bf16.msra.mxu0 %v2522
      %2536 = vmatprep.subr.bf16.mxu0 0
      %2537 = vmatpush1.bf16.msra.mxu0 %v2523
      %2538 = vmatprep.subr.bf16.mxu0 0
      %2539 = vmatpush1.bf16.msra.mxu0 %v2524
      %2540 = vmatprep.subr.bf16.mxu0 0
      %2541 = vmatpush1.bf16.msra.mxu0 %v2525
      %2542 = vmatprep.subr.bf16.mxu0 0
      %2543 = vmatpush1.bf16.msra.mxu0 0
      %2544 = vmatprep.subr.bf16.mxu0 0
      %2545 = vmatpush1.bf16.msra.mxu0 0
      %2546 = vmatprep.subr.bf16.mxu0 0
      %2547 = vmatpush1.bf16.msra.mxu0 0
      %2548 = vmatprep.subr.bf16.mxu0 0
      %2549 = vmatpush1.bf16.msra.mxu0 0
      %2550 = vmatprep.subr.bf16.mxu0 0
      %2551 = vmatpush1.bf16.msra.mxu0 0
      %2552 = vmatprep.subr.bf16.mxu0 0
      %2553 = vmatpush1.bf16.msra.mxu0 0
      %2554 = vmatprep.subr.bf16.mxu0 0
      %2555 = vmatpush1.bf16.msra.mxu0 0
      %2556 = vmatprep.subr.bf16.mxu0 0
      %2557 = vmatpush1.bf16.msra.mxu0 0
      %2558 = vmatprep.subr.bf16.mxu0 0
      %2559 = vmatpush1.bf16.msra.mxu0 0
      %2560 = vmatprep.subr.bf16.mxu0 0
      %2561 = vmatpush1.bf16.msra.mxu0 0
      %2562 = vmatprep.subr.bf16.mxu0 0
      %2563 = vmatpush1.bf16.msra.mxu0 0
      %2564 = vmatprep.subr.bf16.mxu0 0
      %2565 = vmatpush1.bf16.msra.mxu0 0
      %2566 = vmatprep.mubr.bf16.mxu0 0
      %2567 = vmatmul.mubr.bf16.gmra.mrb[0].mxu0 %v2532
      %v2568 = vpop.f32.mrb[0].mxu0
      %v2569 = vadd.f32 0.0, %v2568
      %v2570 = vpop.f32.mrb[0].mxu0
      %v2571 = vpop.f32.mrb[0].mxu0
      %v2572 = vpop.f32.mrb[0].mxu0
      %2573 = vdwg.mxu0
      %v2574 = vadd.f32 %v2374, %v2569
      %v2575 = vld [vmem:[%s749] sm:$0x1]
      %v2577 = vlaneseq
      %v2578 = vshrl.u32 %v2577, 7
      %v2579 = vsub.s32 0, %v2578
      %v2580 = vrot.slane %v2575, %v2579
      %v2582 = vadd.f32 %v2574, %v2580
      %2583 = vst.msk [vmem:[#allocation2] sm:$0x1f] %vm941, %v2582
      %p2584 = scmp.eq.s32.totalorder %s33, 1
      // Predicated region
      $region93: #{_lambda_.2} parent=87 // pred_check
        %p2585 = pneg %p2584
      $region94: #{_lambda_.2} parent=87 // pred_check_branch
        %2587 = sbr.rel (%p2585) target = $region96
      $region95: #{_lambda_.2} parent=87 // pred_region
        %v2588 = vld [vmem:[%s3] sm:$0x1]
        %v2589 = vld [vmem:[%s4] sm:$0x1]
        %v2590 = vsel %vm941, %v2582, 0.0
        %2591 = vadd.xlane.f32.xlu0 %v2590
        %v2592 = vpop.xlane.xlu0 %2591
        %v2593 = vmul.f32 %v2592, %v945
        %v2594 = vsub.f32 %v2582, %v2593
        %v2595 = vmul.f32 %v2594, %v2594
        %v2596 = vsel %vm941, %v2595, 0.0
        %2597 = vadd.xlane.f32.xlu0 %v2596
        %v2598 = vpop.xlane.xlu0 %2597
        %v2599 = vmul.f32 %v2598, %v945
        %v2600 = vadd.f32 %v2599, 1e-05
        %v2601 = vrsqrt.pop %v2600
        %v2602 = vmul.f32 %v2594, %v2601
        %v2604 = vlaneseq
        %v2605 = vshrl.u32 %v2604, 7
        %v2606 = vsub.s32 0, %v2605
        %v2607 = vrot.slane %v2588, %v2606
        %v2609 = vmul.f32 %v2602, %v2607
        %v2611 = vlaneseq
        %v2612 = vshrl.u32 %v2611, 7
        %v2613 = vsub.s32 0, %v2612
        %v2614 = vrot.slane %v2589, %v2613
        %v2616 = vadd.f32 %v2609, %v2614
        %2617 = vst.msk [vmem:[%s753] sm:$0x1f] %vm941, %v2616
      $region96: #{_lambda_.2} parent=87 // pred_fallthru
        _
      %p2618 = scmp.lt.s32.totalorder %s32, 1
      %s2619 = scalar_select %p2618, %s32, 1
      %s2620 = smul.addr %s2619, 8
      %s2621 = scalar_lea.vmem %s17, %s2620
      // Predicated region
      $region97: #{_lambda_.2} parent=87 // pred_check
        %p2622 = pneg %p480
      $region98: #{_lambda_.2} parent=87 // pred_check_branch
        %2624 = sbr.rel (%p2622) target = $region100
      $region99: #{_lambda_.2} parent=87 // pred_region
        _
      $region100: #{_lambda_.2} parent=87 // pred_fallthru
        _
    $region88: #{_lambda_.2} parent=5 // pred_fallthru
      _
    %p2625 = scmp.le.s32.totalorder 2, %s23
    // Predicated region
    $region101: #{_lambda_.2} parent=5 // pred_check
      %p2626 = pneg %p2625
    $region102: #{_lambda_.2} parent=5 // pred_check_branch
      %2628 = sbr.rel (%p2626) target = $region104
    $region103: #{_lambda_.2} parent=5 // pred_region
      %s2629 = ssub.s32 %s23, 2
      // Predicated region
      $region105: #{_lambda_.2} parent=103 // pred_check
        %p2630 = pneg %p486
      $region106: #{_lambda_.2} parent=103 // pred_check_branch
        %2632 = sbr.rel (%p2630) target = $region108
      $region107: #{_lambda_.2} parent=103 // pred_region
        %p2633 = scmp.lt.s32.totalorder %s34, 1
        %s2634 = scalar_select %p2633, %s34, 1
        %s2635 = smul.addr %s2634, 8
        %s2636 = scalar_lea.vmem %s17, %s2635
      $region108: #{_lambda_.2} parent=103 // pred_fallthru
        _
    $region104: #{_lambda_.2} parent=5 // pred_fallthru
      _
  $region6: #{_lambda_.2} parent=0 // loop_footer
    %s27 = sadd.s32 1, %s23
  $region7: #{_lambda_.2} parent=0 // loop_footer_branch
    %22 = sbr.rel target = $region3
  $region8: #{_lambda_.2} parent=0 // loop_exit
    _

// kernel: _lambda_.3
$region0: #{_lambda_.3}
  #allocation0 [shape = 'u32[]', space=smem, size = 0x4, offset = 0x4, fixed_abs, tag = 'smem constant byte address 0x4 - core index']
  #allocation1 [shape = 'u32[144,128]{1,0:T(1,128)}', space=vmem, size = 0x12000, scoped, tag = 'internal scratch']
  #allocation2 [shape = 'f32[8,32]{1,0:T(8,128)}', space=vmem, size = 0x1000, scoped, tag = 'scratch operand']
  %s0 = inlined_call_operand.vmem [shape: f32[2,5,32], index: 0, kind: input, shape index: {}]
  %s1 = inlined_call_operand.vmem [shape: f32[8,32], index: 1, kind: input, shape index: {}]
  %s2 = inlined_call_operand.vmem [shape: bf16[32,16], index: 2, kind: input, shape index: {}]
  %s3 = inlined_call_operand.vmem [shape: f32[1,16], index: 3, kind: input, shape index: {}]
  %s4 = inlined_call_operand.vmem [shape: bf16[2,12,32,8], index: 4, kind: input, shape index: {}]
  %s5 = inlined_call_operand.vmem [shape: f32[2,12,1,8], index: 5, kind: input, shape index: {}]
  %s6 = inlined_call_operand.vmem [shape: bf16[2,4,8,32], index: 6, kind: input, shape index: {}]
  %s7 = inlined_call_operand.vmem [shape: f32[2,1,32], index: 7, kind: input, shape index: {}, may-alias: {7,9,15,17,21,23}]
  %s8 = inlined_call_operand.vmem [shape: f32[2,1,32], index: 8, kind: input, shape index: {}, may-alias: {8,16,22}]
  %s9 = inlined_call_operand.vmem [shape: f32[2,1,32], index: 9, kind: input, shape index: {}, may-alias: {7,9,15,17,21,23}]
  %s10 = inlined_call_operand.vmem [shape: bf16[2,4,32,8], index: 10, kind: input, shape index: {}]
  %s11 = inlined_call_operand.vmem [shape: f32[2,4,1,8], index: 11, kind: input, shape index: {}]
  %s12 = inlined_call_operand.vmem [shape: bf16[2,8,32,8], index: 12, kind: input, shape index: {}]
  %s13 = inlined_call_operand.vmem [shape: f32[2,8,1,8], index: 13, kind: input, shape index: {}]
  %s14 = inlined_call_operand.vmem [shape: bf16[2,4,8,32], index: 14, kind: input, shape index: {}]
  %s15 = inlined_call_operand.vmem [shape: f32[2,1,32], index: 15, kind: input, shape index: {}, may-alias: {7,9,15,17,21,23}]
  %s16 = inlined_call_operand.vmem [shape: f32[2,1,32], index: 16, kind: input, shape index: {}, may-alias: {8,16,22}]
  %s17 = inlined_call_operand.vmem [shape: f32[2,1,32], index: 17, kind: input, shape index: {}, may-alias: {7,9,15,17,21,23}]
  %s18 = inlined_call_operand.vmem [shape: bf16[2,32,64], index: 18, kind: input, shape index: {}]
  %s19 = inlined_call_operand.vmem [shape: f32[2,1,64], index: 19, kind: input, shape index: {}]
  %s20 = inlined_call_operand.vmem [shape: bf16[2,64,32], index: 20, kind: input, shape index: {}]
  %s21 = inlined_call_operand.vmem [shape: f32[2,1,32], index: 21, kind: input, shape index: {}, may-alias: {7,9,15,17,21,23}]
  %s22 = inlined_call_operand.vmem [shape: f32[2,1,32], index: 22, kind: input, shape index: {}, may-alias: {8,16,22}]
  %s23 = inlined_call_operand.vmem [shape: f32[2,1,32], index: 23, kind: input, shape index: {}, may-alias: {7,9,15,17,21,23}]
  %s24 = inlined_call_operand.hbm [shape: f32[2,8,16], index: 24, kind: output, shape index: {}]
  %s25 = sld [smem:[#allocation0]]
  $region137: #{_lambda_.3} parent=0
    _
  %s27 = ssub.s32 1, %s25
  %s28 = scalar_select 0, %s27, %s25
  $region1: #{_lambda_.3} parent=0
    #allocation3 [shape = 'u8[8192]{0}', space=vmem, size = 0x2000, scoped, tag = 'output window, operand 0']
    #allocation4 [shape = 's32[2]{0}', space=sflag, size = 0x8, scoped, tag = 'scoped memory for _lambda_.3']
    %29 = vsyncpa [#allocation4], 0
    %s30 = scalar_lea.sflag [#allocation4], 1
    %31 = vsyncpa %s30, 0
    loop: start=0, step=1, limit=6
    $region2: #{_lambda_.3} parent=1 // loop_pre_header
      _
    $region3: #{_lambda_.3} parent=1 // loop_header
      %s33 = sphi 0, %s37
      %p34 = scmp.ge.s32.totalorder %s33, 6
      %s40 = sphi 0, %s52
      %s41 = sphi 0, %s48
      %s42 = sphi 0, %s40
      %s43 = sphi 0, %s41
      %s44 = sphi 0, %s42
      %s45 = sphi 0, %s43
      %s55 = sphi 0, %s57
      %s58 = sphi 0, %s55
      %s59 = sphi 0, %s58
      %s75 = sphi 0, %s59
      %s79 = sphi 0, %s79
      %s81 = sphi 0, %s79
      %s82 = sphi 0, %s81
      %s96 = sphi 0, %s82
      %s100 = sphi 0, %s100
      %s102 = sphi 0, %s100
      %s103 = sphi 0, %s102
      %s117 = sphi 0, %s103
      %s121 = sphi 0, %s121
      %s123 = sphi 0, %s121
      %s124 = sphi 0, %s123
      %s138 = sphi 0, %s124
      %s144 = sphi 0, %s146
      %s147 = sphi 0, %s144
      %s148 = sphi 0, %s147
      %s164 = sphi 0, %s148
      %s170 = sphi 0, %s172
      %s173 = sphi 0, %s170
      %s174 = sphi 0, %s173
      %s190 = sphi 0, %s174
      %s196 = sphi 0, %s198
      %s199 = sphi 0, %s196
      %s200 = sphi 0, %s199
      %s216 = sphi 0, %s200
      %s222 = sphi 0, %s224
      %s225 = sphi 0, %s222
      %s226 = sphi 0, %s225
      %s242 = sphi 0, %s226
      %s248 = sphi 0, %s250
      %s251 = sphi 0, %s248
      %s252 = sphi 0, %s251
      %s268 = sphi 0, %s252
      %s274 = sphi 0, %s276
      %s277 = sphi 0, %s274
      %s278 = sphi 0, %s277
      %s294 = sphi 0, %s278
      %s300 = sphi 0, %s302
      %s303 = sphi 0, %s300
      %s304 = sphi 0, %s303
      %s320 = sphi 0, %s304
      %s326 = sphi 0, %s328
      %s329 = sphi 0, %s326
      %s330 = sphi 0, %s329
      %s346 = sphi 0, %s330
      %s352 = sphi 0, %s354
      %s355 = sphi 0, %s352
      %s356 = sphi 0, %s355
      %s372 = sphi 0, %s356
      %s378 = sphi 0, %s380
      %s381 = sphi 0, %s378
      %s382 = sphi 0, %s381
      %s398 = sphi 0, %s382
      %s404 = sphi 0, %s406
      %s407 = sphi 0, %s404
      %s408 = sphi 0, %s407
      %s424 = sphi 0, %s408
      %s430 = sphi 0, %s432
      %s433 = sphi 0, %s430
      %s434 = sphi 0, %s433
      %s450 = sphi 0, %s434
      %s456 = sphi 0, %s458
      %s459 = sphi 0, %s456
      %s460 = sphi 0, %s459
      %s476 = sphi 0, %s460
      %s482 = sphi 0, %s484
      %s485 = sphi 0, %s482
      %s486 = sphi 0, %s485
      %s502 = sphi 0, %s486
      %s508 = sphi 0, %s510
      %s511 = sphi 0, %s508
      %s512 = sphi 0, %s511
      %s528 = sphi 0, %s512
      %s534 = sphi 0, %s536
      %s537 = sphi 0, %s534
      %s538 = sphi 0, %s537
      %s554 = sphi 0, %s538
      %s560 = sphi 0, %s562
      %s563 = sphi 0, %s560
      %s564 = sphi 0, %s563
      %s580 = sphi 0, %s564
      %s586 = sphi 0, %s588
      %s589 = sphi 0, %s586
      %s590 = sphi 0, %s589
      %s606 = sphi 0, %s590
      %s612 = sphi 0, %s614
      %s615 = sphi 0, %s612
      %s616 = sphi 0, %s615
      %s632 = sphi 0, %s616
      %s638 = sphi 0, %s640
      %s641 = sphi 0, %s638
      %s642 = sphi 0, %s641
      %s658 = sphi 0, %s642
      %s664 = sphi 0, %s666
      %s667 = sphi 0, %s664
      %s668 = sphi 0, %s667
      %s684 = sphi 0, %s668
    $region4: #{_lambda_.3} parent=1 // loop_header_branch
      %36 = sbr.rel (%p34) target = $region8
    $region5: #{_lambda_.3} parent=1 // loop_body
      %s38 = ssub.s32 %s33, 1
      %s39 = ssub.s32 %s33, 2
      %s46 = sadd.s32 1, %s41
      %p47 = scmp.ge.s32.totalorder %s46, 2
      %s48 = scalar_select %p47, 0, %s46
      %s49 = sadd.s32 1, %s40
      %s50 = scalar_select %p47, %s49, %s40
      %p51 = scmp.ge.s32.totalorder %s50, 2
      %s52 = scalar_select %p51, 0, %s50
      %s53 = ssub.s32 %s40, %s52
      %p54 = scmp.eq.s32.totalorder %s53, 0
      %s56 = sadd.s32 %s55, 1
      %s57 = scalar_select %p54, %s55, %s56
      %p60 = pneg %p54
      %p61 = scmp.eq.s32.totalorder %s33, 3
      %p62 = por %p60, %p61
      %p63 = scmp.ne.s32.totalorder %s55, %s58
      %p64 = scmp.eq.s32.totalorder %s33, 0
      %p65 = por %p63, %p64
      %p66 = scmp.ne.s32.totalorder %s55, %s58
      %p67 = scmp.eq.s32.totalorder %s38, 3
      %p68 = por %p66, %p67
      %p69 = scmp.ne.s32.totalorder %s58, %s59
      %p70 = scmp.eq.s32.totalorder %s38, 0
      %p71 = por %p69, %p70
      %p72 = scmp.ne.s32.totalorder %s58, %s59
      %p73 = scmp.eq.s32.totalorder %s39, 3
      %p74 = por %p72, %p73
      %p76 = scmp.ne.s32.totalorder %s59, %s75
      %p77 = scmp.eq.s32.totalorder %s39, 0
      %p78 = por %p76, %p77
      %s80 = sadd.s32 %s79, 1
      %p83 = scmp.eq.s32.totalorder %s33, 3
      %p84 = scmp.ne.s32.totalorder %s79, %s81
      %p85 = scmp.eq.s32.totalorder %s33, 0
      %p86 = por %p84, %p85
      %p87 = scmp.ne.s32.totalorder %s79, %s81
      %p88 = scmp.eq.s32.totalorder %s38, 3
      %p89 = por %p87, %p88
      %p90 = scmp.ne.s32.totalorder %s81, %s82
      %p91 = scmp.eq.s32.totalorder %s38, 0
      %p92 = por %p90, %p91
      %p93 = scmp.ne.s32.totalorder %s81, %s82
      %p94 = scmp.eq.s32.totalorder %s39, 3
      %p95 = por %p93, %p94
      %p97 = scmp.ne.s32.totalorder %s82, %s96
      %p98 = scmp.eq.s32.totalorder %s39, 0
      %p99 = por %p97, %p98
      %s101 = sadd.s32 %s100, 1
      %p104 = scmp.eq.s32.totalorder %s33, 3
      %p105 = scmp.ne.s32.totalorder %s100, %s102
      %p106 = scmp.eq.s32.totalorder %s33, 0
      %p107 = por %p105, %p106
      %p108 = scmp.ne.s32.totalorder %s100, %s102
      %p109 = scmp.eq.s32.totalorder %s38, 3
      %p110 = por %p108, %p109
      %p111 = scmp.ne.s32.totalorder %s102, %s103
      %p112 = scmp.eq.s32.totalorder %s38, 0
      %p113 = por %p111, %p112
      %p114 = scmp.ne.s32.totalorder %s102, %s103
      %p115 = scmp.eq.s32.totalorder %s39, 3
      %p116 = por %p114, %p115
      %p118 = scmp.ne.s32.totalorder %s103, %s117
      %p119 = scmp.eq.s32.totalorder %s39, 0
      %p120 = por %p118, %p119
      %s122 = sadd.s32 %s121, 1
      %p125 = scmp.eq.s32.totalorder %s33, 3
      %p126 = scmp.ne.s32.totalorder %s121, %s123
      %p127 = scmp.eq.s32.totalorder %s33, 0
      %p128 = por %p126, %p127
      %p129 = scmp.ne.s32.totalorder %s121, %s123
      %p130 = scmp.eq.s32.totalorder %s38, 3
      %p131 = por %p129, %p130
      %p132 = scmp.ne.s32.totalorder %s123, %s124
      %p133 = scmp.eq.s32.totalorder %s38, 0
      %p134 = por %p132, %p133
      %p135 = scmp.ne.s32.totalorder %s123, %s124
      %p136 = scmp.eq.s32.totalorder %s39, 3
      %p137 = por %p135, %p136
      %p139 = scmp.ne.s32.totalorder %s124, %s138
      %p140 = scmp.eq.s32.totalorder %s39, 0
      %p141 = por %p139, %p140
      %s142 = ssub.s32 %s41, %s48
      %p143 = scmp.eq.s32.totalorder %s142, 0
      %s145 = sadd.s32 %s144, 1
      %s146 = scalar_select %p143, %s144, %s145
      %p149 = pneg %p143
      %p150 = scmp.eq.s32.totalorder %s33, 3
      %p151 = por %p149, %p150
      %p152 = scmp.ne.s32.totalorder %s144, %s147
      %p153 = scmp.eq.s32.totalorder %s33, 0
      %p154 = por %p152, %p153
      %p155 = scmp.ne.s32.totalorder %s144, %s147
      %p156 = scmp.eq.s32.totalorder %s38, 3
      %p157 = por %p155, %p156
      %p158 = scmp.ne.s32.totalorder %s147, %s148
      %p159 = scmp.eq.s32.totalorder %s38, 0
      %p160 = por %p158, %p159
      %p161 = scmp.ne.s32.totalorder %s147, %s148
      %p162 = scmp.eq.s32.totalorder %s39, 3
      %p163 = por %p161, %p162
      %p165 = scmp.ne.s32.totalorder %s148, %s164
      %p166 = scmp.eq.s32.totalorder %s39, 0
      %p167 = por %p165, %p166
      %s168 = ssub.s32 %s41, %s48
      %p169 = scmp.eq.s32.totalorder %s168, 0
      %s171 = sadd.s32 %s170, 1
      %s172 = scalar_select %p169, %s170, %s171
      %p175 = pneg %p169
      %p176 = scmp.eq.s32.totalorder %s33, 3
      %p177 = por %p175, %p176
      %p178 = scmp.ne.s32.totalorder %s170, %s173
      %p179 = scmp.eq.s32.totalorder %s33, 0
      %p180 = por %p178, %p179
      %p181 = scmp.ne.s32.totalorder %s170, %s173
      %p182 = scmp.eq.s32.totalorder %s38, 3
      %p183 = por %p181, %p182
      %p184 = scmp.ne.s32.totalorder %s173, %s174
      %p185 = scmp.eq.s32.totalorder %s38, 0
      %p186 = por %p184, %p185
      %p187 = scmp.ne.s32.totalorder %s173, %s174
      %p188 = scmp.eq.s32.totalorder %s39, 3
      %p189 = por %p187, %p188
      %p191 = scmp.ne.s32.totalorder %s174, %s190
      %p192 = scmp.eq.s32.totalorder %s39, 0
      %p193 = por %p191, %p192
      %s194 = ssub.s32 %s41, %s48
      %p195 = scmp.eq.s32.totalorder %s194, 0
      %s197 = sadd.s32 %s196, 1
      %s198 = scalar_select %p195, %s196, %s197
      %p201 = pneg %p195
      %p202 = scmp.eq.s32.totalorder %s33, 3
      %p203 = por %p201, %p202
      %p204 = scmp.ne.s32.totalorder %s196, %s199
      %p205 = scmp.eq.s32.totalorder %s33, 0
      %p206 = por %p204, %p205
      %p207 = scmp.ne.s32.totalorder %s196, %s199
      %p208 = scmp.eq.s32.totalorder %s38, 3
      %p209 = por %p207, %p208
      %p210 = scmp.ne.s32.totalorder %s199, %s200
      %p211 = scmp.eq.s32.totalorder %s38, 0
      %p212 = por %p210, %p211
      %p213 = scmp.ne.s32.totalorder %s199, %s200
      %p214 = scmp.eq.s32.totalorder %s39, 3
      %p215 = por %p213, %p214
      %p217 = scmp.ne.s32.totalorder %s200, %s216
      %p218 = scmp.eq.s32.totalorder %s39, 0
      %p219 = por %p217, %p218
      %s220 = ssub.s32 %s41, %s48
      %p221 = scmp.eq.s32.totalorder %s220, 0
      %s223 = sadd.s32 %s222, 1
      %s224 = scalar_select %p221, %s222, %s223
      %p227 = pneg %p221
      %p228 = scmp.eq.s32.totalorder %s33, 3
      %p229 = por %p227, %p228
      %p230 = scmp.ne.s32.totalorder %s222, %s225
      %p231 = scmp.eq.s32.totalorder %s33, 0
      %p232 = por %p230, %p231
      %p233 = scmp.ne.s32.totalorder %s222, %s225
      %p234 = scmp.eq.s32.totalorder %s38, 3
      %p235 = por %p233, %p234
      %p236 = scmp.ne.s32.totalorder %s225, %s226
      %p237 = scmp.eq.s32.totalorder %s38, 0
      %p238 = por %p236, %p237
      %p239 = scmp.ne.s32.totalorder %s225, %s226
      %p240 = scmp.eq.s32.totalorder %s39, 3
      %p241 = por %p239, %p240
      %p243 = scmp.ne.s32.totalorder %s226, %s242
      %p244 = scmp.eq.s32.totalorder %s39, 0
      %p245 = por %p243, %p244
      %s246 = ssub.s32 %s41, %s48
      %p247 = scmp.eq.s32.totalorder %s246, 0
      %s249 = sadd.s32 %s248, 1
      %s250 = scalar_select %p247, %s248, %s249
      %p253 = pneg %p247
      %p254 = scmp.eq.s32.totalorder %s33, 3
      %p255 = por %p253, %p254
      %p256 = scmp.ne.s32.totalorder %s248, %s251
      %p257 = scmp.eq.s32.totalorder %s33, 0
      %p258 = por %p256, %p257
      %p259 = scmp.ne.s32.totalorder %s248, %s251
      %p260 = scmp.eq.s32.totalorder %s38, 3
      %p261 = por %p259, %p260
      %p262 = scmp.ne.s32.totalorder %s251, %s252
      %p263 = scmp.eq.s32.totalorder %s38, 0
      %p264 = por %p262, %p263
      %p265 = scmp.ne.s32.totalorder %s251, %s252
      %p266 = scmp.eq.s32.totalorder %s39, 3
      %p267 = por %p265, %p266
      %p269 = scmp.ne.s32.totalorder %s252, %s268
      %p270 = scmp.eq.s32.totalorder %s39, 0
      %p271 = por %p269, %p270
      %s272 = ssub.s32 %s41, %s48
      %p273 = scmp.eq.s32.totalorder %s272, 0
      %s275 = sadd.s32 %s274, 1
      %s276 = scalar_select %p273, %s274, %s275
      %p279 = pneg %p273
      %p280 = scmp.eq.s32.totalorder %s33, 3
      %p281 = por %p279, %p280
      %p282 = scmp.ne.s32.totalorder %s274, %s277
      %p283 = scmp.eq.s32.totalorder %s33, 0
      %p284 = por %p282, %p283
      %p285 = scmp.ne.s32.totalorder %s274, %s277
      %p286 = scmp.eq.s32.totalorder %s38, 3
      %p287 = por %p285, %p286
      %p288 = scmp.ne.s32.totalorder %s277, %s278
      %p289 = scmp.eq.s32.totalorder %s38, 0
      %p290 = por %p288, %p289
      %p291 = scmp.ne.s32.totalorder %s277, %s278
      %p292 = scmp.eq.s32.totalorder %s39, 3
      %p293 = por %p291, %p292
      %p295 = scmp.ne.s32.totalorder %s278, %s294
      %p296 = scmp.eq.s32.totalorder %s39, 0
      %p297 = por %p295, %p296
      %s298 = ssub.s32 %s41, %s48
      %p299 = scmp.eq.s32.totalorder %s298, 0
      %s301 = sadd.s32 %s300, 1
      %s302 = scalar_select %p299, %s300, %s301
      %p305 = pneg %p299
      %p306 = scmp.eq.s32.totalorder %s33, 3
      %p307 = por %p305, %p306
      %p308 = scmp.ne.s32.totalorder %s300, %s303
      %p309 = scmp.eq.s32.totalorder %s33, 0
      %p310 = por %p308, %p309
      %p311 = scmp.ne.s32.totalorder %s300, %s303
      %p312 = scmp.eq.s32.totalorder %s38, 3
      %p313 = por %p311, %p312
      %p314 = scmp.ne.s32.totalorder %s303, %s304
      %p315 = scmp.eq.s32.totalorder %s38, 0
      %p316 = por %p314, %p315
      %p317 = scmp.ne.s32.totalorder %s303, %s304
      %p318 = scmp.eq.s32.totalorder %s39, 3
      %p319 = por %p317, %p318
      %p321 = scmp.ne.s32.totalorder %s304, %s320
      %p322 = scmp.eq.s32.totalorder %s39, 0
      %p323 = por %p321, %p322
      %s324 = ssub.s32 %s41, %s48
      %p325 = scmp.eq.s32.totalorder %s324, 0
      %s327 = sadd.s32 %s326, 1
      %s328 = scalar_select %p325, %s326, %s327
      %p331 = pneg %p325
      %p332 = scmp.eq.s32.totalorder %s33, 3
      %p333 = por %p331, %p332
      %p334 = scmp.ne.s32.totalorder %s326, %s329
      %p335 = scmp.eq.s32.totalorder %s33, 0
      %p336 = por %p334, %p335
      %p337 = scmp.ne.s32.totalorder %s326, %s329
      %p338 = scmp.eq.s32.totalorder %s38, 3
      %p339 = por %p337, %p338
      %p340 = scmp.ne.s32.totalorder %s329, %s330
      %p341 = scmp.eq.s32.totalorder %s38, 0
      %p342 = por %p340, %p341
      %p343 = scmp.ne.s32.totalorder %s329, %s330
      %p344 = scmp.eq.s32.totalorder %s39, 3
      %p345 = por %p343, %p344
      %p347 = scmp.ne.s32.totalorder %s330, %s346
      %p348 = scmp.eq.s32.totalorder %s39, 0
      %p349 = por %p347, %p348
      %s350 = ssub.s32 %s41, %s48
      %p351 = scmp.eq.s32.totalorder %s350, 0
      %s353 = sadd.s32 %s352, 1
      %s354 = scalar_select %p351, %s352, %s353
      %p357 = pneg %p351
      %p358 = scmp.eq.s32.totalorder %s33, 3
      %p359 = por %p357, %p358
      %p360 = scmp.ne.s32.totalorder %s352, %s355
      %p361 = scmp.eq.s32.totalorder %s33, 0
      %p362 = por %p360, %p361
      %p363 = scmp.ne.s32.totalorder %s352, %s355
      %p364 = scmp.eq.s32.totalorder %s38, 3
      %p365 = por %p363, %p364
      %p366 = scmp.ne.s32.totalorder %s355, %s356
      %p367 = scmp.eq.s32.totalorder %s38, 0
      %p368 = por %p366, %p367
      %p369 = scmp.ne.s32.totalorder %s355, %s356
      %p370 = scmp.eq.s32.totalorder %s39, 3
      %p371 = por %p369, %p370
      %p373 = scmp.ne.s32.totalorder %s356, %s372
      %p374 = scmp.eq.s32.totalorder %s39, 0
      %p375 = por %p373, %p374
      %s376 = ssub.s32 %s41, %s48
      %p377 = scmp.eq.s32.totalorder %s376, 0
      %s379 = sadd.s32 %s378, 1
      %s380 = scalar_select %p377, %s378, %s379
      %p383 = pneg %p377
      %p384 = scmp.eq.s32.totalorder %s33, 3
      %p385 = por %p383, %p384
      %p386 = scmp.ne.s32.totalorder %s378, %s381
      %p387 = scmp.eq.s32.totalorder %s33, 0
      %p388 = por %p386, %p387
      %p389 = scmp.ne.s32.totalorder %s378, %s381
      %p390 = scmp.eq.s32.totalorder %s38, 3
      %p391 = por %p389, %p390
      %p392 = scmp.ne.s32.totalorder %s381, %s382
      %p393 = scmp.eq.s32.totalorder %s38, 0
      %p394 = por %p392, %p393
      %p395 = scmp.ne.s32.totalorder %s381, %s382
      %p396 = scmp.eq.s32.totalorder %s39, 3
      %p397 = por %p395, %p396
      %p399 = scmp.ne.s32.totalorder %s382, %s398
      %p400 = scmp.eq.s32.totalorder %s39, 0
      %p401 = por %p399, %p400
      %s402 = ssub.s32 %s41, %s48
      %p403 = scmp.eq.s32.totalorder %s402, 0
      %s405 = sadd.s32 %s404, 1
      %s406 = scalar_select %p403, %s404, %s405
      %p409 = pneg %p403
      %p410 = scmp.eq.s32.totalorder %s33, 3
      %p411 = por %p409, %p410
      %p412 = scmp.ne.s32.totalorder %s404, %s407
      %p413 = scmp.eq.s32.totalorder %s33, 0
      %p414 = por %p412, %p413
      %p415 = scmp.ne.s32.totalorder %s404, %s407
      %p416 = scmp.eq.s32.totalorder %s38, 3
      %p417 = por %p415, %p416
      %p418 = scmp.ne.s32.totalorder %s407, %s408
      %p419 = scmp.eq.s32.totalorder %s38, 0
      %p420 = por %p418, %p419
      %p421 = scmp.ne.s32.totalorder %s407, %s408
      %p422 = scmp.eq.s32.totalorder %s39, 3
      %p423 = por %p421, %p422
      %p425 = scmp.ne.s32.totalorder %s408, %s424
      %p426 = scmp.eq.s32.totalorder %s39, 0
      %p427 = por %p425, %p426
      %s428 = ssub.s32 %s41, %s48
      %p429 = scmp.eq.s32.totalorder %s428, 0
      %s431 = sadd.s32 %s430, 1
      %s432 = scalar_select %p429, %s430, %s431
      %p435 = pneg %p429
      %p436 = scmp.eq.s32.totalorder %s33, 3
      %p437 = por %p435, %p436
      %p438 = scmp.ne.s32.totalorder %s430, %s433
      %p439 = scmp.eq.s32.totalorder %s33, 0
      %p440 = por %p438, %p439
      %p441 = scmp.ne.s32.totalorder %s430, %s433
      %p442 = scmp.eq.s32.totalorder %s38, 3
      %p443 = por %p441, %p442
      %p444 = scmp.ne.s32.totalorder %s433, %s434
      %p445 = scmp.eq.s32.totalorder %s38, 0
      %p446 = por %p444, %p445
      %p447 = scmp.ne.s32.totalorder %s433, %s434
      %p448 = scmp.eq.s32.totalorder %s39, 3
      %p449 = por %p447, %p448
      %p451 = scmp.ne.s32.totalorder %s434, %s450
      %p452 = scmp.eq.s32.totalorder %s39, 0
      %p453 = por %p451, %p452
      %s454 = ssub.s32 %s41, %s48
      %p455 = scmp.eq.s32.totalorder %s454, 0
      %s457 = sadd.s32 %s456, 1
      %s458 = scalar_select %p455, %s456, %s457
      %p461 = pneg %p455
      %p462 = scmp.eq.s32.totalorder %s33, 3
      %p463 = por %p461, %p462
      %p464 = scmp.ne.s32.totalorder %s456, %s459
      %p465 = scmp.eq.s32.totalorder %s33, 0
      %p466 = por %p464, %p465
      %p467 = scmp.ne.s32.totalorder %s456, %s459
      %p468 = scmp.eq.s32.totalorder %s38, 3
      %p469 = por %p467, %p468
      %p470 = scmp.ne.s32.totalorder %s459, %s460
      %p471 = scmp.eq.s32.totalorder %s38, 0
      %p472 = por %p470, %p471
      %p473 = scmp.ne.s32.totalorder %s459, %s460
      %p474 = scmp.eq.s32.totalorder %s39, 3
      %p475 = por %p473, %p474
      %p477 = scmp.ne.s32.totalorder %s460, %s476
      %p478 = scmp.eq.s32.totalorder %s39, 0
      %p479 = por %p477, %p478
      %s480 = ssub.s32 %s41, %s48
      %p481 = scmp.eq.s32.totalorder %s480, 0
      %s483 = sadd.s32 %s482, 1
      %s484 = scalar_select %p481, %s482, %s483
      %p487 = pneg %p481
      %p488 = scmp.eq.s32.totalorder %s33, 3
      %p489 = por %p487, %p488
      %p490 = scmp.ne.s32.totalorder %s482, %s485
      %p491 = scmp.eq.s32.totalorder %s33, 0
      %p492 = por %p490, %p491
      %p493 = scmp.ne.s32.totalorder %s482, %s485
      %p494 = scmp.eq.s32.totalorder %s38, 3
      %p495 = por %p493, %p494
      %p496 = scmp.ne.s32.totalorder %s485, %s486
      %p497 = scmp.eq.s32.totalorder %s38, 0
      %p498 = por %p496, %p497
      %p499 = scmp.ne.s32.totalorder %s485, %s486
      %p500 = scmp.eq.s32.totalorder %s39, 3
      %p501 = por %p499, %p500
      %p503 = scmp.ne.s32.totalorder %s486, %s502
      %p504 = scmp.eq.s32.totalorder %s39, 0
      %p505 = por %p503, %p504
      %s506 = ssub.s32 %s41, %s48
      %p507 = scmp.eq.s32.totalorder %s506, 0
      %s509 = sadd.s32 %s508, 1
      %s510 = scalar_select %p507, %s508, %s509
      %p513 = pneg %p507
      %p514 = scmp.eq.s32.totalorder %s33, 3
      %p515 = por %p513, %p514
      %p516 = scmp.ne.s32.totalorder %s508, %s511
      %p517 = scmp.eq.s32.totalorder %s33, 0
      %p518 = por %p516, %p517
      %p519 = scmp.ne.s32.totalorder %s508, %s511
      %p520 = scmp.eq.s32.totalorder %s38, 3
      %p521 = por %p519, %p520
      %p522 = scmp.ne.s32.totalorder %s511, %s512
      %p523 = scmp.eq.s32.totalorder %s38, 0
      %p524 = por %p522, %p523
      %p525 = scmp.ne.s32.totalorder %s511, %s512
      %p526 = scmp.eq.s32.totalorder %s39, 3
      %p527 = por %p525, %p526
      %p529 = scmp.ne.s32.totalorder %s512, %s528
      %p530 = scmp.eq.s32.totalorder %s39, 0
      %p531 = por %p529, %p530
      %s532 = ssub.s32 %s41, %s48
      %p533 = scmp.eq.s32.totalorder %s532, 0
      %s535 = sadd.s32 %s534, 1
      %s536 = scalar_select %p533, %s534, %s535
      %p539 = pneg %p533
      %p540 = scmp.eq.s32.totalorder %s33, 3
      %p541 = por %p539, %p540
      %p542 = scmp.ne.s32.totalorder %s534, %s537
      %p543 = scmp.eq.s32.totalorder %s33, 0
      %p544 = por %p542, %p543
      %p545 = scmp.ne.s32.totalorder %s534, %s537
      %p546 = scmp.eq.s32.totalorder %s38, 3
      %p547 = por %p545, %p546
      %p548 = scmp.ne.s32.totalorder %s537, %s538
      %p549 = scmp.eq.s32.totalorder %s38, 0
      %p550 = por %p548, %p549
      %p551 = scmp.ne.s32.totalorder %s537, %s538
      %p552 = scmp.eq.s32.totalorder %s39, 3
      %p553 = por %p551, %p552
      %p555 = scmp.ne.s32.totalorder %s538, %s554
      %p556 = scmp.eq.s32.totalorder %s39, 0
      %p557 = por %p555, %p556
      %s558 = ssub.s32 %s41, %s48
      %p559 = scmp.eq.s32.totalorder %s558, 0
      %s561 = sadd.s32 %s560, 1
      %s562 = scalar_select %p559, %s560, %s561
      %p565 = pneg %p559
      %p566 = scmp.eq.s32.totalorder %s33, 3
      %p567 = por %p565, %p566
      %p568 = scmp.ne.s32.totalorder %s560, %s563
      %p569 = scmp.eq.s32.totalorder %s33, 0
      %p570 = por %p568, %p569
      %p571 = scmp.ne.s32.totalorder %s560, %s563
      %p572 = scmp.eq.s32.totalorder %s38, 3
      %p573 = por %p571, %p572
      %p574 = scmp.ne.s32.totalorder %s563, %s564
      %p575 = scmp.eq.s32.totalorder %s38, 0
      %p576 = por %p574, %p575
      %p577 = scmp.ne.s32.totalorder %s563, %s564
      %p578 = scmp.eq.s32.totalorder %s39, 3
      %p579 = por %p577, %p578
      %p581 = scmp.ne.s32.totalorder %s564, %s580
      %p582 = scmp.eq.s32.totalorder %s39, 0
      %p583 = por %p581, %p582
      %s584 = ssub.s32 %s41, %s48
      %p585 = scmp.eq.s32.totalorder %s584, 0
      %s587 = sadd.s32 %s586, 1
      %s588 = scalar_select %p585, %s586, %s587
      %p591 = pneg %p585
      %p592 = scmp.eq.s32.totalorder %s33, 3
      %p593 = por %p591, %p592
      %p594 = scmp.ne.s32.totalorder %s586, %s589
      %p595 = scmp.eq.s32.totalorder %s33, 0
      %p596 = por %p594, %p595
      %p597 = scmp.ne.s32.totalorder %s586, %s589
      %p598 = scmp.eq.s32.totalorder %s38, 3
      %p599 = por %p597, %p598
      %p600 = scmp.ne.s32.totalorder %s589, %s590
      %p601 = scmp.eq.s32.totalorder %s38, 0
      %p602 = por %p600, %p601
      %p603 = scmp.ne.s32.totalorder %s589, %s590
      %p604 = scmp.eq.s32.totalorder %s39, 3
      %p605 = por %p603, %p604
      %p607 = scmp.ne.s32.totalorder %s590, %s606
      %p608 = scmp.eq.s32.totalorder %s39, 0
      %p609 = por %p607, %p608
      %s610 = ssub.s32 %s41, %s48
      %p611 = scmp.eq.s32.totalorder %s610, 0
      %s613 = sadd.s32 %s612, 1
      %s614 = scalar_select %p611, %s612, %s613
      %p617 = pneg %p611
      %p618 = scmp.eq.s32.totalorder %s33, 3
      %p619 = por %p617, %p618
      %p620 = scmp.ne.s32.totalorder %s612, %s615
      %p621 = scmp.eq.s32.totalorder %s33, 0
      %p622 = por %p620, %p621
      %p623 = scmp.ne.s32.totalorder %s612, %s615
      %p624 = scmp.eq.s32.totalorder %s38, 3
      %p625 = por %p623, %p624
      %p626 = scmp.ne.s32.totalorder %s615, %s616
      %p627 = scmp.eq.s32.totalorder %s38, 0
      %p628 = por %p626, %p627
      %p629 = scmp.ne.s32.totalorder %s615, %s616
      %p630 = scmp.eq.s32.totalorder %s39, 3
      %p631 = por %p629, %p630
      %p633 = scmp.ne.s32.totalorder %s616, %s632
      %p634 = scmp.eq.s32.totalorder %s39, 0
      %p635 = por %p633, %p634
      %s636 = ssub.s32 %s41, %s48
      %p637 = scmp.eq.s32.totalorder %s636, 0
      %s639 = sadd.s32 %s638, 1
      %s640 = scalar_select %p637, %s638, %s639
      %p643 = pneg %p637
      %p644 = scmp.eq.s32.totalorder %s33, 3
      %p645 = por %p643, %p644
      %p646 = scmp.ne.s32.totalorder %s638, %s641
      %p647 = scmp.eq.s32.totalorder %s33, 0
      %p648 = por %p646, %p647
      %p649 = scmp.ne.s32.totalorder %s638, %s641
      %p650 = scmp.eq.s32.totalorder %s38, 3
      %p651 = por %p649, %p650
      %p652 = scmp.ne.s32.totalorder %s641, %s642
      %p653 = scmp.eq.s32.totalorder %s38, 0
      %p654 = por %p652, %p653
      %p655 = scmp.ne.s32.totalorder %s641, %s642
      %p656 = scmp.eq.s32.totalorder %s39, 3
      %p657 = por %p655, %p656
      %p659 = scmp.ne.s32.totalorder %s642, %s658
      %p660 = scmp.eq.s32.totalorder %s39, 0
      %p661 = por %p659, %p660
      %s662 = ssub.s32 %s40, %s52
      %p663 = scmp.eq.s32.totalorder %s662, 0
      %s665 = sadd.s32 %s664, 1
      %s666 = scalar_select %p663, %s664, %s665
      %p669 = pneg %p663
      %p670 = scmp.eq.s32.totalorder %s33, 3
      %p671 = por %p669, %p670
      %p672 = scmp.ne.s32.totalorder %s664, %s667
      %p673 = scmp.eq.s32.totalorder %s33, 0
      %p674 = por %p672, %p673
      %p675 = scmp.ne.s32.totalorder %s664, %s667
      %p676 = scmp.eq.s32.totalorder %s38, 3
      %p677 = por %p675, %p676
      %p678 = scmp.ne.s32.totalorder %s667, %s668
      %p679 = scmp.eq.s32.totalorder %s38, 0
      %p680 = por %p678, %p679
      %p681 = scmp.ne.s32.totalorder %s667, %s668
      %p682 = scmp.eq.s32.totalorder %s39, 3
      %p683 = por %p681, %p682
      %p685 = scmp.ne.s32.totalorder %s668, %s684
      %p686 = scmp.eq.s32.totalorder %s39, 0
      %p687 = por %p685, %p686
      %p688 = scmp.le.s32.totalorder 1, %s33
      %p689 = scmp.lt.s32.totalorder %s33, 5
      %p690 = pnand %p688, %p689
      %p691 = pneg %p690
      // Predicated region
      $region9: #{_lambda_.3} parent=5 // pred_check
        _
      $region10: #{_lambda_.3} parent=5 // pred_check_branch
        %693 = sbr.rel (%p690) target = $region12
      $region11: #{_lambda_.3} parent=5 // pred_region
        %s694 = ssub.s32 %s33, 1
        // Predicated region
        $region13: #{_lambda_.3} parent=11 // pred_check
          %p695 = pneg %p92
        $region14: #{_lambda_.3} parent=11 // pred_check_branch
          %697 = sbr.rel (%p695) target = $region16
        $region15: #{_lambda_.3} parent=11 // pred_region
          _
        $region16: #{_lambda_.3} parent=11 // pred_fallthru
          _
        // Predicated region
        $region17: #{_lambda_.3} parent=11 // pred_check
          %p698 = pneg %p113
        $region18: #{_lambda_.3} parent=11 // pred_check_branch
          %700 = sbr.rel (%p698) target = $region20
        $region19: #{_lambda_.3} parent=11 // pred_region
          _
        $region20: #{_lambda_.3} parent=11 // pred_fallthru
          _
        // Predicated region
        $region21: #{_lambda_.3} parent=11 // pred_check
          %p701 = pneg %p134
        $region22: #{_lambda_.3} parent=11 // pred_check_branch
          %703 = sbr.rel (%p701) target = $region24
        $region23: #{_lambda_.3} parent=11 // pred_region
          _
        $region24: #{_lambda_.3} parent=11 // pred_fallthru
          _
      $region12: #{_lambda_.3} parent=5 // pred_fallthru
        _
      %p704 = scmp.lt.s32.totalorder %s33, 4
      // Predicated region
      $region25: #{_lambda_.3} parent=5 // pred_check
        %p705 = pneg %p704
      $region26: #{_lambda_.3} parent=5 // pred_check_branch
        %707 = sbr.rel (%p705) target = $region28
      $region27: #{_lambda_.3} parent=5 // pred_region
        // Predicated region
        $region29: #{_lambda_.3} parent=27 // pred_check
          %p708 = pneg %p65
        $region30: #{_lambda_.3} parent=27 // pred_check_branch
          %710 = sbr.rel (%p708) target = $region32
        $region31: #{_lambda_.3} parent=27 // pred_region
          %p711 = scmp.lt.s32.totalorder %s40, 1
          %s712 = scalar_select %p711, %s40, 1
          %s713 = smul.addr %s712, 8
          %s714 = scalar_lea.vmem %s0, %s713
        $region32: #{_lambda_.3} parent=27 // pred_fallthru
          _
        // Predicated region
        $region33: #{_lambda_.3} parent=27 // pred_check
          %p715 = pneg %p154
        $region34: #{_lambda_.3} parent=27 // pred_check_branch
          %717 = sbr.rel (%p715) target = $region36
        $region35: #{_lambda_.3} parent=27 // pred_region
          %p718 = scmp.lt.s32.totalorder %s41, 1
          %s719 = scalar_select %p718, %s41, 1
          %s720 = smul.addr %s719, 48
          %s721 = smul.addr %s720, 4
          %s722 = scalar_lea.vmem %s4, %s721
        $region36: #{_lambda_.3} parent=27 // pred_fallthru
          _
        // Predicated region
        $region37: #{_lambda_.3} parent=27 // pred_check
          %p723 = pneg %p180
        $region38: #{_lambda_.3} parent=27 // pred_check_branch
          %725 = sbr.rel (%p723) target = $region40
        $region39: #{_lambda_.3} parent=27 // pred_region
          %p726 = scmp.lt.s32.totalorder %s41, 1
          %s727 = scalar_select %p726, %s41, 1
          %s728 = smul.addr %s727, 12
          %s729 = scalar_lea.vmem %s5, %s728
        $region40: #{_lambda_.3} parent=27 // pred_fallthru
          _
        // Predicated region
        $region41: #{_lambda_.3} parent=27 // pred_check
          %p730 = pneg %p206
        $region42: #{_lambda_.3} parent=27 // pred_check_branch
          %732 = sbr.rel (%p730) target = $region44
        $region43: #{_lambda_.3} parent=27 // pred_region
          %p733 = scmp.lt.s32.totalorder %s41, 1
          %s734 = scalar_select %p733, %s41, 1
          %s735 = smul.addr %s734, 4
          %s736 = smul.addr %s735, 4
          %s737 = scalar_lea.vmem %s6, %s736
        $region44: #{_lambda_.3} parent=27 // pred_fallthru
          _
        // Predicated region
        $region45: #{_lambda_.3} parent=27 // pred_check
          %p738 = pneg %p232
        $region46: #{_lambda_.3} parent=27 // pred_check_branch
          %740 = sbr.rel (%p738) target = $region48
        $region47: #{_lambda_.3} parent=27 // pred_region
          %p741 = scmp.lt.s32.totalorder %s41, 1
          %s742 = scalar_select %p741, %s41, 1
          %s743 = scalar_lea.vmem %s7, %s742
        $region48: #{_lambda_.3} parent=27 // pred_fallthru
          _
        // Predicated region
        $region49: #{_lambda_.3} parent=27 // pred_check
          %p744 = pneg %p258
        $region50: #{_lambda_.3} parent=27 // pred_check_branch
          %746 = sbr.rel (%p744) target = $region52
        $region51: #{_lambda_.3} parent=27 // pred_region
          %p747 = scmp.lt.s32.totalorder %s41, 1
          %s748 = scalar_select %p747, %s41, 1
          %s749 = scalar_lea.vmem %s8, %s748
        $region52: #{_lambda_.3} parent=27 // pred_fallthru
          _
        // Predicated region
        $region53: #{_lambda_.3} parent=27 // pred_check
          %p750 = pneg %p284
        $region54: #{_lambda_.3} parent=27 // pred_check_branch
          %752 = sbr.rel (%p750) target = $region56
        $region55: #{_lambda_.3} parent=27 // pred_region
          %p753 = scmp.lt.s32.totalorder %s41, 1
          %s754 = scalar_select %p753, %s41, 1
          %s755 = scalar_lea.vmem %s9, %s754
        $region56: #{_lambda_.3} parent=27 // pred_fallthru
          _
        // Predicated region
        $region57: #{_lambda_.3} parent=27 // pred_check
          %p756 = pneg %p310
        $region58: #{_lambda_.3} parent=27 // pred_check_branch
          %758 = sbr.rel (%p756) target = $region60
        $region59: #{_lambda_.3} parent=27 // pred_region
          %p759 = scmp.lt.s32.totalorder %s41, 1
          %s760 = scalar_select %p759, %s41, 1
          %s761 = smul.addr %s760, 16
          %s762 = smul.addr %s761, 4
          %s763 = scalar_lea.vmem %s10, %s762
        $region60: #{_lambda_.3} parent=27 // pred_fallthru
          _
        // Predicated region
        $region61: #{_lambda_.3} parent=27 // pred_check
          %p764 = pneg %p336
        $region62: #{_lambda_.3} parent=27 // pred_check_branch
          %766 = sbr.rel (%p764) target = $region64
        $region63: #{_lambda_.3} parent=27 // pred_region
          %p767 = scmp.lt.s32.totalorder %s41, 1
          %s768 = scalar_select %p767, %s41, 1
          %s769 = smul.addr %s768, 4
          %s770 = scalar_lea.vmem %s11, %s769
        $region64: #{_lambda_.3} parent=27 // pred_fallthru
          _
        // Predicated region
        $region65: #{_lambda_.3} parent=27 // pred_check
          %p771 = pneg %p362
        $region66: #{_lambda_.3} parent=27 // pred_check_branch
          %773 = sbr.rel (%p771) target = $region68
        $region67: #{_lambda_.3} parent=27 // pred_region
          %p774 = scmp.lt.s32.totalorder %s41, 1
          %s775 = scalar_select %p774, %s41, 1
          %s776 = smul.addr %s775, 32
          %s777 = smul.addr %s776, 4
          %s778 = scalar_lea.vmem %s12, %s777
        $region68: #{_lambda_.3} parent=27 // pred_fallthru
          _
        // Predicated region
        $region69: #{_lambda_.3} parent=27 // pred_check
          %p779 = pneg %p388
        $region70: #{_lambda_.3} parent=27 // pred_check_branch
          %781 = sbr.rel (%p779) target = $region72
        $region71: #{_lambda_.3} parent=27 // pred_region
          %p782 = scmp.lt.s32.totalorder %s41, 1
          %s783 = scalar_select %p782, %s41, 1
          %s784 = smul.addr %s783, 8
          %s785 = scalar_lea.vmem %s13, %s784
        $region72: #{_lambda_.3} parent=27 // pred_fallthru
          _
        // Predicated region
        $region73: #{_lambda_.3} parent=27 // pred_check
          %p786 = pneg %p414
        $region74: #{_lambda_.3} parent=27 // pred_check_branch
          %788 = sbr.rel (%p786) target = $region76
        $region75: #{_lambda_.3} parent=27 // pred_region
          %p789 = scmp.lt.s32.totalorder %s41, 1
          %s790 = scalar_select %p789, %s41, 1
          %s791 = smul.addr %s790, 4
          %s792 = smul.addr %s791, 4
          %s793 = scalar_lea.vmem %s14, %s792
        $region76: #{_lambda_.3} parent=27 // pred_fallthru
          _
        // Predicated region
        $region77: #{_lambda_.3} parent=27 // pred_check
          %p794 = pneg %p440
        $region78: #{_lambda_.3} parent=27 // pred_check_branch
          %796 = sbr.rel (%p794) target = $region80
        $region79: #{_lambda_.3} parent=27 // pred_region
          %p797 = scmp.lt.s32.totalorder %s41, 1
          %s798 = scalar_select %p797, %s41, 1
          %s799 = scalar_lea.vmem %s15, %s798
        $region80: #{_lambda_.3} parent=27 // pred_fallthru
          _
        // Predicated region
        $region81: #{_lambda_.3} parent=27 // pred_check
          %p800 = pneg %p466
        $region82: #{_lambda_.3} parent=27 // pred_check_branch
          %802 = sbr.rel (%p800) target = $region84
        $region83: #{_lambda_.3} parent=27 // pred_region
          %p803 = scmp.lt.s32.totalorder %s41, 1
          %s804 = scalar_select %p803, %s41, 1
          %s805 = scalar_lea.vmem %s16, %s804
        $region84: #{_lambda_.3} parent=27 // pred_fallthru
          _
        // Predicated region
        $region85: #{_lambda_.3} parent=27 // pred_check
          %p806 = pneg %p492
        $region86: #{_lambda_.3} parent=27 // pred_check_branch
          %808 = sbr.rel (%p806) target = $region88
        $region87: #{_lambda_.3} parent=27 // pred_region
          %p809 = scmp.lt.s32.totalorder %s41, 1
          %s810 = scalar_select %p809, %s41, 1
          %s811 = scalar_lea.vmem %s17, %s810
        $region88: #{_lambda_.3} parent=27 // pred_fallthru
          _
        // Predicated region
        $region89: #{_lambda_.3} parent=27 // pred_check
          %p812 = pneg %p518
        $region90: #{_lambda_.3} parent=27 // pred_check_branch
          %814 = sbr.rel (%p812) target = $region92
        $region91: #{_lambda_.3} parent=27 // pred_region
          %p815 = scmp.lt.s32.totalorder %s41, 1
          %s816 = scalar_select %p815, %s41, 1
          %s817 = smul.addr %s816, 4
          %s818 = smul.addr %s817, 4
          %s819 = scalar_lea.vmem %s18, %s818
        $region92: #{_lambda_.3} parent=27 // pred_fallthru
          _
        // Predicated region
        $region93: #{_lambda_.3} parent=27 // pred_check
          %p820 = pneg %p544
        $region94: #{_lambda_.3} parent=27 // pred_check_branch
          %822 = sbr.rel (%p820) target = $region96
        $region95: #{_lambda_.3} parent=27 // pred_region
          %p823 = scmp.lt.s32.totalorder %s41, 1
          %s824 = scalar_select %p823, %s41, 1
          %s825 = scalar_lea.vmem %s19, %s824
        $region96: #{_lambda_.3} parent=27 // pred_fallthru
          _
        // Predicated region
        $region97: #{_lambda_.3} parent=27 // pred_check
          %p826 = pneg %p570
        $region98: #{_lambda_.3} parent=27 // pred_check_branch
          %828 = sbr.rel (%p826) target = $region100
        $region99: #{_lambda_.3} parent=27 // pred_region
          %p829 = scmp.lt.s32.totalorder %s41, 1
          %s830 = scalar_select %p829, %s41, 1
          %s831 = smul.addr %s830, 8
          %s832 = smul.addr %s831, 4
          %s833 = scalar_lea.vmem %s20, %s832
        $region100: #{_lambda_.3} parent=27 // pred_fallthru
          _
        // Predicated region
        $region101: #{_lambda_.3} parent=27 // pred_check
          %p834 = pneg %p596
        $region102: #{_lambda_.3} parent=27 // pred_check_branch
          %836 = sbr.rel (%p834) target = $region104
        $region103: #{_lambda_.3} parent=27 // pred_region
          %p837 = scmp.lt.s32.totalorder %s41, 1
          %s838 = scalar_select %p837, %s41, 1
          %s839 = scalar_lea.vmem %s21, %s838
        $region104: #{_lambda_.3} parent=27 // pred_fallthru
          _
        // Predicated region
        $region105: #{_lambda_.3} parent=27 // pred_check
          %p840 = pneg %p622
        $region106: #{_lambda_.3} parent=27 // pred_check_branch
          %842 = sbr.rel (%p840) target = $region108
        $region107: #{_lambda_.3} parent=27 // pred_region
          %p843 = scmp.lt.s32.totalorder %s41, 1
          %s844 = scalar_select %p843, %s41, 1
          %s845 = scalar_lea.vmem %s22, %s844
        $region108: #{_lambda_.3} parent=27 // pred_fallthru
          _
        // Predicated region
        $region109: #{_lambda_.3} parent=27 // pred_check
          %p846 = pneg %p648
        $region110: #{_lambda_.3} parent=27 // pred_check_branch
          %848 = sbr.rel (%p846) target = $region112
        $region111: #{_lambda_.3} parent=27 // pred_region
          %p849 = scmp.lt.s32.totalorder %s41, 1
          %s850 = scalar_select %p849, %s41, 1
          %s851 = scalar_lea.vmem %s23, %s850
        $region112: #{_lambda_.3} parent=27 // pred_fallthru
          _
      $region28: #{_lambda_.3} parent=5 // pred_fallthru
        _
      %p852 = scmp.le.s32.totalorder 1, %s33
      %p853 = scmp.lt.s32.totalorder %s33, 5
      %p854 = pnand %p852, %p853
      %p855 = pneg %p854
      // Predicated region
      $region113: #{_lambda_.3} parent=5 // pred_check
        _
      $region114: #{_lambda_.3} parent=5 // pred_check_branch
        %857 = sbr.rel (%p854) target = $region116
      $region115: #{_lambda_.3} parent=5 // pred_region
        %s858 = ssub.s32 %s33, 1
        %p859 = scmp.lt.s32.totalorder %s42, 1
        %s860 = scalar_select %p859, %s42, 1
        %s861 = smul.addr %s860, 8
        %s862 = scalar_lea.vmem %s0, %s861
        %p863 = pneg %p71
        %p864 = pneg %p68
        %p865 = pneg %p92
        %p866 = pneg %p89
        %p867 = pneg %p113
        %p868 = pneg %p110
        %p869 = pneg %p134
        %p870 = pneg %p131
        %p871 = scmp.lt.s32.totalorder %s43, 1
        %s872 = scalar_select %p871, %s43, 1
        %s873 = smul.addr %s872, 48
        %s874 = smul.addr %s873, 4
        %s875 = scalar_lea.vmem %s4, %s874
        %p876 = pneg %p160
        %p877 = pneg %p157
        %p878 = scmp.lt.s32.totalorder %s43, 1
        %s879 = scalar_select %p878, %s43, 1
        %s880 = smul.addr %s879, 12
        %s881 = scalar_lea.vmem %s5, %s880
        %p882 = pneg %p186
        %p883 = pneg %p183
        %p884 = scmp.lt.s32.totalorder %s43, 1
        %s885 = scalar_select %p884, %s43, 1
        %s886 = smul.addr %s885, 4
        %s887 = smul.addr %s886, 4
        %s888 = scalar_lea.vmem %s6, %s887
        %p889 = pneg %p212
        %p890 = pneg %p209
        %p891 = scmp.lt.s32.totalorder %s43, 1
        %s892 = scalar_select %p891, %s43, 1
        %s893 = scalar_lea.vmem %s7, %s892
        %p894 = pneg %p238
        %p895 = pneg %p235
        %p896 = scmp.lt.s32.totalorder %s43, 1
        %s897 = scalar_select %p896, %s43, 1
        %s898 = scalar_lea.vmem %s8, %s897
        %p899 = pneg %p264
        %p900 = pneg %p261
        %p901 = scmp.lt.s32.totalorder %s43, 1
        %s902 = scalar_select %p901, %s43, 1
        %s903 = scalar_lea.vmem %s9, %s902
        %p904 = pneg %p290
        %p905 = pneg %p287
        %p906 = scmp.lt.s32.totalorder %s43, 1
        %s907 = scalar_select %p906, %s43, 1
        %s908 = smul.addr %s907, 16
        %s909 = smul.addr %s908, 4
        %s910 = scalar_lea.vmem %s10, %s909
        %p911 = pneg %p316
        %p912 = pneg %p313
        %p913 = scmp.lt.s32.totalorder %s43, 1
        %s914 = scalar_select %p913, %s43, 1
        %s915 = smul.addr %s914, 4
        %s916 = scalar_lea.vmem %s11, %s915
        %p917 = pneg %p342
        %p918 = pneg %p339
        %p919 = scmp.lt.s32.totalorder %s43, 1
        %s920 = scalar_select %p919, %s43, 1
        %s921 = smul.addr %s920, 32
        %s922 = smul.addr %s921, 4
        %s923 = scalar_lea.vmem %s12, %s922
        %p924 = pneg %p368
        %p925 = pneg %p365
        %p926 = scmp.lt.s32.totalorder %s43, 1
        %s927 = scalar_select %p926, %s43, 1
        %s928 = smul.addr %s927, 8
        %s929 = scalar_lea.vmem %s13, %s928
        %p930 = pneg %p394
        %p931 = pneg %p391
        %p932 = scmp.lt.s32.totalorder %s43, 1
        %s933 = scalar_select %p932, %s43, 1
        %s934 = smul.addr %s933, 4
        %s935 = smul.addr %s934, 4
        %s936 = scalar_lea.vmem %s14, %s935
        %p937 = pneg %p420
        %p938 = pneg %p417
        %p939 = scmp.lt.s32.totalorder %s43, 1
        %s940 = scalar_select %p939, %s43, 1
        %s941 = scalar_lea.vmem %s15, %s940
        %p942 = pneg %p446
        %p943 = pneg %p443
        %p944 = scmp.lt.s32.totalorder %s43, 1
        %s945 = scalar_select %p944, %s43, 1
        %s946 = scalar_lea.vmem %s16, %s945
        %p947 = pneg %p472
        %p948 = pneg %p469
        %p949 = scmp.lt.s32.totalorder %s43, 1
        %s950 = scalar_select %p949, %s43, 1
        %s951 = scalar_lea.vmem %s17, %s950
        %p952 = pneg %p498
        %p953 = pneg %p495
        %p954 = scmp.lt.s32.totalorder %s43, 1
        %s955 = scalar_select %p954, %s43, 1
        %s956 = smul.addr %s955, 4
        %s957 = smul.addr %s956, 4
        %s958 = scalar_lea.vmem %s18, %s957
        %p959 = pneg %p524
        %p960 = pneg %p521
        %p961 = scmp.lt.s32.totalorder %s43, 1
        %s962 = scalar_select %p961, %s43, 1
        %s963 = scalar_lea.vmem %s19, %s962
        %p964 = pneg %p550
        %p965 = pneg %p547
        %p966 = scmp.lt.s32.totalorder %s43, 1
        %s967 = scalar_select %p966, %s43, 1
        %s968 = smul.addr %s967, 8
        %s969 = smul.addr %s968, 4
        %s970 = scalar_lea.vmem %s20, %s969
        %p971 = pneg %p576
        %p972 = pneg %p573
        %p973 = scmp.lt.s32.totalorder %s43, 1
        %s974 = scalar_select %p973, %s43, 1
        %s975 = scalar_lea.vmem %s21, %s974
        %p976 = pneg %p602
        %p977 = pneg %p599
        %p978 = scmp.lt.s32.totalorder %s43, 1
        %s979 = scalar_select %p978, %s43, 1
        %s980 = scalar_lea.vmem %s22, %s979
        %p981 = pneg %p628
        %p982 = pneg %p625
        %p983 = scmp.lt.s32.totalorder %s43, 1
        %s984 = scalar_select %p983, %s43, 1
        %s985 = scalar_lea.vmem %s23, %s984
        %p986 = pneg %p654
        %p987 = pneg %p651
        %p988 = pneg %p680
        %p989 = pneg %p677
        %s990 = sand.u32 %s667, 1
        %s991 = scalar_lea.sflag [#allocation4], %s990
        %s992 = sand.u32 %s667, 1
        %s993 = smul.addr %s992, 8
        %s994 = scalar_lea.vmem [#allocation3], %s993
        %p995 = scmp.lt.s32.totalorder %s42, 1
        %s996 = scalar_select %p995, %s42, 1
        %s997 = smul.addr %s996, 8
        %s998 = scalar_lea.vmem %s0, %s997
        %p999 = scmp.lt.s32.totalorder %s43, 1
        %s1000 = scalar_select %p999, %s43, 1
        %s1001 = smul.addr %s1000, 48
        %s1002 = smul.addr %s1001, 4
        %s1003 = scalar_lea.vmem %s4, %s1002
        %p1004 = scmp.lt.s32.totalorder %s43, 1
        %s1005 = scalar_select %p1004, %s43, 1
        %s1006 = smul.addr %s1005, 12
        %s1007 = scalar_lea.vmem %s5, %s1006
        %p1008 = scmp.lt.s32.totalorder %s43, 1
        %s1009 = scalar_select %p1008, %s43, 1
        %s1010 = smul.addr %s1009, 4
        %s1011 = smul.addr %s1010, 4
        %s1012 = scalar_lea.vmem %s6, %s1011
        %p1013 = scmp.lt.s32.totalorder %s43, 1
        %s1014 = scalar_select %p1013, %s43, 1
        %s1015 = scalar_lea.vmem %s7, %s1014
        %p1016 = scmp.lt.s32.totalorder %s43, 1
        %s1017 = scalar_select %p1016, %s43, 1
        %s1018 = scalar_lea.vmem %s8, %s1017
        %p1019 = scmp.lt.s32.totalorder %s43, 1
        %s1020 = scalar_select %p1019, %s43, 1
        %s1021 = scalar_lea.vmem %s9, %s1020
        %p1022 = scmp.lt.s32.totalorder %s43, 1
        %s1023 = scalar_select %p1022, %s43, 1
        %s1024 = smul.addr %s1023, 16
        %s1025 = smul.addr %s1024, 4
        %s1026 = scalar_lea.vmem %s10, %s1025
        %p1027 = scmp.lt.s32.totalorder %s43, 1
        %s1028 = scalar_select %p1027, %s43, 1
        %s1029 = smul.addr %s1028, 4
        %s1030 = scalar_lea.vmem %s11, %s1029
        %p1031 = scmp.lt.s32.totalorder %s43, 1
        %s1032 = scalar_select %p1031, %s43, 1
        %s1033 = smul.addr %s1032, 32
        %s1034 = smul.addr %s1033, 4
        %s1035 = scalar_lea.vmem %s12, %s1034
        %p1036 = scmp.lt.s32.totalorder %s43, 1
        %s1037 = scalar_select %p1036, %s43, 1
        %s1038 = smul.addr %s1037, 8
        %s1039 = scalar_lea.vmem %s13, %s1038
        %p1040 = scmp.lt.s32.totalorder %s43, 1
        %s1041 = scalar_select %p1040, %s43, 1
        %s1042 = smul.addr %s1041, 4
        %s1043 = smul.addr %s1042, 4
        %s1044 = scalar_lea.vmem %s14, %s1043
        %p1045 = scmp.lt.s32.totalorder %s43, 1
        %s1046 = scalar_select %p1045, %s43, 1
        %s1047 = scalar_lea.vmem %s15, %s1046
        %p1048 = scmp.lt.s32.totalorder %s43, 1
        %s1049 = scalar_select %p1048, %s43, 1
        %s1050 = scalar_lea.vmem %s16, %s1049
        %p1051 = scmp.lt.s32.totalorder %s43, 1
        %s1052 = scalar_select %p1051, %s43, 1
        %s1053 = scalar_lea.vmem %s17, %s1052
        %p1054 = scmp.lt.s32.totalorder %s43, 1
        %s1055 = scalar_select %p1054, %s43, 1
        %s1056 = smul.addr %s1055, 4
        %s1057 = smul.addr %s1056, 4
        %s1058 = scalar_lea.vmem %s18, %s1057
        %p1059 = scmp.lt.s32.totalorder %s43, 1
        %s1060 = scalar_select %p1059, %s43, 1
        %s1061 = scalar_lea.vmem %s19, %s1060
        %p1062 = scmp.lt.s32.totalorder %s43, 1
        %s1063 = scalar_select %p1062, %s43, 1
        %s1064 = smul.addr %s1063, 8
        %s1065 = smul.addr %s1064, 4
        %s1066 = scalar_lea.vmem %s20, %s1065
        %p1067 = scmp.lt.s32.totalorder %s43, 1
        %s1068 = scalar_select %p1067, %s43, 1
        %s1069 = scalar_lea.vmem %s21, %s1068
        %p1070 = scmp.lt.s32.totalorder %s43, 1
        %s1071 = scalar_select %p1070, %s43, 1
        %s1072 = scalar_lea.vmem %s22, %s1071
        %p1073 = scmp.lt.s32.totalorder %s43, 1
        %s1074 = scalar_select %p1073, %s43, 1
        %s1075 = scalar_lea.vmem %s23, %s1074
        %p1077 = scmp.eq.s32.totalorder %s43, 0
        // Predicated region
        $region117: #{_lambda_.3} parent=115 // pred_check
          %p1078 = pneg %p1077
        $region118: #{_lambda_.3} parent=115 // pred_check_branch
          %1080 = sbr.rel (%p1078) target = $region120
        $region119: #{_lambda_.3} parent=115 // pred_region
          %v1081 = vld [vmem:[%s1] sm:$0xff]
          %vm1082 = vcmask 261120
          %1083 = vst.msk [vmem:[#allocation2] sm:$0xff] %vm1082, %v1081
        $region120: #{_lambda_.3} parent=115 // pred_fallthru
          _
        %v1084 = vld [vmem:[#allocation2] sm:$0xff]
        %v1085 = vld [vmem:[%s998] sm:$0x1f]
        %v1086 = vld [vmem:[%s1003] sm:$0xf]
        %v1087 = vld [vmem:[%s1003 + $0x4] sm:$0xf]
        %v1088 = vld [vmem:[%s1003 + $0x8] sm:$0xf]
        %v1089 = vld [vmem:[%s1003 + $0xc] sm:$0xf]
        %v1090 = vld [vmem:[%s1003 + $0x10] sm:$0xf]
        %v1091 = vld [vmem:[%s1003 + $0x14] sm:$0xf]
        %v1092 = vld [vmem:[%s1003 + $0x18] sm:$0xf]
        %v1093 = vld [vmem:[%s1003 + $0x1c] sm:$0xf]
        %v1094 = vld [vmem:[%s1003 + $0x20] sm:$0xf]
        %v1095 = vld [vmem:[%s1003 + $0x24] sm:$0xf]
        %v1096 = vld [vmem:[%s1003 + $0x28] sm:$0xf]
        %v1097 = vld [vmem:[%s1003 + $0x2c] sm:$0xf]
        %v1098 = vld [vmem:[%s1003 + $0x30] sm:$0xf]
        %v1099 = vld [vmem:[%s1003 + $0x34] sm:$0xf]
        %v1100 = vld [vmem:[%s1003 + $0x38] sm:$0xf]
        %v1101 = vld [vmem:[%s1003 + $0x3c] sm:$0xf]
        %v1102 = vld [vmem:[%s1003 + $0x40] sm:$0xf]
        %v1103 = vld [vmem:[%s1003 + $0x44] sm:$0xf]
        %v1104 = vld [vmem:[%s1003 + $0x48] sm:$0xf]
        %v1105 = vld [vmem:[%s1003 + $0x4c] sm:$0xf]
        %v1106 = vld [vmem:[%s1003 + $0x50] sm:$0xf]
        %v1107 = vld [vmem:[%s1003 + $0x54] sm:$0xf]
        %v1108 = vld [vmem:[%s1003 + $0x58] sm:$0xf]
        %v1109 = vld [vmem:[%s1003 + $0x5c] sm:$0xf]
        %v1110 = vld [vmem:[%s1003 + $0x60] sm:$0xf]
        %v1111 = vld [vmem:[%s1003 + $0x64] sm:$0xf]
        %v1112 = vld [vmem:[%s1003 + $0x68] sm:$0xf]
        %v1113 = vld [vmem:[%s1003 + $0x6c] sm:$0xf]
        %v1114 = vld [vmem:[%s1003 + $0x70] sm:$0xf]
        %v1115 = vld [vmem:[%s1003 + $0x74] sm:$0xf]
        %v1116 = vld [vmem:[%s1003 + $0x78] sm:$0xf]
        %v1117 = vld [vmem:[%s1003 + $0x7c] sm:$0xf]
        %v1118 = vld [vmem:[%s1003 + $0x80] sm:$0xf]
        %v1119 = vld [vmem:[%s1003 + $0x84] sm:$0xf]
        %v1120 = vld [vmem:[%s1003 + $0x88] sm:$0xf]
        %v1121 = vld [vmem:[%s1003 + $0x8c] sm:$0xf]
        %v1122 = vld [vmem:[%s1003 + $0x90] sm:$0xf]
        %v1123 = vld [vmem:[%s1003 + $0x94] sm:$0xf]
        %v1124 = vld [vmem:[%s1003 + $0x98] sm:$0xf]
        %v1125 = vld [vmem:[%s1003 + $0x9c] sm:$0xf]
        %v1126 = vld [vmem:[%s1003 + $0xa0] sm:$0xf]
        %v1127 = vld [vmem:[%s1003 + $0xa4] sm:$0xf]
        %v1128 = vld [vmem:[%s1003 + $0xa8] sm:$0xf]
        %v1129 = vld [vmem:[%s1003 + $0xac] sm:$0xf]
        %v1130 = vld [vmem:[%s1003 + $0xb0] sm:$0xf]
        %v1131 = vld [vmem:[%s1003 + $0xb4] sm:$0xf]
        %v1132 = vld [vmem:[%s1003 + $0xb8] sm:$0xf]
        %v1133 = vld [vmem:[%s1003 + $0xbc] sm:$0xf]
        %v1134 = vld [vmem:[%s1007] sm:$0x1]
        %v1135 = vld [vmem:[%s1007 + $0x1] sm:$0x1]
        %v1136 = vld [vmem:[%s1007 + $0x2] sm:$0x1]
        %v1137 = vld [vmem:[%s1007 + $0x3] sm:$0x1]
        %v1138 = vld [vmem:[%s1007 + $0x4] sm:$0x1]
        %v1139 = vld [vmem:[%s1007 + $0x5] sm:$0x1]
        %v1140 = vld [vmem:[%s1007 + $0x6] sm:$0x1]
        %v1141 = vld [vmem:[%s1007 + $0x7] sm:$0x1]
        %v1142 = vld [vmem:[%s1007 + $0x8] sm:$0x1]
        %v1143 = vld [vmem:[%s1007 + $0x9] sm:$0x1]
        %v1144 = vld [vmem:[%s1007 + $0xa] sm:$0x1]
        %v1145 = vld [vmem:[%s1007 + $0xb] sm:$0x1]
        %v1146 = vpack.c.bf16 %v1084, %v1084
        %v1159 = vlaneseq
        %v1160 = vshrl.u32 %v1159, 7
        %v1161 = vsub.s32 0, %v1160
        %v1162 = vrot.slane %v1134, %v1161
        %v1163 = vlaneseq
        %v1164 = vshrl.u32 %v1163, 7
        %v1165 = vsub.s32 0, %v1164
        %v1166 = vrot.slane %v1135, %v1165
        %v1167 = vlaneseq
        %v1168 = vshrl.u32 %v1167, 7
        %v1169 = vsub.s32 0, %v1168
        %v1170 = vrot.slane %v1136, %v1169
        %v1171 = vlaneseq
        %v1172 = vshrl.u32 %v1171, 7
        %v1173 = vsub.s32 0, %v1172
        %v1174 = vrot.slane %v1137, %v1173
        %v1175 = vlaneseq
        %v1176 = vshrl.u32 %v1175, 7
        %v1177 = vsub.s32 0, %v1176
        %v1178 = vrot.slane %v1138, %v1177
        %v1179 = vlaneseq
        %v1180 = vshrl.u32 %v1179, 7
        %v1181 = vsub.s32 0, %v1180
        %v1182 = vrot.slane %v1139, %v1181
        %v1183 = vlaneseq
        %v1184 = vshrl.u32 %v1183, 7
        %v1185 = vsub.s32 0, %v1184
        %v1186 = vrot.slane %v1140, %v1185
        %v1187 = vlaneseq
        %v1188 = vshrl.u32 %v1187, 7
        %v1189 = vsub.s32 0, %v1188
        %v1190 = vrot.slane %v1141, %v1189
        %v1191 = vlaneseq
        %v1192 = vshrl.u32 %v1191, 7
        %v1193 = vsub.s32 0, %v1192
        %v1194 = vrot.slane %v1142, %v1193
        %v1195 = vlaneseq
        %v1196 = vshrl.u32 %v1195, 7
        %v1197 = vsub.s32 0, %v1196
        %v1198 = vrot.slane %v1143, %v1197
        %v1199 = vlaneseq
        %v1200 = vshrl.u32 %v1199, 7
        %v1201 = vsub.s32 0, %v1200
        %v1202 = vrot.slane %v1144, %v1201
        %v1203 = vlaneseq
        %v1204 = vshrl.u32 %v1203, 7
        %v1205 = vsub.s32 0, %v1204
        %v1206 = vrot.slane %v1145, %v1205
        %v1223 = vunpack.c.l.b16 %v1086
        %v1224 = vunpack.c.l.b16 %v1087
        %v1225 = vunpack.c.l.b16 %v1088
        %v1226 = vunpack.c.l.b16 %v1089
        %v1227 = vpack.c.b16 %v1224, %v1223
        %v1228 = vpack.c.b16 %v1226, %v1225
        %vm1231 = vcmask 261120
        %v1233 = vsel %vm1231, %v1146, 0
        %1235 = vmatprep.subr.bf16.mxu0 0
        %1236 = vmatpush1.bf16.msra.mxu0 %v1227
        %1237 = vmatprep.subr.bf16.mxu0 0
        %1238 = vmatpush1.bf16.msra.mxu0 %v1228
        %1239 = vmatprep.subr.bf16.mxu0 0
        %1240 = vmatpush1.bf16.msra.mxu0 0
        %1241 = vmatprep.subr.bf16.mxu0 0
        %1242 = vmatpush1.bf16.msra.mxu0 0
        %1243 = vmatprep.subr.bf16.mxu0 0
        %1244 = vmatpush1.bf16.msra.mxu0 0
        %1245 = vmatprep.subr.bf16.mxu0 0
        %1246 = vmatpush1.bf16.msra.mxu0 0
        %1247 = vmatprep.subr.bf16.mxu0 0
        %1248 = vmatpush1.bf16.msra.mxu0 0
        %1249 = vmatprep.subr.bf16.mxu0 0
        %1250 = vmatpush1.bf16.msra.mxu0 0
        %1251 = vmatprep.subr.bf16.mxu0 0
        %1252 = vmatpush1.bf16.msra.mxu0 0
        %1253 = vmatprep.subr.bf16.mxu0 0
        %1254 = vmatpush1.bf16.msra.mxu0 0
        %1255 = vmatprep.subr.bf16.mxu0 0
        %1256 = vmatpush1.bf16.msra.mxu0 0
        %1257 = vmatprep.subr.bf16.mxu0 0
        %1258 = vmatpush1.bf16.msra.mxu0 0
        %1259 = vmatprep.subr.bf16.mxu0 0
        %1260 = vmatpush1.bf16.msra.mxu0 0
        %1261 = vmatprep.subr.bf16.mxu0 0
        %1262 = vmatpush1.bf16.msra.mxu0 0
        %1263 = vmatprep.subr.bf16.mxu0 0
        %1264 = vmatpush1.bf16.msra.mxu0 0
        %1265 = vmatprep.subr.bf16.mxu0 0
        %1266 = vmatpush1.bf16.msra.mxu0 0
        %1267 = vmatprep.mubr.bf16.mxu0 0
        %1268 = vmatmul.mubr.bf16.gmra.mrb[0].mxu0 %v1233
        %v1269 = vpop.f32.mrb[0].mxu0
        %v1270 = vadd.f32 %v1162, %v1269
        %v1271 = vpop.f32.mrb[0].mxu0
        %v1272 = vpop.f32.mrb[0].mxu0
        %v1273 = vpop.f32.mrb[0].mxu0
        %1274 = vdwg.mxu0
        %v1279 = vunpack.c.l.b16 %v1090
        %v1280 = vunpack.c.l.b16 %v1091
        %v1281 = vunpack.c.l.b16 %v1092
        %v1282 = vunpack.c.l.b16 %v1093
        %v1283 = vpack.c.b16 %v1280, %v1279
        %v1284 = vpack.c.b16 %v1282, %v1281
        %1287 = vmatprep.subr.bf16.mxu0 0
        %1288 = vmatpush1.bf16.msra.mxu0 %v1283
        %1289 = vmatprep.subr.bf16.mxu0 0
        %1290 = vmatpush1.bf16.msra.mxu0 %v1284
        %1291 = vmatprep.subr.bf16.mxu0 0
        %1292 = vmatpush1.bf16.msra.mxu0 0
        %1293 = vmatprep.subr.bf16.mxu0 0
        %1294 = vmatpush1.bf16.msra.mxu0 0
        %1295 = vmatprep.subr.bf16.mxu0 0
        %1296 = vmatpush1.bf16.msra.mxu0 0
        %1297 = vmatprep.subr.bf16.mxu0 0
        %1298 = vmatpush1.bf16.msra.mxu0 0
        %1299 = vmatprep.subr.bf16.mxu0 0
        %1300 = vmatpush1.bf16.msra.mxu0 0
        %1301 = vmatprep.subr.bf16.mxu0 0
        %1302 = vmatpush1.bf16.msra.mxu0 0
        %1303 = vmatprep.subr.bf16.mxu0 0
        %1304 = vmatpush1.bf16.msra.mxu0 0
        %1305 = vmatprep.subr.bf16.mxu0 0
        %1306 = vmatpush1.bf16.msra.mxu0 0
        %1307 = vmatprep.subr.bf16.mxu0 0
        %1308 = vmatpush1.bf16.msra.mxu0 0
        %1309 = vmatprep.subr.bf16.mxu0 0
        %1310 = vmatpush1.bf16.msra.mxu0 0
        %1311 = vmatprep.subr.bf16.mxu0 0
        %1312 = vmatpush1.bf16.msra.mxu0 0
        %1313 = vmatprep.subr.bf16.mxu0 0
        %1314 = vmatpush1.bf16.msra.mxu0 0
        %1315 = vmatprep.subr.bf16.mxu0 0
        %1316 = vmatpush1.bf16.msra.mxu0 0
        %1317 = vmatprep.subr.bf16.mxu0 0
        %1318 = vmatpush1.bf16.msra.mxu0 0
        %1319 = vmatprep.mubr.bf16.mxu0 0
        %1320 = vmatmul.mubr.bf16.gmra.mrb[0].mxu0 %v1233
        %v1321 = vpop.f32.mrb[0].mxu0
        %v1322 = vadd.f32 %v1166, %v1321
        %v1323 = vpop.f32.mrb[0].mxu0
        %v1324 = vpop.f32.mrb[0].mxu0
        %v1325 = vpop.f32.mrb[0].mxu0
        %1326 = vdwg.mxu0
        %v1331 = vunpack.c.l.b16 %v1094
        %v1332 = vunpack.c.l.b16 %v1095
        %v1333 = vunpack.c.l.b16 %v1096
        %v1334 = vunpack.c.l.b16 %v1097
        %v1335 = vpack.c.b16 %v1332, %v1331
        %v1336 = vpack.c.b16 %v1334, %v1333
        %1339 = vmatprep.subr.bf16.mxu0 0
        %1340 = vmatpush1.bf16.msra.mxu0 %v1335
        %1341 = vmatprep.subr.bf16.mxu0 0
        %1342 = vmatpush1.bf16.msra.mxu0 %v1336
        %1343 = vmatprep.subr.bf16.mxu0 0
        %1344 = vmatpush1.bf16.msra.mxu0 0
        %1345 = vmatprep.subr.bf16.mxu0 0
        %1346 = vmatpush1.bf16.msra.mxu0 0
        %1347 = vmatprep.subr.bf16.mxu0 0
        %1348 = vmatpush1.bf16.msra.mxu0 0
        %1349 = vmatprep.subr.bf16.mxu0 0
        %1350 = vmatpush1.bf16.msra.mxu0 0
        %1351 = vmatprep.subr.bf16.mxu0 0
        %1352 = vmatpush1.bf16.msra.mxu0 0
        %1353 = vmatprep.subr.bf16.mxu0 0
        %1354 = vmatpush1.bf16.msra.mxu0 0
        %1355 = vmatprep.subr.bf16.mxu0 0
        %1356 = vmatpush1.bf16.msra.mxu0 0
        %1357 = vmatprep.subr.bf16.mxu0 0
        %1358 = vmatpush1.bf16.msra.mxu0 0
        %1359 = vmatprep.subr.bf16.mxu0 0
        %1360 = vmatpush1.bf16.msra.mxu0 0
        %1361 = vmatprep.subr.bf16.mxu0 0
        %1362 = vmatpush1.bf16.msra.mxu0 0
        %1363 = vmatprep.subr.bf16.mxu0 0
        %1364 = vmatpush1.bf16.msra.mxu0 0
        %1365 = vmatprep.subr.bf16.mxu0 0
        %1366 = vmatpush1.bf16.msra.mxu0 0
        %1367 = vmatprep.subr.bf16.mxu0 0
        %1368 = vmatpush1.bf16.msra.mxu0 0
        %1369 = vmatprep.subr.bf16.mxu0 0
        %1370 = vmatpush1.bf16.msra.mxu0 0
        %1371 = vmatprep.mubr.bf16.mxu0 0
        %1372 = vmatmul.mubr.bf16.gmra.mrb[0].mxu0 %v1233
        %v1373 = vpop.f32.mrb[0].mxu0
        %v1374 = vadd.f32 %v1170, %v1373
        %v1375 = vpop.f32.mrb[0].mxu0
        %v1376 = vpop.f32.mrb[0].mxu0
        %v1377 = vpop.f32.mrb[0].mxu0
        %1378 = vdwg.mxu0
        %v1383 = vunpack.c.l.b16 %v1098
        %v1384 = vunpack.c.l.b16 %v1099
        %v1385 = vunpack.c.l.b16 %v1100
        %v1386 = vunpack.c.l.b16 %v1101
        %v1387 = vpack.c.b16 %v1384, %v1383
        %v1388 = vpack.c.b16 %v1386, %v1385
        %1391 = vmatprep.subr.bf16.mxu0 0
        %1392 = vmatpush1.bf16.msra.mxu0 %v1387
        %1393 = vmatprep.subr.bf16.mxu0 0
        %1394 = vmatpush1.bf16.msra.mxu0 %v1388
        %1395 = vmatprep.subr.bf16.mxu0 0
        %1396 = vmatpush1.bf16.msra.mxu0 0
        %1397 = vmatprep.subr.bf16.mxu0 0
        %1398 = vmatpush1.bf16.msra.mxu0 0
        %1399 = vmatprep.subr.bf16.mxu0 0
        %1400 = vmatpush1.bf16.msra.mxu0 0
        %1401 = vmatprep.subr.bf16.mxu0 0
        %1402 = vmatpush1.bf16.msra.mxu0 0
        %1403 = vmatprep.subr.bf16.mxu0 0
        %1404 = vmatpush1.bf16.msra.mxu0 0
        %1405 = vmatprep.subr.bf16.mxu0 0
        %1406 = vmatpush1.bf16.msra.mxu0 0
        %1407 = vmatprep.subr.bf16.mxu0 0
        %1408 = vmatpush1.bf16.msra.mxu0 0
        %1409 = vmatprep.subr.bf16.mxu0 0
        %1410 = vmatpush1.bf16.msra.mxu0 0
        %1411 = vmatprep.subr.bf16.mxu0 0
        %1412 = vmatpush1.bf16.msra.mxu0 0
        %1413 = vmatprep.subr.bf16.mxu0 0
        %1414 = vmatpush1.bf16.msra.mxu0 0
        %1415 = vmatprep.subr.bf16.mxu0 0
        %1416 = vmatpush1.bf16.msra.mxu0 0
        %1417 = vmatprep.subr.bf16.mxu0 0
        %1418 = vmatpush1.bf16.msra.mxu0 0
        %1419 = vmatprep.subr.bf16.mxu0 0
        %1420 = vmatpush1.bf16.msra.mxu0 0
        %1421 = vmatprep.subr.bf16.mxu0 0
        %1422 = vmatpush1.bf16.msra.mxu0 0
        %1423 = vmatprep.mubr.bf16.mxu0 0
        %1424 = vmatmul.mubr.bf16.gmra.mrb[0].mxu0 %v1233
        %v1425 = vpop.f32.mrb[0].mxu0
        %v1426 = vadd.f32 %v1174, %v1425
        %v1427 = vpop.f32.mrb[0].mxu0
        %v1428 = vpop.f32.mrb[0].mxu0
        %v1429 = vpop.f32.mrb[0].mxu0
        %1430 = vdwg.mxu0
        %v1435 = vunpack.c.l.b16 %v1102
        %v1436 = vunpack.c.l.b16 %v1103
        %v1437 = vunpack.c.l.b16 %v1104
        %v1438 = vunpack.c.l.b16 %v1105
        %v1439 = vpack.c.b16 %v1436, %v1435
        %v1440 = vpack.c.b16 %v1438, %v1437
        %1443 = vmatprep.subr.bf16.mxu0 0
        %1444 = vmatpush1.bf16.msra.mxu0 %v1439
        %1445 = vmatprep.subr.bf16.mxu0 0
        %1446 = vmatpush1.bf16.msra.mxu0 %v1440
        %1447 = vmatprep.subr.bf16.mxu0 0
        %1448 = vmatpush1.bf16.msra.mxu0 0
        %1449 = vmatprep.subr.bf16.mxu0 0
        %1450 = vmatpush1.bf16.msra.mxu0 0
        %1451 = vmatprep.subr.bf16.mxu0 0
        %1452 = vmatpush1.bf16.msra.mxu0 0
        %1453 = vmatprep.subr.bf16.mxu0 0
        %1454 = vmatpush1.bf16.msra.mxu0 0
        %1455 = vmatprep.subr.bf16.mxu0 0
        %1456 = vmatpush1.bf16.msra.mxu0 0
        %1457 = vmatprep.subr.bf16.mxu0 0
        %1458 = vmatpush1.bf16.msra.mxu0 0
        %1459 = vmatprep.subr.bf16.mxu0 0
        %1460 = vmatpush1.bf16.msra.mxu0 0
        %1461 = vmatprep.subr.bf16.mxu0 0
        %1462 = vmatpush1.bf16.msra.mxu0 0
        %1463 = vmatprep.subr.bf16.mxu0 0
        %1464 = vmatpush1.bf16.msra.mxu0 0
        %1465 = vmatprep.subr.bf16.mxu0 0
        %1466 = vmatpush1.bf16.msra.mxu0 0
        %1467 = vmatprep.subr.bf16.mxu0 0
        %1468 = vmatpush1.bf16.msra.mxu0 0
        %1469 = vmatprep.subr.bf16.mxu0 0
        %1470 = vmatpush1.bf16.msra.mxu0 0
        %1471 = vmatprep.subr.bf16.mxu0 0
        %1472 = vmatpush1.bf16.msra.mxu0 0
        %1473 = vmatprep.subr.bf16.mxu0 0
        %1474 = vmatpush1.bf16.msra.mxu0 0
        %1475 = vmatprep.mubr.bf16.mxu0 0
        %1476 = vmatmul.mubr.bf16.gmra.mrb[0].mxu0 %v1233
        %v1477 = vpop.f32.mrb[0].mxu0
        %v1478 = vadd.f32 %v1178, %v1477
        %v1479 = vpop.f32.mrb[0].mxu0
        %v1480 = vpop.f32.mrb[0].mxu0
        %v1481 = vpop.f32.mrb[0].mxu0
        %1482 = vdwg.mxu0
        %v1487 = vunpack.c.l.b16 %v1106
        %v1488 = vunpack.c.l.b16 %v1107
        %v1489 = vunpack.c.l.b16 %v1108
        %v1490 = vunpack.c.l.b16 %v1109
        %v1491 = vpack.c.b16 %v1488, %v1487
        %v1492 = vpack.c.b16 %v1490, %v1489
        %1495 = vmatprep.subr.bf16.mxu0 0
        %1496 = vmatpush1.bf16.msra.mxu0 %v1491
        %1497 = vmatprep.subr.bf16.mxu0 0
        %1498 = vmatpush1.bf16.msra.mxu0 %v1492
        %1499 = vmatprep.subr.bf16.mxu0 0
        %1500 = vmatpush1.bf16.msra.mxu0 0
        %1501 = vmatprep.subr.bf16.mxu0 0
        %1502 = vmatpush1.bf16.msra.mxu0 0
        %1503 = vmatprep.subr.bf16.mxu0 0
        %1504 = vmatpush1.bf16.msra.mxu0 0
        %1505 = vmatprep.subr.bf16.mxu0 0
        %1506 = vmatpush1.bf16.msra.mxu0 0
        %1507 = vmatprep.subr.bf16.mxu0 0
        %1508 = vmatpush1.bf16.msra.mxu0 0
        %1509 = vmatprep.subr.bf16.mxu0 0
        %1510 = vmatpush1.bf16.msra.mxu0 0
        %1511 = vmatprep.subr.bf16.mxu0 0
        %1512 = vmatpush1.bf16.msra.mxu0 0
        %1513 = vmatprep.subr.bf16.mxu0 0
        %1514 = vmatpush1.bf16.msra.mxu0 0
        %1515 = vmatprep.subr.bf16.mxu0 0
        %1516 = vmatpush1.bf16.msra.mxu0 0
        %1517 = vmatprep.subr.bf16.mxu0 0
        %1518 = vmatpush1.bf16.msra.mxu0 0
        %1519 = vmatprep.subr.bf16.mxu0 0
        %1520 = vmatpush1.bf16.msra.mxu0 0
        %1521 = vmatprep.subr.bf16.mxu0 0
        %1522 = vmatpush1.bf16.msra.mxu0 0
        %1523 = vmatprep.subr.bf16.mxu0 0
        %1524 = vmatpush1.bf16.msra.mxu0 0
        %1525 = vmatprep.subr.bf16.mxu0 0
        %1526 = vmatpush1.bf16.msra.mxu0 0
        %1527 = vmatprep.mubr.bf16.mxu0 0
        %1528 = vmatmul.mubr.bf16.gmra.mrb[0].mxu0 %v1233
        %v1529 = vpop.f32.mrb[0].mxu0
        %v1530 = vadd.f32 %v1182, %v1529
        %v1531 = vpop.f32.mrb[0].mxu0
        %v1532 = vpop.f32.mrb[0].mxu0
        %v1533 = vpop.f32.mrb[0].mxu0
        %1534 = vdwg.mxu0
        %v1539 = vunpack.c.l.b16 %v1110
        %v1540 = vunpack.c.l.b16 %v1111
        %v1541 = vunpack.c.l.b16 %v1112
        %v1542 = vunpack.c.l.b16 %v1113
        %v1543 = vpack.c.b16 %v1540, %v1539
        %v1544 = vpack.c.b16 %v1542, %v1541
        %1547 = vmatprep.subr.bf16.mxu0 0
        %1548 = vmatpush1.bf16.msra.mxu0 %v1543
        %1549 = vmatprep.subr.bf16.mxu0 0
        %1550 = vmatpush1.bf16.msra.mxu0 %v1544
        %1551 = vmatprep.subr.bf16.mxu0 0
        %1552 = vmatpush1.bf16.msra.mxu0 0
        %1553 = vmatprep.subr.bf16.mxu0 0
        %1554 = vmatpush1.bf16.msra.mxu0 0
        %1555 = vmatprep.subr.bf16.mxu0 0
        %1556 = vmatpush1.bf16.msra.mxu0 0
        %1557 = vmatprep.subr.bf16.mxu0 0
        %1558 = vmatpush1.bf16.msra.mxu0 0
        %1559 = vmatprep.subr.bf16.mxu0 0
        %1560 = vmatpush1.bf16.msra.mxu0 0
        %1561 = vmatprep.subr.bf16.mxu0 0
        %1562 = vmatpush1.bf16.msra.mxu0 0
        %1563 = vmatprep.subr.bf16.mxu0 0
        %1564 = vmatpush1.bf16.msra.mxu0 0
        %1565 = vmatprep.subr.bf16.mxu0 0
        %1566 = vmatpush1.bf16.msra.mxu0 0
        %1567 = vmatprep.subr.bf16.mxu0 0
        %1568 = vmatpush1.bf16.msra.mxu0 0
        %1569 = vmatprep.subr.bf16.mxu0 0
        %1570 = vmatpush1.bf16.msra.mxu0 0
        %1571 = vmatprep.subr.bf16.mxu0 0
        %1572 = vmatpush1.bf16.msra.mxu0 0
        %1573 = vmatprep.subr.bf16.mxu0 0
        %1574 = vmatpush1.bf16.msra.mxu0 0
        %1575 = vmatprep.subr.bf16.mxu0 0
        %1576 = vmatpush1.bf16.msra.mxu0 0
        %1577 = vmatprep.subr.bf16.mxu0 0
        %1578 = vmatpush1.bf16.msra.mxu0 0
        %1579 = vmatprep.mubr.bf16.mxu0 0
        %1580 = vmatmul.mubr.bf16.gmra.mrb[0].mxu0 %v1233
        %v1581 = vpop.f32.mrb[0].mxu0
        %v1582 = vadd.f32 %v1186, %v1581
        %v1583 = vpop.f32.mrb[0].mxu0
        %v1584 = vpop.f32.mrb[0].mxu0
        %v1585 = vpop.f32.mrb[0].mxu0
        %1586 = vdwg.mxu0
        %v1591 = vunpack.c.l.b16 %v1114
        %v1592 = vunpack.c.l.b16 %v1115
        %v1593 = vunpack.c.l.b16 %v1116
        %v1594 = vunpack.c.l.b16 %v1117
        %v1595 = vpack.c.b16 %v1592, %v1591
        %v1596 = vpack.c.b16 %v1594, %v1593
        %1599 = vmatprep.subr.bf16.mxu0 0
        %1600 = vmatpush1.bf16.msra.mxu0 %v1595
        %1601 = vmatprep.subr.bf16.mxu0 0
        %1602 = vmatpush1.bf16.msra.mxu0 %v1596
        %1603 = vmatprep.subr.bf16.mxu0 0
        %1604 = vmatpush1.bf16.msra.mxu0 0
        %1605 = vmatprep.subr.bf16.mxu0 0
        %1606 = vmatpush1.bf16.msra.mxu0 0
        %1607 = vmatprep.subr.bf16.mxu0 0
        %1608 = vmatpush1.bf16.msra.mxu0 0
        %1609 = vmatprep.subr.bf16.mxu0 0
        %1610 = vmatpush1.bf16.msra.mxu0 0
        %1611 = vmatprep.subr.bf16.mxu0 0
        %1612 = vmatpush1.bf16.msra.mxu0 0
        %1613 = vmatprep.subr.bf16.mxu0 0
        %1614 = vmatpush1.bf16.msra.mxu0 0
        %1615 = vmatprep.subr.bf16.mxu0 0
        %1616 = vmatpush1.bf16.msra.mxu0 0
        %1617 = vmatprep.subr.bf16.mxu0 0
        %1618 = vmatpush1.bf16.msra.mxu0 0
        %1619 = vmatprep.subr.bf16.mxu0 0
        %1620 = vmatpush1.bf16.msra.mxu0 0
        %1621 = vmatprep.subr.bf16.mxu0 0
        %1622 = vmatpush1.bf16.msra.mxu0 0
        %1623 = vmatprep.subr.bf16.mxu0 0
        %1624 = vmatpush1.bf16.msra.mxu0 0
        %1625 = vmatprep.subr.bf16.mxu0 0
        %1626 = vmatpush1.bf16.msra.mxu0 0
        %1627 = vmatprep.subr.bf16.mxu0 0
        %1628 = vmatpush1.bf16.msra.mxu0 0
        %1629 = vmatprep.subr.bf16.mxu0 0
        %1630 = vmatpush1.bf16.msra.mxu0 0
        %1631 = vmatprep.mubr.bf16.mxu0 0
        %1632 = vmatmul.mubr.bf16.gmra.mrb[0].mxu0 %v1233
        %v1633 = vpop.f32.mrb[0].mxu0
        %v1634 = vadd.f32 %v1190, %v1633
        %v1635 = vpop.f32.mrb[0].mxu0
        %v1636 = vpop.f32.mrb[0].mxu0
        %v1637 = vpop.f32.mrb[0].mxu0
        %1638 = vdwg.mxu0
        %v1643 = vunpack.c.l.b16 %v1118
        %v1644 = vunpack.c.l.b16 %v1119
        %v1645 = vunpack.c.l.b16 %v1120
        %v1646 = vunpack.c.l.b16 %v1121
        %v1647 = vpack.c.b16 %v1644, %v1643
        %v1648 = vpack.c.b16 %v1646, %v1645
        %1651 = vmatprep.subr.bf16.mxu0 0
        %1652 = vmatpush1.bf16.msra.mxu0 %v1647
        %1653 = vmatprep.subr.bf16.mxu0 0
        %1654 = vmatpush1.bf16.msra.mxu0 %v1648
        %1655 = vmatprep.subr.bf16.mxu0 0
        %1656 = vmatpush1.bf16.msra.mxu0 0
        %1657 = vmatprep.subr.bf16.mxu0 0
        %1658 = vmatpush1.bf16.msra.mxu0 0
        %1659 = vmatprep.subr.bf16.mxu0 0
        %1660 = vmatpush1.bf16.msra.mxu0 0
        %1661 = vmatprep.subr.bf16.mxu0 0
        %1662 = vmatpush1.bf16.msra.mxu0 0
        %1663 = vmatprep.subr.bf16.mxu0 0
        %1664 = vmatpush1.bf16.msra.mxu0 0
        %1665 = vmatprep.subr.bf16.mxu0 0
        %1666 = vmatpush1.bf16.msra.mxu0 0
        %1667 = vmatprep.subr.bf16.mxu0 0
        %1668 = vmatpush1.bf16.msra.mxu0 0
        %1669 = vmatprep.subr.bf16.mxu0 0
        %1670 = vmatpush1.bf16.msra.mxu0 0
        %1671 = vmatprep.subr.bf16.mxu0 0
        %1672 = vmatpush1.bf16.msra.mxu0 0
        %1673 = vmatprep.subr.bf16.mxu0 0
        %1674 = vmatpush1.bf16.msra.mxu0 0
        %1675 = vmatprep.subr.bf16.mxu0 0
        %1676 = vmatpush1.bf16.msra.mxu0 0
        %1677 = vmatprep.subr.bf16.mxu0 0
        %1678 = vmatpush1.bf16.msra.mxu0 0
        %1679 = vmatprep.subr.bf16.mxu0 0
        %1680 = vmatpush1.bf16.msra.mxu0 0
        %1681 = vmatprep.subr.bf16.mxu0 0
        %1682 = vmatpush1.bf16.msra.mxu0 0
        %1683 = vmatprep.mubr.bf16.mxu0 0
        %1684 = vmatmul.mubr.bf16.gmra.mrb[0].mxu0 %v1233
        %v1685 = vpop.f32.mrb[0].mxu0
        %v1686 = vadd.f32 %v1194, %v1685
        %v1687 = vpop.f32.mrb[0].mxu0
        %v1688 = vpop.f32.mrb[0].mxu0
        %v1689 = vpop.f32.mrb[0].mxu0
        %1690 = vdwg.mxu0
        %v1695 = vunpack.c.l.b16 %v1122
        %v1696 = vunpack.c.l.b16 %v1123
        %v1697 = vunpack.c.l.b16 %v1124
        %v1698 = vunpack.c.l.b16 %v1125
        %v1699 = vpack.c.b16 %v1696, %v1695
        %v1700 = vpack.c.b16 %v1698, %v1697
        %1703 = vmatprep.subr.bf16.mxu0 0
        %1704 = vmatpush1.bf16.msra.mxu0 %v1699
        %1705 = vmatprep.subr.bf16.mxu0 0
        %1706 = vmatpush1.bf16.msra.mxu0 %v1700
        %1707 = vmatprep.subr.bf16.mxu0 0
        %1708 = vmatpush1.bf16.msra.mxu0 0
        %1709 = vmatprep.subr.bf16.mxu0 0
        %1710 = vmatpush1.bf16.msra.mxu0 0
        %1711 = vmatprep.subr.bf16.mxu0 0
        %1712 = vmatpush1.bf16.msra.mxu0 0
        %1713 = vmatprep.subr.bf16.mxu0 0
        %1714 = vmatpush1.bf16.msra.mxu0 0
        %1715 = vmatprep.subr.bf16.mxu0 0
        %1716 = vmatpush1.bf16.msra.mxu0 0
        %1717 = vmatprep.subr.bf16.mxu0 0
        %1718 = vmatpush1.bf16.msra.mxu0 0
        %1719 = vmatprep.subr.bf16.mxu0 0
        %1720 = vmatpush1.bf16.msra.mxu0 0
        %1721 = vmatprep.subr.bf16.mxu0 0
        %1722 = vmatpush1.bf16.msra.mxu0 0
        %1723 = vmatprep.subr.bf16.mxu0 0
        %1724 = vmatpush1.bf16.msra.mxu0 0
        %1725 = vmatprep.subr.bf16.mxu0 0
        %1726 = vmatpush1.bf16.msra.mxu0 0
        %1727 = vmatprep.subr.bf16.mxu0 0
        %1728 = vmatpush1.bf16.msra.mxu0 0
        %1729 = vmatprep.subr.bf16.mxu0 0
        %1730 = vmatpush1.bf16.msra.mxu0 0
        %1731 = vmatprep.subr.bf16.mxu0 0
        %1732 = vmatpush1.bf16.msra.mxu0 0
        %1733 = vmatprep.subr.bf16.mxu0 0
        %1734 = vmatpush1.bf16.msra.mxu0 0
        %1735 = vmatprep.mubr.bf16.mxu0 0
        %1736 = vmatmul.mubr.bf16.gmra.mrb[0].mxu0 %v1233
        %v1737 = vpop.f32.mrb[0].mxu0
        %v1738 = vadd.f32 %v1198, %v1737
        %v1739 = vpop.f32.mrb[0].mxu0
        %v1740 = vpop.f32.mrb[0].mxu0
        %v1741 = vpop.f32.mrb[0].mxu0
        %1742 = vdwg.mxu0
        %v1747 = vunpack.c.l.b16 %v1126
        %v1748 = vunpack.c.l.b16 %v1127
        %v1749 = vunpack.c.l.b16 %v1128
        %v1750 = vunpack.c.l.b16 %v1129
        %v1751 = vpack.c.b16 %v1748, %v1747
        %v1752 = vpack.c.b16 %v1750, %v1749
        %1755 = vmatprep.subr.bf16.mxu0 0
        %1756 = vmatpush1.bf16.msra.mxu0 %v1751
        %1757 = vmatprep.subr.bf16.mxu0 0
        %1758 = vmatpush1.bf16.msra.mxu0 %v1752
        %1759 = vmatprep.subr.bf16.mxu0 0
        %1760 = vmatpush1.bf16.msra.mxu0 0
        %1761 = vmatprep.subr.bf16.mxu0 0
        %1762 = vmatpush1.bf16.msra.mxu0 0
        %1763 = vmatprep.subr.bf16.mxu0 0
        %1764 = vmatpush1.bf16.msra.mxu0 0
        %1765 = vmatprep.subr.bf16.mxu0 0
        %1766 = vmatpush1.bf16.msra.mxu0 0
        %1767 = vmatprep.subr.bf16.mxu0 0
        %1768 = vmatpush1.bf16.msra.mxu0 0
        %1769 = vmatprep.subr.bf16.mxu0 0
        %1770 = vmatpush1.bf16.msra.mxu0 0
        %1771 = vmatprep.subr.bf16.mxu0 0
        %1772 = vmatpush1.bf16.msra.mxu0 0
        %1773 = vmatprep.subr.bf16.mxu0 0
        %1774 = vmatpush1.bf16.msra.mxu0 0
        %1775 = vmatprep.subr.bf16.mxu0 0
        %1776 = vmatpush1.bf16.msra.mxu0 0
        %1777 = vmatprep.subr.bf16.mxu0 0
        %1778 = vmatpush1.bf16.msra.mxu0 0
        %1779 = vmatprep.subr.bf16.mxu0 0
        %1780 = vmatpush1.bf16.msra.mxu0 0
        %1781 = vmatprep.subr.bf16.mxu0 0
        %1782 = vmatpush1.bf16.msra.mxu0 0
        %1783 = vmatprep.subr.bf16.mxu0 0
        %1784 = vmatpush1.bf16.msra.mxu0 0
        %1785 = vmatprep.subr.bf16.mxu0 0
        %1786 = vmatpush1.bf16.msra.mxu0 0
        %1787 = vmatprep.mubr.bf16.mxu0 0
        %1788 = vmatmul.mubr.bf16.gmra.mrb[0].mxu0 %v1233
        %v1789 = vpop.f32.mrb[0].mxu0
        %v1790 = vadd.f32 %v1202, %v1789
        %v1791 = vpop.f32.mrb[0].mxu0
        %v1792 = vpop.f32.mrb[0].mxu0
        %v1793 = vpop.f32.mrb[0].mxu0
        %1794 = vdwg.mxu0
        %v1799 = vunpack.c.l.b16 %v1130
        %v1800 = vunpack.c.l.b16 %v1131
        %v1801 = vunpack.c.l.b16 %v1132
        %v1802 = vunpack.c.l.b16 %v1133
        %v1803 = vpack.c.b16 %v1800, %v1799
        %v1804 = vpack.c.b16 %v1802, %v1801
        %1807 = vmatprep.subr.bf16.mxu0 0
        %1808 = vmatpush1.bf16.msra.mxu0 %v1803
        %1809 = vmatprep.subr.bf16.mxu0 0
        %1810 = vmatpush1.bf16.msra.mxu0 %v1804
        %1811 = vmatprep.subr.bf16.mxu0 0
        %1812 = vmatpush1.bf16.msra.mxu0 0
        %1813 = vmatprep.subr.bf16.mxu0 0
        %1814 = vmatpush1.bf16.msra.mxu0 0
        %1815 = vmatprep.subr.bf16.mxu0 0
        %1816 = vmatpush1.bf16.msra.mxu0 0
        %1817 = vmatprep.subr.bf16.mxu0 0
        %1818 = vmatpush1.bf16.msra.mxu0 0
        %1819 = vmatprep.subr.bf16.mxu0 0
        %1820 = vmatpush1.bf16.msra.mxu0 0
        %1821 = vmatprep.subr.bf16.mxu0 0
        %1822 = vmatpush1.bf16.msra.mxu0 0
        %1823 = vmatprep.subr.bf16.mxu0 0
        %1824 = vmatpush1.bf16.msra.mxu0 0
        %1825 = vmatprep.subr.bf16.mxu0 0
        %1826 = vmatpush1.bf16.msra.mxu0 0
        %1827 = vmatprep.subr.bf16.mxu0 0
        %1828 = vmatpush1.bf16.msra.mxu0 0
        %1829 = vmatprep.subr.bf16.mxu0 0
        %1830 = vmatpush1.bf16.msra.mxu0 0
        %1831 = vmatprep.subr.bf16.mxu0 0
        %1832 = vmatpush1.bf16.msra.mxu0 0
        %1833 = vmatprep.subr.bf16.mxu0 0
        %1834 = vmatpush1.bf16.msra.mxu0 0
        %1835 = vmatprep.subr.bf16.mxu0 0
        %1836 = vmatpush1.bf16.msra.mxu0 0
        %1837 = vmatprep.subr.bf16.mxu0 0
        %1838 = vmatpush1.bf16.msra.mxu0 0
        %1839 = vmatprep.mubr.bf16.mxu0 0
        %1840 = vmatmul.mubr.bf16.gmra.mrb[0].mxu0 %v1233
        %v1841 = vpop.f32.mrb[0].mxu0
        %v1842 = vadd.f32 %v1206, %v1841
        %v1843 = vpop.f32.mrb[0].mxu0
        %v1844 = vpop.f32.mrb[0].mxu0
        %v1845 = vpop.f32.mrb[0].mxu0
        %1846 = vdwg.mxu0
        %v1847 = vld [vmem:[%s1012] sm:$0xf]
        %v1848 = vld [vmem:[%s1012 + $0x4] sm:$0xf]
        %v1849 = vld [vmem:[%s1012 + $0x8] sm:$0xf]
        %v1850 = vld [vmem:[%s1012 + $0xc] sm:$0xf]
        %v1851 = vld [vmem:[%s1015] sm:$0x1]
        %v1852 = vpack.c.bf16 %v1270, %v1270
        %v1853 = vpack.c.bf16 %v1322, %v1322
        %v1854 = vpack.c.bf16 %v1374, %v1374
        %v1855 = vpack.c.bf16 %v1426, %v1426
        %v1856 = vpack.c.bf16 %v1478, %v1478
        %v1857 = vpack.c.bf16 %v1530, %v1530
        %v1858 = vpack.c.bf16 %v1582, %v1582
        %v1859 = vpack.c.bf16 %v1634, %v1634
        %vm1860 = vcmask 64512
        %v1862 = vsel %vm1860, %v1852, 0
        %v1865 = vsel %vm1860, %v1856, 0
        %1867 = vmatprep.subr.bf16.mxu0 0
        %1868 = vmatpush1.bf16.xpose.msra.mxu0 %v1865
        %1869 = vmatprep.subr.bf16.mxu0 0
        %1870 = vmatpush1.bf16.xpose.msra.mxu0 0
        %1871 = vmatprep.subr.bf16.mxu0 0
        %1872 = vmatpush1.bf16.xpose.msra.mxu0 0
        %1873 = vmatprep.subr.bf16.mxu0 0
        %1874 = vmatpush1.bf16.xpose.msra.mxu0 0
        %1875 = vmatprep.subr.bf16.mxu0 0
        %1876 = vmatpush1.bf16.xpose.msra.mxu0 0
        %1877 = vmatprep.subr.bf16.mxu0 0
        %1878 = vmatpush1.bf16.xpose.msra.mxu0 0
        %1879 = vmatprep.subr.bf16.mxu0 0
        %1880 = vmatpush1.bf16.xpose.msra.mxu0 0
        %1881 = vmatprep.subr.bf16.mxu0 0
        %1882 = vmatpush1.bf16.xpose.msra.mxu0 0
        %1883 = vmatprep.subr.bf16.mxu0 0
        %1884 = vmatpush1.bf16.xpose.msra.mxu0 0
        %1885 = vmatprep.subr.bf16.mxu0 0
        %1886 = vmatpush1.bf16.xpose.msra.mxu0 0
        %1887 = vmatprep.subr.bf16.mxu0 0
        %1888 = vmatpush1.bf16.xpose.msra.mxu0 0
        %1889 = vmatprep.subr.bf16.mxu0 0
        %1890 = vmatpush1.bf16.xpose.msra.mxu0 0
        %1891 = vmatprep.subr.bf16.mxu0 0
        %1892 = vmatpush1.bf16.xpose.msra.mxu0 0
        %1893 = vmatprep.subr.bf16.mxu0 0
        %1894 = vmatpush1.bf16.xpose.msra.mxu0 0
        %1895 = vmatprep.subr.bf16.mxu0 0
        %1896 = vmatpush1.bf16.xpose.msra.mxu0 0
        %1897 = vmatprep.subr.bf16.mxu0 0
        %1898 = vmatpush1.bf16.xpose.msra.mxu0 0
        %1899 = vmatprep.mubr.bf16.mxu0 0
        %1900 = vmatmul.mubr.bf16.gmra.mrb[0].mxu0 %v1862
        %v1901 = vpop.f32.mrb[0].mxu0
        %v1902 = vadd.f32 0.0, %v1901
        %v1903 = vpop.f32.mrb[0].mxu0
        %v1904 = vpop.f32.mrb[0].mxu0
        %v1905 = vpop.f32.mrb[0].mxu0
        %1906 = vdwg.mxu0
        %v1908 = vsel %vm1860, %v1853, 0
        %v1911 = vsel %vm1860, %v1857, 0
        %1913 = vmatprep.subr.bf16.mxu0 0
        %1914 = vmatpush1.bf16.xpose.msra.mxu0 %v1911
        %1915 = vmatprep.subr.bf16.mxu0 0
        %1916 = vmatpush1.bf16.xpose.msra.mxu0 0
        %1917 = vmatprep.subr.bf16.mxu0 0
        %1918 = vmatpush1.bf16.xpose.msra.mxu0 0
        %1919 = vmatprep.subr.bf16.mxu0 0
        %1920 = vmatpush1.bf16.xpose.msra.mxu0 0
        %1921 = vmatprep.subr.bf16.mxu0 0
        %1922 = vmatpush1.bf16.xpose.msra.mxu0 0
        %1923 = vmatprep.subr.bf16.mxu0 0
        %1924 = vmatpush1.bf16.xpose.msra.mxu0 0
        %1925 = vmatprep.subr.bf16.mxu0 0
        %1926 = vmatpush1.bf16.xpose.msra.mxu0 0
        %1927 = vmatprep.subr.bf16.mxu0 0
        %1928 = vmatpush1.bf16.xpose.msra.mxu0 0
        %1929 = vmatprep.subr.bf16.mxu0 0
        %1930 = vmatpush1.bf16.xpose.msra.mxu0 0
        %1931 = vmatprep.subr.bf16.mxu0 0
        %1932 = vmatpush1.bf16.xpose.msra.mxu0 0
        %1933 = vmatprep.subr.bf16.mxu0 0
        %1934 = vmatpush1.bf16.xpose.msra.mxu0 0
        %1935 = vmatprep.subr.bf16.mxu0 0
        %1936 = vmatpush1.bf16.xpose.msra.mxu0 0
        %1937 = vmatprep.subr.bf16.mxu0 0
        %1938 = vmatpush1.bf16.xpose.msra.mxu0 0
        %1939 = vmatprep.subr.bf16.mxu0 0
        %1940 = vmatpush1.bf16.xpose.msra.mxu0 0
        %1941 = vmatprep.subr.bf16.mxu0 0
        %1942 = vmatpush1.bf16.xpose.msra.mxu0 0
        %1943 = vmatprep.subr.bf16.mxu0 0
        %1944 = vmatpush1.bf16.xpose.msra.mxu0 0
        %1945 = vmatprep.mubr.bf16.mxu0 0
        %1946 = vmatmul.mubr.bf16.gmra.mrb[0].mxu0 %v1908
        %v1947 = vpop.f32.mrb[0].mxu0
        %v1948 = vadd.f32 0.0, %v1947
        %v1949 = vpop.f32.mrb[0].mxu0
        %v1950 = vpop.f32.mrb[0].mxu0
        %v1951 = vpop.f32.mrb[0].mxu0
        %1952 = vdwg.mxu0
        %v1954 = vsel %vm1860, %v1854, 0
        %v1957 = vsel %vm1860, %v1858, 0
        %1959 = vmatprep.subr.bf16.mxu0 0
        %1960 = vmatpush1.bf16.xpose.msra.mxu0 %v1957
        %1961 = vmatprep.subr.bf16.mxu0 0
        %1962 = vmatpush1.bf16.xpose.msra.mxu0 0
        %1963 = vmatprep.subr.bf16.mxu0 0
        %1964 = vmatpush1.bf16.xpose.msra.mxu0 0
        %1965 = vmatprep.subr.bf16.mxu0 0
        %1966 = vmatpush1.bf16.xpose.msra.mxu0 0
        %1967 = vmatprep.subr.bf16.mxu0 0
        %1968 = vmatpush1.bf16.xpose.msra.mxu0 0
        %1969 = vmatprep.subr.bf16.mxu0 0
        %1970 = vmatpush1.bf16.xpose.msra.mxu0 0
        %1971 = vmatprep.subr.bf16.mxu0 0
        %1972 = vmatpush1.bf16.xpose.msra.mxu0 0
        %1973 = vmatprep.subr.bf16.mxu0 0
        %1974 = vmatpush1.bf16.xpose.msra.mxu0 0
        %1975 = vmatprep.subr.bf16.mxu0 0
        %1976 = vmatpush1.bf16.xpose.msra.mxu0 0
        %1977 = vmatprep.subr.bf16.mxu0 0
        %1978 = vmatpush1.bf16.xpose.msra.mxu0 0
        %1979 = vmatprep.subr.bf16.mxu0 0
        %1980 = vmatpush1.bf16.xpose.msra.mxu0 0
        %1981 = vmatprep.subr.bf16.mxu0 0
        %1982 = vmatpush1.bf16.xpose.msra.mxu0 0
        %1983 = vmatprep.subr.bf16.mxu0 0
        %1984 = vmatpush1.bf16.xpose.msra.mxu0 0
        %1985 = vmatprep.subr.bf16.mxu0 0
        %1986 = vmatpush1.bf16.xpose.msra.mxu0 0
        %1987 = vmatprep.subr.bf16.mxu0 0
        %1988 = vmatpush1.bf16.xpose.msra.mxu0 0
        %1989 = vmatprep.subr.bf16.mxu0 0
        %1990 = vmatpush1.bf16.xpose.msra.mxu0 0
        %1991 = vmatprep.mubr.bf16.mxu0 0
        %1992 = vmatmul.mubr.bf16.gmra.mrb[0].mxu0 %v1954
        %v1993 = vpop.f32.mrb[0].mxu0
        %v1994 = vadd.f32 0.0, %v1993
        %v1995 = vpop.f32.mrb[0].mxu0
        %v1996 = vpop.f32.mrb[0].mxu0
        %v1997 = vpop.f32.mrb[0].mxu0
        %1998 = vdwg.mxu0
        %v2000 = vsel %vm1860, %v1855, 0
        %v2003 = vsel %vm1860, %v1859, 0
        %2005 = vmatprep.subr.bf16.mxu0 0
        %2006 = vmatpush1.bf16.xpose.msra.mxu0 %v2003
        %2007 = vmatprep.subr.bf16.mxu0 0
        %2008 = vmatpush1.bf16.xpose.msra.mxu0 0
        %2009 = vmatprep.subr.bf16.mxu0 0
        %2010 = vmatpush1.bf16.xpose.msra.mxu0 0
        %2011 = vmatprep.subr.bf16.mxu0 0
        %2012 = vmatpush1.bf16.xpose.msra.mxu0 0
        %2013 = vmatprep.subr.bf16.mxu0 0
        %2014 = vmatpush1.bf16.xpose.msra.mxu0 0
        %2015 = vmatprep.subr.bf16.mxu0 0
        %2016 = vmatpush1.bf16.xpose.msra.mxu0 0
        %2017 = vmatprep.subr.bf16.mxu0 0
        %2018 = vmatpush1.bf16.xpose.msra.mxu0 0
        %2019 = vmatprep.subr.bf16.mxu0 0
        %2020 = vmatpush1.bf16.xpose.msra.mxu0 0
        %2021 = vmatprep.subr.bf16.mxu0 0
        %2022 = vmatpush1.bf16.xpose.msra.mxu0 0
        %2023 = vmatprep.subr.bf16.mxu0 0
        %2024 = vmatpush1.bf16.xpose.msra.mxu0 0
        %2025 = vmatprep.subr.bf16.mxu0 0
        %2026 = vmatpush1.bf16.xpose.msra.mxu0 0
        %2027 = vmatprep.subr.bf16.mxu0 0
        %2028 = vmatpush1.bf16.xpose.msra.mxu0 0
        %2029 = vmatprep.subr.bf16.mxu0 0
        %2030 = vmatpush1.bf16.xpose.msra.mxu0 0
        %2031 = vmatprep.subr.bf16.mxu0 0
        %2032 = vmatpush1.bf16.xpose.msra.mxu0 0
        %2033 = vmatprep.subr.bf16.mxu0 0
        %2034 = vmatpush1.bf16.xpose.msra.mxu0 0
        %2035 = vmatprep.subr.bf16.mxu0 0
        %2036 = vmatpush1.bf16.xpose.msra.mxu0 0
        %2037 = vmatprep.mubr.bf16.mxu0 0
        %2038 = vmatmul.mubr.bf16.gmra.mrb[0].mxu0 %v2000
        %v2039 = vpop.f32.mrb[0].mxu0
        %v2040 = vadd.f32 0.0, %v2039
        %v2041 = vpop.f32.mrb[0].mxu0
        %v2042 = vpop.f32.mrb[0].mxu0
        %v2043 = vpop.f32.mrb[0].mxu0
        %2044 = vdwg.mxu0
        %v2045 = vsel %vm1860, %v1902, -inf
        %2046 = vmax.xlane.f32.xlu0 %v2045
        %v2047 = vpop.xlane.xlu0 %2046
        %v2048 = vsel %vm1860, %v1948, -inf
        %2049 = vmax.xlane.f32.xlu0 %v2048
        %v2050 = vpop.xlane.xlu0 %2049
        %v2051 = vsel %vm1860, %v1994, -inf
        %2052 = vmax.xlane.f32.xlu0 %v2051
        %v2053 = vpop.xlane.xlu0 %2052
        %v2054 = vsel %vm1860, %v2040, -inf
        %2055 = vmax.xlane.f32.xlu0 %v2054
        %v2056 = vpop.xlane.xlu0 %2055
        %v2057 = vsub.f32 %v1902, %v2047
        %v2058 = vsub.f32 %v1948, %v2050
        %v2059 = vsub.f32 %v1994, %v2053
        %v2060 = vsub.f32 %v2040, %v2056
        %v2061 = vmul.f32 %v2057, 1.442695
        %v2062 = vpow.pop %v2061
        %v2063 = vmul.f32 %v2058, 1.442695
        %v2064 = vpow.pop %v2063
        %v2065 = vmul.f32 %v2059, 1.442695
        %v2066 = vpow.pop %v2065
        %v2067 = vmul.f32 %v2060, 1.442695
        %v2068 = vpow.pop %v2067
        %v2069 = vsel %vm1860, %v2062, 0.0
        %2070 = vadd.xlane.f32.xlu0 %v2069
        %v2071 = vpop.xlane.xlu0 %2070
        %v2072 = vsel %vm1860, %v2064, 0.0
        %2073 = vadd.xlane.f32.xlu0 %v2072
        %v2074 = vpop.xlane.xlu0 %2073
        %v2075 = vsel %vm1860, %v2066, 0.0
        %2076 = vadd.xlane.f32.xlu0 %v2075
        %v2077 = vpop.xlane.xlu0 %2076
        %v2078 = vsel %vm1860, %v2068, 0.0
        %2079 = vadd.xlane.f32.xlu0 %v2078
        %v2080 = vpop.xlane.xlu0 %2079
        %v2081 = vrcp.pop %v2071
        %v2082 = vrcp.pop %v2074
        %v2083 = vrcp.pop %v2077
        %v2084 = vrcp.pop %v2080
        %v2085 = vmul.f32 %v2062, %v2081
        %v2086 = vmul.f32 %v2064, %v2082
        %v2087 = vmul.f32 %v2066, %v2083
        %v2088 = vmul.f32 %v2068, %v2084
        %v2089 = vpack.c.bf16 %v2085, %v2085
        %v2090 = vpack.c.bf16 %v2086, %v2086
        %v2091 = vpack.c.bf16 %v2087, %v2087
        %v2092 = vpack.c.bf16 %v2088, %v2088
        %v2093 = vpack.c.bf16 %v1686, %v1686
        %v2094 = vpack.c.bf16 %v1738, %v1738
        %v2095 = vpack.c.bf16 %v1790, %v1790
        %v2096 = vpack.c.bf16 %v1842, %v1842
        %v2098 = vsel %vm1860, %v2089, 0
        %vm2100 = vcmask 1043456
        %v2102 = vsel %vm2100, %v2093, 0
        %2104 = vmatprep.subr.bf16.mxu0 0
        %2105 = vmatpush1.bf16.msra.mxu0 %v2102
        %2106 = vmatprep.subr.bf16.mxu0 0
        %2107 = vmatpush1.bf16.msra.mxu0 0
        %2108 = vmatprep.subr.bf16.mxu0 0
        %2109 = vmatpush1.bf16.msra.mxu0 0
        %2110 = vmatprep.subr.bf16.mxu0 0
        %2111 = vmatpush1.bf16.msra.mxu0 0
        %2112 = vmatprep.subr.bf16.mxu0 0
        %2113 = vmatpush1.bf16.msra.mxu0 0
        %2114 = vmatprep.subr.bf16.mxu0 0
        %2115 = vmatpush1.bf16.msra.mxu0 0
        %2116 = vmatprep.subr.bf16.mxu0 0
        %2117 = vmatpush1.bf16.msra.mxu0 0
        %2118 = vmatprep.subr.bf16.mxu0 0
        %2119 = vmatpush1.bf16.msra.mxu0 0
        %2120 = vmatprep.subr.bf16.mxu0 0
        %2121 = vmatpush1.bf16.msra.mxu0 0
        %2122 = vmatprep.subr.bf16.mxu0 0
        %2123 = vmatpush1.bf16.msra.mxu0 0
        %2124 = vmatprep.subr.bf16.mxu0 0
        %2125 = vmatpush1.bf16.msra.mxu0 0
        %2126 = vmatprep.subr.bf16.mxu0 0
        %2127 = vmatpush1.bf16.msra.mxu0 0
        %2128 = vmatprep.subr.bf16.mxu0 0
        %2129 = vmatpush1.bf16.msra.mxu0 0
        %2130 = vmatprep.subr.bf16.mxu0 0
        %2131 = vmatpush1.bf16.msra.mxu0 0
        %2132 = vmatprep.subr.bf16.mxu0 0
        %2133 = vmatpush1.bf16.msra.mxu0 0
        %2134 = vmatprep.subr.bf16.mxu0 0
        %2135 = vmatpush1.bf16.msra.mxu0 0
        %2136 = vmatprep.mubr.bf16.mxu0 0
        %2137 = vmatmul.mubr.bf16.gmra.mrb[0].mxu0 %v2098
        %v2138 = vpop.f32.mrb[0].mxu0
        %v2139 = vadd.f32 0.0, %v2138
        %v2140 = vpop.f32.mrb[0].mxu0
        %v2141 = vpop.f32.mrb[0].mxu0
        %v2142 = vpop.f32.mrb[0].mxu0
        %2143 = vdwg.mxu0
        %v2145 = vsel %vm1860, %v2090, 0
        %v2148 = vsel %vm2100, %v2094, 0
        %2150 = vmatprep.subr.bf16.mxu0 0
        %2151 = vmatpush1.bf16.msra.mxu0 %v2148
        %2152 = vmatprep.subr.bf16.mxu0 0
        %2153 = vmatpush1.bf16.msra.mxu0 0
        %2154 = vmatprep.subr.bf16.mxu0 0
        %2155 = vmatpush1.bf16.msra.mxu0 0
        %2156 = vmatprep.subr.bf16.mxu0 0
        %2157 = vmatpush1.bf16.msra.mxu0 0
        %2158 = vmatprep.subr.bf16.mxu0 0
        %2159 = vmatpush1.bf16.msra.mxu0 0
        %2160 = vmatprep.subr.bf16.mxu0 0
        %2161 = vmatpush1.bf16.msra.mxu0 0
        %2162 = vmatprep.subr.bf16.mxu0 0
        %2163 = vmatpush1.bf16.msra.mxu0 0
        %2164 = vmatprep.subr.bf16.mxu0 0
        %2165 = vmatpush1.bf16.msra.mxu0 0
        %2166 = vmatprep.subr.bf16.mxu0 0
        %2167 = vmatpush1.bf16.msra.mxu0 0
        %2168 = vmatprep.subr.bf16.mxu0 0
        %2169 = vmatpush1.bf16.msra.mxu0 0
        %2170 = vmatprep.subr.bf16.mxu0 0
        %2171 = vmatpush1.bf16.msra.mxu0 0
        %2172 = vmatprep.subr.bf16.mxu0 0
        %2173 = vmatpush1.bf16.msra.mxu0 0
        %2174 = vmatprep.subr.bf16.mxu0 0
        %2175 = vmatpush1.bf16.msra.mxu0 0
        %2176 = vmatprep.subr.bf16.mxu0 0
        %2177 = vmatpush1.bf16.msra.mxu0 0
        %2178 = vmatprep.subr.bf16.mxu0 0
        %2179 = vmatpush1.bf16.msra.mxu0 0
        %2180 = vmatprep.subr.bf16.mxu0 0
        %2181 = vmatpush1.bf16.msra.mxu0 0
        %2182 = vmatprep.mubr.bf16.mxu0 0
        %2183 = vmatmul.mubr.bf16.gmra.mrb[0].mxu0 %v2145
        %v2184 = vpop.f32.mrb[0].mxu0
        %v2185 = vadd.f32 0.0, %v2184
        %v2186 = vpop.f32.mrb[0].mxu0
        %v2187 = vpop.f32.mrb[0].mxu0
        %v2188 = vpop.f32.mrb[0].mxu0
        %2189 = vdwg.mxu0
        %v2191 = vsel %vm1860, %v2091, 0
        %v2194 = vsel %vm2100, %v2095, 0
        %2196 = vmatprep.subr.bf16.mxu0 0
        %2197 = vmatpush1.bf16.msra.mxu0 %v2194
        %2198 = vmatprep.subr.bf16.mxu0 0
        %2199 = vmatpush1.bf16.msra.mxu0 0
        %2200 = vmatprep.subr.bf16.mxu0 0
        %2201 = vmatpush1.bf16.msra.mxu0 0
        %2202 = vmatprep.subr.bf16.mxu0 0
        %2203 = vmatpush1.bf16.msra.mxu0 0
        %2204 = vmatprep.subr.bf16.mxu0 0
        %2205 = vmatpush1.bf16.msra.mxu0 0
        %2206 = vmatprep.subr.bf16.mxu0 0
        %2207 = vmatpush1.bf16.msra.mxu0 0
        %2208 = vmatprep.subr.bf16.mxu0 0
        %2209 = vmatpush1.bf16.msra.mxu0 0
        %2210 = vmatprep.subr.bf16.mxu0 0
        %2211 = vmatpush1.bf16.msra.mxu0 0
        %2212 = vmatprep.subr.bf16.mxu0 0
        %2213 = vmatpush1.bf16.msra.mxu0 0
        %2214 = vmatprep.subr.bf16.mxu0 0
        %2215 = vmatpush1.bf16.msra.mxu0 0
        %2216 = vmatprep.subr.bf16.mxu0 0
        %2217 = vmatpush1.bf16.msra.mxu0 0
        %2218 = vmatprep.subr.bf16.mxu0 0
        %2219 = vmatpush1.bf16.msra.mxu0 0
        %2220 = vmatprep.subr.bf16.mxu0 0
        %2221 = vmatpush1.bf16.msra.mxu0 0
        %2222 = vmatprep.subr.bf16.mxu0 0
        %2223 = vmatpush1.bf16.msra.mxu0 0
        %2224 = vmatprep.subr.bf16.mxu0 0
        %2225 = vmatpush1.bf16.msra.mxu0 0
        %2226 = vmatprep.subr.bf16.mxu0 0
        %2227 = vmatpush1.bf16.msra.mxu0 0
        %2228 = vmatprep.mubr.bf16.mxu0 0
        %2229 = vmatmul.mubr.bf16.gmra.mrb[0].mxu0 %v2191
        %v2230 = vpop.f32.mrb[0].mxu0
        %v2231 = vadd.f32 0.0, %v2230
        %v2232 = vpop.f32.mrb[0].mxu0
        %v2233 = vpop.f32.mrb[0].mxu0
        %v2234 = vpop.f32.mrb[0].mxu0
        %2235 = vdwg.mxu0
        %v2237 = vsel %vm1860, %v2092, 0
        %v2240 = vsel %vm2100, %v2096, 0
        %2242 = vmatprep.subr.bf16.mxu0 0
        %2243 = vmatpush1.bf16.msra.mxu0 %v2240
        %2244 = vmatprep.subr.bf16.mxu0 0
        %2245 = vmatpush1.bf16.msra.mxu0 0
        %2246 = vmatprep.subr.bf16.mxu0 0
        %2247 = vmatpush1.bf16.msra.mxu0 0
        %2248 = vmatprep.subr.bf16.mxu0 0
        %2249 = vmatpush1.bf16.msra.mxu0 0
        %2250 = vmatprep.subr.bf16.mxu0 0
        %2251 = vmatpush1.bf16.msra.mxu0 0
        %2252 = vmatprep.subr.bf16.mxu0 0
        %2253 = vmatpush1.bf16.msra.mxu0 0
        %2254 = vmatprep.subr.bf16.mxu0 0
        %2255 = vmatpush1.bf16.msra.mxu0 0
        %2256 = vmatprep.subr.bf16.mxu0 0
        %2257 = vmatpush1.bf16.msra.mxu0 0
        %2258 = vmatprep.subr.bf16.mxu0 0
        %2259 = vmatpush1.bf16.msra.mxu0 0
        %2260 = vmatprep.subr.bf16.mxu0 0
        %2261 = vmatpush1.bf16.msra.mxu0 0
        %2262 = vmatprep.subr.bf16.mxu0 0
        %2263 = vmatpush1.bf16.msra.mxu0 0
        %2264 = vmatprep.subr.bf16.mxu0 0
        %2265 = vmatpush1.bf16.msra.mxu0 0
        %2266 = vmatprep.subr.bf16.mxu0 0
        %2267 = vmatpush1.bf16.msra.mxu0 0
        %2268 = vmatprep.subr.bf16.mxu0 0
        %2269 = vmatpush1.bf16.msra.mxu0 0
        %2270 = vmatprep.subr.bf16.mxu0 0
        %2271 = vmatpush1.bf16.msra.mxu0 0
        %2272 = vmatprep.subr.bf16.mxu0 0
        %2273 = vmatpush1.bf16.msra.mxu0 0
        %2274 = vmatprep.mubr.bf16.mxu0 0
        %2275 = vmatmul.mubr.bf16.gmra.mrb[0].mxu0 %v2237
        %v2276 = vpop.f32.mrb[0].mxu0
        %v2277 = vadd.f32 0.0, %v2276
        %v2278 = vpop.f32.mrb[0].mxu0
        %v2279 = vpop.f32.mrb[0].mxu0
        %v2280 = vpop.f32.mrb[0].mxu0
        %2281 = vdwg.mxu0
        %v2282 = vpack.c.bf16 %v2139, %v2139
        %v2283 = vpack.c.bf16 %v2185, %v2185
        %v2284 = vpack.c.bf16 %v2231, %v2231
        %v2285 = vpack.c.bf16 %v2277, %v2277
        %v2287 = vsel %vm1860, %v2282, 0
        %v2290 = vsel %vm2100, %v1847, 0
        %2292 = vmatprep.subr.bf16.mxu0 0
        %2293 = vmatpush1.bf16.msra.mxu0 %v2290
        %2294 = vmatprep.subr.bf16.mxu0 0
        %2295 = vmatpush1.bf16.msra.mxu0 0
        %2296 = vmatprep.subr.bf16.mxu0 0
        %2297 = vmatpush1.bf16.msra.mxu0 0
        %2298 = vmatprep.subr.bf16.mxu0 0
        %2299 = vmatpush1.bf16.msra.mxu0 0
        %2300 = vmatprep.subr.bf16.mxu0 0
        %2301 = vmatpush1.bf16.msra.mxu0 0
        %2302 = vmatprep.subr.bf16.mxu0 0
        %2303 = vmatpush1.bf16.msra.mxu0 0
        %2304 = vmatprep.subr.bf16.mxu0 0
        %2305 = vmatpush1.bf16.msra.mxu0 0
        %2306 = vmatprep.subr.bf16.mxu0 0
        %2307 = vmatpush1.bf16.msra.mxu0 0
        %2308 = vmatprep.subr.bf16.mxu0 0
        %2309 = vmatpush1.bf16.msra.mxu0 0
        %2310 = vmatprep.subr.bf16.mxu0 0
        %2311 = vmatpush1.bf16.msra.mxu0 0
        %2312 = vmatprep.subr.bf16.mxu0 0
        %2313 = vmatpush1.bf16.msra.mxu0 0
        %2314 = vmatprep.subr.bf16.mxu0 0
        %2315 = vmatpush1.bf16.msra.mxu0 0
        %2316 = vmatprep.subr.bf16.mxu0 0
        %2317 = vmatpush1.bf16.msra.mxu0 0
        %2318 = vmatprep.subr.bf16.mxu0 0
        %2319 = vmatpush1.bf16.msra.mxu0 0
        %2320 = vmatprep.subr.bf16.mxu0 0
        %2321 = vmatpush1.bf16.msra.mxu0 0
        %2322 = vmatprep.subr.bf16.mxu0 0
        %2323 = vmatpush1.bf16.msra.mxu0 0
        %2324 = vmatprep.mubr.bf16.mxu0 0
        %2325 = vmatmul.mubr.bf16.gmra.mrb[0].mxu0 %v2287
        %v2326 = vpop.f32.mrb[0].mxu0
        %v2327 = vadd.f32 0.0, %v2326
        %v2328 = vpop.f32.mrb[0].mxu0
        %v2329 = vpop.f32.mrb[0].mxu0
        %v2330 = vpop.f32.mrb[0].mxu0
        %2331 = vdwg.mxu0
        %v2333 = vsel %vm1860, %v2283, 0
        %v2336 = vsel %vm2100, %v1848, 0
        %2338 = vmatprep.subr.bf16.mxu0 0
        %2339 = vmatpush1.bf16.msra.mxu0 %v2336
        %2340 = vmatprep.subr.bf16.mxu0 0
        %2341 = vmatpush1.bf16.msra.mxu0 0
        %2342 = vmatprep.subr.bf16.mxu0 0
        %2343 = vmatpush1.bf16.msra.mxu0 0
        %2344 = vmatprep.subr.bf16.mxu0 0
        %2345 = vmatpush1.bf16.msra.mxu0 0
        %2346 = vmatprep.subr.bf16.mxu0 0
        %2347 = vmatpush1.bf16.msra.mxu0 0
        %2348 = vmatprep.subr.bf16.mxu0 0
        %2349 = vmatpush1.bf16.msra.mxu0 0
        %2350 = vmatprep.subr.bf16.mxu0 0
        %2351 = vmatpush1.bf16.msra.mxu0 0
        %2352 = vmatprep.subr.bf16.mxu0 0
        %2353 = vmatpush1.bf16.msra.mxu0 0
        %2354 = vmatprep.subr.bf16.mxu0 0
        %2355 = vmatpush1.bf16.msra.mxu0 0
        %2356 = vmatprep.subr.bf16.mxu0 0
        %2357 = vmatpush1.bf16.msra.mxu0 0
        %2358 = vmatprep.subr.bf16.mxu0 0
        %2359 = vmatpush1.bf16.msra.mxu0 0
        %2360 = vmatprep.subr.bf16.mxu0 0
        %2361 = vmatpush1.bf16.msra.mxu0 0
        %2362 = vmatprep.subr.bf16.mxu0 0
        %2363 = vmatpush1.bf16.msra.mxu0 0
        %2364 = vmatprep.subr.bf16.mxu0 0
        %2365 = vmatpush1.bf16.msra.mxu0 0
        %2366 = vmatprep.subr.bf16.mxu0 0
        %2367 = vmatpush1.bf16.msra.mxu0 0
        %2368 = vmatprep.subr.bf16.mxu0 0
        %2369 = vmatpush1.bf16.msra.mxu0 0
        %2370 = vmatprep.mubr.bf16.mxu0 0
        %2371 = vmatmul.mubr.bf16.gmra.mrb[0].mxu0 %v2333
        %v2372 = vpop.f32.mrb[0].mxu0
        %v2373 = vadd.f32 0.0, %v2372
        %v2374 = vpop.f32.mrb[0].mxu0
        %v2375 = vpop.f32.mrb[0].mxu0
        %v2376 = vpop.f32.mrb[0].mxu0
        %2377 = vdwg.mxu0
        %v2379 = vsel %vm1860, %v2284, 0
        %v2382 = vsel %vm2100, %v1849, 0
        %2384 = vmatprep.subr.bf16.mxu0 0
        %2385 = vmatpush1.bf16.msra.mxu0 %v2382
        %2386 = vmatprep.subr.bf16.mxu0 0
        %2387 = vmatpush1.bf16.msra.mxu0 0
        %2388 = vmatprep.subr.bf16.mxu0 0
        %2389 = vmatpush1.bf16.msra.mxu0 0
        %2390 = vmatprep.subr.bf16.mxu0 0
        %2391 = vmatpush1.bf16.msra.mxu0 0
        %2392 = vmatprep.subr.bf16.mxu0 0
        %2393 = vmatpush1.bf16.msra.mxu0 0
        %2394 = vmatprep.subr.bf16.mxu0 0
        %2395 = vmatpush1.bf16.msra.mxu0 0
        %2396 = vmatprep.subr.bf16.mxu0 0
        %2397 = vmatpush1.bf16.msra.mxu0 0
        %2398 = vmatprep.subr.bf16.mxu0 0
        %2399 = vmatpush1.bf16.msra.mxu0 0
        %2400 = vmatprep.subr.bf16.mxu0 0
        %2401 = vmatpush1.bf16.msra.mxu0 0
        %2402 = vmatprep.subr.bf16.mxu0 0
        %2403 = vmatpush1.bf16.msra.mxu0 0
        %2404 = vmatprep.subr.bf16.mxu0 0
        %2405 = vmatpush1.bf16.msra.mxu0 0
        %2406 = vmatprep.subr.bf16.mxu0 0
        %2407 = vmatpush1.bf16.msra.mxu0 0
        %2408 = vmatprep.subr.bf16.mxu0 0
        %2409 = vmatpush1.bf16.msra.mxu0 0
        %2410 = vmatprep.subr.bf16.mxu0 0
        %2411 = vmatpush1.bf16.msra.mxu0 0
        %2412 = vmatprep.subr.bf16.mxu0 0
        %2413 = vmatpush1.bf16.msra.mxu0 0
        %2414 = vmatprep.subr.bf16.mxu0 0
        %2415 = vmatpush1.bf16.msra.mxu0 0
        %2416 = vmatprep.mubr.bf16.mxu0 0
        %2417 = vmatmul.mubr.bf16.gmra.mrb[0].mxu0 %v2379
        %v2418 = vpop.f32.mrb[0].mxu0
        %v2419 = vadd.f32 0.0, %v2418
        %v2420 = vpop.f32.mrb[0].mxu0
        %v2421 = vpop.f32.mrb[0].mxu0
        %v2422 = vpop.f32.mrb[0].mxu0
        %2423 = vdwg.mxu0
        %v2425 = vsel %vm1860, %v2285, 0
        %v2428 = vsel %vm2100, %v1850, 0
        %2430 = vmatprep.subr.bf16.mxu0 0
        %2431 = vmatpush1.bf16.msra.mxu0 %v2428
        %2432 = vmatprep.subr.bf16.mxu0 0
        %2433 = vmatpush1.bf16.msra.mxu0 0
        %2434 = vmatprep.subr.bf16.mxu0 0
        %2435 = vmatpush1.bf16.msra.mxu0 0
        %2436 = vmatprep.subr.bf16.mxu0 0
        %2437 = vmatpush1.bf16.msra.mxu0 0
        %2438 = vmatprep.subr.bf16.mxu0 0
        %2439 = vmatpush1.bf16.msra.mxu0 0
        %2440 = vmatprep.subr.bf16.mxu0 0
        %2441 = vmatpush1.bf16.msra.mxu0 0
        %2442 = vmatprep.subr.bf16.mxu0 0
        %2443 = vmatpush1.bf16.msra.mxu0 0
        %2444 = vmatprep.subr.bf16.mxu0 0
        %2445 = vmatpush1.bf16.msra.mxu0 0
        %2446 = vmatprep.subr.bf16.mxu0 0
        %2447 = vmatpush1.bf16.msra.mxu0 0
        %2448 = vmatprep.subr.bf16.mxu0 0
        %2449 = vmatpush1.bf16.msra.mxu0 0
        %2450 = vmatprep.subr.bf16.mxu0 0
        %2451 = vmatpush1.bf16.msra.mxu0 0
        %2452 = vmatprep.subr.bf16.mxu0 0
        %2453 = vmatpush1.bf16.msra.mxu0 0
        %2454 = vmatprep.subr.bf16.mxu0 0
        %2455 = vmatpush1.bf16.msra.mxu0 0
        %2456 = vmatprep.subr.bf16.mxu0 0
        %2457 = vmatpush1.bf16.msra.mxu0 0
        %2458 = vmatprep.subr.bf16.mxu0 0
        %2459 = vmatpush1.bf16.msra.mxu0 0
        %2460 = vmatprep.subr.bf16.mxu0 0
        %2461 = vmatpush1.bf16.msra.mxu0 0
        %2462 = vmatprep.mubr.bf16.mxu0 0
        %2463 = vmatmul.mubr.bf16.gmra.mrb[0].mxu0 %v2425
        %v2464 = vpop.f32.mrb[0].mxu0
        %v2465 = vadd.f32 0.0, %v2464
        %v2466 = vpop.f32.mrb[0].mxu0
        %v2467 = vpop.f32.mrb[0].mxu0
        %v2468 = vpop.f32.mrb[0].mxu0
        %2469 = vdwg.mxu0
        %v2470 = vsel %vm1231, %v2327, 0.0
        %v2471 = vsel %vm1231, %v2373, 0.0
        %v2472 = vadd.f32 %v2470, %v2471
        %v2473 = vsel %vm1231, %v2419, 0.0
        %v2474 = vadd.f32 %v2472, %v2473
        %v2475 = vsel %vm1231, %v2465, 0.0
        %v2476 = vadd.f32 %v2474, %v2475
        %v2478 = vlaneseq
        %v2479 = vshrl.u32 %v2478, 7
        %v2480 = vsub.s32 0, %v2479
        %v2481 = vrot.slane %v1851, %v2480
        %v2483 = vadd.f32 %v2476, %v2481
        %v2484 = vadd.f32 %v1084, %v2483
        %v2485 = vld [vmem:[%s1018] sm:$0x1]
        %v2486 = vld [vmem:[%s1021] sm:$0x1]
        %v2487 = vsel %vm1231, %v2484, 0.0
        %2488 = vadd.xlane.f32.xlu0 %v2487
        %v2489 = vpop.xlane.xlu0 %2488
        %v2490 = vrcp.pop 32.0
        %v2491 = vmul.f32 %v2489, %v2490
        %v2492 = vsub.f32 %v2484, %v2491
        %v2493 = vmul.f32 %v2492, %v2492
        %v2494 = vsel %vm1231, %v2493, 0.0
        %2495 = vadd.xlane.f32.xlu0 %v2494
        %v2496 = vpop.xlane.xlu0 %2495
        %v2497 = vmul.f32 %v2496, %v2490
        %v2498 = vadd.f32 %v2497, 1e-12
        %v2499 = vrsqrt.pop %v2498
        %v2500 = vmul.f32 %v2492, %v2499
        %v2502 = vlaneseq
        %v2503 = vshrl.u32 %v2502, 7
        %v2504 = vsub.s32 0, %v2503
        %v2505 = vrot.slane %v2485, %v2504
        %v2507 = vmul.f32 %v2500, %v2505
        %v2509 = vlaneseq
        %v2510 = vshrl.u32 %v2509, 7
        %v2511 = vsub.s32 0, %v2510
        %v2512 = vrot.slane %v2486, %v2511
        %v2514 = vadd.f32 %v2507, %v2512
        %v2515 = vld [vmem:[%s1026] sm:$0xf]
        %v2516 = vld [vmem:[%s1026 + $0x4] sm:$0xf]
        %v2517 = vld [vmem:[%s1026 + $0x8] sm:$0xf]
        %v2518 = vld [vmem:[%s1026 + $0xc] sm:$0xf]
        %v2519 = vld [vmem:[%s1026 + $0x10] sm:$0xf]
        %v2520 = vld [vmem:[%s1026 + $0x14] sm:$0xf]
        %v2521 = vld [vmem:[%s1026 + $0x18] sm:$0xf]
        %v2522 = vld [vmem:[%s1026 + $0x1c] sm:$0xf]
        %v2523 = vld [vmem:[%s1026 + $0x20] sm:$0xf]
        %v2524 = vld [vmem:[%s1026 + $0x24] sm:$0xf]
        %v2525 = vld [vmem:[%s1026 + $0x28] sm:$0xf]
        %v2526 = vld [vmem:[%s1026 + $0x2c] sm:$0xf]
        %v2527 = vld [vmem:[%s1026 + $0x30] sm:$0xf]
        %v2528 = vld [vmem:[%s1026 + $0x34] sm:$0xf]
        %v2529 = vld [vmem:[%s1026 + $0x38] sm:$0xf]
        %v2530 = vld [vmem:[%s1026 + $0x3c] sm:$0xf]
        %v2531 = vld [vmem:[%s1030] sm:$0x1]
        %v2532 = vld [vmem:[%s1030 + $0x1] sm:$0x1]
        %v2533 = vld [vmem:[%s1030 + $0x2] sm:$0x1]
        %v2534 = vld [vmem:[%s1030 + $0x3] sm:$0x1]
        %v2535 = vpack.c.bf16 %v2514, %v2514
        %v2540 = vlaneseq
        %v2541 = vshrl.u32 %v2540, 7
        %v2542 = vsub.s32 0, %v2541
        %v2543 = vrot.slane %v2531, %v2542
        %v2544 = vlaneseq
        %v2545 = vshrl.u32 %v2544, 7
        %v2546 = vsub.s32 0, %v2545
        %v2547 = vrot.slane %v2532, %v2546
        %v2548 = vlaneseq
        %v2549 = vshrl.u32 %v2548, 7
        %v2550 = vsub.s32 0, %v2549
        %v2551 = vrot.slane %v2533, %v2550
        %v2552 = vlaneseq
        %v2553 = vshrl.u32 %v2552, 7
        %v2554 = vsub.s32 0, %v2553
        %v2555 = vrot.slane %v2534, %v2554
        %v2564 = vunpack.c.l.b16 %v2515
        %v2565 = vunpack.c.l.b16 %v2516
        %v2566 = vunpack.c.l.b16 %v2517
        %v2567 = vunpack.c.l.b16 %v2518
        %v2568 = vpack.c.b16 %v2565, %v2564
        %v2569 = vpack.c.b16 %v2567, %v2566
        %v2573 = vsel %vm1231, %v2535, 0
        %2575 = vmatprep.subr.bf16.mxu0 0
        %2576 = vmatpush1.bf16.msra.mxu0 %v2568
        %2577 = vmatprep.subr.bf16.mxu0 0
        %2578 = vmatpush1.bf16.msra.mxu0 %v2569
        %2579 = vmatprep.subr.bf16.mxu0 0
        %2580 = vmatpush1.bf16.msra.mxu0 0
        %2581 = vmatprep.subr.bf16.mxu0 0
        %2582 = vmatpush1.bf16.msra.mxu0 0
        %2583 = vmatprep.subr.bf16.mxu0 0
        %2584 = vmatpush1.bf16.msra.mxu0 0
        %2585 = vmatprep.subr.bf16.mxu0 0
        %2586 = vmatpush1.bf16.msra.mxu0 0
        %2587 = vmatprep.subr.bf16.mxu0 0
        %2588 = vmatpush1.bf16.msra.mxu0 0
        %2589 = vmatprep.subr.bf16.mxu0 0
        %2590 = vmatpush1.bf16.msra.mxu0 0
        %2591 = vmatprep.subr.bf16.mxu0 0
        %2592 = vmatpush1.bf16.msra.mxu0 0
        %2593 = vmatprep.subr.bf16.mxu0 0
        %2594 = vmatpush1.bf16.msra.mxu0 0
        %2595 = vmatprep.subr.bf16.mxu0 0
        %2596 = vmatpush1.bf16.msra.mxu0 0
        %2597 = vmatprep.subr.bf16.mxu0 0
        %2598 = vmatpush1.bf16.msra.mxu0 0
        %2599 = vmatprep.subr.bf16.mxu0 0
        %2600 = vmatpush1.bf16.msra.mxu0 0
        %2601 = vmatprep.subr.bf16.mxu0 0
        %2602 = vmatpush1.bf16.msra.mxu0 0
        %2603 = vmatprep.subr.bf16.mxu0 0
        %2604 = vmatpush1.bf16.msra.mxu0 0
        %2605 = vmatprep.subr.bf16.mxu0 0
        %2606 = vmatpush1.bf16.msra.mxu0 0
        %2607 = vmatprep.mubr.bf16.mxu0 0
        %2608 = vmatmul.mubr.bf16.gmra.mrb[0].mxu0 %v2573
        %v2609 = vpop.f32.mrb[0].mxu0
        %v2610 = vadd.f32 %v2543, %v2609
        %v2611 = vpop.f32.mrb[0].mxu0
        %v2612 = vpop.f32.mrb[0].mxu0
        %v2613 = vpop.f32.mrb[0].mxu0
        %2614 = vdwg.mxu0
        %v2619 = vunpack.c.l.b16 %v2519
        %v2620 = vunpack.c.l.b16 %v2520
        %v2621 = vunpack.c.l.b16 %v2521
        %v2622 = vunpack.c.l.b16 %v2522
        %v2623 = vpack.c.b16 %v2620, %v2619
        %v2624 = vpack.c.b16 %v2622, %v2621
        %2627 = vmatprep.subr.bf16.mxu0 0
        %2628 = vmatpush1.bf16.msra.mxu0 %v2623
        %2629 = vmatprep.subr.bf16.mxu0 0
        %2630 = vmatpush1.bf16.msra.mxu0 %v2624
        %2631 = vmatprep.subr.bf16.mxu0 0
        %2632 = vmatpush1.bf16.msra.mxu0 0
        %2633 = vmatprep.subr.bf16.mxu0 0
        %2634 = vmatpush1.bf16.msra.mxu0 0
        %2635 = vmatprep.subr.bf16.mxu0 0
        %2636 = vmatpush1.bf16.msra.mxu0 0
        %2637 = vmatprep.subr.bf16.mxu0 0
        %2638 = vmatpush1.bf16.msra.mxu0 0
        %2639 = vmatprep.subr.bf16.mxu0 0
        %2640 = vmatpush1.bf16.msra.mxu0 0
        %2641 = vmatprep.subr.bf16.mxu0 0
        %2642 = vmatpush1.bf16.msra.mxu0 0
        %2643 = vmatprep.subr.bf16.mxu0 0
        %2644 = vmatpush1.bf16.msra.mxu0 0
        %2645 = vmatprep.subr.bf16.mxu0 0
        %2646 = vmatpush1.bf16.msra.mxu0 0
        %2647 = vmatprep.subr.bf16.mxu0 0
        %2648 = vmatpush1.bf16.msra.mxu0 0
        %2649 = vmatprep.subr.bf16.mxu0 0
        %2650 = vmatpush1.bf16.msra.mxu0 0
        %2651 = vmatprep.subr.bf16.mxu0 0
        %2652 = vmatpush1.bf16.msra.mxu0 0
        %2653 = vmatprep.subr.bf16.mxu0 0
        %2654 = vmatpush1.bf16.msra.mxu0 0
        %2655 = vmatprep.subr.bf16.mxu0 0
        %2656 = vmatpush1.bf16.msra.mxu0 0
        %2657 = vmatprep.subr.bf16.mxu0 0
        %2658 = vmatpush1.bf16.msra.mxu0 0
        %2659 = vmatprep.mubr.bf16.mxu0 0
        %2660 = vmatmul.mubr.bf16.gmra.mrb[0].mxu0 %v2573
        %v2661 = vpop.f32.mrb[0].mxu0
        %v2662 = vadd.f32 %v2547, %v2661
        %v2663 = vpop.f32.mrb[0].mxu0
        %v2664 = vpop.f32.mrb[0].mxu0
        %v2665 = vpop.f32.mrb[0].mxu0
        %2666 = vdwg.mxu0
        %v2671 = vunpack.c.l.b16 %v2523
        %v2672 = vunpack.c.l.b16 %v2524
        %v2673 = vunpack.c.l.b16 %v2525
        %v2674 = vunpack.c.l.b16 %v2526
        %v2675 = vpack.c.b16 %v2672, %v2671
        %v2676 = vpack.c.b16 %v2674, %v2673
        %2679 = vmatprep.subr.bf16.mxu0 0
        %2680 = vmatpush1.bf16.msra.mxu0 %v2675
        %2681 = vmatprep.subr.bf16.mxu0 0
        %2682 = vmatpush1.bf16.msra.mxu0 %v2676
        %2683 = vmatprep.subr.bf16.mxu0 0
        %2684 = vmatpush1.bf16.msra.mxu0 0
        %2685 = vmatprep.subr.bf16.mxu0 0
        %2686 = vmatpush1.bf16.msra.mxu0 0
        %2687 = vmatprep.subr.bf16.mxu0 0
        %2688 = vmatpush1.bf16.msra.mxu0 0
        %2689 = vmatprep.subr.bf16.mxu0 0
        %2690 = vmatpush1.bf16.msra.mxu0 0
        %2691 = vmatprep.subr.bf16.mxu0 0
        %2692 = vmatpush1.bf16.msra.mxu0 0
        %2693 = vmatprep.subr.bf16.mxu0 0
        %2694 = vmatpush1.bf16.msra.mxu0 0
        %2695 = vmatprep.subr.bf16.mxu0 0
        %2696 = vmatpush1.bf16.msra.mxu0 0
        %2697 = vmatprep.subr.bf16.mxu0 0
        %2698 = vmatpush1.bf16.msra.mxu0 0
        %2699 = vmatprep.subr.bf16.mxu0 0
        %2700 = vmatpush1.bf16.msra.mxu0 0
        %2701 = vmatprep.subr.bf16.mxu0 0
        %2702 = vmatpush1.bf16.msra.mxu0 0
        %2703 = vmatprep.subr.bf16.mxu0 0
        %2704 = vmatpush1.bf16.msra.mxu0 0
        %2705 = vmatprep.subr.bf16.mxu0 0
        %2706 = vmatpush1.bf16.msra.mxu0 0
        %2707 = vmatprep.subr.bf16.mxu0 0
        %2708 = vmatpush1.bf16.msra.mxu0 0
        %2709 = vmatprep.subr.bf16.mxu0 0
        %2710 = vmatpush1.bf16.msra.mxu0 0
        %2711 = vmatprep.mubr.bf16.mxu0 0
        %2712 = vmatmul.mubr.bf16.gmra.mrb[0].mxu0 %v2573
        %v2713 = vpop.f32.mrb[0].mxu0
        %v2714 = vadd.f32 %v2551, %v2713
        %v2715 = vpop.f32.mrb[0].mxu0
        %v2716 = vpop.f32.mrb[0].mxu0
        %v2717 = vpop.f32.mrb[0].mxu0
        %2718 = vdwg.mxu0
        %v2723 = vunpack.c.l.b16 %v2527
        %v2724 = vunpack.c.l.b16 %v2528
        %v2725 = vunpack.c.l.b16 %v2529
        %v2726 = vunpack.c.l.b16 %v2530
        %v2727 = vpack.c.b16 %v2724, %v2723
        %v2728 = vpack.c.b16 %v2726, %v2725
        %2731 = vmatprep.subr.bf16.mxu0 0
        %2732 = vmatpush1.bf16.msra.mxu0 %v2727
        %2733 = vmatprep.subr.bf16.mxu0 0
        %2734 = vmatpush1.bf16.msra.mxu0 %v2728
        %2735 = vmatprep.subr.bf16.mxu0 0
        %2736 = vmatpush1.bf16.msra.mxu0 0
        %2737 = vmatprep.subr.bf16.mxu0 0
        %2738 = vmatpush1.bf16.msra.mxu0 0
        %2739 = vmatprep.subr.bf16.mxu0 0
        %2740 = vmatpush1.bf16.msra.mxu0 0
        %2741 = vmatprep.subr.bf16.mxu0 0
        %2742 = vmatpush1.bf16.msra.mxu0 0
        %2743 = vmatprep.subr.bf16.mxu0 0
        %2744 = vmatpush1.bf16.msra.mxu0 0
        %2745 = vmatprep.subr.bf16.mxu0 0
        %2746 = vmatpush1.bf16.msra.mxu0 0
        %2747 = vmatprep.subr.bf16.mxu0 0
        %2748 = vmatpush1.bf16.msra.mxu0 0
        %2749 = vmatprep.subr.bf16.mxu0 0
        %2750 = vmatpush1.bf16.msra.mxu0 0
        %2751 = vmatprep.subr.bf16.mxu0 0
        %2752 = vmatpush1.bf16.msra.mxu0 0
        %2753 = vmatprep.subr.bf16.mxu0 0
        %2754 = vmatpush1.bf16.msra.mxu0 0
        %2755 = vmatprep.subr.bf16.mxu0 0
        %2756 = vmatpush1.bf16.msra.mxu0 0
        %2757 = vmatprep.subr.bf16.mxu0 0
        %2758 = vmatpush1.bf16.msra.mxu0 0
        %2759 = vmatprep.subr.bf16.mxu0 0
        %2760 = vmatpush1.bf16.msra.mxu0 0
        %2761 = vmatprep.subr.bf16.mxu0 0
        %2762 = vmatpush1.bf16.msra.mxu0 0
        %2763 = vmatprep.mubr.bf16.mxu0 0
        %2764 = vmatmul.mubr.bf16.gmra.mrb[0].mxu0 %v2573
        %v2765 = vpop.f32.mrb[0].mxu0
        %v2766 = vadd.f32 %v2555, %v2765
        %v2767 = vpop.f32.mrb[0].mxu0
        %v2768 = vpop.f32.mrb[0].mxu0
        %v2769 = vpop.f32.mrb[0].mxu0
        %2770 = vdwg.mxu0
        %v2771 = vld [vmem:[%s1035] sm:$0xf]
        %v2772 = vld [vmem:[%s1035 + $0x4] sm:$0xf]
        %v2773 = vld [vmem:[%s1035 + $0x8] sm:$0xf]
        %v2774 = vld [vmem:[%s1035 + $0xc] sm:$0xf]
        %v2775 = vld [vmem:[%s1035 + $0x10] sm:$0xf]
        %v2776 = vld [vmem:[%s1035 + $0x14] sm:$0xf]
        %v2777 = vld [vmem:[%s1035 + $0x18] sm:$0xf]
        %v2778 = vld [vmem:[%s1035 + $0x1c] sm:$0xf]
        %v2779 = vld [vmem:[%s1035 + $0x20] sm:$0xf]
        %v2780 = vld [vmem:[%s1035 + $0x24] sm:$0xf]
        %v2781 = vld [vmem:[%s1035 + $0x28] sm:$0xf]
        %v2782 = vld [vmem:[%s1035 + $0x2c] sm:$0xf]
        %v2783 = vld [vmem:[%s1035 + $0x30] sm:$0xf]
        %v2784 = vld [vmem:[%s1035 + $0x34] sm:$0xf]
        %v2785 = vld [vmem:[%s1035 + $0x38] sm:$0xf]
        %v2786 = vld [vmem:[%s1035 + $0x3c] sm:$0xf]
        %v2787 = vld [vmem:[%s1035 + $0x40] sm:$0xf]
        %v2788 = vld [vmem:[%s1035 + $0x44] sm:$0xf]
        %v2789 = vld [vmem:[%s1035 + $0x48] sm:$0xf]
        %v2790 = vld [vmem:[%s1035 + $0x4c] sm:$0xf]
        %v2791 = vld [vmem:[%s1035 + $0x50] sm:$0xf]
        %v2792 = vld [vmem:[%s1035 + $0x54] sm:$0xf]
        %v2793 = vld [vmem:[%s1035 + $0x58] sm:$0xf]
        %v2794 = vld [vmem:[%s1035 + $0x5c] sm:$0xf]
        %v2795 = vld [vmem:[%s1035 + $0x60] sm:$0xf]
        %v2796 = vld [vmem:[%s1035 + $0x64] sm:$0xf]
        %v2797 = vld [vmem:[%s1035 + $0x68] sm:$0xf]
        %v2798 = vld [vmem:[%s1035 + $0x6c] sm:$0xf]
        %v2799 = vld [vmem:[%s1035 + $0x70] sm:$0xf]
        %v2800 = vld [vmem:[%s1035 + $0x74] sm:$0xf]
        %v2801 = vld [vmem:[%s1035 + $0x78] sm:$0xf]
        %v2802 = vld [vmem:[%s1035 + $0x7c] sm:$0xf]
        %v2803 = vld [vmem:[%s1039] sm:$0x1]
        %v2804 = vld [vmem:[%s1039 + $0x1] sm:$0x1]
        %v2805 = vld [vmem:[%s1039 + $0x2] sm:$0x1]
        %v2806 = vld [vmem:[%s1039 + $0x3] sm:$0x1]
        %v2807 = vld [vmem:[%s1039 + $0x4] sm:$0x1]
        %v2808 = vld [vmem:[%s1039 + $0x5] sm:$0x1]
        %v2809 = vld [vmem:[%s1039 + $0x6] sm:$0x1]
        %v2810 = vld [vmem:[%s1039 + $0x7] sm:$0x1]
        %v2811 = vpack.c.bf16 %v1085, %v1085
        %v2820 = vlaneseq
        %v2821 = vshrl.u32 %v2820, 7
        %v2822 = vsub.s32 0, %v2821
        %v2823 = vrot.slane %v2803, %v2822
        %v2824 = vlaneseq
        %v2825 = vshrl.u32 %v2824, 7
        %v2826 = vsub.s32 0, %v2825
        %v2827 = vrot.slane %v2804, %v2826
        %v2828 = vlaneseq
        %v2829 = vshrl.u32 %v2828, 7
        %v2830 = vsub.s32 0, %v2829
        %v2831 = vrot.slane %v2805, %v2830
        %v2832 = vlaneseq
        %v2833 = vshrl.u32 %v2832, 7
        %v2834 = vsub.s32 0, %v2833
        %v2835 = vrot.slane %v2806, %v2834
        %v2836 = vlaneseq
        %v2837 = vshrl.u32 %v2836, 7
        %v2838 = vsub.s32 0, %v2837
        %v2839 = vrot.slane %v2807, %v2838
        %v2840 = vlaneseq
        %v2841 = vshrl.u32 %v2840, 7
        %v2842 = vsub.s32 0, %v2841
        %v2843 = vrot.slane %v2808, %v2842
        %v2844 = vlaneseq
        %v2845 = vshrl.u32 %v2844, 7
        %v2846 = vsub.s32 0, %v2845
        %v2847 = vrot.slane %v2809, %v2846
        %v2848 = vlaneseq
        %v2849 = vshrl.u32 %v2848, 7
        %v2850 = vsub.s32 0, %v2849
        %v2851 = vrot.slane %v2810, %v2850
        %v2864 = vunpack.c.l.b16 %v2771
        %v2865 = vunpack.c.l.b16 %v2772
        %v2866 = vunpack.c.l.b16 %v2773
        %v2867 = vunpack.c.l.b16 %v2774
        %v2868 = vpack.c.b16 %v2865, %v2864
        %v2869 = vpack.c.b16 %v2867, %v2866
        %v2873 = vsel %vm1231, %v2811, 0
        %2875 = vmatprep.subr.bf16.mxu0 0
        %2876 = vmatpush1.bf16.msra.mxu0 %v2868
        %2877 = vmatprep.subr.bf16.mxu0 0
        %2878 = vmatpush1.bf16.msra.mxu0 %v2869
        %2879 = vmatprep.subr.bf16.mxu0 0
        %2880 = vmatpush1.bf16.msra.mxu0 0
        %2881 = vmatprep.subr.bf16.mxu0 0
        %2882 = vmatpush1.bf16.msra.mxu0 0
        %2883 = vmatprep.subr.bf16.mxu0 0
        %2884 = vmatpush1.bf16.msra.mxu0 0
        %2885 = vmatprep.subr.bf16.mxu0 0
        %2886 = vmatpush1.bf16.msra.mxu0 0
        %2887 = vmatprep.subr.bf16.mxu0 0
        %2888 = vmatpush1.bf16.msra.mxu0 0
        %2889 = vmatprep.subr.bf16.mxu0 0
        %2890 = vmatpush1.bf16.msra.mxu0 0
        %2891 = vmatprep.subr.bf16.mxu0 0
        %2892 = vmatpush1.bf16.msra.mxu0 0
        %2893 = vmatprep.subr.bf16.mxu0 0
        %2894 = vmatpush1.bf16.msra.mxu0 0
        %2895 = vmatprep.subr.bf16.mxu0 0
        %2896 = vmatpush1.bf16.msra.mxu0 0
        %2897 = vmatprep.subr.bf16.mxu0 0
        %2898 = vmatpush1.bf16.msra.mxu0 0
        %2899 = vmatprep.subr.bf16.mxu0 0
        %2900 = vmatpush1.bf16.msra.mxu0 0
        %2901 = vmatprep.subr.bf16.mxu0 0
        %2902 = vmatpush1.bf16.msra.mxu0 0
        %2903 = vmatprep.subr.bf16.mxu0 0
        %2904 = vmatpush1.bf16.msra.mxu0 0
        %2905 = vmatprep.subr.bf16.mxu0 0
        %2906 = vmatpush1.bf16.msra.mxu0 0
        %2907 = vmatprep.mubr.bf16.mxu0 0
        %2908 = vmatmul.mubr.bf16.gmra.mrb[0].mxu0 %v2873
        %v2909 = vpop.f32.mrb[0].mxu0
        %v2910 = vadd.f32 %v2823, %v2909
        %v2911 = vpop.f32.mrb[0].mxu0
        %v2912 = vpop.f32.mrb[0].mxu0
        %v2913 = vpop.f32.mrb[0].mxu0
        %2914 = vdwg.mxu0
        %v2919 = vunpack.c.l.b16 %v2775
        %v2920 = vunpack.c.l.b16 %v2776
        %v2921 = vunpack.c.l.b16 %v2777
        %v2922 = vunpack.c.l.b16 %v2778
        %v2923 = vpack.c.b16 %v2920, %v2919
        %v2924 = vpack.c.b16 %v2922, %v2921
        %2927 = vmatprep.subr.bf16.mxu0 0
        %2928 = vmatpush1.bf16.msra.mxu0 %v2923
        %2929 = vmatprep.subr.bf16.mxu0 0
        %2930 = vmatpush1.bf16.msra.mxu0 %v2924
        %2931 = vmatprep.subr.bf16.mxu0 0
        %2932 = vmatpush1.bf16.msra.mxu0 0
        %2933 = vmatprep.subr.bf16.mxu0 0
        %2934 = vmatpush1.bf16.msra.mxu0 0
        %2935 = vmatprep.subr.bf16.mxu0 0
        %2936 = vmatpush1.bf16.msra.mxu0 0
        %2937 = vmatprep.subr.bf16.mxu0 0
        %2938 = vmatpush1.bf16.msra.mxu0 0
        %2939 = vmatprep.subr.bf16.mxu0 0
        %2940 = vmatpush1.bf16.msra.mxu0 0
        %2941 = vmatprep.subr.bf16.mxu0 0
        %2942 = vmatpush1.bf16.msra.mxu0 0
        %2943 = vmatprep.subr.bf16.mxu0 0
        %2944 = vmatpush1.bf16.msra.mxu0 0
        %2945 = vmatprep.subr.bf16.mxu0 0
        %2946 = vmatpush1.bf16.msra.mxu0 0
        %2947 = vmatprep.subr.bf16.mxu0 0
        %2948 = vmatpush1.bf16.msra.mxu0 0
        %2949 = vmatprep.subr.bf16.mxu0 0
        %2950 = vmatpush1.bf16.msra.mxu0 0
        %2951 = vmatprep.subr.bf16.mxu0 0
        %2952 = vmatpush1.bf16.msra.mxu0 0
        %2953 = vmatprep.subr.bf16.mxu0 0
        %2954 = vmatpush1.bf16.msra.mxu0 0
        %2955 = vmatprep.subr.bf16.mxu0 0
        %2956 = vmatpush1.bf16.msra.mxu0 0
        %2957 = vmatprep.subr.bf16.mxu0 0
        %2958 = vmatpush1.bf16.msra.mxu0 0
        %2959 = vmatprep.mubr.bf16.mxu0 0
        %2960 = vmatmul.mubr.bf16.gmra.mrb[0].mxu0 %v2873
        %v2961 = vpop.f32.mrb[0].mxu0
        %v2962 = vadd.f32 %v2827, %v2961
        %v2963 = vpop.f32.mrb[0].mxu0
        %v2964 = vpop.f32.mrb[0].mxu0
        %v2965 = vpop.f32.mrb[0].mxu0
        %2966 = vdwg.mxu0
        %v2971 = vunpack.c.l.b16 %v2779
        %v2972 = vunpack.c.l.b16 %v2780
        %v2973 = vunpack.c.l.b16 %v2781
        %v2974 = vunpack.c.l.b16 %v2782
        %v2975 = vpack.c.b16 %v2972, %v2971
        %v2976 = vpack.c.b16 %v2974, %v2973
        %2979 = vmatprep.subr.bf16.mxu0 0
        %2980 = vmatpush1.bf16.msra.mxu0 %v2975
        %2981 = vmatprep.subr.bf16.mxu0 0
        %2982 = vmatpush1.bf16.msra.mxu0 %v2976
        %2983 = vmatprep.subr.bf16.mxu0 0
        %2984 = vmatpush1.bf16.msra.mxu0 0
        %2985 = vmatprep.subr.bf16.mxu0 0
        %2986 = vmatpush1.bf16.msra.mxu0 0
        %2987 = vmatprep.subr.bf16.mxu0 0
        %2988 = vmatpush1.bf16.msra.mxu0 0
        %2989 = vmatprep.subr.bf16.mxu0 0
        %2990 = vmatpush1.bf16.msra.mxu0 0
        %2991 = vmatprep.subr.bf16.mxu0 0
        %2992 = vmatpush1.bf16.msra.mxu0 0
        %2993 = vmatprep.subr.bf16.mxu0 0
        %2994 = vmatpush1.bf16.msra.mxu0 0
        %2995 = vmatprep.subr.bf16.mxu0 0
        %2996 = vmatpush1.bf16.msra.mxu0 0
        %2997 = vmatprep.subr.bf16.mxu0 0
        %2998 = vmatpush1.bf16.msra.mxu0 0
        %2999 = vmatprep.subr.bf16.mxu0 0
        %3000 = vmatpush1.bf16.msra.mxu0 0
        %3001 = vmatprep.subr.bf16.mxu0 0
        %3002 = vmatpush1.bf16.msra.mxu0 0
        %3003 = vmatprep.subr.bf16.mxu0 0
        %3004 = vmatpush1.bf16.msra.mxu0 0
        %3005 = vmatprep.subr.bf16.mxu0 0
        %3006 = vmatpush1.bf16.msra.mxu0 0
        %3007 = vmatprep.subr.bf16.mxu0 0
        %3008 = vmatpush1.bf16.msra.mxu0 0
        %3009 = vmatprep.subr.bf16.mxu0 0
        %3010 = vmatpush1.bf16.msra.mxu0 0
        %3011 = vmatprep.mubr.bf16.mxu0 0
        %3012 = vmatmul.mubr.bf16.gmra.mrb[0].mxu0 %v2873
        %v3013 = vpop.f32.mrb[0].mxu0
        %v3014 = vadd.f32 %v2831, %v3013
        %v3015 = vpop.f32.mrb[0].mxu0
        %v3016 = vpop.f32.mrb[0].mxu0
        %v3017 = vpop.f32.mrb[0].mxu0
        %3018 = vdwg.mxu0
        %v3023 = vunpack.c.l.b16 %v2783
        %v3024 = vunpack.c.l.b16 %v2784
        %v3025 = vunpack.c.l.b16 %v2785
        %v3026 = vunpack.c.l.b16 %v2786
        %v3027 = vpack.c.b16 %v3024, %v3023
        %v3028 = vpack.c.b16 %v3026, %v3025
        %3031 = vmatprep.subr.bf16.mxu0 0
        %3032 = vmatpush1.bf16.msra.mxu0 %v3027
        %3033 = vmatprep.subr.bf16.mxu0 0
        %3034 = vmatpush1.bf16.msra.mxu0 %v3028
        %3035 = vmatprep.subr.bf16.mxu0 0
        %3036 = vmatpush1.bf16.msra.mxu0 0
        %3037 = vmatprep.subr.bf16.mxu0 0
        %3038 = vmatpush1.bf16.msra.mxu0 0
        %3039 = vmatprep.subr.bf16.mxu0 0
        %3040 = vmatpush1.bf16.msra.mxu0 0
        %3041 = vmatprep.subr.bf16.mxu0 0
        %3042 = vmatpush1.bf16.msra.mxu0 0
        %3043 = vmatprep.subr.bf16.mxu0 0
        %3044 = vmatpush1.bf16.msra.mxu0 0
        %3045 = vmatprep.subr.bf16.mxu0 0
        %3046 = vmatpush1.bf16.msra.mxu0 0
        %3047 = vmatprep.subr.bf16.mxu0 0
        %3048 = vmatpush1.bf16.msra.mxu0 0
        %3049 = vmatprep.subr.bf16.mxu0 0
        %3050 = vmatpush1.bf16.msra.mxu0 0
        %3051 = vmatprep.subr.bf16.mxu0 0
        %3052 = vmatpush1.bf16.msra.mxu0 0
        %3053 = vmatprep.subr.bf16.mxu0 0
        %3054 = vmatpush1.bf16.msra.mxu0 0
        %3055 = vmatprep.subr.bf16.mxu0 0
        %3056 = vmatpush1.bf16.msra.mxu0 0
        %3057 = vmatprep.subr.bf16.mxu0 0
        %3058 = vmatpush1.bf16.msra.mxu0 0
        %3059 = vmatprep.subr.bf16.mxu0 0
        %3060 = vmatpush1.bf16.msra.mxu0 0
        %3061 = vmatprep.subr.bf16.mxu0 0
        %3062 = vmatpush1.bf16.msra.mxu0 0
        %3063 = vmatprep.mubr.bf16.mxu0 0
        %3064 = vmatmul.mubr.bf16.gmra.mrb[0].mxu0 %v2873
        %v3065 = vpop.f32.mrb[0].mxu0
        %v3066 = vadd.f32 %v2835, %v3065
        %v3067 = vpop.f32.mrb[0].mxu0
        %v3068 = vpop.f32.mrb[0].mxu0
        %v3069 = vpop.f32.mrb[0].mxu0
        %3070 = vdwg.mxu0
        %v3075 = vunpack.c.l.b16 %v2787
        %v3076 = vunpack.c.l.b16 %v2788
        %v3077 = vunpack.c.l.b16 %v2789
        %v3078 = vunpack.c.l.b16 %v2790
        %v3079 = vpack.c.b16 %v3076, %v3075
        %v3080 = vpack.c.b16 %v3078, %v3077
        %3083 = vmatprep.subr.bf16.mxu0 0
        %3084 = vmatpush1.bf16.msra.mxu0 %v3079
        %3085 = vmatprep.subr.bf16.mxu0 0
        %3086 = vmatpush1.bf16.msra.mxu0 %v3080
        %3087 = vmatprep.subr.bf16.mxu0 0
        %3088 = vmatpush1.bf16.msra.mxu0 0
        %3089 = vmatprep.subr.bf16.mxu0 0
        %3090 = vmatpush1.bf16.msra.mxu0 0
        %3091 = vmatprep.subr.bf16.mxu0 0
        %3092 = vmatpush1.bf16.msra.mxu0 0
        %3093 = vmatprep.subr.bf16.mxu0 0
        %3094 = vmatpush1.bf16.msra.mxu0 0
        %3095 = vmatprep.subr.bf16.mxu0 0
        %3096 = vmatpush1.bf16.msra.mxu0 0
        %3097 = vmatprep.subr.bf16.mxu0 0
        %3098 = vmatpush1.bf16.msra.mxu0 0
        %3099 = vmatprep.subr.bf16.mxu0 0
        %3100 = vmatpush1.bf16.msra.mxu0 0
        %3101 = vmatprep.subr.bf16.mxu0 0
        %3102 = vmatpush1.bf16.msra.mxu0 0
        %3103 = vmatprep.subr.bf16.mxu0 0
        %3104 = vmatpush1.bf16.msra.mxu0 0
        %3105 = vmatprep.subr.bf16.mxu0 0
        %3106 = vmatpush1.bf16.msra.mxu0 0
        %3107 = vmatprep.subr.bf16.mxu0 0
        %3108 = vmatpush1.bf16.msra.mxu0 0
        %3109 = vmatprep.subr.bf16.mxu0 0
        %3110 = vmatpush1.bf16.msra.mxu0 0
        %3111 = vmatprep.subr.bf16.mxu0 0
        %3112 = vmatpush1.bf16.msra.mxu0 0
        %3113 = vmatprep.subr.bf16.mxu0 0
        %3114 = vmatpush1.bf16.msra.mxu0 0
        %3115 = vmatprep.mubr.bf16.mxu0 0
        %3116 = vmatmul.mubr.bf16.gmra.mrb[0].mxu0 %v2873
        %v3117 = vpop.f32.mrb[0].mxu0
        %v3118 = vadd.f32 %v2839, %v3117
        %v3119 = vpop.f32.mrb[0].mxu0
        %v3120 = vpop.f32.mrb[0].mxu0
        %v3121 = vpop.f32.mrb[0].mxu0
        %3122 = vdwg.mxu0
        %v3127 = vunpack.c.l.b16 %v2791
        %v3128 = vunpack.c.l.b16 %v2792
        %v3129 = vunpack.c.l.b16 %v2793
        %v3130 = vunpack.c.l.b16 %v2794
        %v3131 = vpack.c.b16 %v3128, %v3127
        %v3132 = vpack.c.b16 %v3130, %v3129
        %3135 = vmatprep.subr.bf16.mxu0 0
        %3136 = vmatpush1.bf16.msra.mxu0 %v3131
        %3137 = vmatprep.subr.bf16.mxu0 0
        %3138 = vmatpush1.bf16.msra.mxu0 %v3132
        %3139 = vmatprep.subr.bf16.mxu0 0
        %3140 = vmatpush1.bf16.msra.mxu0 0
        %3141 = vmatprep.subr.bf16.mxu0 0
        %3142 = vmatpush1.bf16.msra.mxu0 0
        %3143 = vmatprep.subr.bf16.mxu0 0
        %3144 = vmatpush1.bf16.msra.mxu0 0
        %3145 = vmatprep.subr.bf16.mxu0 0
        %3146 = vmatpush1.bf16.msra.mxu0 0
        %3147 = vmatprep.subr.bf16.mxu0 0
        %3148 = vmatpush1.bf16.msra.mxu0 0
        %3149 = vmatprep.subr.bf16.mxu0 0
        %3150 = vmatpush1.bf16.msra.mxu0 0
        %3151 = vmatprep.subr.bf16.mxu0 0
        %3152 = vmatpush1.bf16.msra.mxu0 0
        %3153 = vmatprep.subr.bf16.mxu0 0
        %3154 = vmatpush1.bf16.msra.mxu0 0
        %3155 = vmatprep.subr.bf16.mxu0 0
        %3156 = vmatpush1.bf16.msra.mxu0 0
        %3157 = vmatprep.subr.bf16.mxu0 0
        %3158 = vmatpush1.bf16.msra.mxu0 0
        %3159 = vmatprep.subr.bf16.mxu0 0
        %3160 = vmatpush1.bf16.msra.mxu0 0
        %3161 = vmatprep.subr.bf16.mxu0 0
        %3162 = vmatpush1.bf16.msra.mxu0 0
        %3163 = vmatprep.subr.bf16.mxu0 0
        %3164 = vmatpush1.bf16.msra.mxu0 0
        %3165 = vmatprep.subr.bf16.mxu0 0
        %3166 = vmatpush1.bf16.msra.mxu0 0
        %3167 = vmatprep.mubr.bf16.mxu0 0
        %3168 = vmatmul.mubr.bf16.gmra.mrb[0].mxu0 %v2873
        %v3169 = vpop.f32.mrb[0].mxu0
        %v3170 = vadd.f32 %v2843, %v3169
        %v3171 = vpop.f32.mrb[0].mxu0
        %v3172 = vpop.f32.mrb[0].mxu0
        %v3173 = vpop.f32.mrb[0].mxu0
        %3174 = vdwg.mxu0
        %v3179 = vunpack.c.l.b16 %v2795
        %v3180 = vunpack.c.l.b16 %v2796
        %v3181 = vunpack.c.l.b16 %v2797
        %v3182 = vunpack.c.l.b16 %v2798
        %v3183 = vpack.c.b16 %v3180, %v3179
        %v3184 = vpack.c.b16 %v3182, %v3181
        %3187 = vmatprep.subr.bf16.mxu0 0
        %3188 = vmatpush1.bf16.msra.mxu0 %v3183
        %3189 = vmatprep.subr.bf16.mxu0 0
        %3190 = vmatpush1.bf16.msra.mxu0 %v3184
        %3191 = vmatprep.subr.bf16.mxu0 0
        %3192 = vmatpush1.bf16.msra.mxu0 0
        %3193 = vmatprep.subr.bf16.mxu0 0
        %3194 = vmatpush1.bf16.msra.mxu0 0
        %3195 = vmatprep.subr.bf16.mxu0 0
        %3196 = vmatpush1.bf16.msra.mxu0 0
        %3197 = vmatprep.subr.bf16.mxu0 0
        %3198 = vmatpush1.bf16.msra.mxu0 0
        %3199 = vmatprep.subr.bf16.mxu0 0
        %3200 = vmatpush1.bf16.msra.mxu0 0
        %3201 = vmatprep.subr.bf16.mxu0 0
        %3202 = vmatpush1.bf16.msra.mxu0 0
        %3203 = vmatprep.subr.bf16.mxu0 0
        %3204 = vmatpush1.bf16.msra.mxu0 0
        %3205 = vmatprep.subr.bf16.mxu0 0
        %3206 = vmatpush1.bf16.msra.mxu0 0
        %3207 = vmatprep.subr.bf16.mxu0 0
        %3208 = vmatpush1.bf16.msra.mxu0 0
        %3209 = vmatprep.subr.bf16.mxu0 0
        %3210 = vmatpush1.bf16.msra.mxu0 0
        %3211 = vmatprep.subr.bf16.mxu0 0
        %3212 = vmatpush1.bf16.msra.mxu0 0
        %3213 = vmatprep.subr.bf16.mxu0 0
        %3214 = vmatpush1.bf16.msra.mxu0 0
        %3215 = vmatprep.subr.bf16.mxu0 0
        %3216 = vmatpush1.bf16.msra.mxu0 0
        %3217 = vmatprep.subr.bf16.mxu0 0
        %3218 = vmatpush1.bf16.msra.mxu0 0
        %3219 = vmatprep.mubr.bf16.mxu0 0
        %3220 = vmatmul.mubr.bf16.gmra.mrb[0].mxu0 %v2873
        %v3221 = vpop.f32.mrb[0].mxu0
        %v3222 = vadd.f32 %v2847, %v3221
        %v3223 = vpop.f32.mrb[0].mxu0
        %v3224 = vpop.f32.mrb[0].mxu0
        %v3225 = vpop.f32.mrb[0].mxu0
        %3226 = vdwg.mxu0
        %v3231 = vunpack.c.l.b16 %v2799
        %v3232 = vunpack.c.l.b16 %v2800
        %v3233 = vunpack.c.l.b16 %v2801
        %v3234 = vunpack.c.l.b16 %v2802
        %v3235 = vpack.c.b16 %v3232, %v3231
        %v3236 = vpack.c.b16 %v3234, %v3233
        %3239 = vmatprep.subr.bf16.mxu0 0
        %3240 = vmatpush1.bf16.msra.mxu0 %v3235
        %3241 = vmatprep.subr.bf16.mxu0 0
        %3242 = vmatpush1.bf16.msra.mxu0 %v3236
        %3243 = vmatprep.subr.bf16.mxu0 0
        %3244 = vmatpush1.bf16.msra.mxu0 0
        %3245 = vmatprep.subr.bf16.mxu0 0
        %3246 = vmatpush1.bf16.msra.mxu0 0
        %3247 = vmatprep.subr.bf16.mxu0 0
        %3248 = vmatpush1.bf16.msra.mxu0 0
        %3249 = vmatprep.subr.bf16.mxu0 0
        %3250 = vmatpush1.bf16.msra.mxu0 0
        %3251 = vmatprep.subr.bf16.mxu0 0
        %3252 = vmatpush1.bf16.msra.mxu0 0
        %3253 = vmatprep.subr.bf16.mxu0 0
        %3254 = vmatpush1.bf16.msra.mxu0 0
        %3255 = vmatprep.subr.bf16.mxu0 0
        %3256 = vmatpush1.bf16.msra.mxu0 0
        %3257 = vmatprep.subr.bf16.mxu0 0
        %3258 = vmatpush1.bf16.msra.mxu0 0
        %3259 = vmatprep.subr.bf16.mxu0 0
        %3260 = vmatpush1.bf16.msra.mxu0 0
        %3261 = vmatprep.subr.bf16.mxu0 0
        %3262 = vmatpush1.bf16.msra.mxu0 0
        %3263 = vmatprep.subr.bf16.mxu0 0
        %3264 = vmatpush1.bf16.msra.mxu0 0
        %3265 = vmatprep.subr.bf16.mxu0 0
        %3266 = vmatpush1.bf16.msra.mxu0 0
        %3267 = vmatprep.subr.bf16.mxu0 0
        %3268 = vmatpush1.bf16.msra.mxu0 0
        %3269 = vmatprep.subr.bf16.mxu0 0
        %3270 = vmatpush1.bf16.msra.mxu0 0
        %3271 = vmatprep.mubr.bf16.mxu0 0
        %3272 = vmatmul.mubr.bf16.gmra.mrb[0].mxu0 %v2873
        %v3273 = vpop.f32.mrb[0].mxu0
        %v3274 = vadd.f32 %v2851, %v3273
        %v3275 = vpop.f32.mrb[0].mxu0
        %v3276 = vpop.f32.mrb[0].mxu0
        %v3277 = vpop.f32.mrb[0].mxu0
        %3278 = vdwg.mxu0
        %v3279 = vld [vmem:[%s1044] sm:$0xf]
        %v3280 = vld [vmem:[%s1044 + $0x4] sm:$0xf]
        %v3281 = vld [vmem:[%s1044 + $0x8] sm:$0xf]
        %v3282 = vld [vmem:[%s1044 + $0xc] sm:$0xf]
        %v3283 = vld [vmem:[%s1047] sm:$0x1]
        %v3284 = vpack.c.bf16 %v2610, %v2610
        %v3285 = vpack.c.bf16 %v2662, %v2662
        %v3286 = vpack.c.bf16 %v2714, %v2714
        %v3287 = vpack.c.bf16 %v2766, %v2766
        %v3288 = vpack.c.bf16 %v2910, %v2910
        %v3289 = vpack.c.bf16 %v2962, %v2962
        %v3290 = vpack.c.bf16 %v3014, %v3014
        %v3291 = vpack.c.bf16 %v3066, %v3066
        %v3293 = vsel %vm1860, %v3284, 0
        %v3296 = vsel %vm1860, %v3288, 0
        %3298 = vmatprep.subr.bf16.mxu0 0
        %3299 = vmatpush1.bf16.xpose.msra.mxu0 %v3296
        %3300 = vmatprep.subr.bf16.mxu0 0
        %3301 = vmatpush1.bf16.xpose.msra.mxu0 0
        %3302 = vmatprep.subr.bf16.mxu0 0
        %3303 = vmatpush1.bf16.xpose.msra.mxu0 0
        %3304 = vmatprep.subr.bf16.mxu0 0
        %3305 = vmatpush1.bf16.xpose.msra.mxu0 0
        %3306 = vmatprep.subr.bf16.mxu0 0
        %3307 = vmatpush1.bf16.xpose.msra.mxu0 0
        %3308 = vmatprep.subr.bf16.mxu0 0
        %3309 = vmatpush1.bf16.xpose.msra.mxu0 0
        %3310 = vmatprep.subr.bf16.mxu0 0
        %3311 = vmatpush1.bf16.xpose.msra.mxu0 0
        %3312 = vmatprep.subr.bf16.mxu0 0
        %3313 = vmatpush1.bf16.xpose.msra.mxu0 0
        %3314 = vmatprep.subr.bf16.mxu0 0
        %3315 = vmatpush1.bf16.xpose.msra.mxu0 0
        %3316 = vmatprep.subr.bf16.mxu0 0
        %3317 = vmatpush1.bf16.xpose.msra.mxu0 0
        %3318 = vmatprep.subr.bf16.mxu0 0
        %3319 = vmatpush1.bf16.xpose.msra.mxu0 0
        %3320 = vmatprep.subr.bf16.mxu0 0
        %3321 = vmatpush1.bf16.xpose.msra.mxu0 0
        %3322 = vmatprep.subr.bf16.mxu0 0
        %3323 = vmatpush1.bf16.xpose.msra.mxu0 0
        %3324 = vmatprep.subr.bf16.mxu0 0
        %3325 = vmatpush1.bf16.xpose.msra.mxu0 0
        %3326 = vmatprep.subr.bf16.mxu0 0
        %3327 = vmatpush1.bf16.xpose.msra.mxu0 0
        %3328 = vmatprep.subr.bf16.mxu0 0
        %3329 = vmatpush1.bf16.xpose.msra.mxu0 0
        %3330 = vmatprep.mubr.bf16.mxu0 0
        %3331 = vmatmul.mubr.bf16.gmra.mrb[0].mxu0 %v3293
        %v3332 = vpop.f32.mrb[0].mxu0
        %v3333 = vadd.f32 0.0, %v3332
        %v3334 = vpop.f32.mrb[0].mxu0
        %v3335 = vpop.f32.mrb[0].mxu0
        %v3336 = vpop.f32.mrb[0].mxu0
        %3337 = vdwg.mxu0
        %v3339 = vsel %vm1860, %v3285, 0
        %v3342 = vsel %vm1860, %v3289, 0
        %3344 = vmatprep.subr.bf16.mxu0 0
        %3345 = vmatpush1.bf16.xpose.msra.mxu0 %v3342
        %3346 = vmatprep.subr.bf16.mxu0 0
        %3347 = vmatpush1.bf16.xpose.msra.mxu0 0
        %3348 = vmatprep.subr.bf16.mxu0 0
        %3349 = vmatpush1.bf16.xpose.msra.mxu0 0
        %3350 = vmatprep.subr.bf16.mxu0 0
        %3351 = vmatpush1.bf16.xpose.msra.mxu0 0
        %3352 = vmatprep.subr.bf16.mxu0 0
        %3353 = vmatpush1.bf16.xpose.msra.mxu0 0
        %3354 = vmatprep.subr.bf16.mxu0 0
        %3355 = vmatpush1.bf16.xpose.msra.mxu0 0
        %3356 = vmatprep.subr.bf16.mxu0 0
        %3357 = vmatpush1.bf16.xpose.msra.mxu0 0
        %3358 = vmatprep.subr.bf16.mxu0 0
        %3359 = vmatpush1.bf16.xpose.msra.mxu0 0
        %3360 = vmatprep.subr.bf16.mxu0 0
        %3361 = vmatpush1.bf16.xpose.msra.mxu0 0
        %3362 = vmatprep.subr.bf16.mxu0 0
        %3363 = vmatpush1.bf16.xpose.msra.mxu0 0
        %3364 = vmatprep.subr.bf16.mxu0 0
        %3365 = vmatpush1.bf16.xpose.msra.mxu0 0
        %3366 = vmatprep.subr.bf16.mxu0 0
        %3367 = vmatpush1.bf16.xpose.msra.mxu0 0
        %3368 = vmatprep.subr.bf16.mxu0 0
        %3369 = vmatpush1.bf16.xpose.msra.mxu0 0
        %3370 = vmatprep.subr.bf16.mxu0 0
        %3371 = vmatpush1.bf16.xpose.msra.mxu0 0
        %3372 = vmatprep.subr.bf16.mxu0 0
        %3373 = vmatpush1.bf16.xpose.msra.mxu0 0
        %3374 = vmatprep.subr.bf16.mxu0 0
        %3375 = vmatpush1.bf16.xpose.msra.mxu0 0
        %3376 = vmatprep.mubr.bf16.mxu0 0
        %3377 = vmatmul.mubr.bf16.gmra.mrb[0].mxu0 %v3339
        %v3378 = vpop.f32.mrb[0].mxu0
        %v3379 = vadd.f32 0.0, %v3378
        %v3380 = vpop.f32.mrb[0].mxu0
        %v3381 = vpop.f32.mrb[0].mxu0
        %v3382 = vpop.f32.mrb[0].mxu0
        %3383 = vdwg.mxu0
        %v3385 = vsel %vm1860, %v3286, 0
        %v3388 = vsel %vm1860, %v3290, 0
        %3390 = vmatprep.subr.bf16.mxu0 0
        %3391 = vmatpush1.bf16.xpose.msra.mxu0 %v3388
        %3392 = vmatprep.subr.bf16.mxu0 0
        %3393 = vmatpush1.bf16.xpose.msra.mxu0 0
        %3394 = vmatprep.subr.bf16.mxu0 0
        %3395 = vmatpush1.bf16.xpose.msra.mxu0 0
        %3396 = vmatprep.subr.bf16.mxu0 0
        %3397 = vmatpush1.bf16.xpose.msra.mxu0 0
        %3398 = vmatprep.subr.bf16.mxu0 0
        %3399 = vmatpush1.bf16.xpose.msra.mxu0 0
        %3400 = vmatprep.subr.bf16.mxu0 0
        %3401 = vmatpush1.bf16.xpose.msra.mxu0 0
        %3402 = vmatprep.subr.bf16.mxu0 0
        %3403 = vmatpush1.bf16.xpose.msra.mxu0 0
        %3404 = vmatprep.subr.bf16.mxu0 0
        %3405 = vmatpush1.bf16.xpose.msra.mxu0 0
        %3406 = vmatprep.subr.bf16.mxu0 0
        %3407 = vmatpush1.bf16.xpose.msra.mxu0 0
        %3408 = vmatprep.subr.bf16.mxu0 0
        %3409 = vmatpush1.bf16.xpose.msra.mxu0 0
        %3410 = vmatprep.subr.bf16.mxu0 0
        %3411 = vmatpush1.bf16.xpose.msra.mxu0 0
        %3412 = vmatprep.subr.bf16.mxu0 0
        %3413 = vmatpush1.bf16.xpose.msra.mxu0 0
        %3414 = vmatprep.subr.bf16.mxu0 0
        %3415 = vmatpush1.bf16.xpose.msra.mxu0 0
        %3416 = vmatprep.subr.bf16.mxu0 0
        %3417 = vmatpush1.bf16.xpose.msra.mxu0 0
        %3418 = vmatprep.subr.bf16.mxu0 0
        %3419 = vmatpush1.bf16.xpose.msra.mxu0 0
        %3420 = vmatprep.subr.bf16.mxu0 0
        %3421 = vmatpush1.bf16.xpose.msra.mxu0 0
        %3422 = vmatprep.mubr.bf16.mxu0 0
        %3423 = vmatmul.mubr.bf16.gmra.mrb[0].mxu0 %v3385
        %v3424 = vpop.f32.mrb[0].mxu0
        %v3425 = vadd.f32 0.0, %v3424
        %v3426 = vpop.f32.mrb[0].mxu0
        %v3427 = vpop.f32.mrb[0].mxu0
        %v3428 = vpop.f32.mrb[0].mxu0
        %3429 = vdwg.mxu0
        %v3431 = vsel %vm1860, %v3287, 0
        %v3434 = vsel %vm1860, %v3291, 0
        %3436 = vmatprep.subr.bf16.mxu0 0
        %3437 = vmatpush1.bf16.xpose.msra.mxu0 %v3434
        %3438 = vmatprep.subr.bf16.mxu0 0
        %3439 = vmatpush1.bf16.xpose.msra.mxu0 0
        %3440 = vmatprep.subr.bf16.mxu0 0
        %3441 = vmatpush1.bf16.xpose.msra.mxu0 0
        %3442 = vmatprep.subr.bf16.mxu0 0
        %3443 = vmatpush1.bf16.xpose.msra.mxu0 0
        %3444 = vmatprep.subr.bf16.mxu0 0
        %3445 = vmatpush1.bf16.xpose.msra.mxu0 0
        %3446 = vmatprep.subr.bf16.mxu0 0
        %3447 = vmatpush1.bf16.xpose.msra.mxu0 0
        %3448 = vmatprep.subr.bf16.mxu0 0
        %3449 = vmatpush1.bf16.xpose.msra.mxu0 0
        %3450 = vmatprep.subr.bf16.mxu0 0
        %3451 = vmatpush1.bf16.xpose.msra.mxu0 0
        %3452 = vmatprep.subr.bf16.mxu0 0
        %3453 = vmatpush1.bf16.xpose.msra.mxu0 0
        %3454 = vmatprep.subr.bf16.mxu0 0
        %3455 = vmatpush1.bf16.xpose.msra.mxu0 0
        %3456 = vmatprep.subr.bf16.mxu0 0
        %3457 = vmatpush1.bf16.xpose.msra.mxu0 0
        %3458 = vmatprep.subr.bf16.mxu0 0
        %3459 = vmatpush1.bf16.xpose.msra.mxu0 0
        %3460 = vmatprep.subr.bf16.mxu0 0
        %3461 = vmatpush1.bf16.xpose.msra.mxu0 0
        %3462 = vmatprep.subr.bf16.mxu0 0
        %3463 = vmatpush1.bf16.xpose.msra.mxu0 0
        %3464 = vmatprep.subr.bf16.mxu0 0
        %3465 = vmatpush1.bf16.xpose.msra.mxu0 0
        %3466 = vmatprep.subr.bf16.mxu0 0
        %3467 = vmatpush1.bf16.xpose.msra.mxu0 0
        %3468 = vmatprep.mubr.bf16.mxu0 0
        %3469 = vmatmul.mubr.bf16.gmra.mrb[0].mxu0 %v3431
        %v3470 = vpop.f32.mrb[0].mxu0
        %v3471 = vadd.f32 0.0, %v3470
        %v3472 = vpop.f32.mrb[0].mxu0
        %v3473 = vpop.f32.mrb[0].mxu0
        %v3474 = vpop.f32.mrb[0].mxu0
        %3475 = vdwg.mxu0
        %vm3476 = vcmask 39936
        %v3477 = vsel %vm3476, %v3333, -inf
        %3478 = vmax.xlane.f32.xlu0 %v3477
        %v3479 = vpop.xlane.xlu0 %3478
        %v3480 = vsel %vm3476, %v3379, -inf
        %3481 = vmax.xlane.f32.xlu0 %v3480
        %v3482 = vpop.xlane.xlu0 %3481
        %v3483 = vsel %vm3476, %v3425, -inf
        %3484 = vmax.xlane.f32.xlu0 %v3483
        %v3485 = vpop.xlane.xlu0 %3484
        %v3486 = vsel %vm3476, %v3471, -inf
        %3487 = vmax.xlane.f32.xlu0 %v3486
        %v3488 = vpop.xlane.xlu0 %3487
        %v3489 = vsub.f32 %v3333, %v3479
        %v3490 = vsub.f32 %v3379, %v3482
        %v3491 = vsub.f32 %v3425, %v3485
        %v3492 = vsub.f32 %v3471, %v3488
        %v3493 = vmul.f32 %v3489, 1.442695
        %v3494 = vpow.pop %v3493
        %v3495 = vmul.f32 %v3490, 1.442695
        %v3496 = vpow.pop %v3495
        %v3497 = vmul.f32 %v3491, 1.442695
        %v3498 = vpow.pop %v3497
        %v3499 = vmul.f32 %v3492, 1.442695
        %v3500 = vpow.pop %v3499
        %v3501 = vsel %vm3476, %v3494, 0.0
        %3502 = vadd.xlane.f32.xlu0 %v3501
        %v3503 = vpop.xlane.xlu0 %3502
        %v3504 = vsel %vm3476, %v3496, 0.0
        %3505 = vadd.xlane.f32.xlu0 %v3504
        %v3506 = vpop.xlane.xlu0 %3505
        %v3507 = vsel %vm3476, %v3498, 0.0
        %3508 = vadd.xlane.f32.xlu0 %v3507
        %v3509 = vpop.xlane.xlu0 %3508
        %v3510 = vsel %vm3476, %v3500, 0.0
        %3511 = vadd.xlane.f32.xlu0 %v3510
        %v3512 = vpop.xlane.xlu0 %3511
        %v3513 = vrcp.pop %v3503
        %v3514 = vrcp.pop %v3506
        %v3515 = vrcp.pop %v3509
        %v3516 = vrcp.pop %v3512
        %v3517 = vmul.f32 %v3494, %v3513
        %v3518 = vmul.f32 %v3496, %v3514
        %v3519 = vmul.f32 %v3498, %v3515
        %v3520 = vmul.f32 %v3500, %v3516
        %v3521 = vpack.c.bf16 %v3517, %v3517
        %v3522 = vpack.c.bf16 %v3518, %v3518
        %v3523 = vpack.c.bf16 %v3519, %v3519
        %v3524 = vpack.c.bf16 %v3520, %v3520
        %v3525 = vpack.c.bf16 %v3118, %v3118
        %v3526 = vpack.c.bf16 %v3170, %v3170
        %v3527 = vpack.c.bf16 %v3222, %v3222
        %v3528 = vpack.c.bf16 %v3274, %v3274
        %v3530 = vsel %vm3476, %v3521, 0
        %vm3532 = vcmask 1041408
        %vm3533 = vcmask 1042432
        %v3534 = vsel %vm3532, 4294967295, 65535
        %v3535 = vsel %vm3533, %v3534, 0
        %v3537 = vand.u32 %v3525, %v3535
        %3539 = vmatprep.subr.bf16.mxu0 0
        %3540 = vmatpush1.bf16.msra.mxu0 %v3537
        %3541 = vmatprep.subr.bf16.mxu0 0
        %3542 = vmatpush1.bf16.msra.mxu0 0
        %3543 = vmatprep.subr.bf16.mxu0 0
        %3544 = vmatpush1.bf16.msra.mxu0 0
        %3545 = vmatprep.subr.bf16.mxu0 0
        %3546 = vmatpush1.bf16.msra.mxu0 0
        %3547 = vmatprep.subr.bf16.mxu0 0
        %3548 = vmatpush1.bf16.msra.mxu0 0
        %3549 = vmatprep.subr.bf16.mxu0 0
        %3550 = vmatpush1.bf16.msra.mxu0 0
        %3551 = vmatprep.subr.bf16.mxu0 0
        %3552 = vmatpush1.bf16.msra.mxu0 0
        %3553 = vmatprep.subr.bf16.mxu0 0
        %3554 = vmatpush1.bf16.msra.mxu0 0
        %3555 = vmatprep.subr.bf16.mxu0 0
        %3556 = vmatpush1.bf16.msra.mxu0 0
        %3557 = vmatprep.subr.bf16.mxu0 0
        %3558 = vmatpush1.bf16.msra.mxu0 0
        %3559 = vmatprep.subr.bf16.mxu0 0
        %3560 = vmatpush1.bf16.msra.mxu0 0
        %3561 = vmatprep.subr.bf16.mxu0 0
        %3562 = vmatpush1.bf16.msra.mxu0 0
        %3563 = vmatprep.subr.bf16.mxu0 0
        %3564 = vmatpush1.bf16.msra.mxu0 0
        %3565 = vmatprep.subr.bf16.mxu0 0
        %3566 = vmatpush1.bf16.msra.mxu0 0
        %3567 = vmatprep.subr.bf16.mxu0 0
        %3568 = vmatpush1.bf16.msra.mxu0 0
        %3569 = vmatprep.subr.bf16.mxu0 0
        %3570 = vmatpush1.bf16.msra.mxu0 0
        %3571 = vmatprep.mubr.bf16.mxu0 0
        %3572 = vmatmul.mubr.bf16.gmra.mrb[0].mxu0 %v3530
        %v3573 = vpop.f32.mrb[0].mxu0
        %v3574 = vadd.f32 0.0, %v3573
        %v3575 = vpop.f32.mrb[0].mxu0
        %v3576 = vpop.f32.mrb[0].mxu0
        %v3577 = vpop.f32.mrb[0].mxu0
        %3578 = vdwg.mxu0
        %v3580 = vsel %vm3476, %v3522, 0
        %v3583 = vand.u32 %v3526, %v3535
        %3585 = vmatprep.subr.bf16.mxu0 0
        %3586 = vmatpush1.bf16.msra.mxu0 %v3583
        %3587 = vmatprep.subr.bf16.mxu0 0
        %3588 = vmatpush1.bf16.msra.mxu0 0
        %3589 = vmatprep.subr.bf16.mxu0 0
        %3590 = vmatpush1.bf16.msra.mxu0 0
        %3591 = vmatprep.subr.bf16.mxu0 0
        %3592 = vmatpush1.bf16.msra.mxu0 0
        %3593 = vmatprep.subr.bf16.mxu0 0
        %3594 = vmatpush1.bf16.msra.mxu0 0
        %3595 = vmatprep.subr.bf16.mxu0 0
        %3596 = vmatpush1.bf16.msra.mxu0 0
        %3597 = vmatprep.subr.bf16.mxu0 0
        %3598 = vmatpush1.bf16.msra.mxu0 0
        %3599 = vmatprep.subr.bf16.mxu0 0
        %3600 = vmatpush1.bf16.msra.mxu0 0
        %3601 = vmatprep.subr.bf16.mxu0 0
        %3602 = vmatpush1.bf16.msra.mxu0 0
        %3603 = vmatprep.subr.bf16.mxu0 0
        %3604 = vmatpush1.bf16.msra.mxu0 0
        %3605 = vmatprep.subr.bf16.mxu0 0
        %3606 = vmatpush1.bf16.msra.mxu0 0
        %3607 = vmatprep.subr.bf16.mxu0 0
        %3608 = vmatpush1.bf16.msra.mxu0 0
        %3609 = vmatprep.subr.bf16.mxu0 0
        %3610 = vmatpush1.bf16.msra.mxu0 0
        %3611 = vmatprep.subr.bf16.mxu0 0
        %3612 = vmatpush1.bf16.msra.mxu0 0
        %3613 = vmatprep.subr.bf16.mxu0 0
        %3614 = vmatpush1.bf16.msra.mxu0 0
        %3615 = vmatprep.subr.bf16.mxu0 0
        %3616 = vmatpush1.bf16.msra.mxu0 0
        %3617 = vmatprep.mubr.bf16.mxu0 0
        %3618 = vmatmul.mubr.bf16.gmra.mrb[0].mxu0 %v3580
        %v3619 = vpop.f32.mrb[0].mxu0
        %v3620 = vadd.f32 0.0, %v3619
        %v3621 = vpop.f32.mrb[0].mxu0
        %v3622 = vpop.f32.mrb[0].mxu0
        %v3623 = vpop.f32.mrb[0].mxu0
        %3624 = vdwg.mxu0
        %v3626 = vsel %vm3476, %v3523, 0
        %v3629 = vand.u32 %v3527, %v3535
        %3631 = vmatprep.subr.bf16.mxu0 0
        %3632 = vmatpush1.bf16.msra.mxu0 %v3629
        %3633 = vmatprep.subr.bf16.mxu0 0
        %3634 = vmatpush1.bf16.msra.mxu0 0
        %3635 = vmatprep.subr.bf16.mxu0 0
        %3636 = vmatpush1.bf16.msra.mxu0 0
        %3637 = vmatprep.subr.bf16.mxu0 0
        %3638 = vmatpush1.bf16.msra.mxu0 0
        %3639 = vmatprep.subr.bf16.mxu0 0
        %3640 = vmatpush1.bf16.msra.mxu0 0
        %3641 = vmatprep.subr.bf16.mxu0 0
        %3642 = vmatpush1.bf16.msra.mxu0 0
        %3643 = vmatprep.subr.bf16.mxu0 0
        %3644 = vmatpush1.bf16.msra.mxu0 0
        %3645 = vmatprep.subr.bf16.mxu0 0
        %3646 = vmatpush1.bf16.msra.mxu0 0
        %3647 = vmatprep.subr.bf16.mxu0 0
        %3648 = vmatpush1.bf16.msra.mxu0 0
        %3649 = vmatprep.subr.bf16.mxu0 0
        %3650 = vmatpush1.bf16.msra.mxu0 0
        %3651 = vmatprep.subr.bf16.mxu0 0
        %3652 = vmatpush1.bf16.msra.mxu0 0
        %3653 = vmatprep.subr.bf16.mxu0 0
        %3654 = vmatpush1.bf16.msra.mxu0 0
        %3655 = vmatprep.subr.bf16.mxu0 0
        %3656 = vmatpush1.bf16.msra.mxu0 0
        %3657 = vmatprep.subr.bf16.mxu0 0
        %3658 = vmatpush1.bf16.msra.mxu0 0
        %3659 = vmatprep.subr.bf16.mxu0 0
        %3660 = vmatpush1.bf16.msra.mxu0 0
        %3661 = vmatprep.subr.bf16.mxu0 0
        %3662 = vmatpush1.bf16.msra.mxu0 0
        %3663 = vmatprep.mubr.bf16.mxu0 0
        %3664 = vmatmul.mubr.bf16.gmra.mrb[0].mxu0 %v3626
        %v3665 = vpop.f32.mrb[0].mxu0
        %v3666 = vadd.f32 0.0, %v3665
        %v3667 = vpop.f32.mrb[0].mxu0
        %v3668 = vpop.f32.mrb[0].mxu0
        %v3669 = vpop.f32.mrb[0].mxu0
        %3670 = vdwg.mxu0
        %v3672 = vsel %vm3476, %v3524, 0
        %v3675 = vand.u32 %v3528, %v3535
        %3677 = vmatprep.subr.bf16.mxu0 0
        %3678 = vmatpush1.bf16.msra.mxu0 %v3675
        %3679 = vmatprep.subr.bf16.mxu0 0
        %3680 = vmatpush1.bf16.msra.mxu0 0
        %3681 = vmatprep.subr.bf16.mxu0 0
        %3682 = vmatpush1.bf16.msra.mxu0 0
        %3683 = vmatprep.subr.bf16.mxu0 0
        %3684 = vmatpush1.bf16.msra.mxu0 0
        %3685 = vmatprep.subr.bf16.mxu0 0
        %3686 = vmatpush1.bf16.msra.mxu0 0
        %3687 = vmatprep.subr.bf16.mxu0 0
        %3688 = vmatpush1.bf16.msra.mxu0 0
        %3689 = vmatprep.subr.bf16.mxu0 0
        %3690 = vmatpush1.bf16.msra.mxu0 0
        %3691 = vmatprep.subr.bf16.mxu0 0
        %3692 = vmatpush1.bf16.msra.mxu0 0
        %3693 = vmatprep.subr.bf16.mxu0 0
        %3694 = vmatpush1.bf16.msra.mxu0 0
        %3695 = vmatprep.subr.bf16.mxu0 0
        %3696 = vmatpush1.bf16.msra.mxu0 0
        %3697 = vmatprep.subr.bf16.mxu0 0
        %3698 = vmatpush1.bf16.msra.mxu0 0
        %3699 = vmatprep.subr.bf16.mxu0 0
        %3700 = vmatpush1.bf16.msra.mxu0 0
        %3701 = vmatprep.subr.bf16.mxu0 0
        %3702 = vmatpush1.bf16.msra.mxu0 0
        %3703 = vmatprep.subr.bf16.mxu0 0
        %3704 = vmatpush1.bf16.msra.mxu0 0
        %3705 = vmatprep.subr.bf16.mxu0 0
        %3706 = vmatpush1.bf16.msra.mxu0 0
        %3707 = vmatprep.subr.bf16.mxu0 0
        %3708 = vmatpush1.bf16.msra.mxu0 0
        %3709 = vmatprep.mubr.bf16.mxu0 0
        %3710 = vmatmul.mubr.bf16.gmra.mrb[0].mxu0 %v3672
        %v3711 = vpop.f32.mrb[0].mxu0
        %v3712 = vadd.f32 0.0, %v3711
        %v3713 = vpop.f32.mrb[0].mxu0
        %v3714 = vpop.f32.mrb[0].mxu0
        %v3715 = vpop.f32.mrb[0].mxu0
        %3716 = vdwg.mxu0
        %v3717 = vpack.c.bf16 %v3574, %v3574
        %v3718 = vpack.c.bf16 %v3620, %v3620
        %v3719 = vpack.c.bf16 %v3666, %v3666
        %v3720 = vpack.c.bf16 %v3712, %v3712
        %v3722 = vsel %vm1860, %v3717, 0
        %v3725 = vsel %vm2100, %v3279, 0
        %3727 = vmatprep.subr.bf16.mxu0 0
        %3728 = vmatpush1.bf16.msra.mxu0 %v3725
        %3729 = vmatprep.subr.bf16.mxu0 0
        %3730 = vmatpush1.bf16.msra.mxu0 0
        %3731 = vmatprep.subr.bf16.mxu0 0
        %3732 = vmatpush1.bf16.msra.mxu0 0
        %3733 = vmatprep.subr.bf16.mxu0 0
        %3734 = vmatpush1.bf16.msra.mxu0 0
        %3735 = vmatprep.subr.bf16.mxu0 0
        %3736 = vmatpush1.bf16.msra.mxu0 0
        %3737 = vmatprep.subr.bf16.mxu0 0
        %3738 = vmatpush1.bf16.msra.mxu0 0
        %3739 = vmatprep.subr.bf16.mxu0 0
        %3740 = vmatpush1.bf16.msra.mxu0 0
        %3741 = vmatprep.subr.bf16.mxu0 0
        %3742 = vmatpush1.bf16.msra.mxu0 0
        %3743 = vmatprep.subr.bf16.mxu0 0
        %3744 = vmatpush1.bf16.msra.mxu0 0
        %3745 = vmatprep.subr.bf16.mxu0 0
        %3746 = vmatpush1.bf16.msra.mxu0 0
        %3747 = vmatprep.subr.bf16.mxu0 0
        %3748 = vmatpush1.bf16.msra.mxu0 0
        %3749 = vmatprep.subr.bf16.mxu0 0
        %3750 = vmatpush1.bf16.msra.mxu0 0
        %3751 = vmatprep.subr.bf16.mxu0 0
        %3752 = vmatpush1.bf16.msra.mxu0 0
        %3753 = vmatprep.subr.bf16.mxu0 0
        %3754 = vmatpush1.bf16.msra.mxu0 0
        %3755 = vmatprep.subr.bf16.mxu0 0
        %3756 = vmatpush1.bf16.msra.mxu0 0
        %3757 = vmatprep.subr.bf16.mxu0 0
        %3758 = vmatpush1.bf16.msra.mxu0 0
        %3759 = vmatprep.mubr.bf16.mxu0 0
        %3760 = vmatmul.mubr.bf16.gmra.mrb[0].mxu0 %v3722
        %v3761 = vpop.f32.mrb[0].mxu0
        %v3762 = vadd.f32 0.0, %v3761
        %v3763 = vpop.f32.mrb[0].mxu0
        %v3764 = vpop.f32.mrb[0].mxu0
        %v3765 = vpop.f32.mrb[0].mxu0
        %3766 = vdwg.mxu0
        %v3768 = vsel %vm1860, %v3718, 0
        %v3771 = vsel %vm2100, %v3280, 0
        %3773 = vmatprep.subr.bf16.mxu0 0
        %3774 = vmatpush1.bf16.msra.mxu0 %v3771
        %3775 = vmatprep.subr.bf16.mxu0 0
        %3776 = vmatpush1.bf16.msra.mxu0 0
        %3777 = vmatprep.subr.bf16.mxu0 0
        %3778 = vmatpush1.bf16.msra.mxu0 0
        %3779 = vmatprep.subr.bf16.mxu0 0
        %3780 = vmatpush1.bf16.msra.mxu0 0
        %3781 = vmatprep.subr.bf16.mxu0 0
        %3782 = vmatpush1.bf16.msra.mxu0 0
        %3783 = vmatprep.subr.bf16.mxu0 0
        %3784 = vmatpush1.bf16.msra.mxu0 0
        %3785 = vmatprep.subr.bf16.mxu0 0
        %3786 = vmatpush1.bf16.msra.mxu0 0
        %3787 = vmatprep.subr.bf16.mxu0 0
        %3788 = vmatpush1.bf16.msra.mxu0 0
        %3789 = vmatprep.subr.bf16.mxu0 0
        %3790 = vmatpush1.bf16.msra.mxu0 0
        %3791 = vmatprep.subr.bf16.mxu0 0
        %3792 = vmatpush1.bf16.msra.mxu0 0
        %3793 = vmatprep.subr.bf16.mxu0 0
        %3794 = vmatpush1.bf16.msra.mxu0 0
        %3795 = vmatprep.subr.bf16.mxu0 0
        %3796 = vmatpush1.bf16.msra.mxu0 0
        %3797 = vmatprep.subr.bf16.mxu0 0
        %3798 = vmatpush1.bf16.msra.mxu0 0
        %3799 = vmatprep.subr.bf16.mxu0 0
        %3800 = vmatpush1.bf16.msra.mxu0 0
        %3801 = vmatprep.subr.bf16.mxu0 0
        %3802 = vmatpush1.bf16.msra.mxu0 0
        %3803 = vmatprep.subr.bf16.mxu0 0
        %3804 = vmatpush1.bf16.msra.mxu0 0
        %3805 = vmatprep.mubr.bf16.mxu0 0
        %3806 = vmatmul.mubr.bf16.gmra.mrb[0].mxu0 %v3768
        %v3807 = vpop.f32.mrb[0].mxu0
        %v3808 = vadd.f32 0.0, %v3807
        %v3809 = vpop.f32.mrb[0].mxu0
        %v3810 = vpop.f32.mrb[0].mxu0
        %v3811 = vpop.f32.mrb[0].mxu0
        %3812 = vdwg.mxu0
        %v3814 = vsel %vm1860, %v3719, 0
        %v3817 = vsel %vm2100, %v3281, 0
        %3819 = vmatprep.subr.bf16.mxu0 0
        %3820 = vmatpush1.bf16.msra.mxu0 %v3817
        %3821 = vmatprep.subr.bf16.mxu0 0
        %3822 = vmatpush1.bf16.msra.mxu0 0
        %3823 = vmatprep.subr.bf16.mxu0 0
        %3824 = vmatpush1.bf16.msra.mxu0 0
        %3825 = vmatprep.subr.bf16.mxu0 0
        %3826 = vmatpush1.bf16.msra.mxu0 0
        %3827 = vmatprep.subr.bf16.mxu0 0
        %3828 = vmatpush1.bf16.msra.mxu0 0
        %3829 = vmatprep.subr.bf16.mxu0 0
        %3830 = vmatpush1.bf16.msra.mxu0 0
        %3831 = vmatprep.subr.bf16.mxu0 0
        %3832 = vmatpush1.bf16.msra.mxu0 0
        %3833 = vmatprep.subr.bf16.mxu0 0
        %3834 = vmatpush1.bf16.msra.mxu0 0
        %3835 = vmatprep.subr.bf16.mxu0 0
        %3836 = vmatpush1.bf16.msra.mxu0 0
        %3837 = vmatprep.subr.bf16.mxu0 0
        %3838 = vmatpush1.bf16.msra.mxu0 0
        %3839 = vmatprep.subr.bf16.mxu0 0
        %3840 = vmatpush1.bf16.msra.mxu0 0
        %3841 = vmatprep.subr.bf16.mxu0 0
        %3842 = vmatpush1.bf16.msra.mxu0 0
        %3843 = vmatprep.subr.bf16.mxu0 0
        %3844 = vmatpush1.bf16.msra.mxu0 0
        %3845 = vmatprep.subr.bf16.mxu0 0
        %3846 = vmatpush1.bf16.msra.mxu0 0
        %3847 = vmatprep.subr.bf16.mxu0 0
        %3848 = vmatpush1.bf16.msra.mxu0 0
        %3849 = vmatprep.subr.bf16.mxu0 0
        %3850 = vmatpush1.bf16.msra.mxu0 0
        %3851 = vmatprep.mubr.bf16.mxu0 0
        %3852 = vmatmul.mubr.bf16.gmra.mrb[0].mxu0 %v3814
        %v3853 = vpop.f32.mrb[0].mxu0
        %v3854 = vadd.f32 0.0, %v3853
        %v3855 = vpop.f32.mrb[0].mxu0
        %v3856 = vpop.f32.mrb[0].mxu0
        %v3857 = vpop.f32.mrb[0].mxu0
        %3858 = vdwg.mxu0
        %v3860 = vsel %vm1860, %v3720, 0
        %v3863 = vsel %vm2100, %v3282, 0
        %3865 = vmatprep.subr.bf16.mxu0 0
        %3866 = vmatpush1.bf16.msra.mxu0 %v3863
        %3867 = vmatprep.subr.bf16.mxu0 0
        %3868 = vmatpush1.bf16.msra.mxu0 0
        %3869 = vmatprep.subr.bf16.mxu0 0
        %3870 = vmatpush1.bf16.msra.mxu0 0
        %3871 = vmatprep.subr.bf16.mxu0 0
        %3872 = vmatpush1.bf16.msra.mxu0 0
        %3873 = vmatprep.subr.bf16.mxu0 0
        %3874 = vmatpush1.bf16.msra.mxu0 0
        %3875 = vmatprep.subr.bf16.mxu0 0
        %3876 = vmatpush1.bf16.msra.mxu0 0
        %3877 = vmatprep.subr.bf16.mxu0 0
        %3878 = vmatpush1.bf16.msra.mxu0 0
        %3879 = vmatprep.subr.bf16.mxu0 0
        %3880 = vmatpush1.bf16.msra.mxu0 0
        %3881 = vmatprep.subr.bf16.mxu0 0
        %3882 = vmatpush1.bf16.msra.mxu0 0
        %3883 = vmatprep.subr.bf16.mxu0 0
        %3884 = vmatpush1.bf16.msra.mxu0 0
        %3885 = vmatprep.subr.bf16.mxu0 0
        %3886 = vmatpush1.bf16.msra.mxu0 0
        %3887 = vmatprep.subr.bf16.mxu0 0
        %3888 = vmatpush1.bf16.msra.mxu0 0
        %3889 = vmatprep.subr.bf16.mxu0 0
        %3890 = vmatpush1.bf16.msra.mxu0 0
        %3891 = vmatprep.subr.bf16.mxu0 0
        %3892 = vmatpush1.bf16.msra.mxu0 0
        %3893 = vmatprep.subr.bf16.mxu0 0
        %3894 = vmatpush1.bf16.msra.mxu0 0
        %3895 = vmatprep.subr.bf16.mxu0 0
        %3896 = vmatpush1.bf16.msra.mxu0 0
        %3897 = vmatprep.mubr.bf16.mxu0 0
        %3898 = vmatmul.mubr.bf16.gmra.mrb[0].mxu0 %v3860
        %v3899 = vpop.f32.mrb[0].mxu0
        %v3900 = vadd.f32 0.0, %v3899
        %v3901 = vpop.f32.mrb[0].mxu0
        %v3902 = vpop.f32.mrb[0].mxu0
        %v3903 = vpop.f32.mrb[0].mxu0
        %3904 = vdwg.mxu0
        %v3905 = vsel %vm1231, %v3762, 0.0
        %v3906 = vsel %vm1231, %v3808, 0.0
        %v3907 = vadd.f32 %v3905, %v3906
        %v3908 = vsel %vm1231, %v3854, 0.0
        %v3909 = vadd.f32 %v3907, %v3908
        %v3910 = vsel %vm1231, %v3900, 0.0
        %v3911 = vadd.f32 %v3909, %v3910
        %v3913 = vlaneseq
        %v3914 = vshrl.u32 %v3913, 7
        %v3915 = vsub.s32 0, %v3914
        %v3916 = vrot.slane %v3283, %v3915
        %v3918 = vadd.f32 %v3911, %v3916
        %v3919 = vadd.f32 %v2514, %v3918
        %v3920 = vld [vmem:[%s1050] sm:$0x1]
        %v3921 = vld [vmem:[%s1053] sm:$0x1]
        %v3922 = vsel %vm1231, %v3919, 0.0
        %3923 = vadd.xlane.f32.xlu0 %v3922
        %v3924 = vpop.xlane.xlu0 %3923
        %v3925 = vmul.f32 %v3924, %v2490
        %v3926 = vsub.f32 %v3919, %v3925
        %v3927 = vmul.f32 %v3926, %v3926
        %v3928 = vsel %vm1231, %v3927, 0.0
        %3929 = vadd.xlane.f32.xlu0 %v3928
        %v3930 = vpop.xlane.xlu0 %3929
        %v3931 = vmul.f32 %v3930, %v2490
        %v3932 = vadd.f32 %v3931, 1e-12
        %v3933 = vrsqrt.pop %v3932
        %v3934 = vmul.f32 %v3926, %v3933
        %v3936 = vlaneseq
        %v3937 = vshrl.u32 %v3936, 7
        %v3938 = vsub.s32 0, %v3937
        %v3939 = vrot.slane %v3920, %v3938
        %v3941 = vmul.f32 %v3934, %v3939
        %v3943 = vlaneseq
        %v3944 = vshrl.u32 %v3943, 7
        %v3945 = vsub.s32 0, %v3944
        %v3946 = vrot.slane %v3921, %v3945
        %v3948 = vadd.f32 %v3941, %v3946
        %v3949 = vpack.c.bf16 %v3948, %v3948
        %v3950 = vld [vmem:[%s1058] sm:$0xf]
        %v3951 = vld [vmem:[%s1058 + $0x4] sm:$0xf]
        %v3952 = vld [vmem:[%s1058 + $0x8] sm:$0xf]
        %v3953 = vld [vmem:[%s1058 + $0xc] sm:$0xf]
        %v3954 = vld [vmem:[%s1061] sm:$0x1]
        %v3956 = vlaneseq
        %v3957 = vshrl.u32 %v3956, 7
        %v3958 = vsub.s32 0, %v3957
        %v3959 = vrot.slane %v3954, %v3958
        %v3965 = vunpack.c.l.b16 %v3950
        %v3966 = vunpack.c.l.b16 %v3951
        %v3967 = vunpack.c.l.b16 %v3952
        %v3968 = vunpack.c.l.b16 %v3953
        %v3969 = vpack.c.b16 %v3966, %v3965
        %v3970 = vpack.c.b16 %v3968, %v3967
        %v3974 = vsel %vm1231, %v3949, 0
        %3976 = vmatprep.subr.bf16.mxu0 0
        %3977 = vmatpush1.bf16.msra.mxu0 %v3969
        %3978 = vmatprep.subr.bf16.mxu0 0
        %3979 = vmatpush1.bf16.msra.mxu0 %v3970
        %3980 = vmatprep.subr.bf16.mxu0 0
        %3981 = vmatpush1.bf16.msra.mxu0 0
        %3982 = vmatprep.subr.bf16.mxu0 0
        %3983 = vmatpush1.bf16.msra.mxu0 0
        %3984 = vmatprep.subr.bf16.mxu0 0
        %3985 = vmatpush1.bf16.msra.mxu0 0
        %3986 = vmatprep.subr.bf16.mxu0 0
        %3987 = vmatpush1.bf16.msra.mxu0 0
        %3988 = vmatprep.subr.bf16.mxu0 0
        %3989 = vmatpush1.bf16.msra.mxu0 0
        %3990 = vmatprep.subr.bf16.mxu0 0
        %3991 = vmatpush1.bf16.msra.mxu0 0
        %3992 = vmatprep.subr.bf16.mxu0 0
        %3993 = vmatpush1.bf16.msra.mxu0 0
        %3994 = vmatprep.subr.bf16.mxu0 0
        %3995 = vmatpush1.bf16.msra.mxu0 0
        %3996 = vmatprep.subr.bf16.mxu0 0
        %3997 = vmatpush1.bf16.msra.mxu0 0
        %3998 = vmatprep.subr.bf16.mxu0 0
        %3999 = vmatpush1.bf16.msra.mxu0 0
        %4000 = vmatprep.subr.bf16.mxu0 0
        %4001 = vmatpush1.bf16.msra.mxu0 0
        %4002 = vmatprep.subr.bf16.mxu0 0
        %4003 = vmatpush1.bf16.msra.mxu0 0
        %4004 = vmatprep.subr.bf16.mxu0 0
        %4005 = vmatpush1.bf16.msra.mxu0 0
        %4006 = vmatprep.subr.bf16.mxu0 0
        %4007 = vmatpush1.bf16.msra.mxu0 0
        %4008 = vmatprep.mubr.bf16.mxu0 0
        %4009 = vmatmul.mubr.bf16.gmra.mrb[0].mxu0 %v3974
        %v4010 = vpop.f32.mrb[0].mxu0
        %v4011 = vadd.f32 %v3959, %v4010
        %v4012 = vpop.f32.mrb[0].mxu0
        %v4013 = vpop.f32.mrb[0].mxu0
        %v4014 = vpop.f32.mrb[0].mxu0
        %4015 = vdwg.mxu0
        %v4016 = vmul.f32 %v4011, 0.5
        %v4017 = vmul.f32 %v4011, 0.70710677
        %v4018 = vand.u32 2147483647, %v4017
        %v4019 = vmul.f32 %v4018, 0.3275911
        %v4020 = vadd.f32 %v4019, 1.0
        %v4021 = vrcp.pop %v4020
        %v4022 = vmul.f32 %v4021, 1.0614054
        %v4023 = vadd.f32 %v4022, -1.4531521
        %v4024 = vmul.f32 %v4023, %v4021
        %v4025 = vadd.f32 %v4024, 1.4214138
        %v4026 = vmul.f32 %v4025, %v4021
        %v4027 = vadd.f32 %v4026, -0.28449672
        %v4028 = vmul.f32 %v4027, %v4021
        %v4029 = vadd.f32 %v4028, 0.2548296
        %v4030 = vmul.f32 %v4029, %v4021
        %v4031 = vsub.f32 0.0, %v4018
        %v4032 = vmul.f32 %v4031, %v4018
        %v4033 = vmul.f32 %v4032, 1.442695
        %v4034 = vpow.pop %v4033
        %v4035 = vmul.f32 %v4030, %v4034
        %v4036 = vsub.f32 1.0, %v4035
        %vm4037 = vcmp.ge.f32.partialorder %v4017, 0.0
        %v4038 = vsub.f32 0.0, %v4036
        %v4039 = vsel %vm4037, %v4036, %v4038
        %v4040 = vadd.f32 %v4039, 1.0
        %v4041 = vmul.f32 %v4016, %v4040
        %v4042 = vpack.c.bf16 %v4041, %v4041
        %v4043 = vld [vmem:[%s1066] sm:$0xf]
        %v4044 = vld [vmem:[%s1066 + $0x4] sm:$0xf]
        %v4045 = vld [vmem:[%s1066 + $0x8] sm:$0xf]
        %v4046 = vld [vmem:[%s1066 + $0xc] sm:$0xf]
        %v4047 = vld [vmem:[%s1066 + $0x10] sm:$0xf]
        %v4048 = vld [vmem:[%s1066 + $0x14] sm:$0xf]
        %v4049 = vld [vmem:[%s1066 + $0x18] sm:$0xf]
        %v4050 = vld [vmem:[%s1066 + $0x1c] sm:$0xf]
        %v4051 = vld [vmem:[%s1069] sm:$0x1]
        %v4053 = vlaneseq
        %v4054 = vshrl.u32 %v4053, 7
        %v4055 = vsub.s32 0, %v4054
        %v4056 = vrot.slane %v4051, %v4055
        %v4066 = vunpack.c.l.b16 %v4043
        %v4067 = vunpack.c.l.b16 %v4044
        %v4068 = vunpack.c.l.b16 %v4045
        %v4069 = vunpack.c.l.b16 %v4046
        %v4070 = vunpack.c.l.b16 %v4047
        %v4071 = vunpack.c.l.b16 %v4048
        %v4072 = vunpack.c.l.b16 %v4049
        %v4073 = vunpack.c.l.b16 %v4050
        %v4074 = vpack.c.b16 %v4067, %v4066
        %v4075 = vpack.c.b16 %v4069, %v4068
        %v4076 = vpack.c.b16 %v4071, %v4070
        %v4077 = vpack.c.b16 %v4073, %v4072
        %vm4082 = vcmask 523264
        %v4084 = vsel %vm4082, %v4042, 0
        %4086 = vmatprep.subr.bf16.mxu0 0
        %4087 = vmatpush1.bf16.msra.mxu0 %v4074
        %4088 = vmatprep.subr.bf16.mxu0 0
        %4089 = vmatpush1.bf16.msra.mxu0 %v4075
        %4090 = vmatprep.subr.bf16.mxu0 0
        %4091 = vmatpush1.bf16.msra.mxu0 %v4076
        %4092 = vmatprep.subr.bf16.mxu0 0
        %4093 = vmatpush1.bf16.msra.mxu0 %v4077
        %4094 = vmatprep.subr.bf16.mxu0 0
        %4095 = vmatpush1.bf16.msra.mxu0 0
        %4096 = vmatprep.subr.bf16.mxu0 0
        %4097 = vmatpush1.bf16.msra.mxu0 0
        %4098 = vmatprep.subr.bf16.mxu0 0
        %4099 = vmatpush1.bf16.msra.mxu0 0
        %4100 = vmatprep.subr.bf16.mxu0 0
        %4101 = vmatpush1.bf16.msra.mxu0 0
        %4102 = vmatprep.subr.bf16.mxu0 0
        %4103 = vmatpush1.bf16.msra.mxu0 0
        %4104 = vmatprep.subr.bf16.mxu0 0
        %4105 = vmatpush1.bf16.msra.mxu0 0
        %4106 = vmatprep.subr.bf16.mxu0 0
        %4107 = vmatpush1.bf16.msra.mxu0 0
        %4108 = vmatprep.subr.bf16.mxu0 0
        %4109 = vmatpush1.bf16.msra.mxu0 0
        %4110 = vmatprep.subr.bf16.mxu0 0
        %4111 = vmatpush1.bf16.msra.mxu0 0
        %4112 = vmatprep.subr.bf16.mxu0 0
        %4113 = vmatpush1.bf16.msra.mxu0 0
        %4114 = vmatprep.subr.bf16.mxu0 0
        %4115 = vmatpush1.bf16.msra.mxu0 0
        %4116 = vmatprep.subr.bf16.mxu0 0
        %4117 = vmatpush1.bf16.msra.mxu0 0
        %4118 = vmatprep.mubr.bf16.mxu0 0
        %4119 = vmatmul.mubr.bf16.gmra.mrb[0].mxu0 %v4084
        %v4120 = vpop.f32.mrb[0].mxu0
        %v4121 = vadd.f32 %v4056, %v4120
        %v4122 = vpop.f32.mrb[0].mxu0
        %v4123 = vpop.f32.mrb[0].mxu0
        %v4124 = vpop.f32.mrb[0].mxu0
        %4125 = vdwg.mxu0
        %v4126 = vadd.f32 %v3948, %v4121
        %v4127 = vld [vmem:[%s1072] sm:$0x1]
        %v4128 = vld [vmem:[%s1075] sm:$0x1]
        %v4129 = vsel %vm1231, %v4126, 0.0
        %4130 = vadd.xlane.f32.xlu0 %v4129
        %v4131 = vpop.xlane.xlu0 %4130
        %v4132 = vmul.f32 %v4131, %v2490
        %v4133 = vsub.f32 %v4126, %v4132
        %v4134 = vmul.f32 %v4133, %v4133
        %v4135 = vsel %vm1231, %v4134, 0.0
        %4136 = vadd.xlane.f32.xlu0 %v4135
        %v4137 = vpop.xlane.xlu0 %4136
        %v4138 = vmul.f32 %v4137, %v2490
        %v4139 = vadd.f32 %v4138, 1e-12
        %v4140 = vrsqrt.pop %v4139
        %v4141 = vmul.f32 %v4133, %v4140
        %v4143 = vlaneseq
        %v4144 = vshrl.u32 %v4143, 7
        %v4145 = vsub.s32 0, %v4144
        %v4146 = vrot.slane %v4127, %v4145
        %v4148 = vmul.f32 %v4141, %v4146
        %v4150 = vlaneseq
        %v4151 = vshrl.u32 %v4150, 7
        %v4152 = vsub.s32 0, %v4151
        %v4153 = vrot.slane %v4128, %v4152
        %v4155 = vadd.f32 %v4148, %v4153
        %4156 = vst.msk [vmem:[#allocation2] sm:$0xff] %vm1231, %v4155
        %p4157 = scmp.eq.s32.totalorder %s43, 1
        // Predicated region
        $region121: #{_lambda_.3} parent=115 // pred_check
          %p4158 = pneg %p4157
        $region122: #{_lambda_.3} parent=115 // pred_check_branch
          %4160 = sbr.rel (%p4158) target = $region124
        $region123: #{_lambda_.3} parent=115 // pred_region
          %v4161 = vpack.c.bf16 %v4155, %v4155
          %v4162 = vld [vmem:[%s2] sm:$0xf]
          %v4163 = vld [vmem:[%s2 + $0x4] sm:$0xf]
          %v4164 = vld [vmem:[%s2 + $0x8] sm:$0xf]
          %v4165 = vld [vmem:[%s2 + $0xc] sm:$0xf]
          %v4166 = vld [vmem:[%s3] sm:$0x1]
          %v4168 = vlaneseq
          %v4169 = vshrl.u32 %v4168, 7
          %v4170 = vsub.s32 0, %v4169
          %v4171 = vrot.slane %v4166, %v4170
          %v4177 = vunpack.c.l.b16 %v4162
          %v4178 = vunpack.c.l.b16 %v4163
          %v4179 = vunpack.c.l.b16 %v4164
          %v4180 = vunpack.c.l.b16 %v4165
          %v4181 = vpack.c.b16 %v4178, %v4177
          %v4182 = vpack.c.b16 %v4180, %v4179
          %v4186 = vsel %vm1231, %v4161, 0
          %4188 = vmatprep.subr.bf16.mxu0 0
          %4189 = vmatpush1.bf16.msra.mxu0 %v4181
          %4190 = vmatprep.subr.bf16.mxu0 0
          %4191 = vmatpush1.bf16.msra.mxu0 %v4182
          %4192 = vmatprep.subr.bf16.mxu0 0
          %4193 = vmatpush1.bf16.msra.mxu0 0
          %4194 = vmatprep.subr.bf16.mxu0 0
          %4195 = vmatpush1.bf16.msra.mxu0 0
          %4196 = vmatprep.subr.bf16.mxu0 0
          %4197 = vmatpush1.bf16.msra.mxu0 0
          %4198 = vmatprep.subr.bf16.mxu0 0
          %4199 = vmatpush1.bf16.msra.mxu0 0
          %4200 = vmatprep.subr.bf16.mxu0 0
          %4201 = vmatpush1.bf16.msra.mxu0 0
          %4202 = vmatprep.subr.bf16.mxu0 0
          %4203 = vmatpush1.bf16.msra.mxu0 0
          %4204 = vmatprep.subr.bf16.mxu0 0
          %4205 = vmatpush1.bf16.msra.mxu0 0
          %4206 = vmatprep.subr.bf16.mxu0 0
          %4207 = vmatpush1.bf16.msra.mxu0 0
          %4208 = vmatprep.subr.bf16.mxu0 0
          %4209 = vmatpush1.bf16.msra.mxu0 0
          %4210 = vmatprep.subr.bf16.mxu0 0
          %4211 = vmatpush1.bf16.msra.mxu0 0
          %4212 = vmatprep.subr.bf16.mxu0 0
          %4213 = vmatpush1.bf16.msra.mxu0 0
          %4214 = vmatprep.subr.bf16.mxu0 0
          %4215 = vmatpush1.bf16.msra.mxu0 0
          %4216 = vmatprep.subr.bf16.mxu0 0
          %4217 = vmatpush1.bf16.msra.mxu0 0
          %4218 = vmatprep.subr.bf16.mxu0 0
          %4219 = vmatpush1.bf16.msra.mxu0 0
          %4220 = vmatprep.mubr.bf16.mxu0 0
          %4221 = vmatmul.mubr.bf16.gmra.mrb[0].mxu0 %v4186
          %v4222 = vpop.f32.mrb[0].mxu0
          %v4223 = vadd.f32 %v4171, %v4222
          %v4224 = vpop.f32.mrb[0].mxu0
          %v4225 = vpop.f32.mrb[0].mxu0
          %v4226 = vpop.f32.mrb[0].mxu0
          %4227 = vdwg.mxu0
          %vm4228 = vcmask 130048
          %4229 = vst.msk [vmem:[%s994] sm:$0xff] %vm4228, %v4223
        $region124: #{_lambda_.3} parent=115 // pred_fallthru
          _
        %s4230 = sand.u32 %s667, 1
        %s4231 = scalar_lea.sflag [#allocation4], %s4230
        %s4232 = sand.u32 %s667, 1
        %s4233 = smul.addr %s4232, 8
        %s4234 = scalar_lea.vmem [#allocation3], %s4233
        // Predicated region
        $region125: #{_lambda_.3} parent=115 // pred_check
          %p4235 = pneg %p677
        $region126: #{_lambda_.3} parent=115 // pred_check_branch
          %4237 = sbr.rel (%p4235) target = $region128
        $region127: #{_lambda_.3} parent=115 // pred_region
          %s4239 = ssub.s32 128, 128
          %4240 = vsyncadd %s4231, %s4239
          %s4241 = smul.addr %s42, 128
          %s4242 = scalar_lea.hbm %s24, %s4241
          %s4244 = sshll.u32 %s4234, 4
          %s4245 = int_to_ptr.vmem [resolvable:$true] %s4244
          %4247 = dma.vmem_to_hbm [thread:$0]  %s4245, 128, %s4242, %s4231
        $region128: #{_lambda_.3} parent=115 // pred_fallthru
          _
      $region116: #{_lambda_.3} parent=5 // pred_fallthru
        _
      %p4248 = scmp.le.s32.totalorder 2, %s33
      // Predicated region
      $region129: #{_lambda_.3} parent=5 // pred_check
        %p4249 = pneg %p4248
      $region130: #{_lambda_.3} parent=5 // pred_check_branch
        %4251 = sbr.rel (%p4249) target = $region132
      $region131: #{_lambda_.3} parent=5 // pred_region
        %s4252 = ssub.s32 %s33, 2
        // Predicated region
        $region133: #{_lambda_.3} parent=131 // pred_check
          %p4253 = pneg %p683
        $region134: #{_lambda_.3} parent=131 // pred_check_branch
          %4255 = sbr.rel (%p4253) target = $region136
        $region135: #{_lambda_.3} parent=131 // pred_region
          %s4256 = sand.u32 %s668, 1
          %s4257 = scalar_lea.sflag [#allocation4], %s4256
          %s4258 = sand.u32 %s668, 1
          %s4259 = smul.addr %s4258, 8
          %s4260 = scalar_lea.vmem [#allocation3], %s4259
          %4261 = dma.done %s4257, 128
        $region136: #{_lambda_.3} parent=131 // pred_fallthru
          _
      $region132: #{_lambda_.3} parent=5 // pred_fallthru
        _
    $region6: #{_lambda_.3} parent=1 // loop_footer
      %s37 = sadd.s32 1, %s33
    $region7: #{_lambda_.3} parent=1 // loop_footer_branch
      %32 = sbr.rel target = $region3
    $region8: #{_lambda_.3} parent=1 // loop_exit
      _
    %4262 = vsyncpa [#allocation4], 1
    %s4263 = scalar_lea.sflag [#allocation4], 1
    %4264 = vsyncpa %s4263, 1

</llo_original>
